<compile_context>
chip_gen: v6e
topology: v6e:2x2x1
jax: 0.10.0
libtpu: 0.0.40
codegen_flags: <defaults>
</compile_context>

<pallas_src>
import jax
import jax.numpy as jnp
from jax.experimental import pallas as pl
from jax.experimental.pallas import tpu as pltpu


def dwconv_bn_kernel(x_ref, w_ref, gamma_ref, beta_ref, o_ref, xpad_ref, conv_ref):
    # x_ref:     (N, H, W, C)        unpadded input block, NHWC (C on the lane axis)
    # w_ref:     (9, C)              depthwise taps, row-major over (kh, kw)
    # gamma_ref: (1, C), beta_ref: (1, C)
    # o_ref:     (N, H, W, C)
    # xpad_ref:  (N, H+2, Wp, C)     VMEM scratch, Wp = round_up(W + 1, 8)
    # conv_ref:  (N, H, Wp, C)       VMEM scratch holding the raw conv result
    N, H, W, C = x_ref.shape
    _, _, Wp, _ = xpad_ref.shape
    f32 = jnp.float32

    # ---- fused zero padding: zero only the border, then copy the interior ----
    zero_row = jnp.zeros((N, 1, Wp, C), f32)
    xpad_ref[:, 0:1, :, :] = zero_row                                    # top pad row
    xpad_ref[:, H + 1:H + 2, :, :] = zero_row                            # bottom pad row
    xpad_ref[:, 1:H + 1, W:Wp, :] = jnp.zeros((N, H, Wp - W, C), f32)    # right pad cols
    xpad_ref[:, 1:H + 1, 0:W, :] = x_ref[...].astype(f32)                # interior
    # TODO(synk): for a bf16-resident model keep xpad/conv scratch in bf16 and cast at
    # the FMAs (bandwidth win); the input here is f32 so f32 scratch is kept.

    # ---- taps / mask, loaded & built once (hoisted out of the hot loop) ----
    w9 = w_ref[...].astype(f32)                                  # (9, C)
    taps = [w9[k].reshape(1, 1, C) for k in range(9)]
    # mask that zeroes the Wp - W garbage columns (used for BN statistics only)
    col = jax.lax.broadcasted_iota(jnp.int32, (1, Wp, C), 1)
    wmask = (col < W).astype(f32)

    # ---- single pass: per-row 3x3 depthwise conv + running BN statistics ----
    def row_body(h, carry):
        s1, s2 = carry
        row = None
        for kh in range(3):                                       # static; fully fused
            rk = xpad_ref[:, pl.ds(h + kh, 1), :, :].reshape(N, Wp, C)
            term = (pltpu.roll(rk, 1, axis=1) * taps[3 * kh + 0]          # x[w-1] (left)
                    + rk * taps[3 * kh + 1]                               # x[w]   (center)
                    + pltpu.roll(rk, Wp - 1, axis=1) * taps[3 * kh + 2])  # x[w+1] (right)
            row = term if row is None else row + term
        conv_ref[:, pl.ds(h, 1), :, :] = row.reshape(N, 1, Wp, C)
        mrow = row * wmask                                        # kill pad-col garbage
        s1 = s1 + jnp.sum(mrow, axis=1)                           # (N, C)
        s2 = s2 + jnp.sum(mrow * row, axis=1)                     # (N, C) == sum(row^2)
        return s1, s2

    s1, s2 = jax.lax.fori_loop(
        0, H, row_body,
        (jnp.zeros((N, C), f32), jnp.zeros((N, C), f32)),
        unroll=True)

    # ---- BatchNorm2d (training): batch stats, biased variance, eps = 1e-3 ----
    cnt = f32(N * H * W)
    mean = jnp.sum(s1, axis=0, keepdims=True) / cnt               # (1, C)
    var = jnp.sum(s2, axis=0, keepdims=True) / cnt - mean * mean  # biased variance
    inv = jax.lax.rsqrt(var + 1e-3)
    gamma = gamma_ref[...].astype(f32)                            # (1, C)
    beta = beta_ref[...].astype(f32)
    scale = (gamma * inv).reshape(1, 1, 1, C)
    shift = (beta - mean * gamma * inv).reshape(1, 1, 1, C)

    # ---- single normalize pass; the Wp -> W crop happens only at this final read ----
    o_ref[...] = (conv_ref[:, :, 0:W, :] * scale + shift).astype(o_ref.dtype)
    # TODO(synk): BatchNorm running_mean/running_var momentum update is a training-time
    # buffer side effect only; it does not affect the returned tensor and is not emitted.


def _default_c_blocks(C):
    """v7x has 2 TensorCores/chip; BN stats are per-channel so a lane-aligned channel
    split is embarrassingly parallel there.  Single-core chips (v5e/v6e) keep a single
    block to avoid the extra grid-step overhead."""
    try:
        kind = jax.devices()[0].device_kind.lower()
    except Exception:
        return 1
    if "v7" in kind and C % 256 == 0:
        return 2
    return 1


def dwconv_bn_nhwc(x_nhwc, w_c33, gamma, beta, *, c_blocks=None):
    """x_nhwc: (N, H, W, C). w_c33: (C, 3, 3). gamma/beta: (C,)."""
    N, H, W, C = x_nhwc.shape
    Wp = pl.cdiv(W + 1, 8) * 8                 # >= W+1 zero pad columns, sublane aligned
    w_9c = jnp.transpose(w_c33, (1, 2, 0)).reshape(9, C)

    if c_blocks is None:
        c_blocks = _default_c_blocks(C)
    cb = C // c_blocks

    return pl.pallas_call(
        dwconv_bn_kernel,
        out_shape=jax.ShapeDtypeStruct((N, H, W, C), x_nhwc.dtype),
        grid_spec=pltpu.PrefetchScalarGridSpec(
            num_scalar_prefetch=0,
            grid=(c_blocks,),
            in_specs=[
                pl.BlockSpec((N, H, W, cb), lambda i: (0, 0, 0, i)),
                pl.BlockSpec((9, cb), lambda i: (0, i)),
                pl.BlockSpec((1, cb), lambda i: (0, i)),
                pl.BlockSpec((1, cb), lambda i: (0, i)),
            ],
            out_specs=pl.BlockSpec((N, H, W, cb), lambda i: (0, 0, 0, i)),
            scratch_shapes=[
                pltpu.VMEM((N, H + 2, Wp, cb), jnp.float32),   # zero-padded activations
                pltpu.VMEM((N, H, Wp, cb), jnp.float32),       # raw conv result
            ]),
        compiler_params=pltpu.CompilerParams(
            dimension_semantics=("parallel",)),
    )(x_nhwc, w_9c, gamma.reshape(1, C), beta.reshape(1, C))


def dwconv_bn(x_nchw, w_c33, gamma, beta):
    """PyTorch-interface wrapper: x_nchw (N, C, H, W) in, NCHW out.

    The two transposes are pure layout plumbing for the NCHW interface of the original
    module; an NHWC-resident model should call dwconv_bn_nhwc directly (no transposes).
    """
    x_nhwc = jnp.transpose(x_nchw, (0, 2, 3, 1))
    out_nhwc = dwconv_bn_nhwc(x_nhwc, w_c33, gamma, beta)
    return jnp.transpose(out_nhwc, (0, 3, 1, 2))


def reference(x_nchw, w_c33, gamma, beta):
    C = x_nchw.shape[1]
    conv = jax.lax.conv_general_dilated(
        x_nchw, w_c33.reshape(C, 1, 3, 3),
        window_strides=(1, 1), padding=((1, 1), (1, 1)),
        dimension_numbers=("NCHW", "OIHW", "NCHW"),
        feature_group_count=C,
        precision=jax.lax.Precision.HIGHEST)
    mean = conv.mean(axis=(0, 2, 3), keepdims=True)
    var = conv.var(axis=(0, 2, 3), keepdims=True)    # biased, matches BN training mode
    return (conv - mean) / jnp.sqrt(var + 1e-3) * gamma.reshape(1, C, 1, 1) \
        + beta.reshape(1, C, 1, 1)


if __name__ == "__main__":
    # Exact module shape: Conv2d(768->768, 3x3, groups=768) over a (1, 768, 14, 14) input.
    N, C, H, W = 1, 768, 14, 14
    key = jax.random.PRNGKey(0)
    kx, kw, kg, kb = jax.random.split(key, 4)

    x = jax.random.normal(kx, (N, C, H, W), jnp.float32)
    w = jax.random.normal(kw, (C, 3, 3), jnp.float32) * 0.1          # Conv2d weight (C,1,3,3) squeezed
    gamma = 1.0 + 0.1 * jax.random.normal(kg, (C,), jnp.float32)     # BatchNorm weight
    beta = 0.1 * jax.random.normal(kb, (C,), jnp.float32)            # BatchNorm bias

    out = dwconv_bn(x, w, gamma, beta)
    jax.block_until_ready(out)

    ref = reference(x, w, gamma, beta)
    assert out.shape == (N, C, H, W)
    assert jnp.allclose(out, ref, atol=1e-4, rtol=1e-4), "mismatch vs reference"
    print("KERNEL_OK")
</pallas_src>

<mosaic_0001>
module attributes {stable_mosaic.version = 11 : i64} {
  func.func @dwconv_bn_kernel(%arg0: i32, %arg1: memref<1x14x14x768xf32, #tpu.memory_space<vmem>>, %arg2: memref<9x768xf32, #tpu.memory_space<vmem>>, %arg3: memref<1x768xf32, #tpu.memory_space<vmem>>, %arg4: memref<1x768xf32, #tpu.memory_space<vmem>>, %arg5: memref<1x14x14x768xf32, #tpu.memory_space<vmem>>, %arg6: memref<1x16x16x768xf32, #tpu.memory_space<vmem>>, %arg7: memref<1x14x16x768xf32, #tpu.memory_space<vmem>>) attributes {dimension_semantics = [#tpu.dimension_semantics<parallel>], iteration_bounds = array<i64: 1>, scalar_prefetch = 0 : i64, scratch_operands = 2 : i64, tpu.core_type = #tpu.core_type<tc>, window_params = [{transform_indices = @transform_0, window_bounds = array<i64: 1, 14, 14, 768>}, {transform_indices = @transform_1, window_bounds = array<i64: 9, 768>}, {transform_indices = @transform_2, window_bounds = array<i64: 1, 768>}, {transform_indices = @transform_3, window_bounds = array<i64: 1, 768>}, {transform_indices = @transform_4, window_bounds = array<i64: 1, 14, 14, 768>}]} {
    %cst = arith.constant 0.000000e+00 : f32
    %0 = vector.broadcast %cst : f32 to vector<1x1x16x768xf32>
    %c0 = arith.constant 0 : index
    %c0_0 = arith.constant 0 : index
    %c0_1 = arith.constant 0 : index
    %c0_2 = arith.constant 0 : index
    %1 = vector.load %arg6[%c0, %c0_0, %c0_1, %c0_2] : memref<1x16x16x768xf32, #tpu.memory_space<vmem>>, vector<1x1x16x768xf32>
    tpu.vector_store %arg6[%c0, %c0_0, %c0_1, %c0_2], %0 {strides = array<i32>} : memref<1x16x16x768xf32, #tpu.memory_space<vmem>>, vector<1x1x16x768xf32>,
    %c0_3 = arith.constant 0 : index
    %c15 = arith.constant 15 : index
    %c0_4 = arith.constant 0 : index
    %c0_5 = arith.constant 0 : index
    %2 = vector.load %arg6[%c0_3, %c15, %c0_4, %c0_5] : memref<1x16x16x768xf32, #tpu.memory_space<vmem>>, vector<1x1x16x768xf32>
    tpu.vector_store %arg6[%c0_3, %c15, %c0_4, %c0_5], %0 {strides = array<i32>} : memref<1x16x16x768xf32, #tpu.memory_space<vmem>>, vector<1x1x16x768xf32>,
    %cst_6 = arith.constant 0.000000e+00 : f32
    %3 = vector.broadcast %cst_6 : f32 to vector<1x14x2x768xf32>
    %c0_7 = arith.constant 0 : index
    %c1 = arith.constant 1 : index
    %c14 = arith.constant 14 : index
    %c0_8 = arith.constant 0 : index
    %4 = vector.load %arg6[%c0_7, %c1, %c14, %c0_8] : memref<1x16x16x768xf32, #tpu.memory_space<vmem>>, vector<1x14x2x768xf32>
    tpu.vector_store %arg6[%c0_7, %c1, %c14, %c0_8], %3 {strides = array<i32>} : memref<1x16x16x768xf32, #tpu.memory_space<vmem>>, vector<1x14x2x768xf32>,
    %c0_9 = arith.constant 0 : index
    %c0_10 = arith.constant 0 : index
    %c0_11 = arith.constant 0 : index
    %c0_12 = arith.constant 0 : index
    %5 = vector.load %arg1[%c0_9, %c0_10, %c0_11, %c0_12] : memref<1x14x14x768xf32, #tpu.memory_space<vmem>>, vector<1x14x14x768xf32>
    %c0_13 = arith.constant 0 : index
    %c1_14 = arith.constant 1 : index
    %c0_15 = arith.constant 0 : index
    %c0_16 = arith.constant 0 : index
    %6 = vector.load %arg6[%c0_13, %c1_14, %c0_15, %c0_16] : memref<1x16x16x768xf32, #tpu.memory_space<vmem>>, vector<1x14x14x768xf32>
    tpu.vector_store %arg6[%c0_13, %c1_14, %c0_15, %c0_16], %5 {strides = array<i32>} : memref<1x16x16x768xf32, #tpu.memory_space<vmem>>, vector<1x14x14x768xf32>,
    %c0_17 = arith.constant 0 : index
    %c0_18 = arith.constant 0 : index
    %7 = vector.load %arg2[%c0_17, %c0_18] : memref<9x768xf32, #tpu.memory_space<vmem>>, vector<9x768xf32>
    %8 = vector.extract_strided_slice %7 {offsets = [0, 0], sizes = [1, 768], strides = [1, 1]} : vector<9x768xf32> to vector<1x768xf32>
    %9 = vector.shape_cast %8 : vector<1x768xf32> to vector<768xf32>
    %10 = vector.shape_cast %9 : vector<768xf32> to vector<1x1x768xf32>
    %11 = vector.extract_strided_slice %7 {offsets = [1, 0], sizes = [1, 768], strides = [1, 1]} : vector<9x768xf32> to vector<1x768xf32>
    %12 = vector.shape_cast %11 : vector<1x768xf32> to vector<768xf32>
    %13 = vector.shape_cast %12 : vector<768xf32> to vector<1x1x768xf32>
    %14 = vector.extract_strided_slice %7 {offsets = [2, 0], sizes = [1, 768], strides = [1, 1]} : vector<9x768xf32> to vector<1x768xf32>
    %15 = vector.shape_cast %14 : vector<1x768xf32> to vector<768xf32>
    %16 = vector.shape_cast %15 : vector<768xf32> to vector<1x1x768xf32>
    %17 = vector.extract_strided_slice %7 {offsets = [3, 0], sizes = [1, 768], strides = [1, 1]} : vector<9x768xf32> to vector<1x768xf32>
    %18 = vector.shape_cast %17 : vector<1x768xf32> to vector<768xf32>
    %19 = vector.shape_cast %18 : vector<768xf32> to vector<1x1x768xf32>
    %20 = vector.extract_strided_slice %7 {offsets = [4, 0], sizes = [1, 768], strides = [1, 1]} : vector<9x768xf32> to vector<1x768xf32>
    %21 = vector.shape_cast %20 : vector<1x768xf32> to vector<768xf32>
    %22 = vector.shape_cast %21 : vector<768xf32> to vector<1x1x768xf32>
    %23 = vector.extract_strided_slice %7 {offsets = [5, 0], sizes = [1, 768], strides = [1, 1]} : vector<9x768xf32> to vector<1x768xf32>
    %24 = vector.shape_cast %23 : vector<1x768xf32> to vector<768xf32>
    %25 = vector.shape_cast %24 : vector<768xf32> to vector<1x1x768xf32>
    %26 = vector.extract_strided_slice %7 {offsets = [6, 0], sizes = [1, 768], strides = [1, 1]} : vector<9x768xf32> to vector<1x768xf32>
    %27 = vector.shape_cast %26 : vector<1x768xf32> to vector<768xf32>
    %28 = vector.shape_cast %27 : vector<768xf32> to vector<1x1x768xf32>
    %29 = vector.extract_strided_slice %7 {offsets = [7, 0], sizes = [1, 768], strides = [1, 1]} : vector<9x768xf32> to vector<1x768xf32>
    %30 = vector.shape_cast %29 : vector<1x768xf32> to vector<768xf32>
    %31 = vector.shape_cast %30 : vector<768xf32> to vector<1x1x768xf32>
    %32 = vector.extract_strided_slice %7 {offsets = [8, 0], sizes = [1, 768], strides = [1, 1]} : vector<9x768xf32> to vector<1x768xf32>
    %33 = vector.shape_cast %32 : vector<1x768xf32> to vector<768xf32>
    %34 = vector.shape_cast %33 : vector<768xf32> to vector<1x1x768xf32>
    %35 = tpu.iota {dimensions = array<i32: 1>} : vector<1x16x768xi32>
    %c14_i32 = arith.constant 14 : i32
    %36 = vector.broadcast %c14_i32 : i32 to vector<1x16x768xi32>
    %37 = arith.cmpi slt, %35, %36 : vector<1x16x768xi32>
    %38 = arith.extui %37 : vector<1x16x768xi1> to vector<1x16x768xi32>
    %39 = arith.sitofp %38 : vector<1x16x768xi32> to vector<1x16x768xf32>
    %cst_19 = arith.constant 0.000000e+00 : f32
    %40 = vector.broadcast %cst_19 : f32 to vector<1x768xf32>
    %cst_20 = arith.constant 0.000000e+00 : f32
    %41 = vector.broadcast %cst_20 : f32 to vector<1x768xf32>
    %c0_i32 = arith.constant 0 : i32
    %c0_i32_21 = arith.constant 0 : i32
    %42 = arith.addi %c0_i32, %c0_i32_21 : i32
    %c0_22 = arith.constant 0 : index
    %43 = arith.index_cast %42 : i32 to index
    %c0_23 = arith.constant 0 : index
    %c0_24 = arith.constant 0 : index
    %44 = vector.load %arg6[%c0_22, %43, %c0_23, %c0_24] : memref<1x16x16x768xf32, #tpu.memory_space<vmem>>, vector<1x1x16x768xf32>
    %45 = vector.shape_cast %44 : vector<1x1x16x768xf32> to vector<1x16x768xf32>
    %c1_i32 = arith.constant 1 : i32
    %46 = tpu.dynamic_rotate %45 by %c1_i32 dim 1 : vector<1x16x768xf32>, i32 -> vector<1x16x768xf32>
    %47 = vector.broadcast %10 : vector<1x1x768xf32> to vector<1x16x768xf32>
    %48 = arith.mulf %46, %47 : vector<1x16x768xf32>
    %49 = vector.broadcast %13 : vector<1x1x768xf32> to vector<1x16x768xf32>
    %50 = arith.mulf %45, %49 : vector<1x16x768xf32>
    %51 = arith.addf %48, %50 : vector<1x16x768xf32>
    %c15_i32 = arith.constant 15 : i32
    %52 = tpu.dynamic_rotate %45 by %c15_i32 dim 1 : vector<1x16x768xf32>, i32 -> vector<1x16x768xf32>
    %53 = vector.broadcast %16 : vector<1x1x768xf32> to vector<1x16x768xf32>
    %54 = arith.mulf %52, %53 : vector<1x16x768xf32>
    %55 = arith.addf %51, %54 : vector<1x16x768xf32>
    %c1_i32_25 = arith.constant 1 : i32
    %56 = arith.addi %c0_i32, %c1_i32_25 : i32
    %c0_26 = arith.constant 0 : index
    %57 = arith.index_cast %56 : i32 to index
    %c0_27 = arith.constant 0 : index
    %c0_28 = arith.constant 0 : index
    %58 = vector.load %arg6[%c0_26, %57, %c0_27, %c0_28] : memref<1x16x16x768xf32, #tpu.memory_space<vmem>>, vector<1x1x16x768xf32>
    %59 = vector.shape_cast %58 : vector<1x1x16x768xf32> to vector<1x16x768xf32>
    %c1_i32_29 = arith.constant 1 : i32
    %60 = tpu.dynamic_rotate %59 by %c1_i32_29 dim 1 : vector<1x16x768xf32>, i32 -> vector<1x16x768xf32>
    %61 = vector.broadcast %19 : vector<1x1x768xf32> to vector<1x16x768xf32>
    %62 = arith.mulf %60, %61 : vector<1x16x768xf32>
    %63 = vector.broadcast %22 : vector<1x1x768xf32> to vector<1x16x768xf32>
    %64 = arith.mulf %59, %63 : vector<1x16x768xf32>
    %65 = arith.addf %62, %64 : vector<1x16x768xf32>
    %c15_i32_30 = arith.constant 15 : i32
    %66 = tpu.dynamic_rotate %59 by %c15_i32_30 dim 1 : vector<1x16x768xf32>, i32 -> vector<1x16x768xf32>
    %67 = vector.broadcast %25 : vector<1x1x768xf32> to vector<1x16x768xf32>
    %68 = arith.mulf %66, %67 : vector<1x16x768xf32>
    %69 = arith.addf %65, %68 : vector<1x16x768xf32>
    %70 = arith.addf %55, %69 : vector<1x16x768xf32>
    %c2_i32 = arith.constant 2 : i32
    %71 = arith.addi %c0_i32, %c2_i32 : i32
    %c0_31 = arith.constant 0 : index
    %72 = arith.index_cast %71 : i32 to index
    %c0_32 = arith.constant 0 : index
    %c0_33 = arith.constant 0 : index
    %73 = vector.load %arg6[%c0_31, %72, %c0_32, %c0_33] : memref<1x16x16x768xf32, #tpu.memory_space<vmem>>, vector<1x1x16x768xf32>
    %74 = vector.shape_cast %73 : vector<1x1x16x768xf32> to vector<1x16x768xf32>
    %c1_i32_34 = arith.constant 1 : i32
    %75 = tpu.dynamic_rotate %74 by %c1_i32_34 dim 1 : vector<1x16x768xf32>, i32 -> vector<1x16x768xf32>
    %76 = vector.broadcast %28 : vector<1x1x768xf32> to vector<1x16x768xf32>
    %77 = arith.mulf %75, %76 : vector<1x16x768xf32>
    %78 = vector.broadcast %31 : vector<1x1x768xf32> to vector<1x16x768xf32>
    %79 = arith.mulf %74, %78 : vector<1x16x768xf32>
    %80 = arith.addf %77, %79 : vector<1x16x768xf32>
    %c15_i32_35 = arith.constant 15 : i32
    %81 = tpu.dynamic_rotate %74 by %c15_i32_35 dim 1 : vector<1x16x768xf32>, i32 -> vector<1x16x768xf32>
    %82 = vector.broadcast %34 : vector<1x1x768xf32> to vector<1x16x768xf32>
    %83 = arith.mulf %81, %82 : vector<1x16x768xf32>
    %84 = arith.addf %80, %83 : vector<1x16x768xf32>
    %85 = arith.addf %70, %84 : vector<1x16x768xf32>
    %86 = vector.shape_cast %85 : vector<1x16x768xf32> to vector<1x1x16x768xf32>
    %c0_36 = arith.constant 0 : index
    %87 = arith.index_cast %c0_i32 : i32 to index
    %c0_37 = arith.constant 0 : index
    %c0_38 = arith.constant 0 : index
    %88 = vector.load %arg7[%c0_36, %87, %c0_37, %c0_38] : memref<1x14x16x768xf32, #tpu.memory_space<vmem>>, vector<1x1x16x768xf32>
    tpu.vector_store %arg7[%c0_36, %87, %c0_37, %c0_38], %86 {strides = array<i32>} : memref<1x14x16x768xf32, #tpu.memory_space<vmem>>, vector<1x1x16x768xf32>,
    %89 = arith.mulf %85, %39 : vector<1x16x768xf32>
    %cst_39 = arith.constant dense<0.000000e+00> : vector<1x768xf32>
    %90 = vector.multi_reduction <add>, %89, %cst_39 [1] : vector<1x16x768xf32> to vector<1x768xf32>
    %91 = arith.addf %40, %90 : vector<1x768xf32>
    %92 = arith.mulf %89, %85 : vector<1x16x768xf32>
    %cst_40 = arith.constant dense<0.000000e+00> : vector<1x768xf32>
    %93 = vector.multi_reduction <add>, %92, %cst_40 [1] : vector<1x16x768xf32> to vector<1x768xf32>
    %94 = arith.addf %41, %93 : vector<1x768xf32>
    %c1_i32_41 = arith.constant 1 : i32
    %c0_i32_42 = arith.constant 0 : i32
    %95 = arith.addi %c1_i32_41, %c0_i32_42 : i32
    %c0_43 = arith.constant 0 : index
    %96 = arith.index_cast %95 : i32 to index
    %c0_44 = arith.constant 0 : index
    %c0_45 = arith.constant 0 : index
    %97 = vector.load %arg6[%c0_43, %96, %c0_44, %c0_45] : memref<1x16x16x768xf32, #tpu.memory_space<vmem>>, vector<1x1x16x768xf32>
    %98 = vector.shape_cast %97 : vector<1x1x16x768xf32> to vector<1x16x768xf32>
    %c1_i32_46 = arith.constant 1 : i32
    %99 = tpu.dynamic_rotate %98 by %c1_i32_46 dim 1 : vector<1x16x768xf32>, i32 -> vector<1x16x768xf32>
    %100 = vector.broadcast %10 : vector<1x1x768xf32> to vector<1x16x768xf32>
    %101 = arith.mulf %99, %100 : vector<1x16x768xf32>
    %102 = vector.broadcast %13 : vector<1x1x768xf32> to vector<1x16x768xf32>
    %103 = arith.mulf %98, %102 : vector<1x16x768xf32>
    %104 = arith.addf %101, %103 : vector<1x16x768xf32>
    %c15_i32_47 = arith.constant 15 : i32
    %105 = tpu.dynamic_rotate %98 by %c15_i32_47 dim 1 : vector<1x16x768xf32>, i32 -> vector<1x16x768xf32>
    %106 = vector.broadcast %16 : vector<1x1x768xf32> to vector<1x16x768xf32>
    %107 = arith.mulf %105, %106 : vector<1x16x768xf32>
    %108 = arith.addf %104, %107 : vector<1x16x768xf32>
    %c1_i32_48 = arith.constant 1 : i32
    %109 = arith.addi %c1_i32_41, %c1_i32_48 : i32
    %c0_49 = arith.constant 0 : index
    %110 = arith.index_cast %109 : i32 to index
    %c0_50 = arith.constant 0 : index
    %c0_51 = arith.constant 0 : index
    %111 = vector.load %arg6[%c0_49, %110, %c0_50, %c0_51] : memref<1x16x16x768xf32, #tpu.memory_space<vmem>>, vector<1x1x16x768xf32>
    %112 = vector.shape_cast %111 : vector<1x1x16x768xf32> to vector<1x16x768xf32>
    %c1_i32_52 = arith.constant 1 : i32
    %113 = tpu.dynamic_rotate %112 by %c1_i32_52 dim 1 : vector<1x16x768xf32>, i32 -> vector<1x16x768xf32>
    %114 = vector.broadcast %19 : vector<1x1x768xf32> to vector<1x16x768xf32>
    %115 = arith.mulf %113, %114 : vector<1x16x768xf32>
    %116 = vector.broadcast %22 : vector<1x1x768xf32> to vector<1x16x768xf32>
    %117 = arith.mulf %112, %116 : vector<1x16x768xf32>
    %118 = arith.addf %115, %117 : vector<1x16x768xf32>
    %c15_i32_53 = arith.constant 15 : i32
    %119 = tpu.dynamic_rotate %112 by %c15_i32_53 dim 1 : vector<1x16x768xf32>, i32 -> vector<1x16x768xf32>
    %120 = vector.broadcast %25 : vector<1x1x768xf32> to vector<1x16x768xf32>
    %121 = arith.mulf %119, %120 : vector<1x16x768xf32>
    %122 = arith.addf %118, %121 : vector<1x16x768xf32>
    %123 = arith.addf %108, %122 : vector<1x16x768xf32>
    %c2_i32_54 = arith.constant 2 : i32
    %124 = arith.addi %c1_i32_41, %c2_i32_54 : i32
    %c0_55 = arith.constant 0 : index
    %125 = arith.index_cast %124 : i32 to index
    %c0_56 = arith.constant 0 : index
    %c0_57 = arith.constant 0 : index
    %126 = vector.load %arg6[%c0_55, %125, %c0_56, %c0_57] : memref<1x16x16x768xf32, #tpu.memory_space<vmem>>, vector<1x1x16x768xf32>
    %127 = vector.shape_cast %126 : vector<1x1x16x768xf32> to vector<1x16x768xf32>
    %c1_i32_58 = arith.constant 1 : i32
    %128 = tpu.dynamic_rotate %127 by %c1_i32_58 dim 1 : vector<1x16x768xf32>, i32 -> vector<1x16x768xf32>
    %129 = vector.broadcast %28 : vector<1x1x768xf32> to vector<1x16x768xf32>
    %130 = arith.mulf %128, %129 : vector<1x16x768xf32>
    %131 = vector.broadcast %31 : vector<1x1x768xf32> to vector<1x16x768xf32>
    %132 = arith.mulf %127, %131 : vector<1x16x768xf32>
    %133 = arith.addf %130, %132 : vector<1x16x768xf32>
    %c15_i32_59 = arith.constant 15 : i32
    %134 = tpu.dynamic_rotate %127 by %c15_i32_59 dim 1 : vector<1x16x768xf32>, i32 -> vector<1x16x768xf32>
    %135 = vector.broadcast %34 : vector<1x1x768xf32> to vector<1x16x768xf32>
    %136 = arith.mulf %134, %135 : vector<1x16x768xf32>
    %137 = arith.addf %133, %136 : vector<1x16x768xf32>
    %138 = arith.addf %123, %137 : vector<1x16x768xf32>
    %139 = vector.shape_cast %138 : vector<1x16x768xf32> to vector<1x1x16x768xf32>
    %c0_60 = arith.constant 0 : index
    %140 = arith.index_cast %c1_i32_41 : i32 to index
    %c0_61 = arith.constant 0 : index
    %c0_62 = arith.constant 0 : index
    %141 = vector.load %arg7[%c0_60, %140, %c0_61, %c0_62] : memref<1x14x16x768xf32, #tpu.memory_space<vmem>>, vector<1x1x16x768xf32>
    tpu.vector_store %arg7[%c0_60, %140, %c0_61, %c0_62], %139 {strides = array<i32>} : memref<1x14x16x768xf32, #tpu.memory_space<vmem>>, vector<1x1x16x768xf32>,
    %142 = arith.mulf %138, %39 : vector<1x16x768xf32>
    %cst_63 = arith.constant dense<0.000000e+00> : vector<1x768xf32>
    %143 = vector.multi_reduction <add>, %142, %cst_63 [1] : vector<1x16x768xf32> to vector<1x768xf32>
    %144 = arith.addf %91, %143 : vector<1x768xf32>
    %145 = arith.mulf %142, %138 : vector<1x16x768xf32>
    %cst_64 = arith.constant dense<0.000000e+00> : vector<1x768xf32>
    %146 = vector.multi_reduction <add>, %145, %cst_64 [1] : vector<1x16x768xf32> to vector<1x768xf32>
    %147 = arith.addf %94, %146 : vector<1x768xf32>
    %c2_i32_65 = arith.constant 2 : i32
    %c0_i32_66 = arith.constant 0 : i32
    %148 = arith.addi %c2_i32_65, %c0_i32_66 : i32
    %c0_67 = arith.constant 0 : index
    %149 = arith.index_cast %148 : i32 to index
    %c0_68 = arith.constant 0 : index
    %c0_69 = arith.constant 0 : index
    %150 = vector.load %arg6[%c0_67, %149, %c0_68, %c0_69] : memref<1x16x16x768xf32, #tpu.memory_space<vmem>>, vector<1x1x16x768xf32>
    %151 = vector.shape_cast %150 : vector<1x1x16x768xf32> to vector<1x16x768xf32>
    %c1_i32_70 = arith.constant 1 : i32
    %152 = tpu.dynamic_rotate %151 by %c1_i32_70 dim 1 : vector<1x16x768xf32>, i32 -> vector<1x16x768xf32>
    %153 = vector.broadcast %10 : vector<1x1x768xf32> to vector<1x16x768xf32>
    %154 = arith.mulf %152, %153 : vector<1x16x768xf32>
    %155 = vector.broadcast %13 : vector<1x1x768xf32> to vector<1x16x768xf32>
    %156 = arith.mulf %151, %155 : vector<1x16x768xf32>
    %157 = arith.addf %154, %156 : vector<1x16x768xf32>
    %c15_i32_71 = arith.constant 15 : i32
    %158 = tpu.dynamic_rotate %151 by %c15_i32_71 dim 1 : vector<1x16x768xf32>, i32 -> vector<1x16x768xf32>
    %159 = vector.broadcast %16 : vector<1x1x768xf32> to vector<1x16x768xf32>
    %160 = arith.mulf %158, %159 : vector<1x16x768xf32>
    %161 = arith.addf %157, %160 : vector<1x16x768xf32>
    %c1_i32_72 = arith.constant 1 : i32
    %162 = arith.addi %c2_i32_65, %c1_i32_72 : i32
    %c0_73 = arith.constant 0 : index
    %163 = arith.index_cast %162 : i32 to index
    %c0_74 = arith.constant 0 : index
    %c0_75 = arith.constant 0 : index
    %164 = vector.load %arg6[%c0_73, %163, %c0_74, %c0_75] : memref<1x16x16x768xf32, #tpu.memory_space<vmem>>, vector<1x1x16x768xf32>
    %165 = vector.shape_cast %164 : vector<1x1x16x768xf32> to vector<1x16x768xf32>
    %c1_i32_76 = arith.constant 1 : i32
    %166 = tpu.dynamic_rotate %165 by %c1_i32_76 dim 1 : vector<1x16x768xf32>, i32 -> vector<1x16x768xf32>
    %167 = vector.broadcast %19 : vector<1x1x768xf32> to vector<1x16x768xf32>
    %168 = arith.mulf %166, %167 : vector<1x16x768xf32>
    %169 = vector.broadcast %22 : vector<1x1x768xf32> to vector<1x16x768xf32>
    %170 = arith.mulf %165, %169 : vector<1x16x768xf32>
    %171 = arith.addf %168, %170 : vector<1x16x768xf32>
    %c15_i32_77 = arith.constant 15 : i32
    %172 = tpu.dynamic_rotate %165 by %c15_i32_77 dim 1 : vector<1x16x768xf32>, i32 -> vector<1x16x768xf32>
    %173 = vector.broadcast %25 : vector<1x1x768xf32> to vector<1x16x768xf32>
    %174 = arith.mulf %172, %173 : vector<1x16x768xf32>
    %175 = arith.addf %171, %174 : vector<1x16x768xf32>
    %176 = arith.addf %161, %175 : vector<1x16x768xf32>
    %c2_i32_78 = arith.constant 2 : i32
    %177 = arith.addi %c2_i32_65, %c2_i32_78 : i32
    %c0_79 = arith.constant 0 : index
    %178 = arith.index_cast %177 : i32 to index
    %c0_80 = arith.constant 0 : index
    %c0_81 = arith.constant 0 : index
    %179 = vector.load %arg6[%c0_79, %178, %c0_80, %c0_81] : memref<1x16x16x768xf32, #tpu.memory_space<vmem>>, vector<1x1x16x768xf32>
    %180 = vector.shape_cast %179 : vector<1x1x16x768xf32> to vector<1x16x768xf32>
    %c1_i32_82 = arith.constant 1 : i32
    %181 = tpu.dynamic_rotate %180 by %c1_i32_82 dim 1 : vector<1x16x768xf32>, i32 -> vector<1x16x768xf32>
    %182 = vector.broadcast %28 : vector<1x1x768xf32> to vector<1x16x768xf32>
    %183 = arith.mulf %181, %182 : vector<1x16x768xf32>
    %184 = vector.broadcast %31 : vector<1x1x768xf32> to vector<1x16x768xf32>
    %185 = arith.mulf %180, %184 : vector<1x16x768xf32>
    %186 = arith.addf %183, %185 : vector<1x16x768xf32>
    %c15_i32_83 = arith.constant 15 : i32
    %187 = tpu.dynamic_rotate %180 by %c15_i32_83 dim 1 : vector<1x16x768xf32>, i32 -> vector<1x16x768xf32>
    %188 = vector.broadcast %34 : vector<1x1x768xf32> to vector<1x16x768xf32>
    %189 = arith.mulf %187, %188 : vector<1x16x768xf32>
    %190 = arith.addf %186, %189 : vector<1x16x768xf32>
    %191 = arith.addf %176, %190 : vector<1x16x768xf32>
    %192 = vector.shape_cast %191 : vector<1x16x768xf32> to vector<1x1x16x768xf32>
    %c0_84 = arith.constant 0 : index
    %193 = arith.index_cast %c2_i32_65 : i32 to index
    %c0_85 = arith.constant 0 : index
    %c0_86 = arith.constant 0 : index
    %194 = vector.load %arg7[%c0_84, %193, %c0_85, %c0_86] : memref<1x14x16x768xf32, #tpu.memory_space<vmem>>, vector<1x1x16x768xf32>
    tpu.vector_store %arg7[%c0_84, %193, %c0_85, %c0_86], %192 {strides = array<i32>} : memref<1x14x16x768xf32, #tpu.memory_space<vmem>>, vector<1x1x16x768xf32>,
    %195 = arith.mulf %191, %39 : vector<1x16x768xf32>
    %cst_87 = arith.constant dense<0.000000e+00> : vector<1x768xf32>
    %196 = vector.multi_reduction <add>, %195, %cst_87 [1] : vector<1x16x768xf32> to vector<1x768xf32>
    %197 = arith.addf %144, %196 : vector<1x768xf32>
    %198 = arith.mulf %195, %191 : vector<1x16x768xf32>
    %cst_88 = arith.constant dense<0.000000e+00> : vector<1x768xf32>
    %199 = vector.multi_reduction <add>, %198, %cst_88 [1] : vector<1x16x768xf32> to vector<1x768xf32>
    %200 = arith.addf %147, %199 : vector<1x768xf32>
    %c3_i32 = arith.constant 3 : i32
    %c0_i32_89 = arith.constant 0 : i32
    %201 = arith.addi %c3_i32, %c0_i32_89 : i32
    %c0_90 = arith.constant 0 : index
    %202 = arith.index_cast %201 : i32 to index
    %c0_91 = arith.constant 0 : index
    %c0_92 = arith.constant 0 : index
    %203 = vector.load %arg6[%c0_90, %202, %c0_91, %c0_92] : memref<1x16x16x768xf32, #tpu.memory_space<vmem>>, vector<1x1x16x768xf32>
    %204 = vector.shape_cast %203 : vector<1x1x16x768xf32> to vector<1x16x768xf32>
    %c1_i32_93 = arith.constant 1 : i32
    %205 = tpu.dynamic_rotate %204 by %c1_i32_93 dim 1 : vector<1x16x768xf32>, i32 -> vector<1x16x768xf32>
    %206 = vector.broadcast %10 : vector<1x1x768xf32> to vector<1x16x768xf32>
    %207 = arith.mulf %205, %206 : vector<1x16x768xf32>
    %208 = vector.broadcast %13 : vector<1x1x768xf32> to vector<1x16x768xf32>
    %209 = arith.mulf %204, %208 : vector<1x16x768xf32>
    %210 = arith.addf %207, %209 : vector<1x16x768xf32>
    %c15_i32_94 = arith.constant 15 : i32
    %211 = tpu.dynamic_rotate %204 by %c15_i32_94 dim 1 : vector<1x16x768xf32>, i32 -> vector<1x16x768xf32>
    %212 = vector.broadcast %16 : vector<1x1x768xf32> to vector<1x16x768xf32>
    %213 = arith.mulf %211, %212 : vector<1x16x768xf32>
    %214 = arith.addf %210, %213 : vector<1x16x768xf32>
    %c1_i32_95 = arith.constant 1 : i32
    %215 = arith.addi %c3_i32, %c1_i32_95 : i32
    %c0_96 = arith.constant 0 : index
    %216 = arith.index_cast %215 : i32 to index
    %c0_97 = arith.constant 0 : index
    %c0_98 = arith.constant 0 : index
    %217 = vector.load %arg6[%c0_96, %216, %c0_97, %c0_98] : memref<1x16x16x768xf32, #tpu.memory_space<vmem>>, vector<1x1x16x768xf32>
    %218 = vector.shape_cast %217 : vector<1x1x16x768xf32> to vector<1x16x768xf32>
    %c1_i32_99 = arith.constant 1 : i32
    %219 = tpu.dynamic_rotate %218 by %c1_i32_99 dim 1 : vector<1x16x768xf32>, i32 -> vector<1x16x768xf32>
    %220 = vector.broadcast %19 : vector<1x1x768xf32> to vector<1x16x768xf32>
    %221 = arith.mulf %219, %220 : vector<1x16x768xf32>
    %222 = vector.broadcast %22 : vector<1x1x768xf32> to vector<1x16x768xf32>
    %223 = arith.mulf %218, %222 : vector<1x16x768xf32>
    %224 = arith.addf %221, %223 : vector<1x16x768xf32>
    %c15_i32_100 = arith.constant 15 : i32
    %225 = tpu.dynamic_rotate %218 by %c15_i32_100 dim 1 : vector<1x16x768xf32>, i32 -> vector<1x16x768xf32>
    %226 = vector.broadcast %25 : vector<1x1x768xf32> to vector<1x16x768xf32>
    %227 = arith.mulf %225, %226 : vector<1x16x768xf32>
    %228 = arith.addf %224, %227 : vector<1x16x768xf32>
    %229 = arith.addf %214, %228 : vector<1x16x768xf32>
    %c2_i32_101 = arith.constant 2 : i32
    %230 = arith.addi %c3_i32, %c2_i32_101 : i32
    %c0_102 = arith.constant 0 : index
    %231 = arith.index_cast %230 : i32 to index
    %c0_103 = arith.constant 0 : index
    %c0_104 = arith.constant 0 : index
    %232 = vector.load %arg6[%c0_102, %231, %c0_103, %c0_104] : memref<1x16x16x768xf32, #tpu.memory_space<vmem>>, vector<1x1x16x768xf32>
    %233 = vector.shape_cast %232 : vector<1x1x16x768xf32> to vector<1x16x768xf32>
    %c1_i32_105 = arith.constant 1 : i32
    %234 = tpu.dynamic_rotate %233 by %c1_i32_105 dim 1 : vector<1x16x768xf32>, i32 -> vector<1x16x768xf32>
    %235 = vector.broadcast %28 : vector<1x1x768xf32> to vector<1x16x768xf32>
    %236 = arith.mulf %234, %235 : vector<1x16x768xf32>
    %237 = vector.broadcast %31 : vector<1x1x768xf32> to vector<1x16x768xf32>
    %238 = arith.mulf %233, %237 : vector<1x16x768xf32>
    %239 = arith.addf %236, %238 : vector<1x16x768xf32>
    %c15_i32_106 = arith.constant 15 : i32
    %240 = tpu.dynamic_rotate %233 by %c15_i32_106 dim 1 : vector<1x16x768xf32>, i32 -> vector<1x16x768xf32>
    %241 = vector.broadcast %34 : vector<1x1x768xf32> to vector<1x16x768xf32>
    %242 = arith.mulf %240, %241 : vector<1x16x768xf32>
    %243 = arith.addf %239, %242 : vector<1x16x768xf32>
    %244 = arith.addf %229, %243 : vector<1x16x768xf32>
    %245 = vector.shape_cast %244 : vector<1x16x768xf32> to vector<1x1x16x768xf32>
    %c0_107 = arith.constant 0 : index
    %246 = arith.index_cast %c3_i32 : i32 to index
    %c0_108 = arith.constant 0 : index
    %c0_109 = arith.constant 0 : index
    %247 = vector.load %arg7[%c0_107, %246, %c0_108, %c0_109] : memref<1x14x16x768xf32, #tpu.memory_space<vmem>>, vector<1x1x16x768xf32>
    tpu.vector_store %arg7[%c0_107, %246, %c0_108, %c0_109], %245 {strides = array<i32>} : memref<1x14x16x768xf32, #tpu.memory_space<vmem>>, vector<1x1x16x768xf32>,
    %248 = arith.mulf %244, %39 : vector<1x16x768xf32>
    %cst_110 = arith.constant dense<0.000000e+00> : vector<1x768xf32>
    %249 = vector.multi_reduction <add>, %248, %cst_110 [1] : vector<1x16x768xf32> to vector<1x768xf32>
    %250 = arith.addf %197, %249 : vector<1x768xf32>
    %251 = arith.mulf %248, %244 : vector<1x16x768xf32>
    %cst_111 = arith.constant dense<0.000000e+00> : vector<1x768xf32>
    %252 = vector.multi_reduction <add>, %251, %cst_111 [1] : vector<1x16x768xf32> to vector<1x768xf32>
    %253 = arith.addf %200, %252 : vector<1x768xf32>
    %c4_i32 = arith.constant 4 : i32
    %c0_i32_112 = arith.constant 0 : i32
    %254 = arith.addi %c4_i32, %c0_i32_112 : i32
    %c0_113 = arith.constant 0 : index
    %255 = arith.index_cast %254 : i32 to index
    %c0_114 = arith.constant 0 : index
    %c0_115 = arith.constant 0 : index
    %256 = vector.load %arg6[%c0_113, %255, %c0_114, %c0_115] : memref<1x16x16x768xf32, #tpu.memory_space<vmem>>, vector<1x1x16x768xf32>
    %257 = vector.shape_cast %256 : vector<1x1x16x768xf32> to vector<1x16x768xf32>
    %c1_i32_116 = arith.constant 1 : i32
    %258 = tpu.dynamic_rotate %257 by %c1_i32_116 dim 1 : vector<1x16x768xf32>, i32 -> vector<1x16x768xf32>
    %259 = vector.broadcast %10 : vector<1x1x768xf32> to vector<1x16x768xf32>
    %260 = arith.mulf %258, %259 : vector<1x16x768xf32>
    %261 = vector.broadcast %13 : vector<1x1x768xf32> to vector<1x16x768xf32>
    %262 = arith.mulf %257, %261 : vector<1x16x768xf32>
    %263 = arith.addf %260, %262 : vector<1x16x768xf32>
    %c15_i32_117 = arith.constant 15 : i32
    %264 = tpu.dynamic_rotate %257 by %c15_i32_117 dim 1 : vector<1x16x768xf32>, i32 -> vector<1x16x768xf32>
    %265 = vector.broadcast %16 : vector<1x1x768xf32> to vector<1x16x768xf32>
    %266 = arith.mulf %264, %265 : vector<1x16x768xf32>
    %267 = arith.addf %263, %266 : vector<1x16x768xf32>
    %c1_i32_118 = arith.constant 1 : i32
    %268 = arith.addi %c4_i32, %c1_i32_118 : i32
    %c0_119 = arith.constant 0 : index
    %269 = arith.index_cast %268 : i32 to index
    %c0_120 = arith.constant 0 : index
    %c0_121 = arith.constant 0 : index
    %270 = vector.load %arg6[%c0_119, %269, %c0_120, %c0_121] : memref<1x16x16x768xf32, #tpu.memory_space<vmem>>, vector<1x1x16x768xf32>
    %271 = vector.shape_cast %270 : vector<1x1x16x768xf32> to vector<1x16x768xf32>
    %c1_i32_122 = arith.constant 1 : i32
    %272 = tpu.dynamic_rotate %271 by %c1_i32_122 dim 1 : vector<1x16x768xf32>, i32 -> vector<1x16x768xf32>
    %273 = vector.broadcast %19 : vector<1x1x768xf32> to vector<1x16x768xf32>
    %274 = arith.mulf %272, %273 : vector<1x16x768xf32>
    %275 = vector.broadcast %22 : vector<1x1x768xf32> to vector<1x16x768xf32>
    %276 = arith.mulf %271, %275 : vector<1x16x768xf32>
    %277 = arith.addf %274, %276 : vector<1x16x768xf32>
    %c15_i32_123 = arith.constant 15 : i32
    %278 = tpu.dynamic_rotate %271 by %c15_i32_123 dim 1 : vector<1x16x768xf32>, i32 -> vector<1x16x768xf32>
    %279 = vector.broadcast %25 : vector<1x1x768xf32> to vector<1x16x768xf32>
    %280 = arith.mulf %278, %279 : vector<1x16x768xf32>
    %281 = arith.addf %277, %280 : vector<1x16x768xf32>
    %282 = arith.addf %267, %281 : vector<1x16x768xf32>
    %c2_i32_124 = arith.constant 2 : i32
    %283 = arith.addi %c4_i32, %c2_i32_124 : i32
    %c0_125 = arith.constant 0 : index
    %284 = arith.index_cast %283 : i32 to index
    %c0_126 = arith.constant 0 : index
    %c0_127 = arith.constant 0 : index
    %285 = vector.load %arg6[%c0_125, %284, %c0_126, %c0_127] : memref<1x16x16x768xf32, #tpu.memory_space<vmem>>, vector<1x1x16x768xf32>
    %286 = vector.shape_cast %285 : vector<1x1x16x768xf32> to vector<1x16x768xf32>
    %c1_i32_128 = arith.constant 1 : i32
    %287 = tpu.dynamic_rotate %286 by %c1_i32_128 dim 1 : vector<1x16x768xf32>, i32 -> vector<1x16x768xf32>
    %288 = vector.broadcast %28 : vector<1x1x768xf32> to vector<1x16x768xf32>
    %289 = arith.mulf %287, %288 : vector<1x16x768xf32>
    %290 = vector.broadcast %31 : vector<1x1x768xf32> to vector<1x16x768xf32>
    %291 = arith.mulf %286, %290 : vector<1x16x768xf32>
    %292 = arith.addf %289, %291 : vector<1x16x768xf32>
    %c15_i32_129 = arith.constant 15 : i32
    %293 = tpu.dynamic_rotate %286 by %c15_i32_129 dim 1 : vector<1x16x768xf32>, i32 -> vector<1x16x768xf32>
    %294 = vector.broadcast %34 : vector<1x1x768xf32> to vector<1x16x768xf32>
    %295 = arith.mulf %293, %294 : vector<1x16x768xf32>
    %296 = arith.addf %292, %295 : vector<1x16x768xf32>
    %297 = arith.addf %282, %296 : vector<1x16x768xf32>
    %298 = vector.shape_cast %297 : vector<1x16x768xf32> to vector<1x1x16x768xf32>
    %c0_130 = arith.constant 0 : index
    %299 = arith.index_cast %c4_i32 : i32 to index
    %c0_131 = arith.constant 0 : index
    %c0_132 = arith.constant 0 : index
    %300 = vector.load %arg7[%c0_130, %299, %c0_131, %c0_132] : memref<1x14x16x768xf32, #tpu.memory_space<vmem>>, vector<1x1x16x768xf32>
    tpu.vector_store %arg7[%c0_130, %299, %c0_131, %c0_132], %298 {strides = array<i32>} : memref<1x14x16x768xf32, #tpu.memory_space<vmem>>, vector<1x1x16x768xf32>,
    %301 = arith.mulf %297, %39 : vector<1x16x768xf32>
    %cst_133 = arith.constant dense<0.000000e+00> : vector<1x768xf32>
    %302 = vector.multi_reduction <add>, %301, %cst_133 [1] : vector<1x16x768xf32> to vector<1x768xf32>
    %303 = arith.addf %250, %302 : vector<1x768xf32>
    %304 = arith.mulf %301, %297 : vector<1x16x768xf32>
    %cst_134 = arith.constant dense<0.000000e+00> : vector<1x768xf32>
    %305 = vector.multi_reduction <add>, %304, %cst_134 [1] : vector<1x16x768xf32> to vector<1x768xf32>
    %306 = arith.addf %253, %305 : vector<1x768xf32>
    %c5_i32 = arith.constant 5 : i32
    %c0_i32_135 = arith.constant 0 : i32
    %307 = arith.addi %c5_i32, %c0_i32_135 : i32
    %c0_136 = arith.constant 0 : index
    %308 = arith.index_cast %307 : i32 to index
    %c0_137 = arith.constant 0 : index
    %c0_138 = arith.constant 0 : index
    %309 = vector.load %arg6[%c0_136, %308, %c0_137, %c0_138] : memref<1x16x16x768xf32, #tpu.memory_space<vmem>>, vector<1x1x16x768xf32>
    %310 = vector.shape_cast %309 : vector<1x1x16x768xf32> to vector<1x16x768xf32>
    %c1_i32_139 = arith.constant 1 : i32
    %311 = tpu.dynamic_rotate %310 by %c1_i32_139 dim 1 : vector<1x16x768xf32>, i32 -> vector<1x16x768xf32>
    %312 = vector.broadcast %10 : vector<1x1x768xf32> to vector<1x16x768xf32>
    %313 = arith.mulf %311, %312 : vector<1x16x768xf32>
    %314 = vector.broadcast %13 : vector<1x1x768xf32> to vector<1x16x768xf32>
    %315 = arith.mulf %310, %314 : vector<1x16x768xf32>
    %316 = arith.addf %313, %315 : vector<1x16x768xf32>
    %c15_i32_140 = arith.constant 15 : i32
    %317 = tpu.dynamic_rotate %310 by %c15_i32_140 dim 1 : vector<1x16x768xf32>, i32 -> vector<1x16x768xf32>
    %318 = vector.broadcast %16 : vector<1x1x768xf32> to vector<1x16x768xf32>
    %319 = arith.mulf %317, %318 : vector<1x16x768xf32>
    %320 = arith.addf %316, %319 : vector<1x16x768xf32>
    %c1_i32_141 = arith.constant 1 : i32
    %321 = arith.addi %c5_i32, %c1_i32_141 : i32
    %c0_142 = arith.constant 0 : index
    %322 = arith.index_cast %321 : i32 to index
    %c0_143 = arith.constant 0 : index
    %c0_144 = arith.constant 0 : index
    %323 = vector.load %arg6[%c0_142, %322, %c0_143, %c0_144] : memref<1x16x16x768xf32, #tpu.memory_space<vmem>>, vector<1x1x16x768xf32>
    %324 = vector.shape_cast %323 : vector<1x1x16x768xf32> to vector<1x16x768xf32>
    %c1_i32_145 = arith.constant 1 : i32
    %325 = tpu.dynamic_rotate %324 by %c1_i32_145 dim 1 : vector<1x16x768xf32>, i32 -> vector<1x16x768xf32>
    %326 = vector.broadcast %19 : vector<1x1x768xf32> to vector<1x16x768xf32>
    %327 = arith.mulf %325, %326 : vector<1x16x768xf32>
    %328 = vector.broadcast %22 : vector<1x1x768xf32> to vector<1x16x768xf32>
    %329 = arith.mulf %324, %328 : vector<1x16x768xf32>
    %330 = arith.addf %327, %329 : vector<1x16x768xf32>
    %c15_i32_146 = arith.constant 15 : i32
    %331 = tpu.dynamic_rotate %324 by %c15_i32_146 dim 1 : vector<1x16x768xf32>, i32 -> vector<1x16x768xf32>
    %332 = vector.broadcast %25 : vector<1x1x768xf32> to vector<1x16x768xf32>
    %333 = arith.mulf %331, %332 : vector<1x16x768xf32>
    %334 = arith.addf %330, %333 : vector<1x16x768xf32>
    %335 = arith.addf %320, %334 : vector<1x16x768xf32>
    %c2_i32_147 = arith.constant 2 : i32
    %336 = arith.addi %c5_i32, %c2_i32_147 : i32
    %c0_148 = arith.constant 0 : index
    %337 = arith.index_cast %336 : i32 to index
    %c0_149 = arith.constant 0 : index
    %c0_150 = arith.constant 0 : index
    %338 = vector.load %arg6[%c0_148, %337, %c0_149, %c0_150] : memref<1x16x16x768xf32, #tpu.memory_space<vmem>>, vector<1x1x16x768xf32>
    %339 = vector.shape_cast %338 : vector<1x1x16x768xf32> to vector<1x16x768xf32>
    %c1_i32_151 = arith.constant 1 : i32
    %340 = tpu.dynamic_rotate %339 by %c1_i32_151 dim 1 : vector<1x16x768xf32>, i32 -> vector<1x16x768xf32>
    %341 = vector.broadcast %28 : vector<1x1x768xf32> to vector<1x16x768xf32>
    %342 = arith.mulf %340, %341 : vector<1x16x768xf32>
    %343 = vector.broadcast %31 : vector<1x1x768xf32> to vector<1x16x768xf32>
    %344 = arith.mulf %339, %343 : vector<1x16x768xf32>
    %345 = arith.addf %342, %344 : vector<1x16x768xf32>
    %c15_i32_152 = arith.constant 15 : i32
    %346 = tpu.dynamic_rotate %339 by %c15_i32_152 dim 1 : vector<1x16x768xf32>, i32 -> vector<1x16x768xf32>
    %347 = vector.broadcast %34 : vector<1x1x768xf32> to vector<1x16x768xf32>
    %348 = arith.mulf %346, %347 : vector<1x16x768xf32>
    %349 = arith.addf %345, %348 : vector<1x16x768xf32>
    %350 = arith.addf %335, %349 : vector<1x16x768xf32>
    %351 = vector.shape_cast %350 : vector<1x16x768xf32> to vector<1x1x16x768xf32>
    %c0_153 = arith.constant 0 : index
    %352 = arith.index_cast %c5_i32 : i32 to index
    %c0_154 = arith.constant 0 : index
    %c0_155 = arith.constant 0 : index
    %353 = vector.load %arg7[%c0_153, %352, %c0_154, %c0_155] : memref<1x14x16x768xf32, #tpu.memory_space<vmem>>, vector<1x1x16x768xf32>
    tpu.vector_store %arg7[%c0_153, %352, %c0_154, %c0_155], %351 {strides = array<i32>} : memref<1x14x16x768xf32, #tpu.memory_space<vmem>>, vector<1x1x16x768xf32>,
    %354 = arith.mulf %350, %39 : vector<1x16x768xf32>
    %cst_156 = arith.constant dense<0.000000e+00> : vector<1x768xf32>
    %355 = vector.multi_reduction <add>, %354, %cst_156 [1] : vector<1x16x768xf32> to vector<1x768xf32>
    %356 = arith.addf %303, %355 : vector<1x768xf32>
    %357 = arith.mulf %354, %350 : vector<1x16x768xf32>
    %cst_157 = arith.constant dense<0.000000e+00> : vector<1x768xf32>
    %358 = vector.multi_reduction <add>, %357, %cst_157 [1] : vector<1x16x768xf32> to vector<1x768xf32>
    %359 = arith.addf %306, %358 : vector<1x768xf32>
    %c6_i32 = arith.constant 6 : i32
    %c0_i32_158 = arith.constant 0 : i32
    %360 = arith.addi %c6_i32, %c0_i32_158 : i32
    %c0_159 = arith.constant 0 : index
    %361 = arith.index_cast %360 : i32 to index
    %c0_160 = arith.constant 0 : index
    %c0_161 = arith.constant 0 : index
    %362 = vector.load %arg6[%c0_159, %361, %c0_160, %c0_161] : memref<1x16x16x768xf32, #tpu.memory_space<vmem>>, vector<1x1x16x768xf32>
    %363 = vector.shape_cast %362 : vector<1x1x16x768xf32> to vector<1x16x768xf32>
    %c1_i32_162 = arith.constant 1 : i32
    %364 = tpu.dynamic_rotate %363 by %c1_i32_162 dim 1 : vector<1x16x768xf32>, i32 -> vector<1x16x768xf32>
    %365 = vector.broadcast %10 : vector<1x1x768xf32> to vector<1x16x768xf32>
    %366 = arith.mulf %364, %365 : vector<1x16x768xf32>
    %367 = vector.broadcast %13 : vector<1x1x768xf32> to vector<1x16x768xf32>
    %368 = arith.mulf %363, %367 : vector<1x16x768xf32>
    %369 = arith.addf %366, %368 : vector<1x16x768xf32>
    %c15_i32_163 = arith.constant 15 : i32
    %370 = tpu.dynamic_rotate %363 by %c15_i32_163 dim 1 : vector<1x16x768xf32>, i32 -> vector<1x16x768xf32>
    %371 = vector.broadcast %16 : vector<1x1x768xf32> to vector<1x16x768xf32>
    %372 = arith.mulf %370, %371 : vector<1x16x768xf32>
    %373 = arith.addf %369, %372 : vector<1x16x768xf32>
    %c1_i32_164 = arith.constant 1 : i32
    %374 = arith.addi %c6_i32, %c1_i32_164 : i32
    %c0_165 = arith.constant 0 : index
    %375 = arith.index_cast %374 : i32 to index
    %c0_166 = arith.constant 0 : index
    %c0_167 = arith.constant 0 : index
    %376 = vector.load %arg6[%c0_165, %375, %c0_166, %c0_167] : memref<1x16x16x768xf32, #tpu.memory_space<vmem>>, vector<1x1x16x768xf32>
    %377 = vector.shape_cast %376 : vector<1x1x16x768xf32> to vector<1x16x768xf32>
    %c1_i32_168 = arith.constant 1 : i32
    %378 = tpu.dynamic_rotate %377 by %c1_i32_168 dim 1 : vector<1x16x768xf32>, i32 -> vector<1x16x768xf32>
    %379 = vector.broadcast %19 : vector<1x1x768xf32> to vector<1x16x768xf32>
    %380 = arith.mulf %378, %379 : vector<1x16x768xf32>
    %381 = vector.broadcast %22 : vector<1x1x768xf32> to vector<1x16x768xf32>
    %382 = arith.mulf %377, %381 : vector<1x16x768xf32>
    %383 = arith.addf %380, %382 : vector<1x16x768xf32>
    %c15_i32_169 = arith.constant 15 : i32
    %384 = tpu.dynamic_rotate %377 by %c15_i32_169 dim 1 : vector<1x16x768xf32>, i32 -> vector<1x16x768xf32>
    %385 = vector.broadcast %25 : vector<1x1x768xf32> to vector<1x16x768xf32>
    %386 = arith.mulf %384, %385 : vector<1x16x768xf32>
    %387 = arith.addf %383, %386 : vector<1x16x768xf32>
    %388 = arith.addf %373, %387 : vector<1x16x768xf32>
    %c2_i32_170 = arith.constant 2 : i32
    %389 = arith.addi %c6_i32, %c2_i32_170 : i32
    %c0_171 = arith.constant 0 : index
    %390 = arith.index_cast %389 : i32 to index
    %c0_172 = arith.constant 0 : index
    %c0_173 = arith.constant 0 : index
    %391 = vector.load %arg6[%c0_171, %390, %c0_172, %c0_173] : memref<1x16x16x768xf32, #tpu.memory_space<vmem>>, vector<1x1x16x768xf32>
    %392 = vector.shape_cast %391 : vector<1x1x16x768xf32> to vector<1x16x768xf32>
    %c1_i32_174 = arith.constant 1 : i32
    %393 = tpu.dynamic_rotate %392 by %c1_i32_174 dim 1 : vector<1x16x768xf32>, i32 -> vector<1x16x768xf32>
    %394 = vector.broadcast %28 : vector<1x1x768xf32> to vector<1x16x768xf32>
    %395 = arith.mulf %393, %394 : vector<1x16x768xf32>
    %396 = vector.broadcast %31 : vector<1x1x768xf32> to vector<1x16x768xf32>
    %397 = arith.mulf %392, %396 : vector<1x16x768xf32>
    %398 = arith.addf %395, %397 : vector<1x16x768xf32>
    %c15_i32_175 = arith.constant 15 : i32
    %399 = tpu.dynamic_rotate %392 by %c15_i32_175 dim 1 : vector<1x16x768xf32>, i32 -> vector<1x16x768xf32>
    %400 = vector.broadcast %34 : vector<1x1x768xf32> to vector<1x16x768xf32>
    %401 = arith.mulf %399, %400 : vector<1x16x768xf32>
    %402 = arith.addf %398, %401 : vector<1x16x768xf32>
    %403 = arith.addf %388, %402 : vector<1x16x768xf32>
    %404 = vector.shape_cast %403 : vector<1x16x768xf32> to vector<1x1x16x768xf32>
    %c0_176 = arith.constant 0 : index
    %405 = arith.index_cast %c6_i32 : i32 to index
    %c0_177 = arith.constant 0 : index
    %c0_178 = arith.constant 0 : index
    %406 = vector.load %arg7[%c0_176, %405, %c0_177, %c0_178] : memref<1x14x16x768xf32, #tpu.memory_space<vmem>>, vector<1x1x16x768xf32>
    tpu.vector_store %arg7[%c0_176, %405, %c0_177, %c0_178], %404 {strides = array<i32>} : memref<1x14x16x768xf32, #tpu.memory_space<vmem>>, vector<1x1x16x768xf32>,
    %407 = arith.mulf %403, %39 : vector<1x16x768xf32>
    %cst_179 = arith.constant dense<0.000000e+00> : vector<1x768xf32>
    %408 = vector.multi_reduction <add>, %407, %cst_179 [1] : vector<1x16x768xf32> to vector<1x768xf32>
    %409 = arith.addf %356, %408 : vector<1x768xf32>
    %410 = arith.mulf %407, %403 : vector<1x16x768xf32>
    %cst_180 = arith.constant dense<0.000000e+00> : vector<1x768xf32>
    %411 = vector.multi_reduction <add>, %410, %cst_180 [1] : vector<1x16x768xf32> to vector<1x768xf32>
    %412 = arith.addf %359, %411 : vector<1x768xf32>
    %c7_i32 = arith.constant 7 : i32
    %c0_i32_181 = arith.constant 0 : i32
    %413 = arith.addi %c7_i32, %c0_i32_181 : i32
    %c0_182 = arith.constant 0 : index
    %414 = arith.index_cast %413 : i32 to index
    %c0_183 = arith.constant 0 : index
    %c0_184 = arith.constant 0 : index
    %415 = vector.load %arg6[%c0_182, %414, %c0_183, %c0_184] : memref<1x16x16x768xf32, #tpu.memory_space<vmem>>, vector<1x1x16x768xf32>
    %416 = vector.shape_cast %415 : vector<1x1x16x768xf32> to vector<1x16x768xf32>
    %c1_i32_185 = arith.constant 1 : i32
    %417 = tpu.dynamic_rotate %416 by %c1_i32_185 dim 1 : vector<1x16x768xf32>, i32 -> vector<1x16x768xf32>
    %418 = vector.broadcast %10 : vector<1x1x768xf32> to vector<1x16x768xf32>
    %419 = arith.mulf %417, %418 : vector<1x16x768xf32>
    %420 = vector.broadcast %13 : vector<1x1x768xf32> to vector<1x16x768xf32>
    %421 = arith.mulf %416, %420 : vector<1x16x768xf32>
    %422 = arith.addf %419, %421 : vector<1x16x768xf32>
    %c15_i32_186 = arith.constant 15 : i32
    %423 = tpu.dynamic_rotate %416 by %c15_i32_186 dim 1 : vector<1x16x768xf32>, i32 -> vector<1x16x768xf32>
    %424 = vector.broadcast %16 : vector<1x1x768xf32> to vector<1x16x768xf32>
    %425 = arith.mulf %423, %424 : vector<1x16x768xf32>
    %426 = arith.addf %422, %425 : vector<1x16x768xf32>
    %c1_i32_187 = arith.constant 1 : i32
    %427 = arith.addi %c7_i32, %c1_i32_187 : i32
    %c0_188 = arith.constant 0 : index
    %428 = arith.index_cast %427 : i32 to index
    %c0_189 = arith.constant 0 : index
    %c0_190 = arith.constant 0 : index
    %429 = vector.load %arg6[%c0_188, %428, %c0_189, %c0_190] : memref<1x16x16x768xf32, #tpu.memory_space<vmem>>, vector<1x1x16x768xf32>
    %430 = vector.shape_cast %429 : vector<1x1x16x768xf32> to vector<1x16x768xf32>
    %c1_i32_191 = arith.constant 1 : i32
    %431 = tpu.dynamic_rotate %430 by %c1_i32_191 dim 1 : vector<1x16x768xf32>, i32 -> vector<1x16x768xf32>
    %432 = vector.broadcast %19 : vector<1x1x768xf32> to vector<1x16x768xf32>
    %433 = arith.mulf %431, %432 : vector<1x16x768xf32>
    %434 = vector.broadcast %22 : vector<1x1x768xf32> to vector<1x16x768xf32>
    %435 = arith.mulf %430, %434 : vector<1x16x768xf32>
    %436 = arith.addf %433, %435 : vector<1x16x768xf32>
    %c15_i32_192 = arith.constant 15 : i32
    %437 = tpu.dynamic_rotate %430 by %c15_i32_192 dim 1 : vector<1x16x768xf32>, i32 -> vector<1x16x768xf32>
    %438 = vector.broadcast %25 : vector<1x1x768xf32> to vector<1x16x768xf32>
    %439 = arith.mulf %437, %438 : vector<1x16x768xf32>
    %440 = arith.addf %436, %439 : vector<1x16x768xf32>
    %441 = arith.addf %426, %440 : vector<1x16x768xf32>
    %c2_i32_193 = arith.constant 2 : i32
    %442 = arith.addi %c7_i32, %c2_i32_193 : i32
    %c0_194 = arith.constant 0 : index
    %443 = arith.index_cast %442 : i32 to index
    %c0_195 = arith.constant 0 : index
    %c0_196 = arith.constant 0 : index
    %444 = vector.load %arg6[%c0_194, %443, %c0_195, %c0_196] : memref<1x16x16x768xf32, #tpu.memory_space<vmem>>, vector<1x1x16x768xf32>
    %445 = vector.shape_cast %444 : vector<1x1x16x768xf32> to vector<1x16x768xf32>
    %c1_i32_197 = arith.constant 1 : i32
    %446 = tpu.dynamic_rotate %445 by %c1_i32_197 dim 1 : vector<1x16x768xf32>, i32 -> vector<1x16x768xf32>
    %447 = vector.broadcast %28 : vector<1x1x768xf32> to vector<1x16x768xf32>
    %448 = arith.mulf %446, %447 : vector<1x16x768xf32>
    %449 = vector.broadcast %31 : vector<1x1x768xf32> to vector<1x16x768xf32>
    %450 = arith.mulf %445, %449 : vector<1x16x768xf32>
    %451 = arith.addf %448, %450 : vector<1x16x768xf32>
    %c15_i32_198 = arith.constant 15 : i32
    %452 = tpu.dynamic_rotate %445 by %c15_i32_198 dim 1 : vector<1x16x768xf32>, i32 -> vector<1x16x768xf32>
    %453 = vector.broadcast %34 : vector<1x1x768xf32> to vector<1x16x768xf32>
    %454 = arith.mulf %452, %453 : vector<1x16x768xf32>
    %455 = arith.addf %451, %454 : vector<1x16x768xf32>
    %456 = arith.addf %441, %455 : vector<1x16x768xf32>
    %457 = vector.shape_cast %456 : vector<1x16x768xf32> to vector<1x1x16x768xf32>
    %c0_199 = arith.constant 0 : index
    %458 = arith.index_cast %c7_i32 : i32 to index
    %c0_200 = arith.constant 0 : index
    %c0_201 = arith.constant 0 : index
    %459 = vector.load %arg7[%c0_199, %458, %c0_200, %c0_201] : memref<1x14x16x768xf32, #tpu.memory_space<vmem>>, vector<1x1x16x768xf32>
    tpu.vector_store %arg7[%c0_199, %458, %c0_200, %c0_201], %457 {strides = array<i32>} : memref<1x14x16x768xf32, #tpu.memory_space<vmem>>, vector<1x1x16x768xf32>,
    %460 = arith.mulf %456, %39 : vector<1x16x768xf32>
    %cst_202 = arith.constant dense<0.000000e+00> : vector<1x768xf32>
    %461 = vector.multi_reduction <add>, %460, %cst_202 [1] : vector<1x16x768xf32> to vector<1x768xf32>
    %462 = arith.addf %409, %461 : vector<1x768xf32>
    %463 = arith.mulf %460, %456 : vector<1x16x768xf32>
    %cst_203 = arith.constant dense<0.000000e+00> : vector<1x768xf32>
    %464 = vector.multi_reduction <add>, %463, %cst_203 [1] : vector<1x16x768xf32> to vector<1x768xf32>
    %465 = arith.addf %412, %464 : vector<1x768xf32>
    %c8_i32 = arith.constant 8 : i32
    %c0_i32_204 = arith.constant 0 : i32
    %466 = arith.addi %c8_i32, %c0_i32_204 : i32
    %c0_205 = arith.constant 0 : index
    %467 = arith.index_cast %466 : i32 to index
    %c0_206 = arith.constant 0 : index
    %c0_207 = arith.constant 0 : index
    %468 = vector.load %arg6[%c0_205, %467, %c0_206, %c0_207] : memref<1x16x16x768xf32, #tpu.memory_space<vmem>>, vector<1x1x16x768xf32>
    %469 = vector.shape_cast %468 : vector<1x1x16x768xf32> to vector<1x16x768xf32>
    %c1_i32_208 = arith.constant 1 : i32
    %470 = tpu.dynamic_rotate %469 by %c1_i32_208 dim 1 : vector<1x16x768xf32>, i32 -> vector<1x16x768xf32>
    %471 = vector.broadcast %10 : vector<1x1x768xf32> to vector<1x16x768xf32>
    %472 = arith.mulf %470, %471 : vector<1x16x768xf32>
    %473 = vector.broadcast %13 : vector<1x1x768xf32> to vector<1x16x768xf32>
    %474 = arith.mulf %469, %473 : vector<1x16x768xf32>
    %475 = arith.addf %472, %474 : vector<1x16x768xf32>
    %c15_i32_209 = arith.constant 15 : i32
    %476 = tpu.dynamic_rotate %469 by %c15_i32_209 dim 1 : vector<1x16x768xf32>, i32 -> vector<1x16x768xf32>
    %477 = vector.broadcast %16 : vector<1x1x768xf32> to vector<1x16x768xf32>
    %478 = arith.mulf %476, %477 : vector<1x16x768xf32>
    %479 = arith.addf %475, %478 : vector<1x16x768xf32>
    %c1_i32_210 = arith.constant 1 : i32
    %480 = arith.addi %c8_i32, %c1_i32_210 : i32
    %c0_211 = arith.constant 0 : index
    %481 = arith.index_cast %480 : i32 to index
    %c0_212 = arith.constant 0 : index
    %c0_213 = arith.constant 0 : index
    %482 = vector.load %arg6[%c0_211, %481, %c0_212, %c0_213] : memref<1x16x16x768xf32, #tpu.memory_space<vmem>>, vector<1x1x16x768xf32>
    %483 = vector.shape_cast %482 : vector<1x1x16x768xf32> to vector<1x16x768xf32>
    %c1_i32_214 = arith.constant 1 : i32
    %484 = tpu.dynamic_rotate %483 by %c1_i32_214 dim 1 : vector<1x16x768xf32>, i32 -> vector<1x16x768xf32>
    %485 = vector.broadcast %19 : vector<1x1x768xf32> to vector<1x16x768xf32>
    %486 = arith.mulf %484, %485 : vector<1x16x768xf32>
    %487 = vector.broadcast %22 : vector<1x1x768xf32> to vector<1x16x768xf32>
    %488 = arith.mulf %483, %487 : vector<1x16x768xf32>
    %489 = arith.addf %486, %488 : vector<1x16x768xf32>
    %c15_i32_215 = arith.constant 15 : i32
    %490 = tpu.dynamic_rotate %483 by %c15_i32_215 dim 1 : vector<1x16x768xf32>, i32 -> vector<1x16x768xf32>
    %491 = vector.broadcast %25 : vector<1x1x768xf32> to vector<1x16x768xf32>
    %492 = arith.mulf %490, %491 : vector<1x16x768xf32>
    %493 = arith.addf %489, %492 : vector<1x16x768xf32>
    %494 = arith.addf %479, %493 : vector<1x16x768xf32>
    %c2_i32_216 = arith.constant 2 : i32
    %495 = arith.addi %c8_i32, %c2_i32_216 : i32
    %c0_217 = arith.constant 0 : index
    %496 = arith.index_cast %495 : i32 to index
    %c0_218 = arith.constant 0 : index
    %c0_219 = arith.constant 0 : index
    %497 = vector.load %arg6[%c0_217, %496, %c0_218, %c0_219] : memref<1x16x16x768xf32, #tpu.memory_space<vmem>>, vector<1x1x16x768xf32>
    %498 = vector.shape_cast %497 : vector<1x1x16x768xf32> to vector<1x16x768xf32>
    %c1_i32_220 = arith.constant 1 : i32
    %499 = tpu.dynamic_rotate %498 by %c1_i32_220 dim 1 : vector<1x16x768xf32>, i32 -> vector<1x16x768xf32>
    %500 = vector.broadcast %28 : vector<1x1x768xf32> to vector<1x16x768xf32>
    %501 = arith.mulf %499, %500 : vector<1x16x768xf32>
    %502 = vector.broadcast %31 : vector<1x1x768xf32> to vector<1x16x768xf32>
    %503 = arith.mulf %498, %502 : vector<1x16x768xf32>
    %504 = arith.addf %501, %503 : vector<1x16x768xf32>
    %c15_i32_221 = arith.constant 15 : i32
    %505 = tpu.dynamic_rotate %498 by %c15_i32_221 dim 1 : vector<1x16x768xf32>, i32 -> vector<1x16x768xf32>
    %506 = vector.broadcast %34 : vector<1x1x768xf32> to vector<1x16x768xf32>
    %507 = arith.mulf %505, %506 : vector<1x16x768xf32>
    %508 = arith.addf %504, %507 : vector<1x16x768xf32>
    %509 = arith.addf %494, %508 : vector<1x16x768xf32>
    %510 = vector.shape_cast %509 : vector<1x16x768xf32> to vector<1x1x16x768xf32>
    %c0_222 = arith.constant 0 : index
    %511 = arith.index_cast %c8_i32 : i32 to index
    %c0_223 = arith.constant 0 : index
    %c0_224 = arith.constant 0 : index
    %512 = vector.load %arg7[%c0_222, %511, %c0_223, %c0_224] : memref<1x14x16x768xf32, #tpu.memory_space<vmem>>, vector<1x1x16x768xf32>
    tpu.vector_store %arg7[%c0_222, %511, %c0_223, %c0_224], %510 {strides = array<i32>} : memref<1x14x16x768xf32, #tpu.memory_space<vmem>>, vector<1x1x16x768xf32>,
    %513 = arith.mulf %509, %39 : vector<1x16x768xf32>
    %cst_225 = arith.constant dense<0.000000e+00> : vector<1x768xf32>
    %514 = vector.multi_reduction <add>, %513, %cst_225 [1] : vector<1x16x768xf32> to vector<1x768xf32>
    %515 = arith.addf %462, %514 : vector<1x768xf32>
    %516 = arith.mulf %513, %509 : vector<1x16x768xf32>
    %cst_226 = arith.constant dense<0.000000e+00> : vector<1x768xf32>
    %517 = vector.multi_reduction <add>, %516, %cst_226 [1] : vector<1x16x768xf32> to vector<1x768xf32>
    %518 = arith.addf %465, %517 : vector<1x768xf32>
    %c9_i32 = arith.constant 9 : i32
    %c0_i32_227 = arith.constant 0 : i32
    %519 = arith.addi %c9_i32, %c0_i32_227 : i32
    %c0_228 = arith.constant 0 : index
    %520 = arith.index_cast %519 : i32 to index
    %c0_229 = arith.constant 0 : index
    %c0_230 = arith.constant 0 : index
    %521 = vector.load %arg6[%c0_228, %520, %c0_229, %c0_230] : memref<1x16x16x768xf32, #tpu.memory_space<vmem>>, vector<1x1x16x768xf32>
    %522 = vector.shape_cast %521 : vector<1x1x16x768xf32> to vector<1x16x768xf32>
    %c1_i32_231 = arith.constant 1 : i32
    %523 = tpu.dynamic_rotate %522 by %c1_i32_231 dim 1 : vector<1x16x768xf32>, i32 -> vector<1x16x768xf32>
    %524 = vector.broadcast %10 : vector<1x1x768xf32> to vector<1x16x768xf32>
    %525 = arith.mulf %523, %524 : vector<1x16x768xf32>
    %526 = vector.broadcast %13 : vector<1x1x768xf32> to vector<1x16x768xf32>
    %527 = arith.mulf %522, %526 : vector<1x16x768xf32>
    %528 = arith.addf %525, %527 : vector<1x16x768xf32>
    %c15_i32_232 = arith.constant 15 : i32
    %529 = tpu.dynamic_rotate %522 by %c15_i32_232 dim 1 : vector<1x16x768xf32>, i32 -> vector<1x16x768xf32>
    %530 = vector.broadcast %16 : vector<1x1x768xf32> to vector<1x16x768xf32>
    %531 = arith.mulf %529, %530 : vector<1x16x768xf32>
    %532 = arith.addf %528, %531 : vector<1x16x768xf32>
    %c1_i32_233 = arith.constant 1 : i32
    %533 = arith.addi %c9_i32, %c1_i32_233 : i32
    %c0_234 = arith.constant 0 : index
    %534 = arith.index_cast %533 : i32 to index
    %c0_235 = arith.constant 0 : index
    %c0_236 = arith.constant 0 : index
    %535 = vector.load %arg6[%c0_234, %534, %c0_235, %c0_236] : memref<1x16x16x768xf32, #tpu.memory_space<vmem>>, vector<1x1x16x768xf32>
    %536 = vector.shape_cast %535 : vector<1x1x16x768xf32> to vector<1x16x768xf32>
    %c1_i32_237 = arith.constant 1 : i32
    %537 = tpu.dynamic_rotate %536 by %c1_i32_237 dim 1 : vector<1x16x768xf32>, i32 -> vector<1x16x768xf32>
    %538 = vector.broadcast %19 : vector<1x1x768xf32> to vector<1x16x768xf32>
    %539 = arith.mulf %537, %538 : vector<1x16x768xf32>
    %540 = vector.broadcast %22 : vector<1x1x768xf32> to vector<1x16x768xf32>
    %541 = arith.mulf %536, %540 : vector<1x16x768xf32>
    %542 = arith.addf %539, %541 : vector<1x16x768xf32>
    %c15_i32_238 = arith.constant 15 : i32
    %543 = tpu.dynamic_rotate %536 by %c15_i32_238 dim 1 : vector<1x16x768xf32>, i32 -> vector<1x16x768xf32>
    %544 = vector.broadcast %25 : vector<1x1x768xf32> to vector<1x16x768xf32>
    %545 = arith.mulf %543, %544 : vector<1x16x768xf32>
    %546 = arith.addf %542, %545 : vector<1x16x768xf32>
    %547 = arith.addf %532, %546 : vector<1x16x768xf32>
    %c2_i32_239 = arith.constant 2 : i32
    %548 = arith.addi %c9_i32, %c2_i32_239 : i32
    %c0_240 = arith.constant 0 : index
    %549 = arith.index_cast %548 : i32 to index
    %c0_241 = arith.constant 0 : index
    %c0_242 = arith.constant 0 : index
    %550 = vector.load %arg6[%c0_240, %549, %c0_241, %c0_242] : memref<1x16x16x768xf32, #tpu.memory_space<vmem>>, vector<1x1x16x768xf32>
    %551 = vector.shape_cast %550 : vector<1x1x16x768xf32> to vector<1x16x768xf32>
    %c1_i32_243 = arith.constant 1 : i32
    %552 = tpu.dynamic_rotate %551 by %c1_i32_243 dim 1 : vector<1x16x768xf32>, i32 -> vector<1x16x768xf32>
    %553 = vector.broadcast %28 : vector<1x1x768xf32> to vector<1x16x768xf32>
    %554 = arith.mulf %552, %553 : vector<1x16x768xf32>
    %555 = vector.broadcast %31 : vector<1x1x768xf32> to vector<1x16x768xf32>
    %556 = arith.mulf %551, %555 : vector<1x16x768xf32>
    %557 = arith.addf %554, %556 : vector<1x16x768xf32>
    %c15_i32_244 = arith.constant 15 : i32
    %558 = tpu.dynamic_rotate %551 by %c15_i32_244 dim 1 : vector<1x16x768xf32>, i32 -> vector<1x16x768xf32>
    %559 = vector.broadcast %34 : vector<1x1x768xf32> to vector<1x16x768xf32>
    %560 = arith.mulf %558, %559 : vector<1x16x768xf32>
    %561 = arith.addf %557, %560 : vector<1x16x768xf32>
    %562 = arith.addf %547, %561 : vector<1x16x768xf32>
    %563 = vector.shape_cast %562 : vector<1x16x768xf32> to vector<1x1x16x768xf32>
    %c0_245 = arith.constant 0 : index
    %564 = arith.index_cast %c9_i32 : i32 to index
    %c0_246 = arith.constant 0 : index
    %c0_247 = arith.constant 0 : index
    %565 = vector.load %arg7[%c0_245, %564, %c0_246, %c0_247] : memref<1x14x16x768xf32, #tpu.memory_space<vmem>>, vector<1x1x16x768xf32>
    tpu.vector_store %arg7[%c0_245, %564, %c0_246, %c0_247], %563 {strides = array<i32>} : memref<1x14x16x768xf32, #tpu.memory_space<vmem>>, vector<1x1x16x768xf32>,
    %566 = arith.mulf %562, %39 : vector<1x16x768xf32>
    %cst_248 = arith.constant dense<0.000000e+00> : vector<1x768xf32>
    %567 = vector.multi_reduction <add>, %566, %cst_248 [1] : vector<1x16x768xf32> to vector<1x768xf32>
    %568 = arith.addf %515, %567 : vector<1x768xf32>
    %569 = arith.mulf %566, %562 : vector<1x16x768xf32>
    %cst_249 = arith.constant dense<0.000000e+00> : vector<1x768xf32>
    %570 = vector.multi_reduction <add>, %569, %cst_249 [1] : vector<1x16x768xf32> to vector<1x768xf32>
    %571 = arith.addf %518, %570 : vector<1x768xf32>
    %c10_i32 = arith.constant 10 : i32
    %c0_i32_250 = arith.constant 0 : i32
    %572 = arith.addi %c10_i32, %c0_i32_250 : i32
    %c0_251 = arith.constant 0 : index
    %573 = arith.index_cast %572 : i32 to index
    %c0_252 = arith.constant 0 : index
    %c0_253 = arith.constant 0 : index
    %574 = vector.load %arg6[%c0_251, %573, %c0_252, %c0_253] : memref<1x16x16x768xf32, #tpu.memory_space<vmem>>, vector<1x1x16x768xf32>
    %575 = vector.shape_cast %574 : vector<1x1x16x768xf32> to vector<1x16x768xf32>
    %c1_i32_254 = arith.constant 1 : i32
    %576 = tpu.dynamic_rotate %575 by %c1_i32_254 dim 1 : vector<1x16x768xf32>, i32 -> vector<1x16x768xf32>
    %577 = vector.broadcast %10 : vector<1x1x768xf32> to vector<1x16x768xf32>
    %578 = arith.mulf %576, %577 : vector<1x16x768xf32>
    %579 = vector.broadcast %13 : vector<1x1x768xf32> to vector<1x16x768xf32>
    %580 = arith.mulf %575, %579 : vector<1x16x768xf32>
    %581 = arith.addf %578, %580 : vector<1x16x768xf32>
    %c15_i32_255 = arith.constant 15 : i32
    %582 = tpu.dynamic_rotate %575 by %c15_i32_255 dim 1 : vector<1x16x768xf32>, i32 -> vector<1x16x768xf32>
    %583 = vector.broadcast %16 : vector<1x1x768xf32> to vector<1x16x768xf32>
    %584 = arith.mulf %582, %583 : vector<1x16x768xf32>
    %585 = arith.addf %581, %584 : vector<1x16x768xf32>
    %c1_i32_256 = arith.constant 1 : i32
    %586 = arith.addi %c10_i32, %c1_i32_256 : i32
    %c0_257 = arith.constant 0 : index
    %587 = arith.index_cast %586 : i32 to index
    %c0_258 = arith.constant 0 : index
    %c0_259 = arith.constant 0 : index
    %588 = vector.load %arg6[%c0_257, %587, %c0_258, %c0_259] : memref<1x16x16x768xf32, #tpu.memory_space<vmem>>, vector<1x1x16x768xf32>
    %589 = vector.shape_cast %588 : vector<1x1x16x768xf32> to vector<1x16x768xf32>
    %c1_i32_260 = arith.constant 1 : i32
    %590 = tpu.dynamic_rotate %589 by %c1_i32_260 dim 1 : vector<1x16x768xf32>, i32 -> vector<1x16x768xf32>
    %591 = vector.broadcast %19 : vector<1x1x768xf32> to vector<1x16x768xf32>
    %592 = arith.mulf %590, %591 : vector<1x16x768xf32>
    %593 = vector.broadcast %22 : vector<1x1x768xf32> to vector<1x16x768xf32>
    %594 = arith.mulf %589, %593 : vector<1x16x768xf32>
    %595 = arith.addf %592, %594 : vector<1x16x768xf32>
    %c15_i32_261 = arith.constant 15 : i32
    %596 = tpu.dynamic_rotate %589 by %c15_i32_261 dim 1 : vector<1x16x768xf32>, i32 -> vector<1x16x768xf32>
    %597 = vector.broadcast %25 : vector<1x1x768xf32> to vector<1x16x768xf32>
    %598 = arith.mulf %596, %597 : vector<1x16x768xf32>
    %599 = arith.addf %595, %598 : vector<1x16x768xf32>
    %600 = arith.addf %585, %599 : vector<1x16x768xf32>
    %c2_i32_262 = arith.constant 2 : i32
    %601 = arith.addi %c10_i32, %c2_i32_262 : i32
    %c0_263 = arith.constant 0 : index
    %602 = arith.index_cast %601 : i32 to index
    %c0_264 = arith.constant 0 : index
    %c0_265 = arith.constant 0 : index
    %603 = vector.load %arg6[%c0_263, %602, %c0_264, %c0_265] : memref<1x16x16x768xf32, #tpu.memory_space<vmem>>, vector<1x1x16x768xf32>
    %604 = vector.shape_cast %603 : vector<1x1x16x768xf32> to vector<1x16x768xf32>
    %c1_i32_266 = arith.constant 1 : i32
    %605 = tpu.dynamic_rotate %604 by %c1_i32_266 dim 1 : vector<1x16x768xf32>, i32 -> vector<1x16x768xf32>
    %606 = vector.broadcast %28 : vector<1x1x768xf32> to vector<1x16x768xf32>
    %607 = arith.mulf %605, %606 : vector<1x16x768xf32>
    %608 = vector.broadcast %31 : vector<1x1x768xf32> to vector<1x16x768xf32>
    %609 = arith.mulf %604, %608 : vector<1x16x768xf32>
    %610 = arith.addf %607, %609 : vector<1x16x768xf32>
    %c15_i32_267 = arith.constant 15 : i32
    %611 = tpu.dynamic_rotate %604 by %c15_i32_267 dim 1 : vector<1x16x768xf32>, i32 -> vector<1x16x768xf32>
    %612 = vector.broadcast %34 : vector<1x1x768xf32> to vector<1x16x768xf32>
    %613 = arith.mulf %611, %612 : vector<1x16x768xf32>
    %614 = arith.addf %610, %613 : vector<1x16x768xf32>
    %615 = arith.addf %600, %614 : vector<1x16x768xf32>
    %616 = vector.shape_cast %615 : vector<1x16x768xf32> to vector<1x1x16x768xf32>
    %c0_268 = arith.constant 0 : index
    %617 = arith.index_cast %c10_i32 : i32 to index
    %c0_269 = arith.constant 0 : index
    %c0_270 = arith.constant 0 : index
    %618 = vector.load %arg7[%c0_268, %617, %c0_269, %c0_270] : memref<1x14x16x768xf32, #tpu.memory_space<vmem>>, vector<1x1x16x768xf32>
    tpu.vector_store %arg7[%c0_268, %617, %c0_269, %c0_270], %616 {strides = array<i32>} : memref<1x14x16x768xf32, #tpu.memory_space<vmem>>, vector<1x1x16x768xf32>,
    %619 = arith.mulf %615, %39 : vector<1x16x768xf32>
    %cst_271 = arith.constant dense<0.000000e+00> : vector<1x768xf32>
    %620 = vector.multi_reduction <add>, %619, %cst_271 [1] : vector<1x16x768xf32> to vector<1x768xf32>
    %621 = arith.addf %568, %620 : vector<1x768xf32>
    %622 = arith.mulf %619, %615 : vector<1x16x768xf32>
    %cst_272 = arith.constant dense<0.000000e+00> : vector<1x768xf32>
    %623 = vector.multi_reduction <add>, %622, %cst_272 [1] : vector<1x16x768xf32> to vector<1x768xf32>
    %624 = arith.addf %571, %623 : vector<1x768xf32>
    %c11_i32 = arith.constant 11 : i32
    %c0_i32_273 = arith.constant 0 : i32
    %625 = arith.addi %c11_i32, %c0_i32_273 : i32
    %c0_274 = arith.constant 0 : index
    %626 = arith.index_cast %625 : i32 to index
    %c0_275 = arith.constant 0 : index
    %c0_276 = arith.constant 0 : index
    %627 = vector.load %arg6[%c0_274, %626, %c0_275, %c0_276] : memref<1x16x16x768xf32, #tpu.memory_space<vmem>>, vector<1x1x16x768xf32>
    %628 = vector.shape_cast %627 : vector<1x1x16x768xf32> to vector<1x16x768xf32>
    %c1_i32_277 = arith.constant 1 : i32
    %629 = tpu.dynamic_rotate %628 by %c1_i32_277 dim 1 : vector<1x16x768xf32>, i32 -> vector<1x16x768xf32>
    %630 = vector.broadcast %10 : vector<1x1x768xf32> to vector<1x16x768xf32>
    %631 = arith.mulf %629, %630 : vector<1x16x768xf32>
    %632 = vector.broadcast %13 : vector<1x1x768xf32> to vector<1x16x768xf32>
    %633 = arith.mulf %628, %632 : vector<1x16x768xf32>
    %634 = arith.addf %631, %633 : vector<1x16x768xf32>
    %c15_i32_278 = arith.constant 15 : i32
    %635 = tpu.dynamic_rotate %628 by %c15_i32_278 dim 1 : vector<1x16x768xf32>, i32 -> vector<1x16x768xf32>
    %636 = vector.broadcast %16 : vector<1x1x768xf32> to vector<1x16x768xf32>
    %637 = arith.mulf %635, %636 : vector<1x16x768xf32>
    %638 = arith.addf %634, %637 : vector<1x16x768xf32>
    %c1_i32_279 = arith.constant 1 : i32
    %639 = arith.addi %c11_i32, %c1_i32_279 : i32
    %c0_280 = arith.constant 0 : index
    %640 = arith.index_cast %639 : i32 to index
    %c0_281 = arith.constant 0 : index
    %c0_282 = arith.constant 0 : index
    %641 = vector.load %arg6[%c0_280, %640, %c0_281, %c0_282] : memref<1x16x16x768xf32, #tpu.memory_space<vmem>>, vector<1x1x16x768xf32>
    %642 = vector.shape_cast %641 : vector<1x1x16x768xf32> to vector<1x16x768xf32>
    %c1_i32_283 = arith.constant 1 : i32
    %643 = tpu.dynamic_rotate %642 by %c1_i32_283 dim 1 : vector<1x16x768xf32>, i32 -> vector<1x16x768xf32>
    %644 = vector.broadcast %19 : vector<1x1x768xf32> to vector<1x16x768xf32>
    %645 = arith.mulf %643, %644 : vector<1x16x768xf32>
    %646 = vector.broadcast %22 : vector<1x1x768xf32> to vector<1x16x768xf32>
    %647 = arith.mulf %642, %646 : vector<1x16x768xf32>
    %648 = arith.addf %645, %647 : vector<1x16x768xf32>
    %c15_i32_284 = arith.constant 15 : i32
    %649 = tpu.dynamic_rotate %642 by %c15_i32_284 dim 1 : vector<1x16x768xf32>, i32 -> vector<1x16x768xf32>
    %650 = vector.broadcast %25 : vector<1x1x768xf32> to vector<1x16x768xf32>
    %651 = arith.mulf %649, %650 : vector<1x16x768xf32>
    %652 = arith.addf %648, %651 : vector<1x16x768xf32>
    %653 = arith.addf %638, %652 : vector<1x16x768xf32>
    %c2_i32_285 = arith.constant 2 : i32
    %654 = arith.addi %c11_i32, %c2_i32_285 : i32
    %c0_286 = arith.constant 0 : index
    %655 = arith.index_cast %654 : i32 to index
    %c0_287 = arith.constant 0 : index
    %c0_288 = arith.constant 0 : index
    %656 = vector.load %arg6[%c0_286, %655, %c0_287, %c0_288] : memref<1x16x16x768xf32, #tpu.memory_space<vmem>>, vector<1x1x16x768xf32>
    %657 = vector.shape_cast %656 : vector<1x1x16x768xf32> to vector<1x16x768xf32>
    %c1_i32_289 = arith.constant 1 : i32
    %658 = tpu.dynamic_rotate %657 by %c1_i32_289 dim 1 : vector<1x16x768xf32>, i32 -> vector<1x16x768xf32>
    %659 = vector.broadcast %28 : vector<1x1x768xf32> to vector<1x16x768xf32>
    %660 = arith.mulf %658, %659 : vector<1x16x768xf32>
    %661 = vector.broadcast %31 : vector<1x1x768xf32> to vector<1x16x768xf32>
    %662 = arith.mulf %657, %661 : vector<1x16x768xf32>
    %663 = arith.addf %660, %662 : vector<1x16x768xf32>
    %c15_i32_290 = arith.constant 15 : i32
    %664 = tpu.dynamic_rotate %657 by %c15_i32_290 dim 1 : vector<1x16x768xf32>, i32 -> vector<1x16x768xf32>
    %665 = vector.broadcast %34 : vector<1x1x768xf32> to vector<1x16x768xf32>
    %666 = arith.mulf %664, %665 : vector<1x16x768xf32>
    %667 = arith.addf %663, %666 : vector<1x16x768xf32>
    %668 = arith.addf %653, %667 : vector<1x16x768xf32>
    %669 = vector.shape_cast %668 : vector<1x16x768xf32> to vector<1x1x16x768xf32>
    %c0_291 = arith.constant 0 : index
    %670 = arith.index_cast %c11_i32 : i32 to index
    %c0_292 = arith.constant 0 : index
    %c0_293 = arith.constant 0 : index
    %671 = vector.load %arg7[%c0_291, %670, %c0_292, %c0_293] : memref<1x14x16x768xf32, #tpu.memory_space<vmem>>, vector<1x1x16x768xf32>
    tpu.vector_store %arg7[%c0_291, %670, %c0_292, %c0_293], %669 {strides = array<i32>} : memref<1x14x16x768xf32, #tpu.memory_space<vmem>>, vector<1x1x16x768xf32>,
    %672 = arith.mulf %668, %39 : vector<1x16x768xf32>
    %cst_294 = arith.constant dense<0.000000e+00> : vector<1x768xf32>
    %673 = vector.multi_reduction <add>, %672, %cst_294 [1] : vector<1x16x768xf32> to vector<1x768xf32>
    %674 = arith.addf %621, %673 : vector<1x768xf32>
    %675 = arith.mulf %672, %668 : vector<1x16x768xf32>
    %cst_295 = arith.constant dense<0.000000e+00> : vector<1x768xf32>
    %676 = vector.multi_reduction <add>, %675, %cst_295 [1] : vector<1x16x768xf32> to vector<1x768xf32>
    %677 = arith.addf %624, %676 : vector<1x768xf32>
    %c12_i32 = arith.constant 12 : i32
    %c0_i32_296 = arith.constant 0 : i32
    %678 = arith.addi %c12_i32, %c0_i32_296 : i32
    %c0_297 = arith.constant 0 : index
    %679 = arith.index_cast %678 : i32 to index
    %c0_298 = arith.constant 0 : index
    %c0_299 = arith.constant 0 : index
    %680 = vector.load %arg6[%c0_297, %679, %c0_298, %c0_299] : memref<1x16x16x768xf32, #tpu.memory_space<vmem>>, vector<1x1x16x768xf32>
    %681 = vector.shape_cast %680 : vector<1x1x16x768xf32> to vector<1x16x768xf32>
    %c1_i32_300 = arith.constant 1 : i32
    %682 = tpu.dynamic_rotate %681 by %c1_i32_300 dim 1 : vector<1x16x768xf32>, i32 -> vector<1x16x768xf32>
    %683 = vector.broadcast %10 : vector<1x1x768xf32> to vector<1x16x768xf32>
    %684 = arith.mulf %682, %683 : vector<1x16x768xf32>
    %685 = vector.broadcast %13 : vector<1x1x768xf32> to vector<1x16x768xf32>
    %686 = arith.mulf %681, %685 : vector<1x16x768xf32>
    %687 = arith.addf %684, %686 : vector<1x16x768xf32>
    %c15_i32_301 = arith.constant 15 : i32
    %688 = tpu.dynamic_rotate %681 by %c15_i32_301 dim 1 : vector<1x16x768xf32>, i32 -> vector<1x16x768xf32>
    %689 = vector.broadcast %16 : vector<1x1x768xf32> to vector<1x16x768xf32>
    %690 = arith.mulf %688, %689 : vector<1x16x768xf32>
    %691 = arith.addf %687, %690 : vector<1x16x768xf32>
    %c1_i32_302 = arith.constant 1 : i32
    %692 = arith.addi %c12_i32, %c1_i32_302 : i32
    %c0_303 = arith.constant 0 : index
    %693 = arith.index_cast %692 : i32 to index
    %c0_304 = arith.constant 0 : index
    %c0_305 = arith.constant 0 : index
    %694 = vector.load %arg6[%c0_303, %693, %c0_304, %c0_305] : memref<1x16x16x768xf32, #tpu.memory_space<vmem>>, vector<1x1x16x768xf32>
    %695 = vector.shape_cast %694 : vector<1x1x16x768xf32> to vector<1x16x768xf32>
    %c1_i32_306 = arith.constant 1 : i32
    %696 = tpu.dynamic_rotate %695 by %c1_i32_306 dim 1 : vector<1x16x768xf32>, i32 -> vector<1x16x768xf32>
    %697 = vector.broadcast %19 : vector<1x1x768xf32> to vector<1x16x768xf32>
    %698 = arith.mulf %696, %697 : vector<1x16x768xf32>
    %699 = vector.broadcast %22 : vector<1x1x768xf32> to vector<1x16x768xf32>
    %700 = arith.mulf %695, %699 : vector<1x16x768xf32>
    %701 = arith.addf %698, %700 : vector<1x16x768xf32>
    %c15_i32_307 = arith.constant 15 : i32
    %702 = tpu.dynamic_rotate %695 by %c15_i32_307 dim 1 : vector<1x16x768xf32>, i32 -> vector<1x16x768xf32>
    %703 = vector.broadcast %25 : vector<1x1x768xf32> to vector<1x16x768xf32>
    %704 = arith.mulf %702, %703 : vector<1x16x768xf32>
    %705 = arith.addf %701, %704 : vector<1x16x768xf32>
    %706 = arith.addf %691, %705 : vector<1x16x768xf32>
    %c2_i32_308 = arith.constant 2 : i32
    %707 = arith.addi %c12_i32, %c2_i32_308 : i32
    %c0_309 = arith.constant 0 : index
    %708 = arith.index_cast %707 : i32 to index
    %c0_310 = arith.constant 0 : index
    %c0_311 = arith.constant 0 : index
    %709 = vector.load %arg6[%c0_309, %708, %c0_310, %c0_311] : memref<1x16x16x768xf32, #tpu.memory_space<vmem>>, vector<1x1x16x768xf32>
    %710 = vector.shape_cast %709 : vector<1x1x16x768xf32> to vector<1x16x768xf32>
    %c1_i32_312 = arith.constant 1 : i32
    %711 = tpu.dynamic_rotate %710 by %c1_i32_312 dim 1 : vector<1x16x768xf32>, i32 -> vector<1x16x768xf32>
    %712 = vector.broadcast %28 : vector<1x1x768xf32> to vector<1x16x768xf32>
    %713 = arith.mulf %711, %712 : vector<1x16x768xf32>
    %714 = vector.broadcast %31 : vector<1x1x768xf32> to vector<1x16x768xf32>
    %715 = arith.mulf %710, %714 : vector<1x16x768xf32>
    %716 = arith.addf %713, %715 : vector<1x16x768xf32>
    %c15_i32_313 = arith.constant 15 : i32
    %717 = tpu.dynamic_rotate %710 by %c15_i32_313 dim 1 : vector<1x16x768xf32>, i32 -> vector<1x16x768xf32>
    %718 = vector.broadcast %34 : vector<1x1x768xf32> to vector<1x16x768xf32>
    %719 = arith.mulf %717, %718 : vector<1x16x768xf32>
    %720 = arith.addf %716, %719 : vector<1x16x768xf32>
    %721 = arith.addf %706, %720 : vector<1x16x768xf32>
    %722 = vector.shape_cast %721 : vector<1x16x768xf32> to vector<1x1x16x768xf32>
    %c0_314 = arith.constant 0 : index
    %723 = arith.index_cast %c12_i32 : i32 to index
    %c0_315 = arith.constant 0 : index
    %c0_316 = arith.constant 0 : index
    %724 = vector.load %arg7[%c0_314, %723, %c0_315, %c0_316] : memref<1x14x16x768xf32, #tpu.memory_space<vmem>>, vector<1x1x16x768xf32>
    tpu.vector_store %arg7[%c0_314, %723, %c0_315, %c0_316], %722 {strides = array<i32>} : memref<1x14x16x768xf32, #tpu.memory_space<vmem>>, vector<1x1x16x768xf32>,
    %725 = arith.mulf %721, %39 : vector<1x16x768xf32>
    %cst_317 = arith.constant dense<0.000000e+00> : vector<1x768xf32>
    %726 = vector.multi_reduction <add>, %725, %cst_317 [1] : vector<1x16x768xf32> to vector<1x768xf32>
    %727 = arith.addf %674, %726 : vector<1x768xf32>
    %728 = arith.mulf %725, %721 : vector<1x16x768xf32>
    %cst_318 = arith.constant dense<0.000000e+00> : vector<1x768xf32>
    %729 = vector.multi_reduction <add>, %728, %cst_318 [1] : vector<1x16x768xf32> to vector<1x768xf32>
    %730 = arith.addf %677, %729 : vector<1x768xf32>
    %c13_i32 = arith.constant 13 : i32
    %c0_i32_319 = arith.constant 0 : i32
    %731 = arith.addi %c13_i32, %c0_i32_319 : i32
    %c0_320 = arith.constant 0 : index
    %732 = arith.index_cast %731 : i32 to index
    %c0_321 = arith.constant 0 : index
    %c0_322 = arith.constant 0 : index
    %733 = vector.load %arg6[%c0_320, %732, %c0_321, %c0_322] : memref<1x16x16x768xf32, #tpu.memory_space<vmem>>, vector<1x1x16x768xf32>
    %734 = vector.shape_cast %733 : vector<1x1x16x768xf32> to vector<1x16x768xf32>
    %c1_i32_323 = arith.constant 1 : i32
    %735 = tpu.dynamic_rotate %734 by %c1_i32_323 dim 1 : vector<1x16x768xf32>, i32 -> vector<1x16x768xf32>
    %736 = vector.broadcast %10 : vector<1x1x768xf32> to vector<1x16x768xf32>
    %737 = arith.mulf %735, %736 : vector<1x16x768xf32>
    %738 = vector.broadcast %13 : vector<1x1x768xf32> to vector<1x16x768xf32>
    %739 = arith.mulf %734, %738 : vector<1x16x768xf32>
    %740 = arith.addf %737, %739 : vector<1x16x768xf32>
    %c15_i32_324 = arith.constant 15 : i32
    %741 = tpu.dynamic_rotate %734 by %c15_i32_324 dim 1 : vector<1x16x768xf32>, i32 -> vector<1x16x768xf32>
    %742 = vector.broadcast %16 : vector<1x1x768xf32> to vector<1x16x768xf32>
    %743 = arith.mulf %741, %742 : vector<1x16x768xf32>
    %744 = arith.addf %740, %743 : vector<1x16x768xf32>
    %c1_i32_325 = arith.constant 1 : i32
    %745 = arith.addi %c13_i32, %c1_i32_325 : i32
    %c0_326 = arith.constant 0 : index
    %746 = arith.index_cast %745 : i32 to index
    %c0_327 = arith.constant 0 : index
    %c0_328 = arith.constant 0 : index
    %747 = vector.load %arg6[%c0_326, %746, %c0_327, %c0_328] : memref<1x16x16x768xf32, #tpu.memory_space<vmem>>, vector<1x1x16x768xf32>
    %748 = vector.shape_cast %747 : vector<1x1x16x768xf32> to vector<1x16x768xf32>
    %c1_i32_329 = arith.constant 1 : i32
    %749 = tpu.dynamic_rotate %748 by %c1_i32_329 dim 1 : vector<1x16x768xf32>, i32 -> vector<1x16x768xf32>
    %750 = vector.broadcast %19 : vector<1x1x768xf32> to vector<1x16x768xf32>
    %751 = arith.mulf %749, %750 : vector<1x16x768xf32>
    %752 = vector.broadcast %22 : vector<1x1x768xf32> to vector<1x16x768xf32>
    %753 = arith.mulf %748, %752 : vector<1x16x768xf32>
    %754 = arith.addf %751, %753 : vector<1x16x768xf32>
    %c15_i32_330 = arith.constant 15 : i32
    %755 = tpu.dynamic_rotate %748 by %c15_i32_330 dim 1 : vector<1x16x768xf32>, i32 -> vector<1x16x768xf32>
    %756 = vector.broadcast %25 : vector<1x1x768xf32> to vector<1x16x768xf32>
    %757 = arith.mulf %755, %756 : vector<1x16x768xf32>
    %758 = arith.addf %754, %757 : vector<1x16x768xf32>
    %759 = arith.addf %744, %758 : vector<1x16x768xf32>
    %c2_i32_331 = arith.constant 2 : i32
    %760 = arith.addi %c13_i32, %c2_i32_331 : i32
    %c0_332 = arith.constant 0 : index
    %761 = arith.index_cast %760 : i32 to index
    %c0_333 = arith.constant 0 : index
    %c0_334 = arith.constant 0 : index
    %762 = vector.load %arg6[%c0_332, %761, %c0_333, %c0_334] : memref<1x16x16x768xf32, #tpu.memory_space<vmem>>, vector<1x1x16x768xf32>
    %763 = vector.shape_cast %762 : vector<1x1x16x768xf32> to vector<1x16x768xf32>
    %c1_i32_335 = arith.constant 1 : i32
    %764 = tpu.dynamic_rotate %763 by %c1_i32_335 dim 1 : vector<1x16x768xf32>, i32 -> vector<1x16x768xf32>
    %765 = vector.broadcast %28 : vector<1x1x768xf32> to vector<1x16x768xf32>
    %766 = arith.mulf %764, %765 : vector<1x16x768xf32>
    %767 = vector.broadcast %31 : vector<1x1x768xf32> to vector<1x16x768xf32>
    %768 = arith.mulf %763, %767 : vector<1x16x768xf32>
    %769 = arith.addf %766, %768 : vector<1x16x768xf32>
    %c15_i32_336 = arith.constant 15 : i32
    %770 = tpu.dynamic_rotate %763 by %c15_i32_336 dim 1 : vector<1x16x768xf32>, i32 -> vector<1x16x768xf32>
    %771 = vector.broadcast %34 : vector<1x1x768xf32> to vector<1x16x768xf32>
    %772 = arith.mulf %770, %771 : vector<1x16x768xf32>
    %773 = arith.addf %769, %772 : vector<1x16x768xf32>
    %774 = arith.addf %759, %773 : vector<1x16x768xf32>
    %775 = vector.shape_cast %774 : vector<1x16x768xf32> to vector<1x1x16x768xf32>
    %c0_337 = arith.constant 0 : index
    %776 = arith.index_cast %c13_i32 : i32 to index
    %c0_338 = arith.constant 0 : index
    %c0_339 = arith.constant 0 : index
    %777 = vector.load %arg7[%c0_337, %776, %c0_338, %c0_339] : memref<1x14x16x768xf32, #tpu.memory_space<vmem>>, vector<1x1x16x768xf32>
    tpu.vector_store %arg7[%c0_337, %776, %c0_338, %c0_339], %775 {strides = array<i32>} : memref<1x14x16x768xf32, #tpu.memory_space<vmem>>, vector<1x1x16x768xf32>,
    %778 = arith.mulf %774, %39 : vector<1x16x768xf32>
    %cst_340 = arith.constant dense<0.000000e+00> : vector<1x768xf32>
    %779 = vector.multi_reduction <add>, %778, %cst_340 [1] : vector<1x16x768xf32> to vector<1x768xf32>
    %780 = arith.addf %727, %779 : vector<1x768xf32>
    %781 = arith.mulf %778, %774 : vector<1x16x768xf32>
    %cst_341 = arith.constant dense<0.000000e+00> : vector<1x768xf32>
    %782 = vector.multi_reduction <add>, %781, %cst_341 [1] : vector<1x16x768xf32> to vector<1x768xf32>
    %783 = arith.addf %730, %782 : vector<1x768xf32>
    %c14_i32_342 = arith.constant 14 : i32
    %cst_343 = arith.constant dense<0.000000e+00> : vector<768xf32>
    %784 = vector.multi_reduction <add>, %780, %cst_343 [0] : vector<1x768xf32> to vector<768xf32>
    %785 = vector.shape_cast %784 : vector<768xf32> to vector<1x768xf32>
    %cst_344 = arith.constant 1.960000e+02 : f32
    %786 = vector.broadcast %cst_344 : f32 to vector<1x768xf32>
    %787 = arith.divf %785, %786 : vector<1x768xf32>
    %cst_345 = arith.constant dense<0.000000e+00> : vector<768xf32>
    %788 = vector.multi_reduction <add>, %783, %cst_345 [0] : vector<1x768xf32> to vector<768xf32>
    %789 = vector.shape_cast %788 : vector<768xf32> to vector<1x768xf32>
    %cst_346 = arith.constant 1.960000e+02 : f32
    %790 = vector.broadcast %cst_346 : f32 to vector<1x768xf32>
    %791 = arith.divf %789, %790 : vector<1x768xf32>
    %792 = arith.mulf %787, %787 : vector<1x768xf32>
    %793 = arith.subf %791, %792 : vector<1x768xf32>
    %cst_347 = arith.constant 1.000000e-03 : f32
    %794 = vector.broadcast %cst_347 : f32 to vector<1x768xf32>
    %795 = arith.addf %793, %794 : vector<1x768xf32>
    %796 = math.rsqrt %795 : vector<1x768xf32>
    %c0_348 = arith.constant 0 : index
    %c0_349 = arith.constant 0 : index
    %797 = vector.load %arg3[%c0_348, %c0_349] : memref<1x768xf32, #tpu.memory_space<vmem>>, vector<1x768xf32>
    %c0_350 = arith.constant 0 : index
    %c0_351 = arith.constant 0 : index
    %798 = vector.load %arg4[%c0_350, %c0_351] : memref<1x768xf32, #tpu.memory_space<vmem>>, vector<1x768xf32>
    %799 = arith.mulf %797, %796 : vector<1x768xf32>
    %800 = vector.shape_cast %799 : vector<1x768xf32> to vector<1x1x1x768xf32>
    %801 = arith.mulf %787, %797 : vector<1x768xf32>
    %802 = arith.mulf %801, %796 : vector<1x768xf32>
    %803 = arith.subf %798, %802 : vector<1x768xf32>
    %804 = vector.shape_cast %803 : vector<1x768xf32> to vector<1x1x1x768xf32>
    %c0_352 = arith.constant 0 : index
    %c0_353 = arith.constant 0 : index
    %c0_354 = arith.constant 0 : index
    %c0_355 = arith.constant 0 : index
    %805 = vector.load %arg7[%c0_352, %c0_353, %c0_354, %c0_355] : memref<1x14x16x768xf32, #tpu.memory_space<vmem>>, vector<1x14x14x768xf32>
    %806 = vector.broadcast %800 : vector<1x1x1x768xf32> to vector<1x14x14x768xf32>
    %807 = arith.mulf %805, %806 : vector<1x14x14x768xf32>
    %808 = vector.broadcast %804 : vector<1x1x1x768xf32> to vector<1x14x14x768xf32>
    %809 = arith.addf %807, %808 : vector<1x14x14x768xf32>
    %c0_356 = arith.constant 0 : index
    %c0_357 = arith.constant 0 : index
    %c0_358 = arith.constant 0 : index
    %c0_359 = arith.constant 0 : index
    %810 = vector.load %arg5[%c0_356, %c0_357, %c0_358, %c0_359] : memref<1x14x14x768xf32, #tpu.memory_space<vmem>>, vector<1x14x14x768xf32>
    tpu.vector_store %arg5[%c0_356, %c0_357, %c0_358, %c0_359], %809 {strides = array<i32>} : memref<1x14x14x768xf32, #tpu.memory_space<vmem>>, vector<1x14x14x768xf32>,
    return
  }
  func.func @transform_0(%arg0: i32) -> (i32, i32, i32, i32) {
    %c0_i32 = arith.constant 0 : i32
    %c0_i32_0 = arith.constant 0 : i32
    %c0_i32_1 = arith.constant 0 : i32
    %c0_i32_2 = arith.constant 0 : i32
    return %c0_i32, %c0_i32_0, %c0_i32_1, %arg0 : i32, i32, i32, i32
  }
  func.func @transform_1(%arg0: i32) -> (i32, i32) {
    %c0_i32 = arith.constant 0 : i32
    %c0_i32_0 = arith.constant 0 : i32
    return %c0_i32, %arg0 : i32, i32
  }
  func.func @transform_2(%arg0: i32) -> (i32, i32) {
    %c0_i32 = arith.constant 0 : i32
    %c0_i32_0 = arith.constant 0 : i32
    return %c0_i32, %arg0 : i32, i32
  }
  func.func @transform_3(%arg0: i32) -> (i32, i32) {
    %c0_i32 = arith.constant 0 : i32
    %c0_i32_0 = arith.constant 0 : i32
    return %c0_i32, %arg0 : i32, i32
  }
  func.func @transform_4(%arg0: i32) -> (i32, i32, i32, i32) {
    %c0_i32 = arith.constant 0 : i32
    %c0_i32_0 = arith.constant 0 : i32
    %c0_i32_1 = arith.constant 0 : i32
    %c0_i32_2 = arith.constant 0 : i32
    return %c0_i32, %c0_i32_0, %c0_i32_1, %arg0 : i32, i32, i32, i32
  }
}

</mosaic_0001>

<llo_original>
// kernel: tpu_custom_call.1
$region0: #{tpu_custom_call.1}
  #allocation0 [shape = 'u32[]', space=smem, size = 0x4, offset = 0x4, fixed_abs, tag = 'smem constant byte address 0x4 - core index']
  #allocation1 [shape = 'u32[144,128]{1,0:T(1,128)}', space=vmem, size = 0x12000, scoped, tag = 'internal scratch']
  #allocation2 [shape = 'f32[1,16,16,768]{3,2,1,0:T(8,128)}', space=vmem, size = 0xc0000, scoped, tag = 'scratch operand']
  #allocation3 [shape = 'f32[1,14,16,768]{3,2,1,0:T(8,128)}', space=vmem, size = 0xa8000, scoped, tag = 'scratch operand']
  %s0 = inlined_call_operand.vmem [shape: f32[1,14,14,768], index: 0, kind: input, shape index: {}]
  %s1 = inlined_call_operand.vmem [shape: f32[9,768], index: 1, kind: input, shape index: {}]
  %s2 = inlined_call_operand.vmem [shape: f32[1,768], index: 2, kind: input, shape index: {}]
  %s3 = inlined_call_operand.vmem [shape: f32[1,768], index: 3, kind: input, shape index: {}]
  %s4 = inlined_call_operand.vmem [shape: f32[1,14,14,768], index: 4, kind: output, shape index: {}]
  %s5 = sld [smem:[#allocation0]]
  $region26: #{tpu_custom_call.1} parent=0
    _
  %s7 = ssub.s32 1, %s5
  %s8 = scalar_select 0, %s7, %s5
  // Predicated region
  $region2: #{tpu_custom_call.1} parent=0 // pred_check
    _
  $region3: #{tpu_custom_call.1} parent=0 // pred_check_branch
    %10 = sbr.rel (0) target = $region5
  $region4: #{tpu_custom_call.1} parent=0 // pred_region
    _
  $region5: #{tpu_custom_call.1} parent=0 // pred_fallthru
    _
  // Predicated region
  $region6: #{tpu_custom_call.1} parent=0 // pred_check
    _
  $region7: #{tpu_custom_call.1} parent=0 // pred_check_branch
    %12 = sbr.rel (0) target = $region9
  $region8: #{tpu_custom_call.1} parent=0 // pred_region
    _
  $region9: #{tpu_custom_call.1} parent=0 // pred_fallthru
    _
  // Predicated region
  $region10: #{tpu_custom_call.1} parent=0 // pred_check
    _
  $region11: #{tpu_custom_call.1} parent=0 // pred_check_branch
    %14 = sbr.rel (0) target = $region13
  $region12: #{tpu_custom_call.1} parent=0 // pred_region
    _
  $region13: #{tpu_custom_call.1} parent=0 // pred_fallthru
    _
  // Predicated region
  $region14: #{tpu_custom_call.1} parent=0 // pred_check
    _
  $region15: #{tpu_custom_call.1} parent=0 // pred_check_branch
    %16 = sbr.rel (0) target = $region17
  $region16: #{tpu_custom_call.1} parent=0 // pred_region
    _
  $region17: #{tpu_custom_call.1} parent=0 // pred_fallthru
    _
  %17 = vst [vmem:[#allocation2] sm:$0xff] 0.0
  %18 = vst [vmem:[#allocation2 + $0x8] sm:$0xff] 0.0
  %19 = vst [vmem:[#allocation2 + $0x10] sm:$0xff] 0.0
  %20 = vst [vmem:[#allocation2 + $0x18] sm:$0xff] 0.0
  %21 = vst [vmem:[#allocation2 + $0x20] sm:$0xff] 0.0
  %22 = vst [vmem:[#allocation2 + $0x28] sm:$0xff] 0.0
  %23 = vst [vmem:[#allocation2 + $0x30] sm:$0xff] 0.0
  %24 = vst [vmem:[#allocation2 + $0x38] sm:$0xff] 0.0
  %25 = vst [vmem:[#allocation2 + $0x40] sm:$0xff] 0.0
  %26 = vst [vmem:[#allocation2 + $0x48] sm:$0xff] 0.0
  %27 = vst [vmem:[#allocation2 + $0x50] sm:$0xff] 0.0
  %28 = vst [vmem:[#allocation2 + $0x58] sm:$0xff] 0.0
  %s29 = scalar_lea.vmem [#allocation2], 1440
  %30 = vst [vmem:[%s29] sm:$0xff] 0.0
  %31 = vst [vmem:[%s29 + $0x8] sm:$0xff] 0.0
  %32 = vst [vmem:[%s29 + $0x10] sm:$0xff] 0.0
  %33 = vst [vmem:[%s29 + $0x18] sm:$0xff] 0.0
  %34 = vst [vmem:[%s29 + $0x20] sm:$0xff] 0.0
  %35 = vst [vmem:[%s29 + $0x28] sm:$0xff] 0.0
  %36 = vst [vmem:[%s29 + $0x30] sm:$0xff] 0.0
  %37 = vst [vmem:[%s29 + $0x38] sm:$0xff] 0.0
  %38 = vst [vmem:[%s29 + $0x40] sm:$0xff] 0.0
  %39 = vst [vmem:[%s29 + $0x48] sm:$0xff] 0.0
  %40 = vst [vmem:[%s29 + $0x50] sm:$0xff] 0.0
  %41 = vst [vmem:[%s29 + $0x58] sm:$0xff] 0.0
  %s42 = scalar_lea.vmem [#allocation2], 96
  %43 = vst [vmem:[%s42 + $0x30] sm:$0xc0] 0.0
  %44 = vst [vmem:[%s42 + $0x38] sm:$0xc0] 0.0
  %45 = vst [vmem:[%s42 + $0x40] sm:$0xc0] 0.0
  %46 = vst [vmem:[%s42 + $0x48] sm:$0xc0] 0.0
  %47 = vst [vmem:[%s42 + $0x50] sm:$0xc0] 0.0
  %48 = vst [vmem:[%s42 + $0x58] sm:$0xc0] 0.0
  %49 = vst [vmem:[%s42 + $0x90] sm:$0xc0] 0.0
  %50 = vst [vmem:[%s42 + $0x98] sm:$0xc0] 0.0
  %51 = vst [vmem:[%s42 + $0xa0] sm:$0xc0] 0.0
  %52 = vst [vmem:[%s42 + $0xa8] sm:$0xc0] 0.0
  %53 = vst [vmem:[%s42 + $0xb0] sm:$0xc0] 0.0
  %54 = vst [vmem:[%s42 + $0xb8] sm:$0xc0] 0.0
  %55 = vst [vmem:[%s42 + $0xf0] sm:$0xc0] 0.0
  %56 = vst [vmem:[%s42 + $0xf8] sm:$0xc0] 0.0
  %57 = vst [vmem:[%s42 + $0x100] sm:$0xc0] 0.0
  %58 = vst [vmem:[%s42 + $0x108] sm:$0xc0] 0.0
  %59 = vst [vmem:[%s42 + $0x110] sm:$0xc0] 0.0
  %60 = vst [vmem:[%s42 + $0x118] sm:$0xc0] 0.0
  %61 = vst [vmem:[%s42 + $0x150] sm:$0xc0] 0.0
  %62 = vst [vmem:[%s42 + $0x158] sm:$0xc0] 0.0
  %63 = vst [vmem:[%s42 + $0x160] sm:$0xc0] 0.0
  %64 = vst [vmem:[%s42 + $0x168] sm:$0xc0] 0.0
  %65 = vst [vmem:[%s42 + $0x170] sm:$0xc0] 0.0
  %66 = vst [vmem:[%s42 + $0x178] sm:$0xc0] 0.0
  %67 = vst [vmem:[%s42 + $0x1b0] sm:$0xc0] 0.0
  %68 = vst [vmem:[%s42 + $0x1b8] sm:$0xc0] 0.0
  %69 = vst [vmem:[%s42 + $0x1c0] sm:$0xc0] 0.0
  %70 = vst [vmem:[%s42 + $0x1c8] sm:$0xc0] 0.0
  %71 = vst [vmem:[%s42 + $0x1d0] sm:$0xc0] 0.0
  %72 = vst [vmem:[%s42 + $0x1d8] sm:$0xc0] 0.0
  %73 = vst [vmem:[%s42 + $0x210] sm:$0xc0] 0.0
  %74 = vst [vmem:[%s42 + $0x218] sm:$0xc0] 0.0
  %75 = vst [vmem:[%s42 + $0x220] sm:$0xc0] 0.0
  %76 = vst [vmem:[%s42 + $0x228] sm:$0xc0] 0.0
  %77 = vst [vmem:[%s42 + $0x230] sm:$0xc0] 0.0
  %78 = vst [vmem:[%s42 + $0x238] sm:$0xc0] 0.0
  %79 = vst [vmem:[%s42 + $0x270] sm:$0xc0] 0.0
  %80 = vst [vmem:[%s42 + $0x278] sm:$0xc0] 0.0
  %81 = vst [vmem:[%s42 + $0x280] sm:$0xc0] 0.0
  %82 = vst [vmem:[%s42 + $0x288] sm:$0xc0] 0.0
  %83 = vst [vmem:[%s42 + $0x290] sm:$0xc0] 0.0
  %84 = vst [vmem:[%s42 + $0x298] sm:$0xc0] 0.0
  %85 = vst [vmem:[%s42 + $0x2d0] sm:$0xc0] 0.0
  %86 = vst [vmem:[%s42 + $0x2d8] sm:$0xc0] 0.0
  %87 = vst [vmem:[%s42 + $0x2e0] sm:$0xc0] 0.0
  %88 = vst [vmem:[%s42 + $0x2e8] sm:$0xc0] 0.0
  %89 = vst [vmem:[%s42 + $0x2f0] sm:$0xc0] 0.0
  %90 = vst [vmem:[%s42 + $0x2f8] sm:$0xc0] 0.0
  %91 = vst [vmem:[%s42 + $0x330] sm:$0xc0] 0.0
  %92 = vst [vmem:[%s42 + $0x338] sm:$0xc0] 0.0
  %93 = vst [vmem:[%s42 + $0x340] sm:$0xc0] 0.0
  %94 = vst [vmem:[%s42 + $0x348] sm:$0xc0] 0.0
  %95 = vst [vmem:[%s42 + $0x350] sm:$0xc0] 0.0
  %96 = vst [vmem:[%s42 + $0x358] sm:$0xc0] 0.0
  %97 = vst [vmem:[%s42 + $0x390] sm:$0xc0] 0.0
  %98 = vst [vmem:[%s42 + $0x398] sm:$0xc0] 0.0
  %99 = vst [vmem:[%s42 + $0x3a0] sm:$0xc0] 0.0
  %100 = vst [vmem:[%s42 + $0x3a8] sm:$0xc0] 0.0
  %101 = vst [vmem:[%s42 + $0x3b0] sm:$0xc0] 0.0
  %102 = vst [vmem:[%s42 + $0x3b8] sm:$0xc0] 0.0
  %103 = vst [vmem:[%s42 + $0x3f0] sm:$0xc0] 0.0
  %104 = vst [vmem:[%s42 + $0x3f8] sm:$0xc0] 0.0
  %105 = vst [vmem:[%s42 + $0x400] sm:$0xc0] 0.0
  %106 = vst [vmem:[%s42 + $0x408] sm:$0xc0] 0.0
  %107 = vst [vmem:[%s42 + $0x410] sm:$0xc0] 0.0
  %108 = vst [vmem:[%s42 + $0x418] sm:$0xc0] 0.0
  %109 = vst [vmem:[%s42 + $0x450] sm:$0xc0] 0.0
  %110 = vst [vmem:[%s42 + $0x458] sm:$0xc0] 0.0
  %111 = vst [vmem:[%s42 + $0x460] sm:$0xc0] 0.0
  %112 = vst [vmem:[%s42 + $0x468] sm:$0xc0] 0.0
  %113 = vst [vmem:[%s42 + $0x470] sm:$0xc0] 0.0
  %114 = vst [vmem:[%s42 + $0x478] sm:$0xc0] 0.0
  %115 = vst [vmem:[%s42 + $0x4b0] sm:$0xc0] 0.0
  %116 = vst [vmem:[%s42 + $0x4b8] sm:$0xc0] 0.0
  %117 = vst [vmem:[%s42 + $0x4c0] sm:$0xc0] 0.0
  %118 = vst [vmem:[%s42 + $0x4c8] sm:$0xc0] 0.0
  %119 = vst [vmem:[%s42 + $0x4d0] sm:$0xc0] 0.0
  %120 = vst [vmem:[%s42 + $0x4d8] sm:$0xc0] 0.0
  %121 = vst [vmem:[%s42 + $0x510] sm:$0xc0] 0.0
  %122 = vst [vmem:[%s42 + $0x518] sm:$0xc0] 0.0
  %123 = vst [vmem:[%s42 + $0x520] sm:$0xc0] 0.0
  %124 = vst [vmem:[%s42 + $0x528] sm:$0xc0] 0.0
  %125 = vst [vmem:[%s42 + $0x530] sm:$0xc0] 0.0
  %126 = vst [vmem:[%s42 + $0x538] sm:$0xc0] 0.0
  %v127 = vld [vmem:[%s0] sm:$0xff]
  %v128 = vld [vmem:[%s0 + $0x8] sm:$0xff]
  %v129 = vld [vmem:[%s0 + $0x10] sm:$0xff]
  %v130 = vld [vmem:[%s0 + $0x18] sm:$0xff]
  %v131 = vld [vmem:[%s0 + $0x20] sm:$0xff]
  %v132 = vld [vmem:[%s0 + $0x28] sm:$0xff]
  %v133 = vld [vmem:[%s0 + $0x30] sm:$0x3f]
  %v134 = vld [vmem:[%s0 + $0x38] sm:$0x3f]
  %v135 = vld [vmem:[%s0 + $0x40] sm:$0x3f]
  %v136 = vld [vmem:[%s0 + $0x48] sm:$0x3f]
  %v137 = vld [vmem:[%s0 + $0x50] sm:$0x3f]
  %v138 = vld [vmem:[%s0 + $0x58] sm:$0x3f]
  %v139 = vld [vmem:[%s0 + $0x60] sm:$0xff]
  %v140 = vld [vmem:[%s0 + $0x68] sm:$0xff]
  %v141 = vld [vmem:[%s0 + $0x70] sm:$0xff]
  %v142 = vld [vmem:[%s0 + $0x78] sm:$0xff]
  %v143 = vld [vmem:[%s0 + $0x80] sm:$0xff]
  %v144 = vld [vmem:[%s0 + $0x88] sm:$0xff]
  %v145 = vld [vmem:[%s0 + $0x90] sm:$0x3f]
  %v146 = vld [vmem:[%s0 + $0x98] sm:$0x3f]
  %v147 = vld [vmem:[%s0 + $0xa0] sm:$0x3f]
  %v148 = vld [vmem:[%s0 + $0xa8] sm:$0x3f]
  %v149 = vld [vmem:[%s0 + $0xb0] sm:$0x3f]
  %v150 = vld [vmem:[%s0 + $0xb8] sm:$0x3f]
  %v151 = vld [vmem:[%s0 + $0xc0] sm:$0xff]
  %v152 = vld [vmem:[%s0 + $0xc8] sm:$0xff]
  %v153 = vld [vmem:[%s0 + $0xd0] sm:$0xff]
  %v154 = vld [vmem:[%s0 + $0xd8] sm:$0xff]
  %v155 = vld [vmem:[%s0 + $0xe0] sm:$0xff]
  %v156 = vld [vmem:[%s0 + $0xe8] sm:$0xff]
  %v157 = vld [vmem:[%s0 + $0xf0] sm:$0x3f]
  %v158 = vld [vmem:[%s0 + $0xf8] sm:$0x3f]
  %v159 = vld [vmem:[%s0 + $0x100] sm:$0x3f]
  %v160 = vld [vmem:[%s0 + $0x108] sm:$0x3f]
  %v161 = vld [vmem:[%s0 + $0x110] sm:$0x3f]
  %v162 = vld [vmem:[%s0 + $0x118] sm:$0x3f]
  %v163 = vld [vmem:[%s0 + $0x120] sm:$0xff]
  %v164 = vld [vmem:[%s0 + $0x128] sm:$0xff]
  %v165 = vld [vmem:[%s0 + $0x130] sm:$0xff]
  %v166 = vld [vmem:[%s0 + $0x138] sm:$0xff]
  %v167 = vld [vmem:[%s0 + $0x140] sm:$0xff]
  %v168 = vld [vmem:[%s0 + $0x148] sm:$0xff]
  %v169 = vld [vmem:[%s0 + $0x150] sm:$0x3f]
  %v170 = vld [vmem:[%s0 + $0x158] sm:$0x3f]
  %v171 = vld [vmem:[%s0 + $0x160] sm:$0x3f]
  %v172 = vld [vmem:[%s0 + $0x168] sm:$0x3f]
  %v173 = vld [vmem:[%s0 + $0x170] sm:$0x3f]
  %v174 = vld [vmem:[%s0 + $0x178] sm:$0x3f]
  %v175 = vld [vmem:[%s0 + $0x180] sm:$0xff]
  %v176 = vld [vmem:[%s0 + $0x188] sm:$0xff]
  %v177 = vld [vmem:[%s0 + $0x190] sm:$0xff]
  %v178 = vld [vmem:[%s0 + $0x198] sm:$0xff]
  %v179 = vld [vmem:[%s0 + $0x1a0] sm:$0xff]
  %v180 = vld [vmem:[%s0 + $0x1a8] sm:$0xff]
  %v181 = vld [vmem:[%s0 + $0x1b0] sm:$0x3f]
  %v182 = vld [vmem:[%s0 + $0x1b8] sm:$0x3f]
  %v183 = vld [vmem:[%s0 + $0x1c0] sm:$0x3f]
  %v184 = vld [vmem:[%s0 + $0x1c8] sm:$0x3f]
  %v185 = vld [vmem:[%s0 + $0x1d0] sm:$0x3f]
  %v186 = vld [vmem:[%s0 + $0x1d8] sm:$0x3f]
  %v187 = vld [vmem:[%s0 + $0x1e0] sm:$0xff]
  %v188 = vld [vmem:[%s0 + $0x1e8] sm:$0xff]
  %v189 = vld [vmem:[%s0 + $0x1f0] sm:$0xff]
  %v190 = vld [vmem:[%s0 + $0x1f8] sm:$0xff]
  %v191 = vld [vmem:[%s0 + $0x200] sm:$0xff]
  %v192 = vld [vmem:[%s0 + $0x208] sm:$0xff]
  %v193 = vld [vmem:[%s0 + $0x210] sm:$0x3f]
  %v194 = vld [vmem:[%s0 + $0x218] sm:$0x3f]
  %v195 = vld [vmem:[%s0 + $0x220] sm:$0x3f]
  %v196 = vld [vmem:[%s0 + $0x228] sm:$0x3f]
  %v197 = vld [vmem:[%s0 + $0x230] sm:$0x3f]
  %v198 = vld [vmem:[%s0 + $0x238] sm:$0x3f]
  %v199 = vld [vmem:[%s0 + $0x240] sm:$0xff]
  %v200 = vld [vmem:[%s0 + $0x248] sm:$0xff]
  %v201 = vld [vmem:[%s0 + $0x250] sm:$0xff]
  %v202 = vld [vmem:[%s0 + $0x258] sm:$0xff]
  %v203 = vld [vmem:[%s0 + $0x260] sm:$0xff]
  %v204 = vld [vmem:[%s0 + $0x268] sm:$0xff]
  %v205 = vld [vmem:[%s0 + $0x270] sm:$0x3f]
  %v206 = vld [vmem:[%s0 + $0x278] sm:$0x3f]
  %v207 = vld [vmem:[%s0 + $0x280] sm:$0x3f]
  %v208 = vld [vmem:[%s0 + $0x288] sm:$0x3f]
  %v209 = vld [vmem:[%s0 + $0x290] sm:$0x3f]
  %v210 = vld [vmem:[%s0 + $0x298] sm:$0x3f]
  %v211 = vld [vmem:[%s0 + $0x2a0] sm:$0xff]
  %v212 = vld [vmem:[%s0 + $0x2a8] sm:$0xff]
  %v213 = vld [vmem:[%s0 + $0x2b0] sm:$0xff]
  %v214 = vld [vmem:[%s0 + $0x2b8] sm:$0xff]
  %v215 = vld [vmem:[%s0 + $0x2c0] sm:$0xff]
  %v216 = vld [vmem:[%s0 + $0x2c8] sm:$0xff]
  %v217 = vld [vmem:[%s0 + $0x2d0] sm:$0x3f]
  %v218 = vld [vmem:[%s0 + $0x2d8] sm:$0x3f]
  %v219 = vld [vmem:[%s0 + $0x2e0] sm:$0x3f]
  %v220 = vld [vmem:[%s0 + $0x2e8] sm:$0x3f]
  %v221 = vld [vmem:[%s0 + $0x2f0] sm:$0x3f]
  %v222 = vld [vmem:[%s0 + $0x2f8] sm:$0x3f]
  %v223 = vld [vmem:[%s0 + $0x300] sm:$0xff]
  %v224 = vld [vmem:[%s0 + $0x308] sm:$0xff]
  %v225 = vld [vmem:[%s0 + $0x310] sm:$0xff]
  %v226 = vld [vmem:[%s0 + $0x318] sm:$0xff]
  %v227 = vld [vmem:[%s0 + $0x320] sm:$0xff]
  %v228 = vld [vmem:[%s0 + $0x328] sm:$0xff]
  %v229 = vld [vmem:[%s0 + $0x330] sm:$0x3f]
  %v230 = vld [vmem:[%s0 + $0x338] sm:$0x3f]
  %v231 = vld [vmem:[%s0 + $0x340] sm:$0x3f]
  %v232 = vld [vmem:[%s0 + $0x348] sm:$0x3f]
  %v233 = vld [vmem:[%s0 + $0x350] sm:$0x3f]
  %v234 = vld [vmem:[%s0 + $0x358] sm:$0x3f]
  %v235 = vld [vmem:[%s0 + $0x360] sm:$0xff]
  %v236 = vld [vmem:[%s0 + $0x368] sm:$0xff]
  %v237 = vld [vmem:[%s0 + $0x370] sm:$0xff]
  %v238 = vld [vmem:[%s0 + $0x378] sm:$0xff]
  %v239 = vld [vmem:[%s0 + $0x380] sm:$0xff]
  %v240 = vld [vmem:[%s0 + $0x388] sm:$0xff]
  %v241 = vld [vmem:[%s0 + $0x390] sm:$0x3f]
  %v242 = vld [vmem:[%s0 + $0x398] sm:$0x3f]
  %v243 = vld [vmem:[%s0 + $0x3a0] sm:$0x3f]
  %v244 = vld [vmem:[%s0 + $0x3a8] sm:$0x3f]
  %v245 = vld [vmem:[%s0 + $0x3b0] sm:$0x3f]
  %v246 = vld [vmem:[%s0 + $0x3b8] sm:$0x3f]
  %v247 = vld [vmem:[%s0 + $0x3c0] sm:$0xff]
  %v248 = vld [vmem:[%s0 + $0x3c8] sm:$0xff]
  %v249 = vld [vmem:[%s0 + $0x3d0] sm:$0xff]
  %v250 = vld [vmem:[%s0 + $0x3d8] sm:$0xff]
  %v251 = vld [vmem:[%s0 + $0x3e0] sm:$0xff]
  %v252 = vld [vmem:[%s0 + $0x3e8] sm:$0xff]
  %v253 = vld [vmem:[%s0 + $0x3f0] sm:$0x3f]
  %v254 = vld [vmem:[%s0 + $0x3f8] sm:$0x3f]
  %v255 = vld [vmem:[%s0 + $0x400] sm:$0x3f]
  %v256 = vld [vmem:[%s0 + $0x408] sm:$0x3f]
  %v257 = vld [vmem:[%s0 + $0x410] sm:$0x3f]
  %v258 = vld [vmem:[%s0 + $0x418] sm:$0x3f]
  %v259 = vld [vmem:[%s0 + $0x420] sm:$0xff]
  %v260 = vld [vmem:[%s0 + $0x428] sm:$0xff]
  %v261 = vld [vmem:[%s0 + $0x430] sm:$0xff]
  %v262 = vld [vmem:[%s0 + $0x438] sm:$0xff]
  %v263 = vld [vmem:[%s0 + $0x440] sm:$0xff]
  %v264 = vld [vmem:[%s0 + $0x448] sm:$0xff]
  %v265 = vld [vmem:[%s0 + $0x450] sm:$0x3f]
  %v266 = vld [vmem:[%s0 + $0x458] sm:$0x3f]
  %v267 = vld [vmem:[%s0 + $0x460] sm:$0x3f]
  %v268 = vld [vmem:[%s0 + $0x468] sm:$0x3f]
  %v269 = vld [vmem:[%s0 + $0x470] sm:$0x3f]
  %v270 = vld [vmem:[%s0 + $0x478] sm:$0x3f]
  %v271 = vld [vmem:[%s0 + $0x480] sm:$0xff]
  %v272 = vld [vmem:[%s0 + $0x488] sm:$0xff]
  %v273 = vld [vmem:[%s0 + $0x490] sm:$0xff]
  %v274 = vld [vmem:[%s0 + $0x498] sm:$0xff]
  %v275 = vld [vmem:[%s0 + $0x4a0] sm:$0xff]
  %v276 = vld [vmem:[%s0 + $0x4a8] sm:$0xff]
  %v277 = vld [vmem:[%s0 + $0x4b0] sm:$0x3f]
  %v278 = vld [vmem:[%s0 + $0x4b8] sm:$0x3f]
  %v279 = vld [vmem:[%s0 + $0x4c0] sm:$0x3f]
  %v280 = vld [vmem:[%s0 + $0x4c8] sm:$0x3f]
  %v281 = vld [vmem:[%s0 + $0x4d0] sm:$0x3f]
  %v282 = vld [vmem:[%s0 + $0x4d8] sm:$0x3f]
  %v283 = vld [vmem:[%s0 + $0x4e0] sm:$0xff]
  %v284 = vld [vmem:[%s0 + $0x4e8] sm:$0xff]
  %v285 = vld [vmem:[%s0 + $0x4f0] sm:$0xff]
  %v286 = vld [vmem:[%s0 + $0x4f8] sm:$0xff]
  %v287 = vld [vmem:[%s0 + $0x500] sm:$0xff]
  %v288 = vld [vmem:[%s0 + $0x508] sm:$0xff]
  %v289 = vld [vmem:[%s0 + $0x510] sm:$0x3f]
  %v290 = vld [vmem:[%s0 + $0x518] sm:$0x3f]
  %v291 = vld [vmem:[%s0 + $0x520] sm:$0x3f]
  %v292 = vld [vmem:[%s0 + $0x528] sm:$0x3f]
  %v293 = vld [vmem:[%s0 + $0x530] sm:$0x3f]
  %v294 = vld [vmem:[%s0 + $0x538] sm:$0x3f]
  %295 = vst [vmem:[%s42] sm:$0xff] %v127
  %296 = vst [vmem:[%s42 + $0x8] sm:$0xff] %v128
  %297 = vst [vmem:[%s42 + $0x10] sm:$0xff] %v129
  %298 = vst [vmem:[%s42 + $0x18] sm:$0xff] %v130
  %299 = vst [vmem:[%s42 + $0x20] sm:$0xff] %v131
  %300 = vst [vmem:[%s42 + $0x28] sm:$0xff] %v132
  %301 = vst [vmem:[%s42 + $0x30] sm:$0x3f] %v133
  %302 = vst [vmem:[%s42 + $0x38] sm:$0x3f] %v134
  %303 = vst [vmem:[%s42 + $0x40] sm:$0x3f] %v135
  %304 = vst [vmem:[%s42 + $0x48] sm:$0x3f] %v136
  %305 = vst [vmem:[%s42 + $0x50] sm:$0x3f] %v137
  %306 = vst [vmem:[%s42 + $0x58] sm:$0x3f] %v138
  %307 = vst [vmem:[%s42 + $0x60] sm:$0xff] %v139
  %308 = vst [vmem:[%s42 + $0x68] sm:$0xff] %v140
  %309 = vst [vmem:[%s42 + $0x70] sm:$0xff] %v141
  %310 = vst [vmem:[%s42 + $0x78] sm:$0xff] %v142
  %311 = vst [vmem:[%s42 + $0x80] sm:$0xff] %v143
  %312 = vst [vmem:[%s42 + $0x88] sm:$0xff] %v144
  %313 = vst [vmem:[%s42 + $0x90] sm:$0x3f] %v145
  %314 = vst [vmem:[%s42 + $0x98] sm:$0x3f] %v146
  %315 = vst [vmem:[%s42 + $0xa0] sm:$0x3f] %v147
  %316 = vst [vmem:[%s42 + $0xa8] sm:$0x3f] %v148
  %317 = vst [vmem:[%s42 + $0xb0] sm:$0x3f] %v149
  %318 = vst [vmem:[%s42 + $0xb8] sm:$0x3f] %v150
  %319 = vst [vmem:[%s42 + $0xc0] sm:$0xff] %v151
  %320 = vst [vmem:[%s42 + $0xc8] sm:$0xff] %v152
  %321 = vst [vmem:[%s42 + $0xd0] sm:$0xff] %v153
  %322 = vst [vmem:[%s42 + $0xd8] sm:$0xff] %v154
  %323 = vst [vmem:[%s42 + $0xe0] sm:$0xff] %v155
  %324 = vst [vmem:[%s42 + $0xe8] sm:$0xff] %v156
  %325 = vst [vmem:[%s42 + $0xf0] sm:$0x3f] %v157
  %326 = vst [vmem:[%s42 + $0xf8] sm:$0x3f] %v158
  %327 = vst [vmem:[%s42 + $0x100] sm:$0x3f] %v159
  %328 = vst [vmem:[%s42 + $0x108] sm:$0x3f] %v160
  %329 = vst [vmem:[%s42 + $0x110] sm:$0x3f] %v161
  %330 = vst [vmem:[%s42 + $0x118] sm:$0x3f] %v162
  %331 = vst [vmem:[%s42 + $0x120] sm:$0xff] %v163
  %332 = vst [vmem:[%s42 + $0x128] sm:$0xff] %v164
  %333 = vst [vmem:[%s42 + $0x130] sm:$0xff] %v165
  %334 = vst [vmem:[%s42 + $0x138] sm:$0xff] %v166
  %335 = vst [vmem:[%s42 + $0x140] sm:$0xff] %v167
  %336 = vst [vmem:[%s42 + $0x148] sm:$0xff] %v168
  %337 = vst [vmem:[%s42 + $0x150] sm:$0x3f] %v169
  %338 = vst [vmem:[%s42 + $0x158] sm:$0x3f] %v170
  %339 = vst [vmem:[%s42 + $0x160] sm:$0x3f] %v171
  %340 = vst [vmem:[%s42 + $0x168] sm:$0x3f] %v172
  %341 = vst [vmem:[%s42 + $0x170] sm:$0x3f] %v173
  %342 = vst [vmem:[%s42 + $0x178] sm:$0x3f] %v174
  %343 = vst [vmem:[%s42 + $0x180] sm:$0xff] %v175
  %344 = vst [vmem:[%s42 + $0x188] sm:$0xff] %v176
  %345 = vst [vmem:[%s42 + $0x190] sm:$0xff] %v177
  %346 = vst [vmem:[%s42 + $0x198] sm:$0xff] %v178
  %347 = vst [vmem:[%s42 + $0x1a0] sm:$0xff] %v179
  %348 = vst [vmem:[%s42 + $0x1a8] sm:$0xff] %v180
  %349 = vst [vmem:[%s42 + $0x1b0] sm:$0x3f] %v181
  %350 = vst [vmem:[%s42 + $0x1b8] sm:$0x3f] %v182
  %351 = vst [vmem:[%s42 + $0x1c0] sm:$0x3f] %v183
  %352 = vst [vmem:[%s42 + $0x1c8] sm:$0x3f] %v184
  %353 = vst [vmem:[%s42 + $0x1d0] sm:$0x3f] %v185
  %354 = vst [vmem:[%s42 + $0x1d8] sm:$0x3f] %v186
  %355 = vst [vmem:[%s42 + $0x1e0] sm:$0xff] %v187
  %356 = vst [vmem:[%s42 + $0x1e8] sm:$0xff] %v188
  %357 = vst [vmem:[%s42 + $0x1f0] sm:$0xff] %v189
  %358 = vst [vmem:[%s42 + $0x1f8] sm:$0xff] %v190
  %359 = vst [vmem:[%s42 + $0x200] sm:$0xff] %v191
  %360 = vst [vmem:[%s42 + $0x208] sm:$0xff] %v192
  %361 = vst [vmem:[%s42 + $0x210] sm:$0x3f] %v193
  %362 = vst [vmem:[%s42 + $0x218] sm:$0x3f] %v194
  %363 = vst [vmem:[%s42 + $0x220] sm:$0x3f] %v195
  %364 = vst [vmem:[%s42 + $0x228] sm:$0x3f] %v196
  %365 = vst [vmem:[%s42 + $0x230] sm:$0x3f] %v197
  %366 = vst [vmem:[%s42 + $0x238] sm:$0x3f] %v198
  %367 = vst [vmem:[%s42 + $0x240] sm:$0xff] %v199
  %368 = vst [vmem:[%s42 + $0x248] sm:$0xff] %v200
  %369 = vst [vmem:[%s42 + $0x250] sm:$0xff] %v201
  %370 = vst [vmem:[%s42 + $0x258] sm:$0xff] %v202
  %371 = vst [vmem:[%s42 + $0x260] sm:$0xff] %v203
  %372 = vst [vmem:[%s42 + $0x268] sm:$0xff] %v204
  %373 = vst [vmem:[%s42 + $0x270] sm:$0x3f] %v205
  %374 = vst [vmem:[%s42 + $0x278] sm:$0x3f] %v206
  %375 = vst [vmem:[%s42 + $0x280] sm:$0x3f] %v207
  %376 = vst [vmem:[%s42 + $0x288] sm:$0x3f] %v208
  %377 = vst [vmem:[%s42 + $0x290] sm:$0x3f] %v209
  %378 = vst [vmem:[%s42 + $0x298] sm:$0x3f] %v210
  %379 = vst [vmem:[%s42 + $0x2a0] sm:$0xff] %v211
  %380 = vst [vmem:[%s42 + $0x2a8] sm:$0xff] %v212
  %381 = vst [vmem:[%s42 + $0x2b0] sm:$0xff] %v213
  %382 = vst [vmem:[%s42 + $0x2b8] sm:$0xff] %v214
  %383 = vst [vmem:[%s42 + $0x2c0] sm:$0xff] %v215
  %384 = vst [vmem:[%s42 + $0x2c8] sm:$0xff] %v216
  %385 = vst [vmem:[%s42 + $0x2d0] sm:$0x3f] %v217
  %386 = vst [vmem:[%s42 + $0x2d8] sm:$0x3f] %v218
  %387 = vst [vmem:[%s42 + $0x2e0] sm:$0x3f] %v219
  %388 = vst [vmem:[%s42 + $0x2e8] sm:$0x3f] %v220
  %389 = vst [vmem:[%s42 + $0x2f0] sm:$0x3f] %v221
  %390 = vst [vmem:[%s42 + $0x2f8] sm:$0x3f] %v222
  %391 = vst [vmem:[%s42 + $0x300] sm:$0xff] %v223
  %392 = vst [vmem:[%s42 + $0x308] sm:$0xff] %v224
  %393 = vst [vmem:[%s42 + $0x310] sm:$0xff] %v225
  %394 = vst [vmem:[%s42 + $0x318] sm:$0xff] %v226
  %395 = vst [vmem:[%s42 + $0x320] sm:$0xff] %v227
  %396 = vst [vmem:[%s42 + $0x328] sm:$0xff] %v228
  %397 = vst [vmem:[%s42 + $0x330] sm:$0x3f] %v229
  %398 = vst [vmem:[%s42 + $0x338] sm:$0x3f] %v230
  %399 = vst [vmem:[%s42 + $0x340] sm:$0x3f] %v231
  %400 = vst [vmem:[%s42 + $0x348] sm:$0x3f] %v232
  %401 = vst [vmem:[%s42 + $0x350] sm:$0x3f] %v233
  %402 = vst [vmem:[%s42 + $0x358] sm:$0x3f] %v234
  %403 = vst [vmem:[%s42 + $0x360] sm:$0xff] %v235
  %404 = vst [vmem:[%s42 + $0x368] sm:$0xff] %v236
  %405 = vst [vmem:[%s42 + $0x370] sm:$0xff] %v237
  %406 = vst [vmem:[%s42 + $0x378] sm:$0xff] %v238
  %407 = vst [vmem:[%s42 + $0x380] sm:$0xff] %v239
  %408 = vst [vmem:[%s42 + $0x388] sm:$0xff] %v240
  %409 = vst [vmem:[%s42 + $0x390] sm:$0x3f] %v241
  %410 = vst [vmem:[%s42 + $0x398] sm:$0x3f] %v242
  %411 = vst [vmem:[%s42 + $0x3a0] sm:$0x3f] %v243
  %412 = vst [vmem:[%s42 + $0x3a8] sm:$0x3f] %v244
  %413 = vst [vmem:[%s42 + $0x3b0] sm:$0x3f] %v245
  %414 = vst [vmem:[%s42 + $0x3b8] sm:$0x3f] %v246
  %415 = vst [vmem:[%s42 + $0x3c0] sm:$0xff] %v247
  %416 = vst [vmem:[%s42 + $0x3c8] sm:$0xff] %v248
  %417 = vst [vmem:[%s42 + $0x3d0] sm:$0xff] %v249
  %418 = vst [vmem:[%s42 + $0x3d8] sm:$0xff] %v250
  %419 = vst [vmem:[%s42 + $0x3e0] sm:$0xff] %v251
  %420 = vst [vmem:[%s42 + $0x3e8] sm:$0xff] %v252
  %421 = vst [vmem:[%s42 + $0x3f0] sm:$0x3f] %v253
  %422 = vst [vmem:[%s42 + $0x3f8] sm:$0x3f] %v254
  %423 = vst [vmem:[%s42 + $0x400] sm:$0x3f] %v255
  %424 = vst [vmem:[%s42 + $0x408] sm:$0x3f] %v256
  %425 = vst [vmem:[%s42 + $0x410] sm:$0x3f] %v257
  %426 = vst [vmem:[%s42 + $0x418] sm:$0x3f] %v258
  %427 = vst [vmem:[%s42 + $0x420] sm:$0xff] %v259
  %428 = vst [vmem:[%s42 + $0x428] sm:$0xff] %v260
  %429 = vst [vmem:[%s42 + $0x430] sm:$0xff] %v261
  %430 = vst [vmem:[%s42 + $0x438] sm:$0xff] %v262
  %431 = vst [vmem:[%s42 + $0x440] sm:$0xff] %v263
  %432 = vst [vmem:[%s42 + $0x448] sm:$0xff] %v264
  %433 = vst [vmem:[%s42 + $0x450] sm:$0x3f] %v265
  %434 = vst [vmem:[%s42 + $0x458] sm:$0x3f] %v266
  %435 = vst [vmem:[%s42 + $0x460] sm:$0x3f] %v267
  %436 = vst [vmem:[%s42 + $0x468] sm:$0x3f] %v268
  %437 = vst [vmem:[%s42 + $0x470] sm:$0x3f] %v269
  %438 = vst [vmem:[%s42 + $0x478] sm:$0x3f] %v270
  %439 = vst [vmem:[%s42 + $0x480] sm:$0xff] %v271
  %440 = vst [vmem:[%s42 + $0x488] sm:$0xff] %v272
  %441 = vst [vmem:[%s42 + $0x490] sm:$0xff] %v273
  %442 = vst [vmem:[%s42 + $0x498] sm:$0xff] %v274
  %443 = vst [vmem:[%s42 + $0x4a0] sm:$0xff] %v275
  %444 = vst [vmem:[%s42 + $0x4a8] sm:$0xff] %v276
  %445 = vst [vmem:[%s42 + $0x4b0] sm:$0x3f] %v277
  %446 = vst [vmem:[%s42 + $0x4b8] sm:$0x3f] %v278
  %447 = vst [vmem:[%s42 + $0x4c0] sm:$0x3f] %v279
  %448 = vst [vmem:[%s42 + $0x4c8] sm:$0x3f] %v280
  %449 = vst [vmem:[%s42 + $0x4d0] sm:$0x3f] %v281
  %450 = vst [vmem:[%s42 + $0x4d8] sm:$0x3f] %v282
  %451 = vst [vmem:[%s42 + $0x4e0] sm:$0xff] %v283
  %452 = vst [vmem:[%s42 + $0x4e8] sm:$0xff] %v284
  %453 = vst [vmem:[%s42 + $0x4f0] sm:$0xff] %v285
  %454 = vst [vmem:[%s42 + $0x4f8] sm:$0xff] %v286
  %455 = vst [vmem:[%s42 + $0x500] sm:$0xff] %v287
  %456 = vst [vmem:[%s42 + $0x508] sm:$0xff] %v288
  %457 = vst [vmem:[%s42 + $0x510] sm:$0x3f] %v289
  %458 = vst [vmem:[%s42 + $0x518] sm:$0x3f] %v290
  %459 = vst [vmem:[%s42 + $0x520] sm:$0x3f] %v291
  %460 = vst [vmem:[%s42 + $0x528] sm:$0x3f] %v292
  %461 = vst [vmem:[%s42 + $0x530] sm:$0x3f] %v293
  %462 = vst [vmem:[%s42 + $0x538] sm:$0x3f] %v294
  %v463 = vld [vmem:[%s1] sm:$0xff]
  %v464 = vld [vmem:[%s1 + $0x8] sm:$0xff]
  %v465 = vld [vmem:[%s1 + $0x10] sm:$0xff]
  %v466 = vld [vmem:[%s1 + $0x18] sm:$0xff]
  %v467 = vld [vmem:[%s1 + $0x20] sm:$0xff]
  %v468 = vld [vmem:[%s1 + $0x28] sm:$0xff]
  %v469 = vld [vmem:[%s1 + $0x30] sm:$0x1]
  %v470 = vld [vmem:[%s1 + $0x38] sm:$0x1]
  %v471 = vld [vmem:[%s1 + $0x40] sm:$0x1]
  %v472 = vld [vmem:[%s1 + $0x48] sm:$0x1]
  %v473 = vld [vmem:[%s1 + $0x50] sm:$0x1]
  %v474 = vld [vmem:[%s1 + $0x58] sm:$0x1]
  %v475 = vlaneseq
  %v476 = vshrl.u32 %v475, 7
  %v477 = vadd.s32 %v476, 8
  %vm478 = vcmp.lt.s32.totalorder %v476, 14
  %vm479 = vcmp.lt.s32.totalorder %v477, 14
  %v480 = vsel %vm478, 1, 0
  %v481 = vsel %vm479, 1, 0
  %v482 = vcvt.s32.f32 %v480
  %v483 = vcvt.s32.f32 %v481
  %v484 = vld [vmem:[#allocation2] sm:$0xff]
  %v485 = vld [vmem:[#allocation2 + $0x8] sm:$0xff]
  %v486 = vld [vmem:[#allocation2 + $0x10] sm:$0xff]
  %v487 = vld [vmem:[#allocation2 + $0x18] sm:$0xff]
  %v488 = vld [vmem:[#allocation2 + $0x20] sm:$0xff]
  %v489 = vld [vmem:[#allocation2 + $0x28] sm:$0xff]
  %v490 = vld [vmem:[#allocation2 + $0x30] sm:$0xff]
  %v491 = vld [vmem:[#allocation2 + $0x38] sm:$0xff]
  %v492 = vld [vmem:[#allocation2 + $0x40] sm:$0xff]
  %v493 = vld [vmem:[#allocation2 + $0x48] sm:$0xff]
  %v494 = vld [vmem:[#allocation2 + $0x50] sm:$0xff]
  %v495 = vld [vmem:[#allocation2 + $0x58] sm:$0xff]
  %v496 = vrot.slane %v484, 7
  %v497 = vrot.slane %v485, 7
  %v498 = vrot.slane %v486, 7
  %v499 = vrot.slane %v487, 7
  %v500 = vrot.slane %v488, 7
  %v501 = vrot.slane %v489, 7
  %v502 = vrot.slane %v490, 7
  %v503 = vrot.slane %v491, 7
  %v504 = vrot.slane %v492, 7
  %v505 = vrot.slane %v493, 7
  %v506 = vrot.slane %v494, 7
  %v507 = vrot.slane %v495, 7
  %vm508 = vcmp.lt.s32.totalorder %v476, 1
  %v509 = vsel %vm508, %v496, %v502
  %v510 = vsel %vm508, %v497, %v503
  %v511 = vsel %vm508, %v498, %v504
  %v512 = vsel %vm508, %v499, %v505
  %v513 = vsel %vm508, %v500, %v506
  %v514 = vsel %vm508, %v501, %v507
  %v515 = vsel %vm508, %v502, %v496
  %v516 = vsel %vm508, %v503, %v497
  %v517 = vsel %vm508, %v504, %v498
  %v518 = vsel %vm508, %v505, %v499
  %v519 = vsel %vm508, %v506, %v500
  %v520 = vsel %vm508, %v507, %v501
  %v521 = vlaneseq
  %v522 = vshrl.u32 %v521, 7
  %v523 = vsub.s32 0, %v522
  %v524 = vrot.slane %v463, %v523
  %v525 = vlaneseq
  %v526 = vshrl.u32 %v525, 7
  %v527 = vsub.s32 0, %v526
  %v528 = vrot.slane %v464, %v527
  %v529 = vlaneseq
  %v530 = vshrl.u32 %v529, 7
  %v531 = vsub.s32 0, %v530
  %v532 = vrot.slane %v465, %v531
  %v533 = vlaneseq
  %v534 = vshrl.u32 %v533, 7
  %v535 = vsub.s32 0, %v534
  %v536 = vrot.slane %v466, %v535
  %v537 = vlaneseq
  %v538 = vshrl.u32 %v537, 7
  %v539 = vsub.s32 0, %v538
  %v540 = vrot.slane %v467, %v539
  %v541 = vlaneseq
  %v542 = vshrl.u32 %v541, 7
  %v543 = vsub.s32 0, %v542
  %v544 = vrot.slane %v468, %v543
  %v545 = vmul.f32 %v515, %v524
  %v546 = vmul.f32 %v516, %v528
  %v547 = vmul.f32 %v517, %v532
  %v548 = vmul.f32 %v518, %v536
  %v549 = vmul.f32 %v519, %v540
  %v550 = vmul.f32 %v520, %v544
  %v551 = vmul.f32 %v509, %v524
  %v552 = vmul.f32 %v510, %v528
  %v553 = vmul.f32 %v511, %v532
  %v554 = vmul.f32 %v512, %v536
  %v555 = vmul.f32 %v513, %v540
  %v556 = vmul.f32 %v514, %v544
  %v557 = vlaneseq
  %v558 = vshrl.u32 %v557, 7
  %v559 = vsub.s32 1, %v558
  %v560 = vrot.slane %v463, %v559
  %v561 = vlaneseq
  %v562 = vshrl.u32 %v561, 7
  %v563 = vsub.s32 1, %v562
  %v564 = vrot.slane %v464, %v563
  %v565 = vlaneseq
  %v566 = vshrl.u32 %v565, 7
  %v567 = vsub.s32 1, %v566
  %v568 = vrot.slane %v465, %v567
  %v569 = vlaneseq
  %v570 = vshrl.u32 %v569, 7
  %v571 = vsub.s32 1, %v570
  %v572 = vrot.slane %v466, %v571
  %v573 = vlaneseq
  %v574 = vshrl.u32 %v573, 7
  %v575 = vsub.s32 1, %v574
  %v576 = vrot.slane %v467, %v575
  %v577 = vlaneseq
  %v578 = vshrl.u32 %v577, 7
  %v579 = vsub.s32 1, %v578
  %v580 = vrot.slane %v468, %v579
  %v581 = vmul.f32 %v484, %v560
  %v582 = vmul.f32 %v485, %v564
  %v583 = vmul.f32 %v486, %v568
  %v584 = vmul.f32 %v487, %v572
  %v585 = vmul.f32 %v488, %v576
  %v586 = vmul.f32 %v489, %v580
  %v587 = vmul.f32 %v490, %v560
  %v588 = vmul.f32 %v491, %v564
  %v589 = vmul.f32 %v492, %v568
  %v590 = vmul.f32 %v493, %v572
  %v591 = vmul.f32 %v494, %v576
  %v592 = vmul.f32 %v495, %v580
  %v593 = vadd.f32 %v545, %v581
  %v594 = vadd.f32 %v546, %v582
  %v595 = vadd.f32 %v547, %v583
  %v596 = vadd.f32 %v548, %v584
  %v597 = vadd.f32 %v549, %v585
  %v598 = vadd.f32 %v550, %v586
  %v599 = vadd.f32 %v551, %v587
  %v600 = vadd.f32 %v552, %v588
  %v601 = vadd.f32 %v553, %v589
  %v602 = vadd.f32 %v554, %v590
  %v603 = vadd.f32 %v555, %v591
  %v604 = vadd.f32 %v556, %v592
  %v605 = vrot.slane %v484, 1
  %v606 = vrot.slane %v485, 1
  %v607 = vrot.slane %v486, 1
  %v608 = vrot.slane %v487, 1
  %v609 = vrot.slane %v488, 1
  %v610 = vrot.slane %v489, 1
  %v611 = vrot.slane %v490, 1
  %v612 = vrot.slane %v491, 1
  %v613 = vrot.slane %v492, 1
  %v614 = vrot.slane %v493, 1
  %v615 = vrot.slane %v494, 1
  %v616 = vrot.slane %v495, 1
  %vm617 = vcmp.lt.s32.totalorder %v476, 7
  %v618 = vsel %vm617, %v605, %v611
  %v619 = vsel %vm617, %v606, %v612
  %v620 = vsel %vm617, %v607, %v613
  %v621 = vsel %vm617, %v608, %v614
  %v622 = vsel %vm617, %v609, %v615
  %v623 = vsel %vm617, %v610, %v616
  %v624 = vsel %vm617, %v611, %v605
  %v625 = vsel %vm617, %v612, %v606
  %v626 = vsel %vm617, %v613, %v607
  %v627 = vsel %vm617, %v614, %v608
  %v628 = vsel %vm617, %v615, %v609
  %v629 = vsel %vm617, %v616, %v610
  %v630 = vlaneseq
  %v631 = vshrl.u32 %v630, 7
  %v632 = vsub.s32 2, %v631
  %v633 = vrot.slane %v463, %v632
  %v634 = vlaneseq
  %v635 = vshrl.u32 %v634, 7
  %v636 = vsub.s32 2, %v635
  %v637 = vrot.slane %v464, %v636
  %v638 = vlaneseq
  %v639 = vshrl.u32 %v638, 7
  %v640 = vsub.s32 2, %v639
  %v641 = vrot.slane %v465, %v640
  %v642 = vlaneseq
  %v643 = vshrl.u32 %v642, 7
  %v644 = vsub.s32 2, %v643
  %v645 = vrot.slane %v466, %v644
  %v646 = vlaneseq
  %v647 = vshrl.u32 %v646, 7
  %v648 = vsub.s32 2, %v647
  %v649 = vrot.slane %v467, %v648
  %v650 = vlaneseq
  %v651 = vshrl.u32 %v650, 7
  %v652 = vsub.s32 2, %v651
  %v653 = vrot.slane %v468, %v652
  %v654 = vmul.f32 %v618, %v633
  %v655 = vmul.f32 %v619, %v637
  %v656 = vmul.f32 %v620, %v641
  %v657 = vmul.f32 %v621, %v645
  %v658 = vmul.f32 %v622, %v649
  %v659 = vmul.f32 %v623, %v653
  %v660 = vmul.f32 %v624, %v633
  %v661 = vmul.f32 %v625, %v637
  %v662 = vmul.f32 %v626, %v641
  %v663 = vmul.f32 %v627, %v645
  %v664 = vmul.f32 %v628, %v649
  %v665 = vmul.f32 %v629, %v653
  %v666 = vadd.f32 %v593, %v654
  %v667 = vadd.f32 %v594, %v655
  %v668 = vadd.f32 %v595, %v656
  %v669 = vadd.f32 %v596, %v657
  %v670 = vadd.f32 %v597, %v658
  %v671 = vadd.f32 %v598, %v659
  %v672 = vadd.f32 %v599, %v660
  %v673 = vadd.f32 %v600, %v661
  %v674 = vadd.f32 %v601, %v662
  %v675 = vadd.f32 %v602, %v663
  %v676 = vadd.f32 %v603, %v664
  %v677 = vadd.f32 %v604, %v665
  %v678 = vld [vmem:[%s42] sm:$0xff]
  %v679 = vld [vmem:[%s42 + $0x8] sm:$0xff]
  %v680 = vld [vmem:[%s42 + $0x10] sm:$0xff]
  %v681 = vld [vmem:[%s42 + $0x18] sm:$0xff]
  %v682 = vld [vmem:[%s42 + $0x20] sm:$0xff]
  %v683 = vld [vmem:[%s42 + $0x28] sm:$0xff]
  %v684 = vld [vmem:[%s42 + $0x30] sm:$0xff]
  %v685 = vld [vmem:[%s42 + $0x38] sm:$0xff]
  %v686 = vld [vmem:[%s42 + $0x40] sm:$0xff]
  %v687 = vld [vmem:[%s42 + $0x48] sm:$0xff]
  %v688 = vld [vmem:[%s42 + $0x50] sm:$0xff]
  %v689 = vld [vmem:[%s42 + $0x58] sm:$0xff]
  %v690 = vrot.slane %v678, 7
  %v691 = vrot.slane %v679, 7
  %v692 = vrot.slane %v680, 7
  %v693 = vrot.slane %v681, 7
  %v694 = vrot.slane %v682, 7
  %v695 = vrot.slane %v683, 7
  %v696 = vrot.slane %v684, 7
  %v697 = vrot.slane %v685, 7
  %v698 = vrot.slane %v686, 7
  %v699 = vrot.slane %v687, 7
  %v700 = vrot.slane %v688, 7
  %v701 = vrot.slane %v689, 7
  %v702 = vsel %vm508, %v690, %v696
  %v703 = vsel %vm508, %v691, %v697
  %v704 = vsel %vm508, %v692, %v698
  %v705 = vsel %vm508, %v693, %v699
  %v706 = vsel %vm508, %v694, %v700
  %v707 = vsel %vm508, %v695, %v701
  %v708 = vsel %vm508, %v696, %v690
  %v709 = vsel %vm508, %v697, %v691
  %v710 = vsel %vm508, %v698, %v692
  %v711 = vsel %vm508, %v699, %v693
  %v712 = vsel %vm508, %v700, %v694
  %v713 = vsel %vm508, %v701, %v695
  %v714 = vlaneseq
  %v715 = vshrl.u32 %v714, 7
  %v716 = vsub.s32 3, %v715
  %v717 = vrot.slane %v463, %v716
  %v718 = vlaneseq
  %v719 = vshrl.u32 %v718, 7
  %v720 = vsub.s32 3, %v719
  %v721 = vrot.slane %v464, %v720
  %v722 = vlaneseq
  %v723 = vshrl.u32 %v722, 7
  %v724 = vsub.s32 3, %v723
  %v725 = vrot.slane %v465, %v724
  %v726 = vlaneseq
  %v727 = vshrl.u32 %v726, 7
  %v728 = vsub.s32 3, %v727
  %v729 = vrot.slane %v466, %v728
  %v730 = vlaneseq
  %v731 = vshrl.u32 %v730, 7
  %v732 = vsub.s32 3, %v731
  %v733 = vrot.slane %v467, %v732
  %v734 = vlaneseq
  %v735 = vshrl.u32 %v734, 7
  %v736 = vsub.s32 3, %v735
  %v737 = vrot.slane %v468, %v736
  %v738 = vmul.f32 %v708, %v717
  %v739 = vmul.f32 %v709, %v721
  %v740 = vmul.f32 %v710, %v725
  %v741 = vmul.f32 %v711, %v729
  %v742 = vmul.f32 %v712, %v733
  %v743 = vmul.f32 %v713, %v737
  %v744 = vmul.f32 %v702, %v717
  %v745 = vmul.f32 %v703, %v721
  %v746 = vmul.f32 %v704, %v725
  %v747 = vmul.f32 %v705, %v729
  %v748 = vmul.f32 %v706, %v733
  %v749 = vmul.f32 %v707, %v737
  %v750 = vlaneseq
  %v751 = vshrl.u32 %v750, 7
  %v752 = vsub.s32 4, %v751
  %v753 = vrot.slane %v463, %v752
  %v754 = vlaneseq
  %v755 = vshrl.u32 %v754, 7
  %v756 = vsub.s32 4, %v755
  %v757 = vrot.slane %v464, %v756
  %v758 = vlaneseq
  %v759 = vshrl.u32 %v758, 7
  %v760 = vsub.s32 4, %v759
  %v761 = vrot.slane %v465, %v760
  %v762 = vlaneseq
  %v763 = vshrl.u32 %v762, 7
  %v764 = vsub.s32 4, %v763
  %v765 = vrot.slane %v466, %v764
  %v766 = vlaneseq
  %v767 = vshrl.u32 %v766, 7
  %v768 = vsub.s32 4, %v767
  %v769 = vrot.slane %v467, %v768
  %v770 = vlaneseq
  %v771 = vshrl.u32 %v770, 7
  %v772 = vsub.s32 4, %v771
  %v773 = vrot.slane %v468, %v772
  %v774 = vmul.f32 %v678, %v753
  %v775 = vmul.f32 %v679, %v757
  %v776 = vmul.f32 %v680, %v761
  %v777 = vmul.f32 %v681, %v765
  %v778 = vmul.f32 %v682, %v769
  %v779 = vmul.f32 %v683, %v773
  %v780 = vmul.f32 %v684, %v753
  %v781 = vmul.f32 %v685, %v757
  %v782 = vmul.f32 %v686, %v761
  %v783 = vmul.f32 %v687, %v765
  %v784 = vmul.f32 %v688, %v769
  %v785 = vmul.f32 %v689, %v773
  %v786 = vadd.f32 %v738, %v774
  %v787 = vadd.f32 %v739, %v775
  %v788 = vadd.f32 %v740, %v776
  %v789 = vadd.f32 %v741, %v777
  %v790 = vadd.f32 %v742, %v778
  %v791 = vadd.f32 %v743, %v779
  %v792 = vadd.f32 %v744, %v780
  %v793 = vadd.f32 %v745, %v781
  %v794 = vadd.f32 %v746, %v782
  %v795 = vadd.f32 %v747, %v783
  %v796 = vadd.f32 %v748, %v784
  %v797 = vadd.f32 %v749, %v785
  %v798 = vrot.slane %v678, 1
  %v799 = vrot.slane %v679, 1
  %v800 = vrot.slane %v680, 1
  %v801 = vrot.slane %v681, 1
  %v802 = vrot.slane %v682, 1
  %v803 = vrot.slane %v683, 1
  %v804 = vrot.slane %v684, 1
  %v805 = vrot.slane %v685, 1
  %v806 = vrot.slane %v686, 1
  %v807 = vrot.slane %v687, 1
  %v808 = vrot.slane %v688, 1
  %v809 = vrot.slane %v689, 1
  %v810 = vsel %vm617, %v798, %v804
  %v811 = vsel %vm617, %v799, %v805
  %v812 = vsel %vm617, %v800, %v806
  %v813 = vsel %vm617, %v801, %v807
  %v814 = vsel %vm617, %v802, %v808
  %v815 = vsel %vm617, %v803, %v809
  %v816 = vsel %vm617, %v804, %v798
  %v817 = vsel %vm617, %v805, %v799
  %v818 = vsel %vm617, %v806, %v800
  %v819 = vsel %vm617, %v807, %v801
  %v820 = vsel %vm617, %v808, %v802
  %v821 = vsel %vm617, %v809, %v803
  %v822 = vlaneseq
  %v823 = vshrl.u32 %v822, 7
  %v824 = vsub.s32 5, %v823
  %v825 = vrot.slane %v463, %v824
  %v826 = vlaneseq
  %v827 = vshrl.u32 %v826, 7
  %v828 = vsub.s32 5, %v827
  %v829 = vrot.slane %v464, %v828
  %v830 = vlaneseq
  %v831 = vshrl.u32 %v830, 7
  %v832 = vsub.s32 5, %v831
  %v833 = vrot.slane %v465, %v832
  %v834 = vlaneseq
  %v835 = vshrl.u32 %v834, 7
  %v836 = vsub.s32 5, %v835
  %v837 = vrot.slane %v466, %v836
  %v838 = vlaneseq
  %v839 = vshrl.u32 %v838, 7
  %v840 = vsub.s32 5, %v839
  %v841 = vrot.slane %v467, %v840
  %v842 = vlaneseq
  %v843 = vshrl.u32 %v842, 7
  %v844 = vsub.s32 5, %v843
  %v845 = vrot.slane %v468, %v844
  %v846 = vmul.f32 %v810, %v825
  %v847 = vmul.f32 %v811, %v829
  %v848 = vmul.f32 %v812, %v833
  %v849 = vmul.f32 %v813, %v837
  %v850 = vmul.f32 %v814, %v841
  %v851 = vmul.f32 %v815, %v845
  %v852 = vmul.f32 %v816, %v825
  %v853 = vmul.f32 %v817, %v829
  %v854 = vmul.f32 %v818, %v833
  %v855 = vmul.f32 %v819, %v837
  %v856 = vmul.f32 %v820, %v841
  %v857 = vmul.f32 %v821, %v845
  %v858 = vadd.f32 %v786, %v846
  %v859 = vadd.f32 %v787, %v847
  %v860 = vadd.f32 %v788, %v848
  %v861 = vadd.f32 %v789, %v849
  %v862 = vadd.f32 %v790, %v850
  %v863 = vadd.f32 %v791, %v851
  %v864 = vadd.f32 %v792, %v852
  %v865 = vadd.f32 %v793, %v853
  %v866 = vadd.f32 %v794, %v854
  %v867 = vadd.f32 %v795, %v855
  %v868 = vadd.f32 %v796, %v856
  %v869 = vadd.f32 %v797, %v857
  %v870 = vadd.f32 %v666, %v858
  %v871 = vadd.f32 %v667, %v859
  %v872 = vadd.f32 %v668, %v860
  %v873 = vadd.f32 %v669, %v861
  %v874 = vadd.f32 %v670, %v862
  %v875 = vadd.f32 %v671, %v863
  %v876 = vadd.f32 %v672, %v864
  %v877 = vadd.f32 %v673, %v865
  %v878 = vadd.f32 %v674, %v866
  %v879 = vadd.f32 %v675, %v867
  %v880 = vadd.f32 %v676, %v868
  %v881 = vadd.f32 %v677, %v869
  %s882 = scalar_lea.vmem [#allocation2], 192
  %v883 = vld [vmem:[%s882] sm:$0xff]
  %v884 = vld [vmem:[%s882 + $0x8] sm:$0xff]
  %v885 = vld [vmem:[%s882 + $0x10] sm:$0xff]
  %v886 = vld [vmem:[%s882 + $0x18] sm:$0xff]
  %v887 = vld [vmem:[%s882 + $0x20] sm:$0xff]
  %v888 = vld [vmem:[%s882 + $0x28] sm:$0xff]
  %v889 = vld [vmem:[%s882 + $0x30] sm:$0xff]
  %v890 = vld [vmem:[%s882 + $0x38] sm:$0xff]
  %v891 = vld [vmem:[%s882 + $0x40] sm:$0xff]
  %v892 = vld [vmem:[%s882 + $0x48] sm:$0xff]
  %v893 = vld [vmem:[%s882 + $0x50] sm:$0xff]
  %v894 = vld [vmem:[%s882 + $0x58] sm:$0xff]
  %v895 = vrot.slane %v883, 7
  %v896 = vrot.slane %v884, 7
  %v897 = vrot.slane %v885, 7
  %v898 = vrot.slane %v886, 7
  %v899 = vrot.slane %v887, 7
  %v900 = vrot.slane %v888, 7
  %v901 = vrot.slane %v889, 7
  %v902 = vrot.slane %v890, 7
  %v903 = vrot.slane %v891, 7
  %v904 = vrot.slane %v892, 7
  %v905 = vrot.slane %v893, 7
  %v906 = vrot.slane %v894, 7
  %v907 = vsel %vm508, %v895, %v901
  %v908 = vsel %vm508, %v896, %v902
  %v909 = vsel %vm508, %v897, %v903
  %v910 = vsel %vm508, %v898, %v904
  %v911 = vsel %vm508, %v899, %v905
  %v912 = vsel %vm508, %v900, %v906
  %v913 = vsel %vm508, %v901, %v895
  %v914 = vsel %vm508, %v902, %v896
  %v915 = vsel %vm508, %v903, %v897
  %v916 = vsel %vm508, %v904, %v898
  %v917 = vsel %vm508, %v905, %v899
  %v918 = vsel %vm508, %v906, %v900
  %v919 = vlaneseq
  %v920 = vshrl.u32 %v919, 7
  %v921 = vsub.s32 6, %v920
  %v922 = vrot.slane %v463, %v921
  %v923 = vlaneseq
  %v924 = vshrl.u32 %v923, 7
  %v925 = vsub.s32 6, %v924
  %v926 = vrot.slane %v464, %v925
  %v927 = vlaneseq
  %v928 = vshrl.u32 %v927, 7
  %v929 = vsub.s32 6, %v928
  %v930 = vrot.slane %v465, %v929
  %v931 = vlaneseq
  %v932 = vshrl.u32 %v931, 7
  %v933 = vsub.s32 6, %v932
  %v934 = vrot.slane %v466, %v933
  %v935 = vlaneseq
  %v936 = vshrl.u32 %v935, 7
  %v937 = vsub.s32 6, %v936
  %v938 = vrot.slane %v467, %v937
  %v939 = vlaneseq
  %v940 = vshrl.u32 %v939, 7
  %v941 = vsub.s32 6, %v940
  %v942 = vrot.slane %v468, %v941
  %v943 = vmul.f32 %v913, %v922
  %v944 = vmul.f32 %v914, %v926
  %v945 = vmul.f32 %v915, %v930
  %v946 = vmul.f32 %v916, %v934
  %v947 = vmul.f32 %v917, %v938
  %v948 = vmul.f32 %v918, %v942
  %v949 = vmul.f32 %v907, %v922
  %v950 = vmul.f32 %v908, %v926
  %v951 = vmul.f32 %v909, %v930
  %v952 = vmul.f32 %v910, %v934
  %v953 = vmul.f32 %v911, %v938
  %v954 = vmul.f32 %v912, %v942
  %v955 = vlaneseq
  %v956 = vshrl.u32 %v955, 7
  %v957 = vsub.s32 7, %v956
  %v958 = vrot.slane %v463, %v957
  %v959 = vlaneseq
  %v960 = vshrl.u32 %v959, 7
  %v961 = vsub.s32 7, %v960
  %v962 = vrot.slane %v464, %v961
  %v963 = vlaneseq
  %v964 = vshrl.u32 %v963, 7
  %v965 = vsub.s32 7, %v964
  %v966 = vrot.slane %v465, %v965
  %v967 = vlaneseq
  %v968 = vshrl.u32 %v967, 7
  %v969 = vsub.s32 7, %v968
  %v970 = vrot.slane %v466, %v969
  %v971 = vlaneseq
  %v972 = vshrl.u32 %v971, 7
  %v973 = vsub.s32 7, %v972
  %v974 = vrot.slane %v467, %v973
  %v975 = vlaneseq
  %v976 = vshrl.u32 %v975, 7
  %v977 = vsub.s32 7, %v976
  %v978 = vrot.slane %v468, %v977
  %v979 = vmul.f32 %v883, %v958
  %v980 = vmul.f32 %v884, %v962
  %v981 = vmul.f32 %v885, %v966
  %v982 = vmul.f32 %v886, %v970
  %v983 = vmul.f32 %v887, %v974
  %v984 = vmul.f32 %v888, %v978
  %v985 = vmul.f32 %v889, %v958
  %v986 = vmul.f32 %v890, %v962
  %v987 = vmul.f32 %v891, %v966
  %v988 = vmul.f32 %v892, %v970
  %v989 = vmul.f32 %v893, %v974
  %v990 = vmul.f32 %v894, %v978
  %v991 = vadd.f32 %v943, %v979
  %v992 = vadd.f32 %v944, %v980
  %v993 = vadd.f32 %v945, %v981
  %v994 = vadd.f32 %v946, %v982
  %v995 = vadd.f32 %v947, %v983
  %v996 = vadd.f32 %v948, %v984
  %v997 = vadd.f32 %v949, %v985
  %v998 = vadd.f32 %v950, %v986
  %v999 = vadd.f32 %v951, %v987
  %v1000 = vadd.f32 %v952, %v988
  %v1001 = vadd.f32 %v953, %v989
  %v1002 = vadd.f32 %v954, %v990
  %v1003 = vrot.slane %v883, 1
  %v1004 = vrot.slane %v884, 1
  %v1005 = vrot.slane %v885, 1
  %v1006 = vrot.slane %v886, 1
  %v1007 = vrot.slane %v887, 1
  %v1008 = vrot.slane %v888, 1
  %v1009 = vrot.slane %v889, 1
  %v1010 = vrot.slane %v890, 1
  %v1011 = vrot.slane %v891, 1
  %v1012 = vrot.slane %v892, 1
  %v1013 = vrot.slane %v893, 1
  %v1014 = vrot.slane %v894, 1
  %v1015 = vsel %vm617, %v1003, %v1009
  %v1016 = vsel %vm617, %v1004, %v1010
  %v1017 = vsel %vm617, %v1005, %v1011
  %v1018 = vsel %vm617, %v1006, %v1012
  %v1019 = vsel %vm617, %v1007, %v1013
  %v1020 = vsel %vm617, %v1008, %v1014
  %v1021 = vsel %vm617, %v1009, %v1003
  %v1022 = vsel %vm617, %v1010, %v1004
  %v1023 = vsel %vm617, %v1011, %v1005
  %v1024 = vsel %vm617, %v1012, %v1006
  %v1025 = vsel %vm617, %v1013, %v1007
  %v1026 = vsel %vm617, %v1014, %v1008
  %v1027 = vlaneseq
  %v1028 = vshrl.u32 %v1027, 7
  %v1029 = vsub.s32 0, %v1028
  %v1030 = vrot.slane %v469, %v1029
  %v1031 = vlaneseq
  %v1032 = vshrl.u32 %v1031, 7
  %v1033 = vsub.s32 0, %v1032
  %v1034 = vrot.slane %v470, %v1033
  %v1035 = vlaneseq
  %v1036 = vshrl.u32 %v1035, 7
  %v1037 = vsub.s32 0, %v1036
  %v1038 = vrot.slane %v471, %v1037
  %v1039 = vlaneseq
  %v1040 = vshrl.u32 %v1039, 7
  %v1041 = vsub.s32 0, %v1040
  %v1042 = vrot.slane %v472, %v1041
  %v1043 = vlaneseq
  %v1044 = vshrl.u32 %v1043, 7
  %v1045 = vsub.s32 0, %v1044
  %v1046 = vrot.slane %v473, %v1045
  %v1047 = vlaneseq
  %v1048 = vshrl.u32 %v1047, 7
  %v1049 = vsub.s32 0, %v1048
  %v1050 = vrot.slane %v474, %v1049
  %v1051 = vmul.f32 %v1015, %v1030
  %v1052 = vmul.f32 %v1016, %v1034
  %v1053 = vmul.f32 %v1017, %v1038
  %v1054 = vmul.f32 %v1018, %v1042
  %v1055 = vmul.f32 %v1019, %v1046
  %v1056 = vmul.f32 %v1020, %v1050
  %v1057 = vmul.f32 %v1021, %v1030
  %v1058 = vmul.f32 %v1022, %v1034
  %v1059 = vmul.f32 %v1023, %v1038
  %v1060 = vmul.f32 %v1024, %v1042
  %v1061 = vmul.f32 %v1025, %v1046
  %v1062 = vmul.f32 %v1026, %v1050
  %v1063 = vadd.f32 %v991, %v1051
  %v1064 = vadd.f32 %v992, %v1052
  %v1065 = vadd.f32 %v993, %v1053
  %v1066 = vadd.f32 %v994, %v1054
  %v1067 = vadd.f32 %v995, %v1055
  %v1068 = vadd.f32 %v996, %v1056
  %v1069 = vadd.f32 %v997, %v1057
  %v1070 = vadd.f32 %v998, %v1058
  %v1071 = vadd.f32 %v999, %v1059
  %v1072 = vadd.f32 %v1000, %v1060
  %v1073 = vadd.f32 %v1001, %v1061
  %v1074 = vadd.f32 %v1002, %v1062
  %v1075 = vadd.f32 %v870, %v1063
  %v1076 = vadd.f32 %v871, %v1064
  %v1077 = vadd.f32 %v872, %v1065
  %v1078 = vadd.f32 %v873, %v1066
  %v1079 = vadd.f32 %v874, %v1067
  %v1080 = vadd.f32 %v875, %v1068
  %v1081 = vadd.f32 %v876, %v1069
  %v1082 = vadd.f32 %v877, %v1070
  %v1083 = vadd.f32 %v878, %v1071
  %v1084 = vadd.f32 %v879, %v1072
  %v1085 = vadd.f32 %v880, %v1073
  %v1086 = vadd.f32 %v881, %v1074
  %1087 = vst [vmem:[#allocation3] sm:$0xff] %v1075
  %1088 = vst [vmem:[#allocation3 + $0x8] sm:$0xff] %v1076
  %1089 = vst [vmem:[#allocation3 + $0x10] sm:$0xff] %v1077
  %1090 = vst [vmem:[#allocation3 + $0x18] sm:$0xff] %v1078
  %1091 = vst [vmem:[#allocation3 + $0x20] sm:$0xff] %v1079
  %1092 = vst [vmem:[#allocation3 + $0x28] sm:$0xff] %v1080
  %1093 = vst [vmem:[#allocation3 + $0x30] sm:$0xff] %v1081
  %1094 = vst [vmem:[#allocation3 + $0x38] sm:$0xff] %v1082
  %1095 = vst [vmem:[#allocation3 + $0x40] sm:$0xff] %v1083
  %1096 = vst [vmem:[#allocation3 + $0x48] sm:$0xff] %v1084
  %1097 = vst [vmem:[#allocation3 + $0x50] sm:$0xff] %v1085
  %1098 = vst [vmem:[#allocation3 + $0x58] sm:$0xff] %v1086
  %v1099 = vmul.f32 %v1075, %v482
  %v1100 = vmul.f32 %v1076, %v482
  %v1101 = vmul.f32 %v1077, %v482
  %v1102 = vmul.f32 %v1078, %v482
  %v1103 = vmul.f32 %v1079, %v482
  %v1104 = vmul.f32 %v1080, %v482
  %v1105 = vmul.f32 %v1081, %v483
  %v1106 = vmul.f32 %v1082, %v483
  %v1107 = vmul.f32 %v1083, %v483
  %v1108 = vmul.f32 %v1084, %v483
  %v1109 = vmul.f32 %v1085, %v483
  %v1110 = vmul.f32 %v1086, %v483
  %v1111 = vadd.f32 %v1099, %v1105
  %v1112 = vrot.slane %v1111, 4
  %v1113 = vadd.f32 %v1111, %v1112
  %v1114 = vrot.slane %v1113, 2
  %v1115 = vadd.f32 %v1113, %v1114
  %v1116 = vrot.slane %v1115, 1
  %v1117 = vadd.f32 %v1115, %v1116
  %v1118 = vadd.f32 %v1100, %v1106
  %v1119 = vrot.slane %v1118, 4
  %v1120 = vadd.f32 %v1118, %v1119
  %v1121 = vrot.slane %v1120, 2
  %v1122 = vadd.f32 %v1120, %v1121
  %v1123 = vrot.slane %v1122, 1
  %v1124 = vadd.f32 %v1122, %v1123
  %v1125 = vadd.f32 %v1101, %v1107
  %v1126 = vrot.slane %v1125, 4
  %v1127 = vadd.f32 %v1125, %v1126
  %v1128 = vrot.slane %v1127, 2
  %v1129 = vadd.f32 %v1127, %v1128
  %v1130 = vrot.slane %v1129, 1
  %v1131 = vadd.f32 %v1129, %v1130
  %v1132 = vadd.f32 %v1102, %v1108
  %v1133 = vrot.slane %v1132, 4
  %v1134 = vadd.f32 %v1132, %v1133
  %v1135 = vrot.slane %v1134, 2
  %v1136 = vadd.f32 %v1134, %v1135
  %v1137 = vrot.slane %v1136, 1
  %v1138 = vadd.f32 %v1136, %v1137
  %v1139 = vadd.f32 %v1103, %v1109
  %v1140 = vrot.slane %v1139, 4
  %v1141 = vadd.f32 %v1139, %v1140
  %v1142 = vrot.slane %v1141, 2
  %v1143 = vadd.f32 %v1141, %v1142
  %v1144 = vrot.slane %v1143, 1
  %v1145 = vadd.f32 %v1143, %v1144
  %v1146 = vadd.f32 %v1104, %v1110
  %v1147 = vrot.slane %v1146, 4
  %v1148 = vadd.f32 %v1146, %v1147
  %v1149 = vrot.slane %v1148, 2
  %v1150 = vadd.f32 %v1148, %v1149
  %v1151 = vrot.slane %v1150, 1
  %v1152 = vadd.f32 %v1150, %v1151
  %v1153 = vadd.f32 %v1117, 0.0
  %v1154 = vadd.f32 %v1124, 0.0
  %v1155 = vadd.f32 %v1131, 0.0
  %v1156 = vadd.f32 %v1138, 0.0
  %v1157 = vadd.f32 %v1145, 0.0
  %v1158 = vadd.f32 %v1152, 0.0
  %v1159 = vmul.f32 %v1099, %v1075
  %v1160 = vmul.f32 %v1100, %v1076
  %v1161 = vmul.f32 %v1101, %v1077
  %v1162 = vmul.f32 %v1102, %v1078
  %v1163 = vmul.f32 %v1103, %v1079
  %v1164 = vmul.f32 %v1104, %v1080
  %v1165 = vmul.f32 %v1105, %v1081
  %v1166 = vmul.f32 %v1106, %v1082
  %v1167 = vmul.f32 %v1107, %v1083
  %v1168 = vmul.f32 %v1108, %v1084
  %v1169 = vmul.f32 %v1109, %v1085
  %v1170 = vmul.f32 %v1110, %v1086
  %v1171 = vadd.f32 %v1159, %v1165
  %v1172 = vrot.slane %v1171, 4
  %v1173 = vadd.f32 %v1171, %v1172
  %v1174 = vrot.slane %v1173, 2
  %v1175 = vadd.f32 %v1173, %v1174
  %v1176 = vrot.slane %v1175, 1
  %v1177 = vadd.f32 %v1175, %v1176
  %v1178 = vadd.f32 %v1160, %v1166
  %v1179 = vrot.slane %v1178, 4
  %v1180 = vadd.f32 %v1178, %v1179
  %v1181 = vrot.slane %v1180, 2
  %v1182 = vadd.f32 %v1180, %v1181
  %v1183 = vrot.slane %v1182, 1
  %v1184 = vadd.f32 %v1182, %v1183
  %v1185 = vadd.f32 %v1161, %v1167
  %v1186 = vrot.slane %v1185, 4
  %v1187 = vadd.f32 %v1185, %v1186
  %v1188 = vrot.slane %v1187, 2
  %v1189 = vadd.f32 %v1187, %v1188
  %v1190 = vrot.slane %v1189, 1
  %v1191 = vadd.f32 %v1189, %v1190
  %v1192 = vadd.f32 %v1162, %v1168
  %v1193 = vrot.slane %v1192, 4
  %v1194 = vadd.f32 %v1192, %v1193
  %v1195 = vrot.slane %v1194, 2
  %v1196 = vadd.f32 %v1194, %v1195
  %v1197 = vrot.slane %v1196, 1
  %v1198 = vadd.f32 %v1196, %v1197
  %v1199 = vadd.f32 %v1163, %v1169
  %v1200 = vrot.slane %v1199, 4
  %v1201 = vadd.f32 %v1199, %v1200
  %v1202 = vrot.slane %v1201, 2
  %v1203 = vadd.f32 %v1201, %v1202
  %v1204 = vrot.slane %v1203, 1
  %v1205 = vadd.f32 %v1203, %v1204
  %v1206 = vadd.f32 %v1164, %v1170
  %v1207 = vrot.slane %v1206, 4
  %v1208 = vadd.f32 %v1206, %v1207
  %v1209 = vrot.slane %v1208, 2
  %v1210 = vadd.f32 %v1208, %v1209
  %v1211 = vrot.slane %v1210, 1
  %v1212 = vadd.f32 %v1210, %v1211
  %v1213 = vadd.f32 %v1177, 0.0
  %v1214 = vadd.f32 %v1184, 0.0
  %v1215 = vadd.f32 %v1191, 0.0
  %v1216 = vadd.f32 %v1198, 0.0
  %v1217 = vadd.f32 %v1205, 0.0
  %v1218 = vadd.f32 %v1212, 0.0
  %v1219 = vld [vmem:[%s42] sm:$0xff]
  %v1220 = vld [vmem:[%s42 + $0x8] sm:$0xff]
  %v1221 = vld [vmem:[%s42 + $0x10] sm:$0xff]
  %v1222 = vld [vmem:[%s42 + $0x18] sm:$0xff]
  %v1223 = vld [vmem:[%s42 + $0x20] sm:$0xff]
  %v1224 = vld [vmem:[%s42 + $0x28] sm:$0xff]
  %v1225 = vld [vmem:[%s42 + $0x30] sm:$0xff]
  %v1226 = vld [vmem:[%s42 + $0x38] sm:$0xff]
  %v1227 = vld [vmem:[%s42 + $0x40] sm:$0xff]
  %v1228 = vld [vmem:[%s42 + $0x48] sm:$0xff]
  %v1229 = vld [vmem:[%s42 + $0x50] sm:$0xff]
  %v1230 = vld [vmem:[%s42 + $0x58] sm:$0xff]
  %v1231 = vrot.slane %v1219, 7
  %v1232 = vrot.slane %v1220, 7
  %v1233 = vrot.slane %v1221, 7
  %v1234 = vrot.slane %v1222, 7
  %v1235 = vrot.slane %v1223, 7
  %v1236 = vrot.slane %v1224, 7
  %v1237 = vrot.slane %v1225, 7
  %v1238 = vrot.slane %v1226, 7
  %v1239 = vrot.slane %v1227, 7
  %v1240 = vrot.slane %v1228, 7
  %v1241 = vrot.slane %v1229, 7
  %v1242 = vrot.slane %v1230, 7
  %v1243 = vsel %vm508, %v1231, %v1237
  %v1244 = vsel %vm508, %v1232, %v1238
  %v1245 = vsel %vm508, %v1233, %v1239
  %v1246 = vsel %vm508, %v1234, %v1240
  %v1247 = vsel %vm508, %v1235, %v1241
  %v1248 = vsel %vm508, %v1236, %v1242
  %v1249 = vsel %vm508, %v1237, %v1231
  %v1250 = vsel %vm508, %v1238, %v1232
  %v1251 = vsel %vm508, %v1239, %v1233
  %v1252 = vsel %vm508, %v1240, %v1234
  %v1253 = vsel %vm508, %v1241, %v1235
  %v1254 = vsel %vm508, %v1242, %v1236
  %v1255 = vmul.f32 %v1249, %v524
  %v1256 = vmul.f32 %v1250, %v528
  %v1257 = vmul.f32 %v1251, %v532
  %v1258 = vmul.f32 %v1252, %v536
  %v1259 = vmul.f32 %v1253, %v540
  %v1260 = vmul.f32 %v1254, %v544
  %v1261 = vmul.f32 %v1243, %v524
  %v1262 = vmul.f32 %v1244, %v528
  %v1263 = vmul.f32 %v1245, %v532
  %v1264 = vmul.f32 %v1246, %v536
  %v1265 = vmul.f32 %v1247, %v540
  %v1266 = vmul.f32 %v1248, %v544
  %v1267 = vmul.f32 %v1219, %v560
  %v1268 = vmul.f32 %v1220, %v564
  %v1269 = vmul.f32 %v1221, %v568
  %v1270 = vmul.f32 %v1222, %v572
  %v1271 = vmul.f32 %v1223, %v576
  %v1272 = vmul.f32 %v1224, %v580
  %v1273 = vmul.f32 %v1225, %v560
  %v1274 = vmul.f32 %v1226, %v564
  %v1275 = vmul.f32 %v1227, %v568
  %v1276 = vmul.f32 %v1228, %v572
  %v1277 = vmul.f32 %v1229, %v576
  %v1278 = vmul.f32 %v1230, %v580
  %v1279 = vadd.f32 %v1255, %v1267
  %v1280 = vadd.f32 %v1256, %v1268
  %v1281 = vadd.f32 %v1257, %v1269
  %v1282 = vadd.f32 %v1258, %v1270
  %v1283 = vadd.f32 %v1259, %v1271
  %v1284 = vadd.f32 %v1260, %v1272
  %v1285 = vadd.f32 %v1261, %v1273
  %v1286 = vadd.f32 %v1262, %v1274
  %v1287 = vadd.f32 %v1263, %v1275
  %v1288 = vadd.f32 %v1264, %v1276
  %v1289 = vadd.f32 %v1265, %v1277
  %v1290 = vadd.f32 %v1266, %v1278
  %v1291 = vrot.slane %v1219, 1
  %v1292 = vrot.slane %v1220, 1
  %v1293 = vrot.slane %v1221, 1
  %v1294 = vrot.slane %v1222, 1
  %v1295 = vrot.slane %v1223, 1
  %v1296 = vrot.slane %v1224, 1
  %v1297 = vrot.slane %v1225, 1
  %v1298 = vrot.slane %v1226, 1
  %v1299 = vrot.slane %v1227, 1
  %v1300 = vrot.slane %v1228, 1
  %v1301 = vrot.slane %v1229, 1
  %v1302 = vrot.slane %v1230, 1
  %v1303 = vsel %vm617, %v1291, %v1297
  %v1304 = vsel %vm617, %v1292, %v1298
  %v1305 = vsel %vm617, %v1293, %v1299
  %v1306 = vsel %vm617, %v1294, %v1300
  %v1307 = vsel %vm617, %v1295, %v1301
  %v1308 = vsel %vm617, %v1296, %v1302
  %v1309 = vsel %vm617, %v1297, %v1291
  %v1310 = vsel %vm617, %v1298, %v1292
  %v1311 = vsel %vm617, %v1299, %v1293
  %v1312 = vsel %vm617, %v1300, %v1294
  %v1313 = vsel %vm617, %v1301, %v1295
  %v1314 = vsel %vm617, %v1302, %v1296
  %v1315 = vmul.f32 %v1303, %v633
  %v1316 = vmul.f32 %v1304, %v637
  %v1317 = vmul.f32 %v1305, %v641
  %v1318 = vmul.f32 %v1306, %v645
  %v1319 = vmul.f32 %v1307, %v649
  %v1320 = vmul.f32 %v1308, %v653
  %v1321 = vmul.f32 %v1309, %v633
  %v1322 = vmul.f32 %v1310, %v637
  %v1323 = vmul.f32 %v1311, %v641
  %v1324 = vmul.f32 %v1312, %v645
  %v1325 = vmul.f32 %v1313, %v649
  %v1326 = vmul.f32 %v1314, %v653
  %v1327 = vadd.f32 %v1279, %v1315
  %v1328 = vadd.f32 %v1280, %v1316
  %v1329 = vadd.f32 %v1281, %v1317
  %v1330 = vadd.f32 %v1282, %v1318
  %v1331 = vadd.f32 %v1283, %v1319
  %v1332 = vadd.f32 %v1284, %v1320
  %v1333 = vadd.f32 %v1285, %v1321
  %v1334 = vadd.f32 %v1286, %v1322
  %v1335 = vadd.f32 %v1287, %v1323
  %v1336 = vadd.f32 %v1288, %v1324
  %v1337 = vadd.f32 %v1289, %v1325
  %v1338 = vadd.f32 %v1290, %v1326
  %v1339 = vld [vmem:[%s882] sm:$0xff]
  %v1340 = vld [vmem:[%s882 + $0x8] sm:$0xff]
  %v1341 = vld [vmem:[%s882 + $0x10] sm:$0xff]
  %v1342 = vld [vmem:[%s882 + $0x18] sm:$0xff]
  %v1343 = vld [vmem:[%s882 + $0x20] sm:$0xff]
  %v1344 = vld [vmem:[%s882 + $0x28] sm:$0xff]
  %v1345 = vld [vmem:[%s882 + $0x30] sm:$0xff]
  %v1346 = vld [vmem:[%s882 + $0x38] sm:$0xff]
  %v1347 = vld [vmem:[%s882 + $0x40] sm:$0xff]
  %v1348 = vld [vmem:[%s882 + $0x48] sm:$0xff]
  %v1349 = vld [vmem:[%s882 + $0x50] sm:$0xff]
  %v1350 = vld [vmem:[%s882 + $0x58] sm:$0xff]
  %v1351 = vrot.slane %v1339, 7
  %v1352 = vrot.slane %v1340, 7
  %v1353 = vrot.slane %v1341, 7
  %v1354 = vrot.slane %v1342, 7
  %v1355 = vrot.slane %v1343, 7
  %v1356 = vrot.slane %v1344, 7
  %v1357 = vrot.slane %v1345, 7
  %v1358 = vrot.slane %v1346, 7
  %v1359 = vrot.slane %v1347, 7
  %v1360 = vrot.slane %v1348, 7
  %v1361 = vrot.slane %v1349, 7
  %v1362 = vrot.slane %v1350, 7
  %v1363 = vsel %vm508, %v1351, %v1357
  %v1364 = vsel %vm508, %v1352, %v1358
  %v1365 = vsel %vm508, %v1353, %v1359
  %v1366 = vsel %vm508, %v1354, %v1360
  %v1367 = vsel %vm508, %v1355, %v1361
  %v1368 = vsel %vm508, %v1356, %v1362
  %v1369 = vsel %vm508, %v1357, %v1351
  %v1370 = vsel %vm508, %v1358, %v1352
  %v1371 = vsel %vm508, %v1359, %v1353
  %v1372 = vsel %vm508, %v1360, %v1354
  %v1373 = vsel %vm508, %v1361, %v1355
  %v1374 = vsel %vm508, %v1362, %v1356
  %v1375 = vmul.f32 %v1369, %v717
  %v1376 = vmul.f32 %v1370, %v721
  %v1377 = vmul.f32 %v1371, %v725
  %v1378 = vmul.f32 %v1372, %v729
  %v1379 = vmul.f32 %v1373, %v733
  %v1380 = vmul.f32 %v1374, %v737
  %v1381 = vmul.f32 %v1363, %v717
  %v1382 = vmul.f32 %v1364, %v721
  %v1383 = vmul.f32 %v1365, %v725
  %v1384 = vmul.f32 %v1366, %v729
  %v1385 = vmul.f32 %v1367, %v733
  %v1386 = vmul.f32 %v1368, %v737
  %v1387 = vmul.f32 %v1339, %v753
  %v1388 = vmul.f32 %v1340, %v757
  %v1389 = vmul.f32 %v1341, %v761
  %v1390 = vmul.f32 %v1342, %v765
  %v1391 = vmul.f32 %v1343, %v769
  %v1392 = vmul.f32 %v1344, %v773
  %v1393 = vmul.f32 %v1345, %v753
  %v1394 = vmul.f32 %v1346, %v757
  %v1395 = vmul.f32 %v1347, %v761
  %v1396 = vmul.f32 %v1348, %v765
  %v1397 = vmul.f32 %v1349, %v769
  %v1398 = vmul.f32 %v1350, %v773
  %v1399 = vadd.f32 %v1375, %v1387
  %v1400 = vadd.f32 %v1376, %v1388
  %v1401 = vadd.f32 %v1377, %v1389
  %v1402 = vadd.f32 %v1378, %v1390
  %v1403 = vadd.f32 %v1379, %v1391
  %v1404 = vadd.f32 %v1380, %v1392
  %v1405 = vadd.f32 %v1381, %v1393
  %v1406 = vadd.f32 %v1382, %v1394
  %v1407 = vadd.f32 %v1383, %v1395
  %v1408 = vadd.f32 %v1384, %v1396
  %v1409 = vadd.f32 %v1385, %v1397
  %v1410 = vadd.f32 %v1386, %v1398
  %v1411 = vrot.slane %v1339, 1
  %v1412 = vrot.slane %v1340, 1
  %v1413 = vrot.slane %v1341, 1
  %v1414 = vrot.slane %v1342, 1
  %v1415 = vrot.slane %v1343, 1
  %v1416 = vrot.slane %v1344, 1
  %v1417 = vrot.slane %v1345, 1
  %v1418 = vrot.slane %v1346, 1
  %v1419 = vrot.slane %v1347, 1
  %v1420 = vrot.slane %v1348, 1
  %v1421 = vrot.slane %v1349, 1
  %v1422 = vrot.slane %v1350, 1
  %v1423 = vsel %vm617, %v1411, %v1417
  %v1424 = vsel %vm617, %v1412, %v1418
  %v1425 = vsel %vm617, %v1413, %v1419
  %v1426 = vsel %vm617, %v1414, %v1420
  %v1427 = vsel %vm617, %v1415, %v1421
  %v1428 = vsel %vm617, %v1416, %v1422
  %v1429 = vsel %vm617, %v1417, %v1411
  %v1430 = vsel %vm617, %v1418, %v1412
  %v1431 = vsel %vm617, %v1419, %v1413
  %v1432 = vsel %vm617, %v1420, %v1414
  %v1433 = vsel %vm617, %v1421, %v1415
  %v1434 = vsel %vm617, %v1422, %v1416
  %v1435 = vmul.f32 %v1423, %v825
  %v1436 = vmul.f32 %v1424, %v829
  %v1437 = vmul.f32 %v1425, %v833
  %v1438 = vmul.f32 %v1426, %v837
  %v1439 = vmul.f32 %v1427, %v841
  %v1440 = vmul.f32 %v1428, %v845
  %v1441 = vmul.f32 %v1429, %v825
  %v1442 = vmul.f32 %v1430, %v829
  %v1443 = vmul.f32 %v1431, %v833
  %v1444 = vmul.f32 %v1432, %v837
  %v1445 = vmul.f32 %v1433, %v841
  %v1446 = vmul.f32 %v1434, %v845
  %v1447 = vadd.f32 %v1399, %v1435
  %v1448 = vadd.f32 %v1400, %v1436
  %v1449 = vadd.f32 %v1401, %v1437
  %v1450 = vadd.f32 %v1402, %v1438
  %v1451 = vadd.f32 %v1403, %v1439
  %v1452 = vadd.f32 %v1404, %v1440
  %v1453 = vadd.f32 %v1405, %v1441
  %v1454 = vadd.f32 %v1406, %v1442
  %v1455 = vadd.f32 %v1407, %v1443
  %v1456 = vadd.f32 %v1408, %v1444
  %v1457 = vadd.f32 %v1409, %v1445
  %v1458 = vadd.f32 %v1410, %v1446
  %v1459 = vadd.f32 %v1327, %v1447
  %v1460 = vadd.f32 %v1328, %v1448
  %v1461 = vadd.f32 %v1329, %v1449
  %v1462 = vadd.f32 %v1330, %v1450
  %v1463 = vadd.f32 %v1331, %v1451
  %v1464 = vadd.f32 %v1332, %v1452
  %v1465 = vadd.f32 %v1333, %v1453
  %v1466 = vadd.f32 %v1334, %v1454
  %v1467 = vadd.f32 %v1335, %v1455
  %v1468 = vadd.f32 %v1336, %v1456
  %v1469 = vadd.f32 %v1337, %v1457
  %v1470 = vadd.f32 %v1338, %v1458
  %s1471 = scalar_lea.vmem [#allocation2], 288
  %v1472 = vld [vmem:[%s1471] sm:$0xff]
  %v1473 = vld [vmem:[%s1471 + $0x8] sm:$0xff]
  %v1474 = vld [vmem:[%s1471 + $0x10] sm:$0xff]
  %v1475 = vld [vmem:[%s1471 + $0x18] sm:$0xff]
  %v1476 = vld [vmem:[%s1471 + $0x20] sm:$0xff]
  %v1477 = vld [vmem:[%s1471 + $0x28] sm:$0xff]
  %v1478 = vld [vmem:[%s1471 + $0x30] sm:$0xff]
  %v1479 = vld [vmem:[%s1471 + $0x38] sm:$0xff]
  %v1480 = vld [vmem:[%s1471 + $0x40] sm:$0xff]
  %v1481 = vld [vmem:[%s1471 + $0x48] sm:$0xff]
  %v1482 = vld [vmem:[%s1471 + $0x50] sm:$0xff]
  %v1483 = vld [vmem:[%s1471 + $0x58] sm:$0xff]
  %v1484 = vrot.slane %v1472, 7
  %v1485 = vrot.slane %v1473, 7
  %v1486 = vrot.slane %v1474, 7
  %v1487 = vrot.slane %v1475, 7
  %v1488 = vrot.slane %v1476, 7
  %v1489 = vrot.slane %v1477, 7
  %v1490 = vrot.slane %v1478, 7
  %v1491 = vrot.slane %v1479, 7
  %v1492 = vrot.slane %v1480, 7
  %v1493 = vrot.slane %v1481, 7
  %v1494 = vrot.slane %v1482, 7
  %v1495 = vrot.slane %v1483, 7
  %v1496 = vsel %vm508, %v1484, %v1490
  %v1497 = vsel %vm508, %v1485, %v1491
  %v1498 = vsel %vm508, %v1486, %v1492
  %v1499 = vsel %vm508, %v1487, %v1493
  %v1500 = vsel %vm508, %v1488, %v1494
  %v1501 = vsel %vm508, %v1489, %v1495
  %v1502 = vsel %vm508, %v1490, %v1484
  %v1503 = vsel %vm508, %v1491, %v1485
  %v1504 = vsel %vm508, %v1492, %v1486
  %v1505 = vsel %vm508, %v1493, %v1487
  %v1506 = vsel %vm508, %v1494, %v1488
  %v1507 = vsel %vm508, %v1495, %v1489
  %v1508 = vmul.f32 %v1502, %v922
  %v1509 = vmul.f32 %v1503, %v926
  %v1510 = vmul.f32 %v1504, %v930
  %v1511 = vmul.f32 %v1505, %v934
  %v1512 = vmul.f32 %v1506, %v938
  %v1513 = vmul.f32 %v1507, %v942
  %v1514 = vmul.f32 %v1496, %v922
  %v1515 = vmul.f32 %v1497, %v926
  %v1516 = vmul.f32 %v1498, %v930
  %v1517 = vmul.f32 %v1499, %v934
  %v1518 = vmul.f32 %v1500, %v938
  %v1519 = vmul.f32 %v1501, %v942
  %v1520 = vmul.f32 %v1472, %v958
  %v1521 = vmul.f32 %v1473, %v962
  %v1522 = vmul.f32 %v1474, %v966
  %v1523 = vmul.f32 %v1475, %v970
  %v1524 = vmul.f32 %v1476, %v974
  %v1525 = vmul.f32 %v1477, %v978
  %v1526 = vmul.f32 %v1478, %v958
  %v1527 = vmul.f32 %v1479, %v962
  %v1528 = vmul.f32 %v1480, %v966
  %v1529 = vmul.f32 %v1481, %v970
  %v1530 = vmul.f32 %v1482, %v974
  %v1531 = vmul.f32 %v1483, %v978
  %v1532 = vadd.f32 %v1508, %v1520
  %v1533 = vadd.f32 %v1509, %v1521
  %v1534 = vadd.f32 %v1510, %v1522
  %v1535 = vadd.f32 %v1511, %v1523
  %v1536 = vadd.f32 %v1512, %v1524
  %v1537 = vadd.f32 %v1513, %v1525
  %v1538 = vadd.f32 %v1514, %v1526
  %v1539 = vadd.f32 %v1515, %v1527
  %v1540 = vadd.f32 %v1516, %v1528
  %v1541 = vadd.f32 %v1517, %v1529
  %v1542 = vadd.f32 %v1518, %v1530
  %v1543 = vadd.f32 %v1519, %v1531
  %v1544 = vrot.slane %v1472, 1
  %v1545 = vrot.slane %v1473, 1
  %v1546 = vrot.slane %v1474, 1
  %v1547 = vrot.slane %v1475, 1
  %v1548 = vrot.slane %v1476, 1
  %v1549 = vrot.slane %v1477, 1
  %v1550 = vrot.slane %v1478, 1
  %v1551 = vrot.slane %v1479, 1
  %v1552 = vrot.slane %v1480, 1
  %v1553 = vrot.slane %v1481, 1
  %v1554 = vrot.slane %v1482, 1
  %v1555 = vrot.slane %v1483, 1
  %v1556 = vsel %vm617, %v1544, %v1550
  %v1557 = vsel %vm617, %v1545, %v1551
  %v1558 = vsel %vm617, %v1546, %v1552
  %v1559 = vsel %vm617, %v1547, %v1553
  %v1560 = vsel %vm617, %v1548, %v1554
  %v1561 = vsel %vm617, %v1549, %v1555
  %v1562 = vsel %vm617, %v1550, %v1544
  %v1563 = vsel %vm617, %v1551, %v1545
  %v1564 = vsel %vm617, %v1552, %v1546
  %v1565 = vsel %vm617, %v1553, %v1547
  %v1566 = vsel %vm617, %v1554, %v1548
  %v1567 = vsel %vm617, %v1555, %v1549
  %v1568 = vmul.f32 %v1556, %v1030
  %v1569 = vmul.f32 %v1557, %v1034
  %v1570 = vmul.f32 %v1558, %v1038
  %v1571 = vmul.f32 %v1559, %v1042
  %v1572 = vmul.f32 %v1560, %v1046
  %v1573 = vmul.f32 %v1561, %v1050
  %v1574 = vmul.f32 %v1562, %v1030
  %v1575 = vmul.f32 %v1563, %v1034
  %v1576 = vmul.f32 %v1564, %v1038
  %v1577 = vmul.f32 %v1565, %v1042
  %v1578 = vmul.f32 %v1566, %v1046
  %v1579 = vmul.f32 %v1567, %v1050
  %v1580 = vadd.f32 %v1532, %v1568
  %v1581 = vadd.f32 %v1533, %v1569
  %v1582 = vadd.f32 %v1534, %v1570
  %v1583 = vadd.f32 %v1535, %v1571
  %v1584 = vadd.f32 %v1536, %v1572
  %v1585 = vadd.f32 %v1537, %v1573
  %v1586 = vadd.f32 %v1538, %v1574
  %v1587 = vadd.f32 %v1539, %v1575
  %v1588 = vadd.f32 %v1540, %v1576
  %v1589 = vadd.f32 %v1541, %v1577
  %v1590 = vadd.f32 %v1542, %v1578
  %v1591 = vadd.f32 %v1543, %v1579
  %v1592 = vadd.f32 %v1459, %v1580
  %v1593 = vadd.f32 %v1460, %v1581
  %v1594 = vadd.f32 %v1461, %v1582
  %v1595 = vadd.f32 %v1462, %v1583
  %v1596 = vadd.f32 %v1463, %v1584
  %v1597 = vadd.f32 %v1464, %v1585
  %v1598 = vadd.f32 %v1465, %v1586
  %v1599 = vadd.f32 %v1466, %v1587
  %v1600 = vadd.f32 %v1467, %v1588
  %v1601 = vadd.f32 %v1468, %v1589
  %v1602 = vadd.f32 %v1469, %v1590
  %v1603 = vadd.f32 %v1470, %v1591
  %s1604 = scalar_lea.vmem [#allocation3], 96
  %1605 = vst [vmem:[%s1604] sm:$0xff] %v1592
  %1606 = vst [vmem:[%s1604 + $0x8] sm:$0xff] %v1593
  %1607 = vst [vmem:[%s1604 + $0x10] sm:$0xff] %v1594
  %1608 = vst [vmem:[%s1604 + $0x18] sm:$0xff] %v1595
  %1609 = vst [vmem:[%s1604 + $0x20] sm:$0xff] %v1596
  %1610 = vst [vmem:[%s1604 + $0x28] sm:$0xff] %v1597
  %1611 = vst [vmem:[%s1604 + $0x30] sm:$0xff] %v1598
  %1612 = vst [vmem:[%s1604 + $0x38] sm:$0xff] %v1599
  %1613 = vst [vmem:[%s1604 + $0x40] sm:$0xff] %v1600
  %1614 = vst [vmem:[%s1604 + $0x48] sm:$0xff] %v1601
  %1615 = vst [vmem:[%s1604 + $0x50] sm:$0xff] %v1602
  %1616 = vst [vmem:[%s1604 + $0x58] sm:$0xff] %v1603
  %v1617 = vmul.f32 %v1592, %v482
  %v1618 = vmul.f32 %v1593, %v482
  %v1619 = vmul.f32 %v1594, %v482
  %v1620 = vmul.f32 %v1595, %v482
  %v1621 = vmul.f32 %v1596, %v482
  %v1622 = vmul.f32 %v1597, %v482
  %v1623 = vmul.f32 %v1598, %v483
  %v1624 = vmul.f32 %v1599, %v483
  %v1625 = vmul.f32 %v1600, %v483
  %v1626 = vmul.f32 %v1601, %v483
  %v1627 = vmul.f32 %v1602, %v483
  %v1628 = vmul.f32 %v1603, %v483
  %v1629 = vadd.f32 %v1617, %v1623
  %v1630 = vrot.slane %v1629, 4
  %v1631 = vadd.f32 %v1629, %v1630
  %v1632 = vrot.slane %v1631, 2
  %v1633 = vadd.f32 %v1631, %v1632
  %v1634 = vrot.slane %v1633, 1
  %v1635 = vadd.f32 %v1633, %v1634
  %v1636 = vadd.f32 %v1618, %v1624
  %v1637 = vrot.slane %v1636, 4
  %v1638 = vadd.f32 %v1636, %v1637
  %v1639 = vrot.slane %v1638, 2
  %v1640 = vadd.f32 %v1638, %v1639
  %v1641 = vrot.slane %v1640, 1
  %v1642 = vadd.f32 %v1640, %v1641
  %v1643 = vadd.f32 %v1619, %v1625
  %v1644 = vrot.slane %v1643, 4
  %v1645 = vadd.f32 %v1643, %v1644
  %v1646 = vrot.slane %v1645, 2
  %v1647 = vadd.f32 %v1645, %v1646
  %v1648 = vrot.slane %v1647, 1
  %v1649 = vadd.f32 %v1647, %v1648
  %v1650 = vadd.f32 %v1620, %v1626
  %v1651 = vrot.slane %v1650, 4
  %v1652 = vadd.f32 %v1650, %v1651
  %v1653 = vrot.slane %v1652, 2
  %v1654 = vadd.f32 %v1652, %v1653
  %v1655 = vrot.slane %v1654, 1
  %v1656 = vadd.f32 %v1654, %v1655
  %v1657 = vadd.f32 %v1621, %v1627
  %v1658 = vrot.slane %v1657, 4
  %v1659 = vadd.f32 %v1657, %v1658
  %v1660 = vrot.slane %v1659, 2
  %v1661 = vadd.f32 %v1659, %v1660
  %v1662 = vrot.slane %v1661, 1
  %v1663 = vadd.f32 %v1661, %v1662
  %v1664 = vadd.f32 %v1622, %v1628
  %v1665 = vrot.slane %v1664, 4
  %v1666 = vadd.f32 %v1664, %v1665
  %v1667 = vrot.slane %v1666, 2
  %v1668 = vadd.f32 %v1666, %v1667
  %v1669 = vrot.slane %v1668, 1
  %v1670 = vadd.f32 %v1668, %v1669
  %v1671 = vadd.f32 %v1153, %v1635
  %v1672 = vadd.f32 %v1154, %v1642
  %v1673 = vadd.f32 %v1155, %v1649
  %v1674 = vadd.f32 %v1156, %v1656
  %v1675 = vadd.f32 %v1157, %v1663
  %v1676 = vadd.f32 %v1158, %v1670
  %v1677 = vmul.f32 %v1617, %v1592
  %v1678 = vmul.f32 %v1618, %v1593
  %v1679 = vmul.f32 %v1619, %v1594
  %v1680 = vmul.f32 %v1620, %v1595
  %v1681 = vmul.f32 %v1621, %v1596
  %v1682 = vmul.f32 %v1622, %v1597
  %v1683 = vmul.f32 %v1623, %v1598
  %v1684 = vmul.f32 %v1624, %v1599
  %v1685 = vmul.f32 %v1625, %v1600
  %v1686 = vmul.f32 %v1626, %v1601
  %v1687 = vmul.f32 %v1627, %v1602
  %v1688 = vmul.f32 %v1628, %v1603
  %v1689 = vadd.f32 %v1677, %v1683
  %v1690 = vrot.slane %v1689, 4
  %v1691 = vadd.f32 %v1689, %v1690
  %v1692 = vrot.slane %v1691, 2
  %v1693 = vadd.f32 %v1691, %v1692
  %v1694 = vrot.slane %v1693, 1
  %v1695 = vadd.f32 %v1693, %v1694
  %v1696 = vadd.f32 %v1678, %v1684
  %v1697 = vrot.slane %v1696, 4
  %v1698 = vadd.f32 %v1696, %v1697
  %v1699 = vrot.slane %v1698, 2
  %v1700 = vadd.f32 %v1698, %v1699
  %v1701 = vrot.slane %v1700, 1
  %v1702 = vadd.f32 %v1700, %v1701
  %v1703 = vadd.f32 %v1679, %v1685
  %v1704 = vrot.slane %v1703, 4
  %v1705 = vadd.f32 %v1703, %v1704
  %v1706 = vrot.slane %v1705, 2
  %v1707 = vadd.f32 %v1705, %v1706
  %v1708 = vrot.slane %v1707, 1
  %v1709 = vadd.f32 %v1707, %v1708
  %v1710 = vadd.f32 %v1680, %v1686
  %v1711 = vrot.slane %v1710, 4
  %v1712 = vadd.f32 %v1710, %v1711
  %v1713 = vrot.slane %v1712, 2
  %v1714 = vadd.f32 %v1712, %v1713
  %v1715 = vrot.slane %v1714, 1
  %v1716 = vadd.f32 %v1714, %v1715
  %v1717 = vadd.f32 %v1681, %v1687
  %v1718 = vrot.slane %v1717, 4
  %v1719 = vadd.f32 %v1717, %v1718
  %v1720 = vrot.slane %v1719, 2
  %v1721 = vadd.f32 %v1719, %v1720
  %v1722 = vrot.slane %v1721, 1
  %v1723 = vadd.f32 %v1721, %v1722
  %v1724 = vadd.f32 %v1682, %v1688
  %v1725 = vrot.slane %v1724, 4
  %v1726 = vadd.f32 %v1724, %v1725
  %v1727 = vrot.slane %v1726, 2
  %v1728 = vadd.f32 %v1726, %v1727
  %v1729 = vrot.slane %v1728, 1
  %v1730 = vadd.f32 %v1728, %v1729
  %v1731 = vadd.f32 %v1213, %v1695
  %v1732 = vadd.f32 %v1214, %v1702
  %v1733 = vadd.f32 %v1215, %v1709
  %v1734 = vadd.f32 %v1216, %v1716
  %v1735 = vadd.f32 %v1217, %v1723
  %v1736 = vadd.f32 %v1218, %v1730
  %v1737 = vld [vmem:[%s882] sm:$0xff]
  %v1738 = vld [vmem:[%s882 + $0x8] sm:$0xff]
  %v1739 = vld [vmem:[%s882 + $0x10] sm:$0xff]
  %v1740 = vld [vmem:[%s882 + $0x18] sm:$0xff]
  %v1741 = vld [vmem:[%s882 + $0x20] sm:$0xff]
  %v1742 = vld [vmem:[%s882 + $0x28] sm:$0xff]
  %v1743 = vld [vmem:[%s882 + $0x30] sm:$0xff]
  %v1744 = vld [vmem:[%s882 + $0x38] sm:$0xff]
  %v1745 = vld [vmem:[%s882 + $0x40] sm:$0xff]
  %v1746 = vld [vmem:[%s882 + $0x48] sm:$0xff]
  %v1747 = vld [vmem:[%s882 + $0x50] sm:$0xff]
  %v1748 = vld [vmem:[%s882 + $0x58] sm:$0xff]
  %v1749 = vrot.slane %v1737, 7
  %v1750 = vrot.slane %v1738, 7
  %v1751 = vrot.slane %v1739, 7
  %v1752 = vrot.slane %v1740, 7
  %v1753 = vrot.slane %v1741, 7
  %v1754 = vrot.slane %v1742, 7
  %v1755 = vrot.slane %v1743, 7
  %v1756 = vrot.slane %v1744, 7
  %v1757 = vrot.slane %v1745, 7
  %v1758 = vrot.slane %v1746, 7
  %v1759 = vrot.slane %v1747, 7
  %v1760 = vrot.slane %v1748, 7
  %v1761 = vsel %vm508, %v1749, %v1755
  %v1762 = vsel %vm508, %v1750, %v1756
  %v1763 = vsel %vm508, %v1751, %v1757
  %v1764 = vsel %vm508, %v1752, %v1758
  %v1765 = vsel %vm508, %v1753, %v1759
  %v1766 = vsel %vm508, %v1754, %v1760
  %v1767 = vsel %vm508, %v1755, %v1749
  %v1768 = vsel %vm508, %v1756, %v1750
  %v1769 = vsel %vm508, %v1757, %v1751
  %v1770 = vsel %vm508, %v1758, %v1752
  %v1771 = vsel %vm508, %v1759, %v1753
  %v1772 = vsel %vm508, %v1760, %v1754
  %v1773 = vmul.f32 %v1767, %v524
  %v1774 = vmul.f32 %v1768, %v528
  %v1775 = vmul.f32 %v1769, %v532
  %v1776 = vmul.f32 %v1770, %v536
  %v1777 = vmul.f32 %v1771, %v540
  %v1778 = vmul.f32 %v1772, %v544
  %v1779 = vmul.f32 %v1761, %v524
  %v1780 = vmul.f32 %v1762, %v528
  %v1781 = vmul.f32 %v1763, %v532
  %v1782 = vmul.f32 %v1764, %v536
  %v1783 = vmul.f32 %v1765, %v540
  %v1784 = vmul.f32 %v1766, %v544
  %v1785 = vmul.f32 %v1737, %v560
  %v1786 = vmul.f32 %v1738, %v564
  %v1787 = vmul.f32 %v1739, %v568
  %v1788 = vmul.f32 %v1740, %v572
  %v1789 = vmul.f32 %v1741, %v576
  %v1790 = vmul.f32 %v1742, %v580
  %v1791 = vmul.f32 %v1743, %v560
  %v1792 = vmul.f32 %v1744, %v564
  %v1793 = vmul.f32 %v1745, %v568
  %v1794 = vmul.f32 %v1746, %v572
  %v1795 = vmul.f32 %v1747, %v576
  %v1796 = vmul.f32 %v1748, %v580
  %v1797 = vadd.f32 %v1773, %v1785
  %v1798 = vadd.f32 %v1774, %v1786
  %v1799 = vadd.f32 %v1775, %v1787
  %v1800 = vadd.f32 %v1776, %v1788
  %v1801 = vadd.f32 %v1777, %v1789
  %v1802 = vadd.f32 %v1778, %v1790
  %v1803 = vadd.f32 %v1779, %v1791
  %v1804 = vadd.f32 %v1780, %v1792
  %v1805 = vadd.f32 %v1781, %v1793
  %v1806 = vadd.f32 %v1782, %v1794
  %v1807 = vadd.f32 %v1783, %v1795
  %v1808 = vadd.f32 %v1784, %v1796
  %v1809 = vrot.slane %v1737, 1
  %v1810 = vrot.slane %v1738, 1
  %v1811 = vrot.slane %v1739, 1
  %v1812 = vrot.slane %v1740, 1
  %v1813 = vrot.slane %v1741, 1
  %v1814 = vrot.slane %v1742, 1
  %v1815 = vrot.slane %v1743, 1
  %v1816 = vrot.slane %v1744, 1
  %v1817 = vrot.slane %v1745, 1
  %v1818 = vrot.slane %v1746, 1
  %v1819 = vrot.slane %v1747, 1
  %v1820 = vrot.slane %v1748, 1
  %v1821 = vsel %vm617, %v1809, %v1815
  %v1822 = vsel %vm617, %v1810, %v1816
  %v1823 = vsel %vm617, %v1811, %v1817
  %v1824 = vsel %vm617, %v1812, %v1818
  %v1825 = vsel %vm617, %v1813, %v1819
  %v1826 = vsel %vm617, %v1814, %v1820
  %v1827 = vsel %vm617, %v1815, %v1809
  %v1828 = vsel %vm617, %v1816, %v1810
  %v1829 = vsel %vm617, %v1817, %v1811
  %v1830 = vsel %vm617, %v1818, %v1812
  %v1831 = vsel %vm617, %v1819, %v1813
  %v1832 = vsel %vm617, %v1820, %v1814
  %v1833 = vmul.f32 %v1821, %v633
  %v1834 = vmul.f32 %v1822, %v637
  %v1835 = vmul.f32 %v1823, %v641
  %v1836 = vmul.f32 %v1824, %v645
  %v1837 = vmul.f32 %v1825, %v649
  %v1838 = vmul.f32 %v1826, %v653
  %v1839 = vmul.f32 %v1827, %v633
  %v1840 = vmul.f32 %v1828, %v637
  %v1841 = vmul.f32 %v1829, %v641
  %v1842 = vmul.f32 %v1830, %v645
  %v1843 = vmul.f32 %v1831, %v649
  %v1844 = vmul.f32 %v1832, %v653
  %v1845 = vadd.f32 %v1797, %v1833
  %v1846 = vadd.f32 %v1798, %v1834
  %v1847 = vadd.f32 %v1799, %v1835
  %v1848 = vadd.f32 %v1800, %v1836
  %v1849 = vadd.f32 %v1801, %v1837
  %v1850 = vadd.f32 %v1802, %v1838
  %v1851 = vadd.f32 %v1803, %v1839
  %v1852 = vadd.f32 %v1804, %v1840
  %v1853 = vadd.f32 %v1805, %v1841
  %v1854 = vadd.f32 %v1806, %v1842
  %v1855 = vadd.f32 %v1807, %v1843
  %v1856 = vadd.f32 %v1808, %v1844
  %v1857 = vld [vmem:[%s1471] sm:$0xff]
  %v1858 = vld [vmem:[%s1471 + $0x8] sm:$0xff]
  %v1859 = vld [vmem:[%s1471 + $0x10] sm:$0xff]
  %v1860 = vld [vmem:[%s1471 + $0x18] sm:$0xff]
  %v1861 = vld [vmem:[%s1471 + $0x20] sm:$0xff]
  %v1862 = vld [vmem:[%s1471 + $0x28] sm:$0xff]
  %v1863 = vld [vmem:[%s1471 + $0x30] sm:$0xff]
  %v1864 = vld [vmem:[%s1471 + $0x38] sm:$0xff]
  %v1865 = vld [vmem:[%s1471 + $0x40] sm:$0xff]
  %v1866 = vld [vmem:[%s1471 + $0x48] sm:$0xff]
  %v1867 = vld [vmem:[%s1471 + $0x50] sm:$0xff]
  %v1868 = vld [vmem:[%s1471 + $0x58] sm:$0xff]
  %v1869 = vrot.slane %v1857, 7
  %v1870 = vrot.slane %v1858, 7
  %v1871 = vrot.slane %v1859, 7
  %v1872 = vrot.slane %v1860, 7
  %v1873 = vrot.slane %v1861, 7
  %v1874 = vrot.slane %v1862, 7
  %v1875 = vrot.slane %v1863, 7
  %v1876 = vrot.slane %v1864, 7
  %v1877 = vrot.slane %v1865, 7
  %v1878 = vrot.slane %v1866, 7
  %v1879 = vrot.slane %v1867, 7
  %v1880 = vrot.slane %v1868, 7
  %v1881 = vsel %vm508, %v1869, %v1875
  %v1882 = vsel %vm508, %v1870, %v1876
  %v1883 = vsel %vm508, %v1871, %v1877
  %v1884 = vsel %vm508, %v1872, %v1878
  %v1885 = vsel %vm508, %v1873, %v1879
  %v1886 = vsel %vm508, %v1874, %v1880
  %v1887 = vsel %vm508, %v1875, %v1869
  %v1888 = vsel %vm508, %v1876, %v1870
  %v1889 = vsel %vm508, %v1877, %v1871
  %v1890 = vsel %vm508, %v1878, %v1872
  %v1891 = vsel %vm508, %v1879, %v1873
  %v1892 = vsel %vm508, %v1880, %v1874
  %v1893 = vmul.f32 %v1887, %v717
  %v1894 = vmul.f32 %v1888, %v721
  %v1895 = vmul.f32 %v1889, %v725
  %v1896 = vmul.f32 %v1890, %v729
  %v1897 = vmul.f32 %v1891, %v733
  %v1898 = vmul.f32 %v1892, %v737
  %v1899 = vmul.f32 %v1881, %v717
  %v1900 = vmul.f32 %v1882, %v721
  %v1901 = vmul.f32 %v1883, %v725
  %v1902 = vmul.f32 %v1884, %v729
  %v1903 = vmul.f32 %v1885, %v733
  %v1904 = vmul.f32 %v1886, %v737
  %v1905 = vmul.f32 %v1857, %v753
  %v1906 = vmul.f32 %v1858, %v757
  %v1907 = vmul.f32 %v1859, %v761
  %v1908 = vmul.f32 %v1860, %v765
  %v1909 = vmul.f32 %v1861, %v769
  %v1910 = vmul.f32 %v1862, %v773
  %v1911 = vmul.f32 %v1863, %v753
  %v1912 = vmul.f32 %v1864, %v757
  %v1913 = vmul.f32 %v1865, %v761
  %v1914 = vmul.f32 %v1866, %v765
  %v1915 = vmul.f32 %v1867, %v769
  %v1916 = vmul.f32 %v1868, %v773
  %v1917 = vadd.f32 %v1893, %v1905
  %v1918 = vadd.f32 %v1894, %v1906
  %v1919 = vadd.f32 %v1895, %v1907
  %v1920 = vadd.f32 %v1896, %v1908
  %v1921 = vadd.f32 %v1897, %v1909
  %v1922 = vadd.f32 %v1898, %v1910
  %v1923 = vadd.f32 %v1899, %v1911
  %v1924 = vadd.f32 %v1900, %v1912
  %v1925 = vadd.f32 %v1901, %v1913
  %v1926 = vadd.f32 %v1902, %v1914
  %v1927 = vadd.f32 %v1903, %v1915
  %v1928 = vadd.f32 %v1904, %v1916
  %v1929 = vrot.slane %v1857, 1
  %v1930 = vrot.slane %v1858, 1
  %v1931 = vrot.slane %v1859, 1
  %v1932 = vrot.slane %v1860, 1
  %v1933 = vrot.slane %v1861, 1
  %v1934 = vrot.slane %v1862, 1
  %v1935 = vrot.slane %v1863, 1
  %v1936 = vrot.slane %v1864, 1
  %v1937 = vrot.slane %v1865, 1
  %v1938 = vrot.slane %v1866, 1
  %v1939 = vrot.slane %v1867, 1
  %v1940 = vrot.slane %v1868, 1
  %v1941 = vsel %vm617, %v1929, %v1935
  %v1942 = vsel %vm617, %v1930, %v1936
  %v1943 = vsel %vm617, %v1931, %v1937
  %v1944 = vsel %vm617, %v1932, %v1938
  %v1945 = vsel %vm617, %v1933, %v1939
  %v1946 = vsel %vm617, %v1934, %v1940
  %v1947 = vsel %vm617, %v1935, %v1929
  %v1948 = vsel %vm617, %v1936, %v1930
  %v1949 = vsel %vm617, %v1937, %v1931
  %v1950 = vsel %vm617, %v1938, %v1932
  %v1951 = vsel %vm617, %v1939, %v1933
  %v1952 = vsel %vm617, %v1940, %v1934
  %v1953 = vmul.f32 %v1941, %v825
  %v1954 = vmul.f32 %v1942, %v829
  %v1955 = vmul.f32 %v1943, %v833
  %v1956 = vmul.f32 %v1944, %v837
  %v1957 = vmul.f32 %v1945, %v841
  %v1958 = vmul.f32 %v1946, %v845
  %v1959 = vmul.f32 %v1947, %v825
  %v1960 = vmul.f32 %v1948, %v829
  %v1961 = vmul.f32 %v1949, %v833
  %v1962 = vmul.f32 %v1950, %v837
  %v1963 = vmul.f32 %v1951, %v841
  %v1964 = vmul.f32 %v1952, %v845
  %v1965 = vadd.f32 %v1917, %v1953
  %v1966 = vadd.f32 %v1918, %v1954
  %v1967 = vadd.f32 %v1919, %v1955
  %v1968 = vadd.f32 %v1920, %v1956
  %v1969 = vadd.f32 %v1921, %v1957
  %v1970 = vadd.f32 %v1922, %v1958
  %v1971 = vadd.f32 %v1923, %v1959
  %v1972 = vadd.f32 %v1924, %v1960
  %v1973 = vadd.f32 %v1925, %v1961
  %v1974 = vadd.f32 %v1926, %v1962
  %v1975 = vadd.f32 %v1927, %v1963
  %v1976 = vadd.f32 %v1928, %v1964
  %v1977 = vadd.f32 %v1845, %v1965
  %v1978 = vadd.f32 %v1846, %v1966
  %v1979 = vadd.f32 %v1847, %v1967
  %v1980 = vadd.f32 %v1848, %v1968
  %v1981 = vadd.f32 %v1849, %v1969
  %v1982 = vadd.f32 %v1850, %v1970
  %v1983 = vadd.f32 %v1851, %v1971
  %v1984 = vadd.f32 %v1852, %v1972
  %v1985 = vadd.f32 %v1853, %v1973
  %v1986 = vadd.f32 %v1854, %v1974
  %v1987 = vadd.f32 %v1855, %v1975
  %v1988 = vadd.f32 %v1856, %v1976
  %s1989 = scalar_lea.vmem [#allocation2], 384
  %v1990 = vld [vmem:[%s1989] sm:$0xff]
  %v1991 = vld [vmem:[%s1989 + $0x8] sm:$0xff]
  %v1992 = vld [vmem:[%s1989 + $0x10] sm:$0xff]
  %v1993 = vld [vmem:[%s1989 + $0x18] sm:$0xff]
  %v1994 = vld [vmem:[%s1989 + $0x20] sm:$0xff]
  %v1995 = vld [vmem:[%s1989 + $0x28] sm:$0xff]
  %v1996 = vld [vmem:[%s1989 + $0x30] sm:$0xff]
  %v1997 = vld [vmem:[%s1989 + $0x38] sm:$0xff]
  %v1998 = vld [vmem:[%s1989 + $0x40] sm:$0xff]
  %v1999 = vld [vmem:[%s1989 + $0x48] sm:$0xff]
  %v2000 = vld [vmem:[%s1989 + $0x50] sm:$0xff]
  %v2001 = vld [vmem:[%s1989 + $0x58] sm:$0xff]
  %v2002 = vrot.slane %v1990, 7
  %v2003 = vrot.slane %v1991, 7
  %v2004 = vrot.slane %v1992, 7
  %v2005 = vrot.slane %v1993, 7
  %v2006 = vrot.slane %v1994, 7
  %v2007 = vrot.slane %v1995, 7
  %v2008 = vrot.slane %v1996, 7
  %v2009 = vrot.slane %v1997, 7
  %v2010 = vrot.slane %v1998, 7
  %v2011 = vrot.slane %v1999, 7
  %v2012 = vrot.slane %v2000, 7
  %v2013 = vrot.slane %v2001, 7
  %v2014 = vsel %vm508, %v2002, %v2008
  %v2015 = vsel %vm508, %v2003, %v2009
  %v2016 = vsel %vm508, %v2004, %v2010
  %v2017 = vsel %vm508, %v2005, %v2011
  %v2018 = vsel %vm508, %v2006, %v2012
  %v2019 = vsel %vm508, %v2007, %v2013
  %v2020 = vsel %vm508, %v2008, %v2002
  %v2021 = vsel %vm508, %v2009, %v2003
  %v2022 = vsel %vm508, %v2010, %v2004
  %v2023 = vsel %vm508, %v2011, %v2005
  %v2024 = vsel %vm508, %v2012, %v2006
  %v2025 = vsel %vm508, %v2013, %v2007
  %v2026 = vmul.f32 %v2020, %v922
  %v2027 = vmul.f32 %v2021, %v926
  %v2028 = vmul.f32 %v2022, %v930
  %v2029 = vmul.f32 %v2023, %v934
  %v2030 = vmul.f32 %v2024, %v938
  %v2031 = vmul.f32 %v2025, %v942
  %v2032 = vmul.f32 %v2014, %v922
  %v2033 = vmul.f32 %v2015, %v926
  %v2034 = vmul.f32 %v2016, %v930
  %v2035 = vmul.f32 %v2017, %v934
  %v2036 = vmul.f32 %v2018, %v938
  %v2037 = vmul.f32 %v2019, %v942
  %v2038 = vmul.f32 %v1990, %v958
  %v2039 = vmul.f32 %v1991, %v962
  %v2040 = vmul.f32 %v1992, %v966
  %v2041 = vmul.f32 %v1993, %v970
  %v2042 = vmul.f32 %v1994, %v974
  %v2043 = vmul.f32 %v1995, %v978
  %v2044 = vmul.f32 %v1996, %v958
  %v2045 = vmul.f32 %v1997, %v962
  %v2046 = vmul.f32 %v1998, %v966
  %v2047 = vmul.f32 %v1999, %v970
  %v2048 = vmul.f32 %v2000, %v974
  %v2049 = vmul.f32 %v2001, %v978
  %v2050 = vadd.f32 %v2026, %v2038
  %v2051 = vadd.f32 %v2027, %v2039
  %v2052 = vadd.f32 %v2028, %v2040
  %v2053 = vadd.f32 %v2029, %v2041
  %v2054 = vadd.f32 %v2030, %v2042
  %v2055 = vadd.f32 %v2031, %v2043
  %v2056 = vadd.f32 %v2032, %v2044
  %v2057 = vadd.f32 %v2033, %v2045
  %v2058 = vadd.f32 %v2034, %v2046
  %v2059 = vadd.f32 %v2035, %v2047
  %v2060 = vadd.f32 %v2036, %v2048
  %v2061 = vadd.f32 %v2037, %v2049
  %v2062 = vrot.slane %v1990, 1
  %v2063 = vrot.slane %v1991, 1
  %v2064 = vrot.slane %v1992, 1
  %v2065 = vrot.slane %v1993, 1
  %v2066 = vrot.slane %v1994, 1
  %v2067 = vrot.slane %v1995, 1
  %v2068 = vrot.slane %v1996, 1
  %v2069 = vrot.slane %v1997, 1
  %v2070 = vrot.slane %v1998, 1
  %v2071 = vrot.slane %v1999, 1
  %v2072 = vrot.slane %v2000, 1
  %v2073 = vrot.slane %v2001, 1
  %v2074 = vsel %vm617, %v2062, %v2068
  %v2075 = vsel %vm617, %v2063, %v2069
  %v2076 = vsel %vm617, %v2064, %v2070
  %v2077 = vsel %vm617, %v2065, %v2071
  %v2078 = vsel %vm617, %v2066, %v2072
  %v2079 = vsel %vm617, %v2067, %v2073
  %v2080 = vsel %vm617, %v2068, %v2062
  %v2081 = vsel %vm617, %v2069, %v2063
  %v2082 = vsel %vm617, %v2070, %v2064
  %v2083 = vsel %vm617, %v2071, %v2065
  %v2084 = vsel %vm617, %v2072, %v2066
  %v2085 = vsel %vm617, %v2073, %v2067
  %v2086 = vmul.f32 %v2074, %v1030
  %v2087 = vmul.f32 %v2075, %v1034
  %v2088 = vmul.f32 %v2076, %v1038
  %v2089 = vmul.f32 %v2077, %v1042
  %v2090 = vmul.f32 %v2078, %v1046
  %v2091 = vmul.f32 %v2079, %v1050
  %v2092 = vmul.f32 %v2080, %v1030
  %v2093 = vmul.f32 %v2081, %v1034
  %v2094 = vmul.f32 %v2082, %v1038
  %v2095 = vmul.f32 %v2083, %v1042
  %v2096 = vmul.f32 %v2084, %v1046
  %v2097 = vmul.f32 %v2085, %v1050
  %v2098 = vadd.f32 %v2050, %v2086
  %v2099 = vadd.f32 %v2051, %v2087
  %v2100 = vadd.f32 %v2052, %v2088
  %v2101 = vadd.f32 %v2053, %v2089
  %v2102 = vadd.f32 %v2054, %v2090
  %v2103 = vadd.f32 %v2055, %v2091
  %v2104 = vadd.f32 %v2056, %v2092
  %v2105 = vadd.f32 %v2057, %v2093
  %v2106 = vadd.f32 %v2058, %v2094
  %v2107 = vadd.f32 %v2059, %v2095
  %v2108 = vadd.f32 %v2060, %v2096
  %v2109 = vadd.f32 %v2061, %v2097
  %v2110 = vadd.f32 %v1977, %v2098
  %v2111 = vadd.f32 %v1978, %v2099
  %v2112 = vadd.f32 %v1979, %v2100
  %v2113 = vadd.f32 %v1980, %v2101
  %v2114 = vadd.f32 %v1981, %v2102
  %v2115 = vadd.f32 %v1982, %v2103
  %v2116 = vadd.f32 %v1983, %v2104
  %v2117 = vadd.f32 %v1984, %v2105
  %v2118 = vadd.f32 %v1985, %v2106
  %v2119 = vadd.f32 %v1986, %v2107
  %v2120 = vadd.f32 %v1987, %v2108
  %v2121 = vadd.f32 %v1988, %v2109
  %s2122 = scalar_lea.vmem [#allocation3], 192
  %2123 = vst [vmem:[%s2122] sm:$0xff] %v2110
  %2124 = vst [vmem:[%s2122 + $0x8] sm:$0xff] %v2111
  %2125 = vst [vmem:[%s2122 + $0x10] sm:$0xff] %v2112
  %2126 = vst [vmem:[%s2122 + $0x18] sm:$0xff] %v2113
  %2127 = vst [vmem:[%s2122 + $0x20] sm:$0xff] %v2114
  %2128 = vst [vmem:[%s2122 + $0x28] sm:$0xff] %v2115
  %2129 = vst [vmem:[%s2122 + $0x30] sm:$0xff] %v2116
  %2130 = vst [vmem:[%s2122 + $0x38] sm:$0xff] %v2117
  %2131 = vst [vmem:[%s2122 + $0x40] sm:$0xff] %v2118
  %2132 = vst [vmem:[%s2122 + $0x48] sm:$0xff] %v2119
  %2133 = vst [vmem:[%s2122 + $0x50] sm:$0xff] %v2120
  %2134 = vst [vmem:[%s2122 + $0x58] sm:$0xff] %v2121
  %v2135 = vmul.f32 %v2110, %v482
  %v2136 = vmul.f32 %v2111, %v482
  %v2137 = vmul.f32 %v2112, %v482
  %v2138 = vmul.f32 %v2113, %v482
  %v2139 = vmul.f32 %v2114, %v482
  %v2140 = vmul.f32 %v2115, %v482
  %v2141 = vmul.f32 %v2116, %v483
  %v2142 = vmul.f32 %v2117, %v483
  %v2143 = vmul.f32 %v2118, %v483
  %v2144 = vmul.f32 %v2119, %v483
  %v2145 = vmul.f32 %v2120, %v483
  %v2146 = vmul.f32 %v2121, %v483
  %v2147 = vadd.f32 %v2135, %v2141
  %v2148 = vrot.slane %v2147, 4
  %v2149 = vadd.f32 %v2147, %v2148
  %v2150 = vrot.slane %v2149, 2
  %v2151 = vadd.f32 %v2149, %v2150
  %v2152 = vrot.slane %v2151, 1
  %v2153 = vadd.f32 %v2151, %v2152
  %v2154 = vadd.f32 %v2136, %v2142
  %v2155 = vrot.slane %v2154, 4
  %v2156 = vadd.f32 %v2154, %v2155
  %v2157 = vrot.slane %v2156, 2
  %v2158 = vadd.f32 %v2156, %v2157
  %v2159 = vrot.slane %v2158, 1
  %v2160 = vadd.f32 %v2158, %v2159
  %v2161 = vadd.f32 %v2137, %v2143
  %v2162 = vrot.slane %v2161, 4
  %v2163 = vadd.f32 %v2161, %v2162
  %v2164 = vrot.slane %v2163, 2
  %v2165 = vadd.f32 %v2163, %v2164
  %v2166 = vrot.slane %v2165, 1
  %v2167 = vadd.f32 %v2165, %v2166
  %v2168 = vadd.f32 %v2138, %v2144
  %v2169 = vrot.slane %v2168, 4
  %v2170 = vadd.f32 %v2168, %v2169
  %v2171 = vrot.slane %v2170, 2
  %v2172 = vadd.f32 %v2170, %v2171
  %v2173 = vrot.slane %v2172, 1
  %v2174 = vadd.f32 %v2172, %v2173
  %v2175 = vadd.f32 %v2139, %v2145
  %v2176 = vrot.slane %v2175, 4
  %v2177 = vadd.f32 %v2175, %v2176
  %v2178 = vrot.slane %v2177, 2
  %v2179 = vadd.f32 %v2177, %v2178
  %v2180 = vrot.slane %v2179, 1
  %v2181 = vadd.f32 %v2179, %v2180
  %v2182 = vadd.f32 %v2140, %v2146
  %v2183 = vrot.slane %v2182, 4
  %v2184 = vadd.f32 %v2182, %v2183
  %v2185 = vrot.slane %v2184, 2
  %v2186 = vadd.f32 %v2184, %v2185
  %v2187 = vrot.slane %v2186, 1
  %v2188 = vadd.f32 %v2186, %v2187
  %v2189 = vadd.f32 %v1671, %v2153
  %v2190 = vadd.f32 %v1672, %v2160
  %v2191 = vadd.f32 %v1673, %v2167
  %v2192 = vadd.f32 %v1674, %v2174
  %v2193 = vadd.f32 %v1675, %v2181
  %v2194 = vadd.f32 %v1676, %v2188
  %v2195 = vmul.f32 %v2135, %v2110
  %v2196 = vmul.f32 %v2136, %v2111
  %v2197 = vmul.f32 %v2137, %v2112
  %v2198 = vmul.f32 %v2138, %v2113
  %v2199 = vmul.f32 %v2139, %v2114
  %v2200 = vmul.f32 %v2140, %v2115
  %v2201 = vmul.f32 %v2141, %v2116
  %v2202 = vmul.f32 %v2142, %v2117
  %v2203 = vmul.f32 %v2143, %v2118
  %v2204 = vmul.f32 %v2144, %v2119
  %v2205 = vmul.f32 %v2145, %v2120
  %v2206 = vmul.f32 %v2146, %v2121
  %v2207 = vadd.f32 %v2195, %v2201
  %v2208 = vrot.slane %v2207, 4
  %v2209 = vadd.f32 %v2207, %v2208
  %v2210 = vrot.slane %v2209, 2
  %v2211 = vadd.f32 %v2209, %v2210
  %v2212 = vrot.slane %v2211, 1
  %v2213 = vadd.f32 %v2211, %v2212
  %v2214 = vadd.f32 %v2196, %v2202
  %v2215 = vrot.slane %v2214, 4
  %v2216 = vadd.f32 %v2214, %v2215
  %v2217 = vrot.slane %v2216, 2
  %v2218 = vadd.f32 %v2216, %v2217
  %v2219 = vrot.slane %v2218, 1
  %v2220 = vadd.f32 %v2218, %v2219
  %v2221 = vadd.f32 %v2197, %v2203
  %v2222 = vrot.slane %v2221, 4
  %v2223 = vadd.f32 %v2221, %v2222
  %v2224 = vrot.slane %v2223, 2
  %v2225 = vadd.f32 %v2223, %v2224
  %v2226 = vrot.slane %v2225, 1
  %v2227 = vadd.f32 %v2225, %v2226
  %v2228 = vadd.f32 %v2198, %v2204
  %v2229 = vrot.slane %v2228, 4
  %v2230 = vadd.f32 %v2228, %v2229
  %v2231 = vrot.slane %v2230, 2
  %v2232 = vadd.f32 %v2230, %v2231
  %v2233 = vrot.slane %v2232, 1
  %v2234 = vadd.f32 %v2232, %v2233
  %v2235 = vadd.f32 %v2199, %v2205
  %v2236 = vrot.slane %v2235, 4
  %v2237 = vadd.f32 %v2235, %v2236
  %v2238 = vrot.slane %v2237, 2
  %v2239 = vadd.f32 %v2237, %v2238
  %v2240 = vrot.slane %v2239, 1
  %v2241 = vadd.f32 %v2239, %v2240
  %v2242 = vadd.f32 %v2200, %v2206
  %v2243 = vrot.slane %v2242, 4
  %v2244 = vadd.f32 %v2242, %v2243
  %v2245 = vrot.slane %v2244, 2
  %v2246 = vadd.f32 %v2244, %v2245
  %v2247 = vrot.slane %v2246, 1
  %v2248 = vadd.f32 %v2246, %v2247
  %v2249 = vadd.f32 %v1731, %v2213
  %v2250 = vadd.f32 %v1732, %v2220
  %v2251 = vadd.f32 %v1733, %v2227
  %v2252 = vadd.f32 %v1734, %v2234
  %v2253 = vadd.f32 %v1735, %v2241
  %v2254 = vadd.f32 %v1736, %v2248
  %v2255 = vld [vmem:[%s1471] sm:$0xff]
  %v2256 = vld [vmem:[%s1471 + $0x8] sm:$0xff]
  %v2257 = vld [vmem:[%s1471 + $0x10] sm:$0xff]
  %v2258 = vld [vmem:[%s1471 + $0x18] sm:$0xff]
  %v2259 = vld [vmem:[%s1471 + $0x20] sm:$0xff]
  %v2260 = vld [vmem:[%s1471 + $0x28] sm:$0xff]
  %v2261 = vld [vmem:[%s1471 + $0x30] sm:$0xff]
  %v2262 = vld [vmem:[%s1471 + $0x38] sm:$0xff]
  %v2263 = vld [vmem:[%s1471 + $0x40] sm:$0xff]
  %v2264 = vld [vmem:[%s1471 + $0x48] sm:$0xff]
  %v2265 = vld [vmem:[%s1471 + $0x50] sm:$0xff]
  %v2266 = vld [vmem:[%s1471 + $0x58] sm:$0xff]
  %v2267 = vrot.slane %v2255, 7
  %v2268 = vrot.slane %v2256, 7
  %v2269 = vrot.slane %v2257, 7
  %v2270 = vrot.slane %v2258, 7
  %v2271 = vrot.slane %v2259, 7
  %v2272 = vrot.slane %v2260, 7
  %v2273 = vrot.slane %v2261, 7
  %v2274 = vrot.slane %v2262, 7
  %v2275 = vrot.slane %v2263, 7
  %v2276 = vrot.slane %v2264, 7
  %v2277 = vrot.slane %v2265, 7
  %v2278 = vrot.slane %v2266, 7
  %v2279 = vsel %vm508, %v2267, %v2273
  %v2280 = vsel %vm508, %v2268, %v2274
  %v2281 = vsel %vm508, %v2269, %v2275
  %v2282 = vsel %vm508, %v2270, %v2276
  %v2283 = vsel %vm508, %v2271, %v2277
  %v2284 = vsel %vm508, %v2272, %v2278
  %v2285 = vsel %vm508, %v2273, %v2267
  %v2286 = vsel %vm508, %v2274, %v2268
  %v2287 = vsel %vm508, %v2275, %v2269
  %v2288 = vsel %vm508, %v2276, %v2270
  %v2289 = vsel %vm508, %v2277, %v2271
  %v2290 = vsel %vm508, %v2278, %v2272
  %v2291 = vmul.f32 %v2285, %v524
  %v2292 = vmul.f32 %v2286, %v528
  %v2293 = vmul.f32 %v2287, %v532
  %v2294 = vmul.f32 %v2288, %v536
  %v2295 = vmul.f32 %v2289, %v540
  %v2296 = vmul.f32 %v2290, %v544
  %v2297 = vmul.f32 %v2279, %v524
  %v2298 = vmul.f32 %v2280, %v528
  %v2299 = vmul.f32 %v2281, %v532
  %v2300 = vmul.f32 %v2282, %v536
  %v2301 = vmul.f32 %v2283, %v540
  %v2302 = vmul.f32 %v2284, %v544
  %v2303 = vmul.f32 %v2255, %v560
  %v2304 = vmul.f32 %v2256, %v564
  %v2305 = vmul.f32 %v2257, %v568
  %v2306 = vmul.f32 %v2258, %v572
  %v2307 = vmul.f32 %v2259, %v576
  %v2308 = vmul.f32 %v2260, %v580
  %v2309 = vmul.f32 %v2261, %v560
  %v2310 = vmul.f32 %v2262, %v564
  %v2311 = vmul.f32 %v2263, %v568
  %v2312 = vmul.f32 %v2264, %v572
  %v2313 = vmul.f32 %v2265, %v576
  %v2314 = vmul.f32 %v2266, %v580
  %v2315 = vadd.f32 %v2291, %v2303
  %v2316 = vadd.f32 %v2292, %v2304
  %v2317 = vadd.f32 %v2293, %v2305
  %v2318 = vadd.f32 %v2294, %v2306
  %v2319 = vadd.f32 %v2295, %v2307
  %v2320 = vadd.f32 %v2296, %v2308
  %v2321 = vadd.f32 %v2297, %v2309
  %v2322 = vadd.f32 %v2298, %v2310
  %v2323 = vadd.f32 %v2299, %v2311
  %v2324 = vadd.f32 %v2300, %v2312
  %v2325 = vadd.f32 %v2301, %v2313
  %v2326 = vadd.f32 %v2302, %v2314
  %v2327 = vrot.slane %v2255, 1
  %v2328 = vrot.slane %v2256, 1
  %v2329 = vrot.slane %v2257, 1
  %v2330 = vrot.slane %v2258, 1
  %v2331 = vrot.slane %v2259, 1
  %v2332 = vrot.slane %v2260, 1
  %v2333 = vrot.slane %v2261, 1
  %v2334 = vrot.slane %v2262, 1
  %v2335 = vrot.slane %v2263, 1
  %v2336 = vrot.slane %v2264, 1
  %v2337 = vrot.slane %v2265, 1
  %v2338 = vrot.slane %v2266, 1
  %v2339 = vsel %vm617, %v2327, %v2333
  %v2340 = vsel %vm617, %v2328, %v2334
  %v2341 = vsel %vm617, %v2329, %v2335
  %v2342 = vsel %vm617, %v2330, %v2336
  %v2343 = vsel %vm617, %v2331, %v2337
  %v2344 = vsel %vm617, %v2332, %v2338
  %v2345 = vsel %vm617, %v2333, %v2327
  %v2346 = vsel %vm617, %v2334, %v2328
  %v2347 = vsel %vm617, %v2335, %v2329
  %v2348 = vsel %vm617, %v2336, %v2330
  %v2349 = vsel %vm617, %v2337, %v2331
  %v2350 = vsel %vm617, %v2338, %v2332
  %v2351 = vmul.f32 %v2339, %v633
  %v2352 = vmul.f32 %v2340, %v637
  %v2353 = vmul.f32 %v2341, %v641
  %v2354 = vmul.f32 %v2342, %v645
  %v2355 = vmul.f32 %v2343, %v649
  %v2356 = vmul.f32 %v2344, %v653
  %v2357 = vmul.f32 %v2345, %v633
  %v2358 = vmul.f32 %v2346, %v637
  %v2359 = vmul.f32 %v2347, %v641
  %v2360 = vmul.f32 %v2348, %v645
  %v2361 = vmul.f32 %v2349, %v649
  %v2362 = vmul.f32 %v2350, %v653
  %v2363 = vadd.f32 %v2315, %v2351
  %v2364 = vadd.f32 %v2316, %v2352
  %v2365 = vadd.f32 %v2317, %v2353
  %v2366 = vadd.f32 %v2318, %v2354
  %v2367 = vadd.f32 %v2319, %v2355
  %v2368 = vadd.f32 %v2320, %v2356
  %v2369 = vadd.f32 %v2321, %v2357
  %v2370 = vadd.f32 %v2322, %v2358
  %v2371 = vadd.f32 %v2323, %v2359
  %v2372 = vadd.f32 %v2324, %v2360
  %v2373 = vadd.f32 %v2325, %v2361
  %v2374 = vadd.f32 %v2326, %v2362
  %v2375 = vld [vmem:[%s1989] sm:$0xff]
  %v2376 = vld [vmem:[%s1989 + $0x8] sm:$0xff]
  %v2377 = vld [vmem:[%s1989 + $0x10] sm:$0xff]
  %v2378 = vld [vmem:[%s1989 + $0x18] sm:$0xff]
  %v2379 = vld [vmem:[%s1989 + $0x20] sm:$0xff]
  %v2380 = vld [vmem:[%s1989 + $0x28] sm:$0xff]
  %v2381 = vld [vmem:[%s1989 + $0x30] sm:$0xff]
  %v2382 = vld [vmem:[%s1989 + $0x38] sm:$0xff]
  %v2383 = vld [vmem:[%s1989 + $0x40] sm:$0xff]
  %v2384 = vld [vmem:[%s1989 + $0x48] sm:$0xff]
  %v2385 = vld [vmem:[%s1989 + $0x50] sm:$0xff]
  %v2386 = vld [vmem:[%s1989 + $0x58] sm:$0xff]
  %v2387 = vrot.slane %v2375, 7
  %v2388 = vrot.slane %v2376, 7
  %v2389 = vrot.slane %v2377, 7
  %v2390 = vrot.slane %v2378, 7
  %v2391 = vrot.slane %v2379, 7
  %v2392 = vrot.slane %v2380, 7
  %v2393 = vrot.slane %v2381, 7
  %v2394 = vrot.slane %v2382, 7
  %v2395 = vrot.slane %v2383, 7
  %v2396 = vrot.slane %v2384, 7
  %v2397 = vrot.slane %v2385, 7
  %v2398 = vrot.slane %v2386, 7
  %v2399 = vsel %vm508, %v2387, %v2393
  %v2400 = vsel %vm508, %v2388, %v2394
  %v2401 = vsel %vm508, %v2389, %v2395
  %v2402 = vsel %vm508, %v2390, %v2396
  %v2403 = vsel %vm508, %v2391, %v2397
  %v2404 = vsel %vm508, %v2392, %v2398
  %v2405 = vsel %vm508, %v2393, %v2387
  %v2406 = vsel %vm508, %v2394, %v2388
  %v2407 = vsel %vm508, %v2395, %v2389
  %v2408 = vsel %vm508, %v2396, %v2390
  %v2409 = vsel %vm508, %v2397, %v2391
  %v2410 = vsel %vm508, %v2398, %v2392
  %v2411 = vmul.f32 %v2405, %v717
  %v2412 = vmul.f32 %v2406, %v721
  %v2413 = vmul.f32 %v2407, %v725
  %v2414 = vmul.f32 %v2408, %v729
  %v2415 = vmul.f32 %v2409, %v733
  %v2416 = vmul.f32 %v2410, %v737
  %v2417 = vmul.f32 %v2399, %v717
  %v2418 = vmul.f32 %v2400, %v721
  %v2419 = vmul.f32 %v2401, %v725
  %v2420 = vmul.f32 %v2402, %v729
  %v2421 = vmul.f32 %v2403, %v733
  %v2422 = vmul.f32 %v2404, %v737
  %v2423 = vmul.f32 %v2375, %v753
  %v2424 = vmul.f32 %v2376, %v757
  %v2425 = vmul.f32 %v2377, %v761
  %v2426 = vmul.f32 %v2378, %v765
  %v2427 = vmul.f32 %v2379, %v769
  %v2428 = vmul.f32 %v2380, %v773
  %v2429 = vmul.f32 %v2381, %v753
  %v2430 = vmul.f32 %v2382, %v757
  %v2431 = vmul.f32 %v2383, %v761
  %v2432 = vmul.f32 %v2384, %v765
  %v2433 = vmul.f32 %v2385, %v769
  %v2434 = vmul.f32 %v2386, %v773
  %v2435 = vadd.f32 %v2411, %v2423
  %v2436 = vadd.f32 %v2412, %v2424
  %v2437 = vadd.f32 %v2413, %v2425
  %v2438 = vadd.f32 %v2414, %v2426
  %v2439 = vadd.f32 %v2415, %v2427
  %v2440 = vadd.f32 %v2416, %v2428
  %v2441 = vadd.f32 %v2417, %v2429
  %v2442 = vadd.f32 %v2418, %v2430
  %v2443 = vadd.f32 %v2419, %v2431
  %v2444 = vadd.f32 %v2420, %v2432
  %v2445 = vadd.f32 %v2421, %v2433
  %v2446 = vadd.f32 %v2422, %v2434
  %v2447 = vrot.slane %v2375, 1
  %v2448 = vrot.slane %v2376, 1
  %v2449 = vrot.slane %v2377, 1
  %v2450 = vrot.slane %v2378, 1
  %v2451 = vrot.slane %v2379, 1
  %v2452 = vrot.slane %v2380, 1
  %v2453 = vrot.slane %v2381, 1
  %v2454 = vrot.slane %v2382, 1
  %v2455 = vrot.slane %v2383, 1
  %v2456 = vrot.slane %v2384, 1
  %v2457 = vrot.slane %v2385, 1
  %v2458 = vrot.slane %v2386, 1
  %v2459 = vsel %vm617, %v2447, %v2453
  %v2460 = vsel %vm617, %v2448, %v2454
  %v2461 = vsel %vm617, %v2449, %v2455
  %v2462 = vsel %vm617, %v2450, %v2456
  %v2463 = vsel %vm617, %v2451, %v2457
  %v2464 = vsel %vm617, %v2452, %v2458
  %v2465 = vsel %vm617, %v2453, %v2447
  %v2466 = vsel %vm617, %v2454, %v2448
  %v2467 = vsel %vm617, %v2455, %v2449
  %v2468 = vsel %vm617, %v2456, %v2450
  %v2469 = vsel %vm617, %v2457, %v2451
  %v2470 = vsel %vm617, %v2458, %v2452
  %v2471 = vmul.f32 %v2459, %v825
  %v2472 = vmul.f32 %v2460, %v829
  %v2473 = vmul.f32 %v2461, %v833
  %v2474 = vmul.f32 %v2462, %v837
  %v2475 = vmul.f32 %v2463, %v841
  %v2476 = vmul.f32 %v2464, %v845
  %v2477 = vmul.f32 %v2465, %v825
  %v2478 = vmul.f32 %v2466, %v829
  %v2479 = vmul.f32 %v2467, %v833
  %v2480 = vmul.f32 %v2468, %v837
  %v2481 = vmul.f32 %v2469, %v841
  %v2482 = vmul.f32 %v2470, %v845
  %v2483 = vadd.f32 %v2435, %v2471
  %v2484 = vadd.f32 %v2436, %v2472
  %v2485 = vadd.f32 %v2437, %v2473
  %v2486 = vadd.f32 %v2438, %v2474
  %v2487 = vadd.f32 %v2439, %v2475
  %v2488 = vadd.f32 %v2440, %v2476
  %v2489 = vadd.f32 %v2441, %v2477
  %v2490 = vadd.f32 %v2442, %v2478
  %v2491 = vadd.f32 %v2443, %v2479
  %v2492 = vadd.f32 %v2444, %v2480
  %v2493 = vadd.f32 %v2445, %v2481
  %v2494 = vadd.f32 %v2446, %v2482
  %v2495 = vadd.f32 %v2363, %v2483
  %v2496 = vadd.f32 %v2364, %v2484
  %v2497 = vadd.f32 %v2365, %v2485
  %v2498 = vadd.f32 %v2366, %v2486
  %v2499 = vadd.f32 %v2367, %v2487
  %v2500 = vadd.f32 %v2368, %v2488
  %v2501 = vadd.f32 %v2369, %v2489
  %v2502 = vadd.f32 %v2370, %v2490
  %v2503 = vadd.f32 %v2371, %v2491
  %v2504 = vadd.f32 %v2372, %v2492
  %v2505 = vadd.f32 %v2373, %v2493
  %v2506 = vadd.f32 %v2374, %v2494
  %s2507 = scalar_lea.vmem [#allocation2], 480
  %v2508 = vld [vmem:[%s2507] sm:$0xff]
  %v2509 = vld [vmem:[%s2507 + $0x8] sm:$0xff]
  %v2510 = vld [vmem:[%s2507 + $0x10] sm:$0xff]
  %v2511 = vld [vmem:[%s2507 + $0x18] sm:$0xff]
  %v2512 = vld [vmem:[%s2507 + $0x20] sm:$0xff]
  %v2513 = vld [vmem:[%s2507 + $0x28] sm:$0xff]
  %v2514 = vld [vmem:[%s2507 + $0x30] sm:$0xff]
  %v2515 = vld [vmem:[%s2507 + $0x38] sm:$0xff]
  %v2516 = vld [vmem:[%s2507 + $0x40] sm:$0xff]
  %v2517 = vld [vmem:[%s2507 + $0x48] sm:$0xff]
  %v2518 = vld [vmem:[%s2507 + $0x50] sm:$0xff]
  %v2519 = vld [vmem:[%s2507 + $0x58] sm:$0xff]
  %v2520 = vrot.slane %v2508, 7
  %v2521 = vrot.slane %v2509, 7
  %v2522 = vrot.slane %v2510, 7
  %v2523 = vrot.slane %v2511, 7
  %v2524 = vrot.slane %v2512, 7
  %v2525 = vrot.slane %v2513, 7
  %v2526 = vrot.slane %v2514, 7
  %v2527 = vrot.slane %v2515, 7
  %v2528 = vrot.slane %v2516, 7
  %v2529 = vrot.slane %v2517, 7
  %v2530 = vrot.slane %v2518, 7
  %v2531 = vrot.slane %v2519, 7
  %v2532 = vsel %vm508, %v2520, %v2526
  %v2533 = vsel %vm508, %v2521, %v2527
  %v2534 = vsel %vm508, %v2522, %v2528
  %v2535 = vsel %vm508, %v2523, %v2529
  %v2536 = vsel %vm508, %v2524, %v2530
  %v2537 = vsel %vm508, %v2525, %v2531
  %v2538 = vsel %vm508, %v2526, %v2520
  %v2539 = vsel %vm508, %v2527, %v2521
  %v2540 = vsel %vm508, %v2528, %v2522
  %v2541 = vsel %vm508, %v2529, %v2523
  %v2542 = vsel %vm508, %v2530, %v2524
  %v2543 = vsel %vm508, %v2531, %v2525
  %v2544 = vmul.f32 %v2538, %v922
  %v2545 = vmul.f32 %v2539, %v926
  %v2546 = vmul.f32 %v2540, %v930
  %v2547 = vmul.f32 %v2541, %v934
  %v2548 = vmul.f32 %v2542, %v938
  %v2549 = vmul.f32 %v2543, %v942
  %v2550 = vmul.f32 %v2532, %v922
  %v2551 = vmul.f32 %v2533, %v926
  %v2552 = vmul.f32 %v2534, %v930
  %v2553 = vmul.f32 %v2535, %v934
  %v2554 = vmul.f32 %v2536, %v938
  %v2555 = vmul.f32 %v2537, %v942
  %v2556 = vmul.f32 %v2508, %v958
  %v2557 = vmul.f32 %v2509, %v962
  %v2558 = vmul.f32 %v2510, %v966
  %v2559 = vmul.f32 %v2511, %v970
  %v2560 = vmul.f32 %v2512, %v974
  %v2561 = vmul.f32 %v2513, %v978
  %v2562 = vmul.f32 %v2514, %v958
  %v2563 = vmul.f32 %v2515, %v962
  %v2564 = vmul.f32 %v2516, %v966
  %v2565 = vmul.f32 %v2517, %v970
  %v2566 = vmul.f32 %v2518, %v974
  %v2567 = vmul.f32 %v2519, %v978
  %v2568 = vadd.f32 %v2544, %v2556
  %v2569 = vadd.f32 %v2545, %v2557
  %v2570 = vadd.f32 %v2546, %v2558
  %v2571 = vadd.f32 %v2547, %v2559
  %v2572 = vadd.f32 %v2548, %v2560
  %v2573 = vadd.f32 %v2549, %v2561
  %v2574 = vadd.f32 %v2550, %v2562
  %v2575 = vadd.f32 %v2551, %v2563
  %v2576 = vadd.f32 %v2552, %v2564
  %v2577 = vadd.f32 %v2553, %v2565
  %v2578 = vadd.f32 %v2554, %v2566
  %v2579 = vadd.f32 %v2555, %v2567
  %v2580 = vrot.slane %v2508, 1
  %v2581 = vrot.slane %v2509, 1
  %v2582 = vrot.slane %v2510, 1
  %v2583 = vrot.slane %v2511, 1
  %v2584 = vrot.slane %v2512, 1
  %v2585 = vrot.slane %v2513, 1
  %v2586 = vrot.slane %v2514, 1
  %v2587 = vrot.slane %v2515, 1
  %v2588 = vrot.slane %v2516, 1
  %v2589 = vrot.slane %v2517, 1
  %v2590 = vrot.slane %v2518, 1
  %v2591 = vrot.slane %v2519, 1
  %v2592 = vsel %vm617, %v2580, %v2586
  %v2593 = vsel %vm617, %v2581, %v2587
  %v2594 = vsel %vm617, %v2582, %v2588
  %v2595 = vsel %vm617, %v2583, %v2589
  %v2596 = vsel %vm617, %v2584, %v2590
  %v2597 = vsel %vm617, %v2585, %v2591
  %v2598 = vsel %vm617, %v2586, %v2580
  %v2599 = vsel %vm617, %v2587, %v2581
  %v2600 = vsel %vm617, %v2588, %v2582
  %v2601 = vsel %vm617, %v2589, %v2583
  %v2602 = vsel %vm617, %v2590, %v2584
  %v2603 = vsel %vm617, %v2591, %v2585
  %v2604 = vmul.f32 %v2592, %v1030
  %v2605 = vmul.f32 %v2593, %v1034
  %v2606 = vmul.f32 %v2594, %v1038
  %v2607 = vmul.f32 %v2595, %v1042
  %v2608 = vmul.f32 %v2596, %v1046
  %v2609 = vmul.f32 %v2597, %v1050
  %v2610 = vmul.f32 %v2598, %v1030
  %v2611 = vmul.f32 %v2599, %v1034
  %v2612 = vmul.f32 %v2600, %v1038
  %v2613 = vmul.f32 %v2601, %v1042
  %v2614 = vmul.f32 %v2602, %v1046
  %v2615 = vmul.f32 %v2603, %v1050
  %v2616 = vadd.f32 %v2568, %v2604
  %v2617 = vadd.f32 %v2569, %v2605
  %v2618 = vadd.f32 %v2570, %v2606
  %v2619 = vadd.f32 %v2571, %v2607
  %v2620 = vadd.f32 %v2572, %v2608
  %v2621 = vadd.f32 %v2573, %v2609
  %v2622 = vadd.f32 %v2574, %v2610
  %v2623 = vadd.f32 %v2575, %v2611
  %v2624 = vadd.f32 %v2576, %v2612
  %v2625 = vadd.f32 %v2577, %v2613
  %v2626 = vadd.f32 %v2578, %v2614
  %v2627 = vadd.f32 %v2579, %v2615
  %v2628 = vadd.f32 %v2495, %v2616
  %v2629 = vadd.f32 %v2496, %v2617
  %v2630 = vadd.f32 %v2497, %v2618
  %v2631 = vadd.f32 %v2498, %v2619
  %v2632 = vadd.f32 %v2499, %v2620
  %v2633 = vadd.f32 %v2500, %v2621
  %v2634 = vadd.f32 %v2501, %v2622
  %v2635 = vadd.f32 %v2502, %v2623
  %v2636 = vadd.f32 %v2503, %v2624
  %v2637 = vadd.f32 %v2504, %v2625
  %v2638 = vadd.f32 %v2505, %v2626
  %v2639 = vadd.f32 %v2506, %v2627
  %s2640 = scalar_lea.vmem [#allocation3], 288
  %2641 = vst [vmem:[%s2640] sm:$0xff] %v2628
  %2642 = vst [vmem:[%s2640 + $0x8] sm:$0xff] %v2629
  %2643 = vst [vmem:[%s2640 + $0x10] sm:$0xff] %v2630
  %2644 = vst [vmem:[%s2640 + $0x18] sm:$0xff] %v2631
  %2645 = vst [vmem:[%s2640 + $0x20] sm:$0xff] %v2632
  %2646 = vst [vmem:[%s2640 + $0x28] sm:$0xff] %v2633
  %2647 = vst [vmem:[%s2640 + $0x30] sm:$0xff] %v2634
  %2648 = vst [vmem:[%s2640 + $0x38] sm:$0xff] %v2635
  %2649 = vst [vmem:[%s2640 + $0x40] sm:$0xff] %v2636
  %2650 = vst [vmem:[%s2640 + $0x48] sm:$0xff] %v2637
  %2651 = vst [vmem:[%s2640 + $0x50] sm:$0xff] %v2638
  %2652 = vst [vmem:[%s2640 + $0x58] sm:$0xff] %v2639
  %v2653 = vmul.f32 %v2628, %v482
  %v2654 = vmul.f32 %v2629, %v482
  %v2655 = vmul.f32 %v2630, %v482
  %v2656 = vmul.f32 %v2631, %v482
  %v2657 = vmul.f32 %v2632, %v482
  %v2658 = vmul.f32 %v2633, %v482
  %v2659 = vmul.f32 %v2634, %v483
  %v2660 = vmul.f32 %v2635, %v483
  %v2661 = vmul.f32 %v2636, %v483
  %v2662 = vmul.f32 %v2637, %v483
  %v2663 = vmul.f32 %v2638, %v483
  %v2664 = vmul.f32 %v2639, %v483
  %v2665 = vadd.f32 %v2653, %v2659
  %v2666 = vrot.slane %v2665, 4
  %v2667 = vadd.f32 %v2665, %v2666
  %v2668 = vrot.slane %v2667, 2
  %v2669 = vadd.f32 %v2667, %v2668
  %v2670 = vrot.slane %v2669, 1
  %v2671 = vadd.f32 %v2669, %v2670
  %v2672 = vadd.f32 %v2654, %v2660
  %v2673 = vrot.slane %v2672, 4
  %v2674 = vadd.f32 %v2672, %v2673
  %v2675 = vrot.slane %v2674, 2
  %v2676 = vadd.f32 %v2674, %v2675
  %v2677 = vrot.slane %v2676, 1
  %v2678 = vadd.f32 %v2676, %v2677
  %v2679 = vadd.f32 %v2655, %v2661
  %v2680 = vrot.slane %v2679, 4
  %v2681 = vadd.f32 %v2679, %v2680
  %v2682 = vrot.slane %v2681, 2
  %v2683 = vadd.f32 %v2681, %v2682
  %v2684 = vrot.slane %v2683, 1
  %v2685 = vadd.f32 %v2683, %v2684
  %v2686 = vadd.f32 %v2656, %v2662
  %v2687 = vrot.slane %v2686, 4
  %v2688 = vadd.f32 %v2686, %v2687
  %v2689 = vrot.slane %v2688, 2
  %v2690 = vadd.f32 %v2688, %v2689
  %v2691 = vrot.slane %v2690, 1
  %v2692 = vadd.f32 %v2690, %v2691
  %v2693 = vadd.f32 %v2657, %v2663
  %v2694 = vrot.slane %v2693, 4
  %v2695 = vadd.f32 %v2693, %v2694
  %v2696 = vrot.slane %v2695, 2
  %v2697 = vadd.f32 %v2695, %v2696
  %v2698 = vrot.slane %v2697, 1
  %v2699 = vadd.f32 %v2697, %v2698
  %v2700 = vadd.f32 %v2658, %v2664
  %v2701 = vrot.slane %v2700, 4
  %v2702 = vadd.f32 %v2700, %v2701
  %v2703 = vrot.slane %v2702, 2
  %v2704 = vadd.f32 %v2702, %v2703
  %v2705 = vrot.slane %v2704, 1
  %v2706 = vadd.f32 %v2704, %v2705
  %v2707 = vadd.f32 %v2189, %v2671
  %v2708 = vadd.f32 %v2190, %v2678
  %v2709 = vadd.f32 %v2191, %v2685
  %v2710 = vadd.f32 %v2192, %v2692
  %v2711 = vadd.f32 %v2193, %v2699
  %v2712 = vadd.f32 %v2194, %v2706
  %v2713 = vmul.f32 %v2653, %v2628
  %v2714 = vmul.f32 %v2654, %v2629
  %v2715 = vmul.f32 %v2655, %v2630
  %v2716 = vmul.f32 %v2656, %v2631
  %v2717 = vmul.f32 %v2657, %v2632
  %v2718 = vmul.f32 %v2658, %v2633
  %v2719 = vmul.f32 %v2659, %v2634
  %v2720 = vmul.f32 %v2660, %v2635
  %v2721 = vmul.f32 %v2661, %v2636
  %v2722 = vmul.f32 %v2662, %v2637
  %v2723 = vmul.f32 %v2663, %v2638
  %v2724 = vmul.f32 %v2664, %v2639
  %v2725 = vadd.f32 %v2713, %v2719
  %v2726 = vrot.slane %v2725, 4
  %v2727 = vadd.f32 %v2725, %v2726
  %v2728 = vrot.slane %v2727, 2
  %v2729 = vadd.f32 %v2727, %v2728
  %v2730 = vrot.slane %v2729, 1
  %v2731 = vadd.f32 %v2729, %v2730
  %v2732 = vadd.f32 %v2714, %v2720
  %v2733 = vrot.slane %v2732, 4
  %v2734 = vadd.f32 %v2732, %v2733
  %v2735 = vrot.slane %v2734, 2
  %v2736 = vadd.f32 %v2734, %v2735
  %v2737 = vrot.slane %v2736, 1
  %v2738 = vadd.f32 %v2736, %v2737
  %v2739 = vadd.f32 %v2715, %v2721
  %v2740 = vrot.slane %v2739, 4
  %v2741 = vadd.f32 %v2739, %v2740
  %v2742 = vrot.slane %v2741, 2
  %v2743 = vadd.f32 %v2741, %v2742
  %v2744 = vrot.slane %v2743, 1
  %v2745 = vadd.f32 %v2743, %v2744
  %v2746 = vadd.f32 %v2716, %v2722
  %v2747 = vrot.slane %v2746, 4
  %v2748 = vadd.f32 %v2746, %v2747
  %v2749 = vrot.slane %v2748, 2
  %v2750 = vadd.f32 %v2748, %v2749
  %v2751 = vrot.slane %v2750, 1
  %v2752 = vadd.f32 %v2750, %v2751
  %v2753 = vadd.f32 %v2717, %v2723
  %v2754 = vrot.slane %v2753, 4
  %v2755 = vadd.f32 %v2753, %v2754
  %v2756 = vrot.slane %v2755, 2
  %v2757 = vadd.f32 %v2755, %v2756
  %v2758 = vrot.slane %v2757, 1
  %v2759 = vadd.f32 %v2757, %v2758
  %v2760 = vadd.f32 %v2718, %v2724
  %v2761 = vrot.slane %v2760, 4
  %v2762 = vadd.f32 %v2760, %v2761
  %v2763 = vrot.slane %v2762, 2
  %v2764 = vadd.f32 %v2762, %v2763
  %v2765 = vrot.slane %v2764, 1
  %v2766 = vadd.f32 %v2764, %v2765
  %v2767 = vadd.f32 %v2249, %v2731
  %v2768 = vadd.f32 %v2250, %v2738
  %v2769 = vadd.f32 %v2251, %v2745
  %v2770 = vadd.f32 %v2252, %v2752
  %v2771 = vadd.f32 %v2253, %v2759
  %v2772 = vadd.f32 %v2254, %v2766
  %v2773 = vld [vmem:[%s1989] sm:$0xff]
  %v2774 = vld [vmem:[%s1989 + $0x8] sm:$0xff]
  %v2775 = vld [vmem:[%s1989 + $0x10] sm:$0xff]
  %v2776 = vld [vmem:[%s1989 + $0x18] sm:$0xff]
  %v2777 = vld [vmem:[%s1989 + $0x20] sm:$0xff]
  %v2778 = vld [vmem:[%s1989 + $0x28] sm:$0xff]
  %v2779 = vld [vmem:[%s1989 + $0x30] sm:$0xff]
  %v2780 = vld [vmem:[%s1989 + $0x38] sm:$0xff]
  %v2781 = vld [vmem:[%s1989 + $0x40] sm:$0xff]
  %v2782 = vld [vmem:[%s1989 + $0x48] sm:$0xff]
  %v2783 = vld [vmem:[%s1989 + $0x50] sm:$0xff]
  %v2784 = vld [vmem:[%s1989 + $0x58] sm:$0xff]
  %v2785 = vrot.slane %v2773, 7
  %v2786 = vrot.slane %v2774, 7
  %v2787 = vrot.slane %v2775, 7
  %v2788 = vrot.slane %v2776, 7
  %v2789 = vrot.slane %v2777, 7
  %v2790 = vrot.slane %v2778, 7
  %v2791 = vrot.slane %v2779, 7
  %v2792 = vrot.slane %v2780, 7
  %v2793 = vrot.slane %v2781, 7
  %v2794 = vrot.slane %v2782, 7
  %v2795 = vrot.slane %v2783, 7
  %v2796 = vrot.slane %v2784, 7
  %v2797 = vsel %vm508, %v2785, %v2791
  %v2798 = vsel %vm508, %v2786, %v2792
  %v2799 = vsel %vm508, %v2787, %v2793
  %v2800 = vsel %vm508, %v2788, %v2794
  %v2801 = vsel %vm508, %v2789, %v2795
  %v2802 = vsel %vm508, %v2790, %v2796
  %v2803 = vsel %vm508, %v2791, %v2785
  %v2804 = vsel %vm508, %v2792, %v2786
  %v2805 = vsel %vm508, %v2793, %v2787
  %v2806 = vsel %vm508, %v2794, %v2788
  %v2807 = vsel %vm508, %v2795, %v2789
  %v2808 = vsel %vm508, %v2796, %v2790
  %v2809 = vmul.f32 %v2803, %v524
  %v2810 = vmul.f32 %v2804, %v528
  %v2811 = vmul.f32 %v2805, %v532
  %v2812 = vmul.f32 %v2806, %v536
  %v2813 = vmul.f32 %v2807, %v540
  %v2814 = vmul.f32 %v2808, %v544
  %v2815 = vmul.f32 %v2797, %v524
  %v2816 = vmul.f32 %v2798, %v528
  %v2817 = vmul.f32 %v2799, %v532
  %v2818 = vmul.f32 %v2800, %v536
  %v2819 = vmul.f32 %v2801, %v540
  %v2820 = vmul.f32 %v2802, %v544
  %v2821 = vmul.f32 %v2773, %v560
  %v2822 = vmul.f32 %v2774, %v564
  %v2823 = vmul.f32 %v2775, %v568
  %v2824 = vmul.f32 %v2776, %v572
  %v2825 = vmul.f32 %v2777, %v576
  %v2826 = vmul.f32 %v2778, %v580
  %v2827 = vmul.f32 %v2779, %v560
  %v2828 = vmul.f32 %v2780, %v564
  %v2829 = vmul.f32 %v2781, %v568
  %v2830 = vmul.f32 %v2782, %v572
  %v2831 = vmul.f32 %v2783, %v576
  %v2832 = vmul.f32 %v2784, %v580
  %v2833 = vadd.f32 %v2809, %v2821
  %v2834 = vadd.f32 %v2810, %v2822
  %v2835 = vadd.f32 %v2811, %v2823
  %v2836 = vadd.f32 %v2812, %v2824
  %v2837 = vadd.f32 %v2813, %v2825
  %v2838 = vadd.f32 %v2814, %v2826
  %v2839 = vadd.f32 %v2815, %v2827
  %v2840 = vadd.f32 %v2816, %v2828
  %v2841 = vadd.f32 %v2817, %v2829
  %v2842 = vadd.f32 %v2818, %v2830
  %v2843 = vadd.f32 %v2819, %v2831
  %v2844 = vadd.f32 %v2820, %v2832
  %v2845 = vrot.slane %v2773, 1
  %v2846 = vrot.slane %v2774, 1
  %v2847 = vrot.slane %v2775, 1
  %v2848 = vrot.slane %v2776, 1
  %v2849 = vrot.slane %v2777, 1
  %v2850 = vrot.slane %v2778, 1
  %v2851 = vrot.slane %v2779, 1
  %v2852 = vrot.slane %v2780, 1
  %v2853 = vrot.slane %v2781, 1
  %v2854 = vrot.slane %v2782, 1
  %v2855 = vrot.slane %v2783, 1
  %v2856 = vrot.slane %v2784, 1
  %v2857 = vsel %vm617, %v2845, %v2851
  %v2858 = vsel %vm617, %v2846, %v2852
  %v2859 = vsel %vm617, %v2847, %v2853
  %v2860 = vsel %vm617, %v2848, %v2854
  %v2861 = vsel %vm617, %v2849, %v2855
  %v2862 = vsel %vm617, %v2850, %v2856
  %v2863 = vsel %vm617, %v2851, %v2845
  %v2864 = vsel %vm617, %v2852, %v2846
  %v2865 = vsel %vm617, %v2853, %v2847
  %v2866 = vsel %vm617, %v2854, %v2848
  %v2867 = vsel %vm617, %v2855, %v2849
  %v2868 = vsel %vm617, %v2856, %v2850
  %v2869 = vmul.f32 %v2857, %v633
  %v2870 = vmul.f32 %v2858, %v637
  %v2871 = vmul.f32 %v2859, %v641
  %v2872 = vmul.f32 %v2860, %v645
  %v2873 = vmul.f32 %v2861, %v649
  %v2874 = vmul.f32 %v2862, %v653
  %v2875 = vmul.f32 %v2863, %v633
  %v2876 = vmul.f32 %v2864, %v637
  %v2877 = vmul.f32 %v2865, %v641
  %v2878 = vmul.f32 %v2866, %v645
  %v2879 = vmul.f32 %v2867, %v649
  %v2880 = vmul.f32 %v2868, %v653
  %v2881 = vadd.f32 %v2833, %v2869
  %v2882 = vadd.f32 %v2834, %v2870
  %v2883 = vadd.f32 %v2835, %v2871
  %v2884 = vadd.f32 %v2836, %v2872
  %v2885 = vadd.f32 %v2837, %v2873
  %v2886 = vadd.f32 %v2838, %v2874
  %v2887 = vadd.f32 %v2839, %v2875
  %v2888 = vadd.f32 %v2840, %v2876
  %v2889 = vadd.f32 %v2841, %v2877
  %v2890 = vadd.f32 %v2842, %v2878
  %v2891 = vadd.f32 %v2843, %v2879
  %v2892 = vadd.f32 %v2844, %v2880
  %v2893 = vld [vmem:[%s2507] sm:$0xff]
  %v2894 = vld [vmem:[%s2507 + $0x8] sm:$0xff]
  %v2895 = vld [vmem:[%s2507 + $0x10] sm:$0xff]
  %v2896 = vld [vmem:[%s2507 + $0x18] sm:$0xff]
  %v2897 = vld [vmem:[%s2507 + $0x20] sm:$0xff]
  %v2898 = vld [vmem:[%s2507 + $0x28] sm:$0xff]
  %v2899 = vld [vmem:[%s2507 + $0x30] sm:$0xff]
  %v2900 = vld [vmem:[%s2507 + $0x38] sm:$0xff]
  %v2901 = vld [vmem:[%s2507 + $0x40] sm:$0xff]
  %v2902 = vld [vmem:[%s2507 + $0x48] sm:$0xff]
  %v2903 = vld [vmem:[%s2507 + $0x50] sm:$0xff]
  %v2904 = vld [vmem:[%s2507 + $0x58] sm:$0xff]
  %v2905 = vrot.slane %v2893, 7
  %v2906 = vrot.slane %v2894, 7
  %v2907 = vrot.slane %v2895, 7
  %v2908 = vrot.slane %v2896, 7
  %v2909 = vrot.slane %v2897, 7
  %v2910 = vrot.slane %v2898, 7
  %v2911 = vrot.slane %v2899, 7
  %v2912 = vrot.slane %v2900, 7
  %v2913 = vrot.slane %v2901, 7
  %v2914 = vrot.slane %v2902, 7
  %v2915 = vrot.slane %v2903, 7
  %v2916 = vrot.slane %v2904, 7
  %v2917 = vsel %vm508, %v2905, %v2911
  %v2918 = vsel %vm508, %v2906, %v2912
  %v2919 = vsel %vm508, %v2907, %v2913
  %v2920 = vsel %vm508, %v2908, %v2914
  %v2921 = vsel %vm508, %v2909, %v2915
  %v2922 = vsel %vm508, %v2910, %v2916
  %v2923 = vsel %vm508, %v2911, %v2905
  %v2924 = vsel %vm508, %v2912, %v2906
  %v2925 = vsel %vm508, %v2913, %v2907
  %v2926 = vsel %vm508, %v2914, %v2908
  %v2927 = vsel %vm508, %v2915, %v2909
  %v2928 = vsel %vm508, %v2916, %v2910
  %v2929 = vmul.f32 %v2923, %v717
  %v2930 = vmul.f32 %v2924, %v721
  %v2931 = vmul.f32 %v2925, %v725
  %v2932 = vmul.f32 %v2926, %v729
  %v2933 = vmul.f32 %v2927, %v733
  %v2934 = vmul.f32 %v2928, %v737
  %v2935 = vmul.f32 %v2917, %v717
  %v2936 = vmul.f32 %v2918, %v721
  %v2937 = vmul.f32 %v2919, %v725
  %v2938 = vmul.f32 %v2920, %v729
  %v2939 = vmul.f32 %v2921, %v733
  %v2940 = vmul.f32 %v2922, %v737
  %v2941 = vmul.f32 %v2893, %v753
  %v2942 = vmul.f32 %v2894, %v757
  %v2943 = vmul.f32 %v2895, %v761
  %v2944 = vmul.f32 %v2896, %v765
  %v2945 = vmul.f32 %v2897, %v769
  %v2946 = vmul.f32 %v2898, %v773
  %v2947 = vmul.f32 %v2899, %v753
  %v2948 = vmul.f32 %v2900, %v757
  %v2949 = vmul.f32 %v2901, %v761
  %v2950 = vmul.f32 %v2902, %v765
  %v2951 = vmul.f32 %v2903, %v769
  %v2952 = vmul.f32 %v2904, %v773
  %v2953 = vadd.f32 %v2929, %v2941
  %v2954 = vadd.f32 %v2930, %v2942
  %v2955 = vadd.f32 %v2931, %v2943
  %v2956 = vadd.f32 %v2932, %v2944
  %v2957 = vadd.f32 %v2933, %v2945
  %v2958 = vadd.f32 %v2934, %v2946
  %v2959 = vadd.f32 %v2935, %v2947
  %v2960 = vadd.f32 %v2936, %v2948
  %v2961 = vadd.f32 %v2937, %v2949
  %v2962 = vadd.f32 %v2938, %v2950
  %v2963 = vadd.f32 %v2939, %v2951
  %v2964 = vadd.f32 %v2940, %v2952
  %v2965 = vrot.slane %v2893, 1
  %v2966 = vrot.slane %v2894, 1
  %v2967 = vrot.slane %v2895, 1
  %v2968 = vrot.slane %v2896, 1
  %v2969 = vrot.slane %v2897, 1
  %v2970 = vrot.slane %v2898, 1
  %v2971 = vrot.slane %v2899, 1
  %v2972 = vrot.slane %v2900, 1
  %v2973 = vrot.slane %v2901, 1
  %v2974 = vrot.slane %v2902, 1
  %v2975 = vrot.slane %v2903, 1
  %v2976 = vrot.slane %v2904, 1
  %v2977 = vsel %vm617, %v2965, %v2971
  %v2978 = vsel %vm617, %v2966, %v2972
  %v2979 = vsel %vm617, %v2967, %v2973
  %v2980 = vsel %vm617, %v2968, %v2974
  %v2981 = vsel %vm617, %v2969, %v2975
  %v2982 = vsel %vm617, %v2970, %v2976
  %v2983 = vsel %vm617, %v2971, %v2965
  %v2984 = vsel %vm617, %v2972, %v2966
  %v2985 = vsel %vm617, %v2973, %v2967
  %v2986 = vsel %vm617, %v2974, %v2968
  %v2987 = vsel %vm617, %v2975, %v2969
  %v2988 = vsel %vm617, %v2976, %v2970
  %v2989 = vmul.f32 %v2977, %v825
  %v2990 = vmul.f32 %v2978, %v829
  %v2991 = vmul.f32 %v2979, %v833
  %v2992 = vmul.f32 %v2980, %v837
  %v2993 = vmul.f32 %v2981, %v841
  %v2994 = vmul.f32 %v2982, %v845
  %v2995 = vmul.f32 %v2983, %v825
  %v2996 = vmul.f32 %v2984, %v829
  %v2997 = vmul.f32 %v2985, %v833
  %v2998 = vmul.f32 %v2986, %v837
  %v2999 = vmul.f32 %v2987, %v841
  %v3000 = vmul.f32 %v2988, %v845
  %v3001 = vadd.f32 %v2953, %v2989
  %v3002 = vadd.f32 %v2954, %v2990
  %v3003 = vadd.f32 %v2955, %v2991
  %v3004 = vadd.f32 %v2956, %v2992
  %v3005 = vadd.f32 %v2957, %v2993
  %v3006 = vadd.f32 %v2958, %v2994
  %v3007 = vadd.f32 %v2959, %v2995
  %v3008 = vadd.f32 %v2960, %v2996
  %v3009 = vadd.f32 %v2961, %v2997
  %v3010 = vadd.f32 %v2962, %v2998
  %v3011 = vadd.f32 %v2963, %v2999
  %v3012 = vadd.f32 %v2964, %v3000
  %v3013 = vadd.f32 %v2881, %v3001
  %v3014 = vadd.f32 %v2882, %v3002
  %v3015 = vadd.f32 %v2883, %v3003
  %v3016 = vadd.f32 %v2884, %v3004
  %v3017 = vadd.f32 %v2885, %v3005
  %v3018 = vadd.f32 %v2886, %v3006
  %v3019 = vadd.f32 %v2887, %v3007
  %v3020 = vadd.f32 %v2888, %v3008
  %v3021 = vadd.f32 %v2889, %v3009
  %v3022 = vadd.f32 %v2890, %v3010
  %v3023 = vadd.f32 %v2891, %v3011
  %v3024 = vadd.f32 %v2892, %v3012
  %s3025 = scalar_lea.vmem [#allocation2], 576
  %v3026 = vld [vmem:[%s3025] sm:$0xff]
  %v3027 = vld [vmem:[%s3025 + $0x8] sm:$0xff]
  %v3028 = vld [vmem:[%s3025 + $0x10] sm:$0xff]
  %v3029 = vld [vmem:[%s3025 + $0x18] sm:$0xff]
  %v3030 = vld [vmem:[%s3025 + $0x20] sm:$0xff]
  %v3031 = vld [vmem:[%s3025 + $0x28] sm:$0xff]
  %v3032 = vld [vmem:[%s3025 + $0x30] sm:$0xff]
  %v3033 = vld [vmem:[%s3025 + $0x38] sm:$0xff]
  %v3034 = vld [vmem:[%s3025 + $0x40] sm:$0xff]
  %v3035 = vld [vmem:[%s3025 + $0x48] sm:$0xff]
  %v3036 = vld [vmem:[%s3025 + $0x50] sm:$0xff]
  %v3037 = vld [vmem:[%s3025 + $0x58] sm:$0xff]
  %v3038 = vrot.slane %v3026, 7
  %v3039 = vrot.slane %v3027, 7
  %v3040 = vrot.slane %v3028, 7
  %v3041 = vrot.slane %v3029, 7
  %v3042 = vrot.slane %v3030, 7
  %v3043 = vrot.slane %v3031, 7
  %v3044 = vrot.slane %v3032, 7
  %v3045 = vrot.slane %v3033, 7
  %v3046 = vrot.slane %v3034, 7
  %v3047 = vrot.slane %v3035, 7
  %v3048 = vrot.slane %v3036, 7
  %v3049 = vrot.slane %v3037, 7
  %v3050 = vsel %vm508, %v3038, %v3044
  %v3051 = vsel %vm508, %v3039, %v3045
  %v3052 = vsel %vm508, %v3040, %v3046
  %v3053 = vsel %vm508, %v3041, %v3047
  %v3054 = vsel %vm508, %v3042, %v3048
  %v3055 = vsel %vm508, %v3043, %v3049
  %v3056 = vsel %vm508, %v3044, %v3038
  %v3057 = vsel %vm508, %v3045, %v3039
  %v3058 = vsel %vm508, %v3046, %v3040
  %v3059 = vsel %vm508, %v3047, %v3041
  %v3060 = vsel %vm508, %v3048, %v3042
  %v3061 = vsel %vm508, %v3049, %v3043
  %v3062 = vmul.f32 %v3056, %v922
  %v3063 = vmul.f32 %v3057, %v926
  %v3064 = vmul.f32 %v3058, %v930
  %v3065 = vmul.f32 %v3059, %v934
  %v3066 = vmul.f32 %v3060, %v938
  %v3067 = vmul.f32 %v3061, %v942
  %v3068 = vmul.f32 %v3050, %v922
  %v3069 = vmul.f32 %v3051, %v926
  %v3070 = vmul.f32 %v3052, %v930
  %v3071 = vmul.f32 %v3053, %v934
  %v3072 = vmul.f32 %v3054, %v938
  %v3073 = vmul.f32 %v3055, %v942
  %v3074 = vmul.f32 %v3026, %v958
  %v3075 = vmul.f32 %v3027, %v962
  %v3076 = vmul.f32 %v3028, %v966
  %v3077 = vmul.f32 %v3029, %v970
  %v3078 = vmul.f32 %v3030, %v974
  %v3079 = vmul.f32 %v3031, %v978
  %v3080 = vmul.f32 %v3032, %v958
  %v3081 = vmul.f32 %v3033, %v962
  %v3082 = vmul.f32 %v3034, %v966
  %v3083 = vmul.f32 %v3035, %v970
  %v3084 = vmul.f32 %v3036, %v974
  %v3085 = vmul.f32 %v3037, %v978
  %v3086 = vadd.f32 %v3062, %v3074
  %v3087 = vadd.f32 %v3063, %v3075
  %v3088 = vadd.f32 %v3064, %v3076
  %v3089 = vadd.f32 %v3065, %v3077
  %v3090 = vadd.f32 %v3066, %v3078
  %v3091 = vadd.f32 %v3067, %v3079
  %v3092 = vadd.f32 %v3068, %v3080
  %v3093 = vadd.f32 %v3069, %v3081
  %v3094 = vadd.f32 %v3070, %v3082
  %v3095 = vadd.f32 %v3071, %v3083
  %v3096 = vadd.f32 %v3072, %v3084
  %v3097 = vadd.f32 %v3073, %v3085
  %v3098 = vrot.slane %v3026, 1
  %v3099 = vrot.slane %v3027, 1
  %v3100 = vrot.slane %v3028, 1
  %v3101 = vrot.slane %v3029, 1
  %v3102 = vrot.slane %v3030, 1
  %v3103 = vrot.slane %v3031, 1
  %v3104 = vrot.slane %v3032, 1
  %v3105 = vrot.slane %v3033, 1
  %v3106 = vrot.slane %v3034, 1
  %v3107 = vrot.slane %v3035, 1
  %v3108 = vrot.slane %v3036, 1
  %v3109 = vrot.slane %v3037, 1
  %v3110 = vsel %vm617, %v3098, %v3104
  %v3111 = vsel %vm617, %v3099, %v3105
  %v3112 = vsel %vm617, %v3100, %v3106
  %v3113 = vsel %vm617, %v3101, %v3107
  %v3114 = vsel %vm617, %v3102, %v3108
  %v3115 = vsel %vm617, %v3103, %v3109
  %v3116 = vsel %vm617, %v3104, %v3098
  %v3117 = vsel %vm617, %v3105, %v3099
  %v3118 = vsel %vm617, %v3106, %v3100
  %v3119 = vsel %vm617, %v3107, %v3101
  %v3120 = vsel %vm617, %v3108, %v3102
  %v3121 = vsel %vm617, %v3109, %v3103
  %v3122 = vmul.f32 %v3110, %v1030
  %v3123 = vmul.f32 %v3111, %v1034
  %v3124 = vmul.f32 %v3112, %v1038
  %v3125 = vmul.f32 %v3113, %v1042
  %v3126 = vmul.f32 %v3114, %v1046
  %v3127 = vmul.f32 %v3115, %v1050
  %v3128 = vmul.f32 %v3116, %v1030
  %v3129 = vmul.f32 %v3117, %v1034
  %v3130 = vmul.f32 %v3118, %v1038
  %v3131 = vmul.f32 %v3119, %v1042
  %v3132 = vmul.f32 %v3120, %v1046
  %v3133 = vmul.f32 %v3121, %v1050
  %v3134 = vadd.f32 %v3086, %v3122
  %v3135 = vadd.f32 %v3087, %v3123
  %v3136 = vadd.f32 %v3088, %v3124
  %v3137 = vadd.f32 %v3089, %v3125
  %v3138 = vadd.f32 %v3090, %v3126
  %v3139 = vadd.f32 %v3091, %v3127
  %v3140 = vadd.f32 %v3092, %v3128
  %v3141 = vadd.f32 %v3093, %v3129
  %v3142 = vadd.f32 %v3094, %v3130
  %v3143 = vadd.f32 %v3095, %v3131
  %v3144 = vadd.f32 %v3096, %v3132
  %v3145 = vadd.f32 %v3097, %v3133
  %v3146 = vadd.f32 %v3013, %v3134
  %v3147 = vadd.f32 %v3014, %v3135
  %v3148 = vadd.f32 %v3015, %v3136
  %v3149 = vadd.f32 %v3016, %v3137
  %v3150 = vadd.f32 %v3017, %v3138
  %v3151 = vadd.f32 %v3018, %v3139
  %v3152 = vadd.f32 %v3019, %v3140
  %v3153 = vadd.f32 %v3020, %v3141
  %v3154 = vadd.f32 %v3021, %v3142
  %v3155 = vadd.f32 %v3022, %v3143
  %v3156 = vadd.f32 %v3023, %v3144
  %v3157 = vadd.f32 %v3024, %v3145
  %s3158 = scalar_lea.vmem [#allocation3], 384
  %3159 = vst [vmem:[%s3158] sm:$0xff] %v3146
  %3160 = vst [vmem:[%s3158 + $0x8] sm:$0xff] %v3147
  %3161 = vst [vmem:[%s3158 + $0x10] sm:$0xff] %v3148
  %3162 = vst [vmem:[%s3158 + $0x18] sm:$0xff] %v3149
  %3163 = vst [vmem:[%s3158 + $0x20] sm:$0xff] %v3150
  %3164 = vst [vmem:[%s3158 + $0x28] sm:$0xff] %v3151
  %3165 = vst [vmem:[%s3158 + $0x30] sm:$0xff] %v3152
  %3166 = vst [vmem:[%s3158 + $0x38] sm:$0xff] %v3153
  %3167 = vst [vmem:[%s3158 + $0x40] sm:$0xff] %v3154
  %3168 = vst [vmem:[%s3158 + $0x48] sm:$0xff] %v3155
  %3169 = vst [vmem:[%s3158 + $0x50] sm:$0xff] %v3156
  %3170 = vst [vmem:[%s3158 + $0x58] sm:$0xff] %v3157
  %v3171 = vmul.f32 %v3146, %v482
  %v3172 = vmul.f32 %v3147, %v482
  %v3173 = vmul.f32 %v3148, %v482
  %v3174 = vmul.f32 %v3149, %v482
  %v3175 = vmul.f32 %v3150, %v482
  %v3176 = vmul.f32 %v3151, %v482
  %v3177 = vmul.f32 %v3152, %v483
  %v3178 = vmul.f32 %v3153, %v483
  %v3179 = vmul.f32 %v3154, %v483
  %v3180 = vmul.f32 %v3155, %v483
  %v3181 = vmul.f32 %v3156, %v483
  %v3182 = vmul.f32 %v3157, %v483
  %v3183 = vadd.f32 %v3171, %v3177
  %v3184 = vrot.slane %v3183, 4
  %v3185 = vadd.f32 %v3183, %v3184
  %v3186 = vrot.slane %v3185, 2
  %v3187 = vadd.f32 %v3185, %v3186
  %v3188 = vrot.slane %v3187, 1
  %v3189 = vadd.f32 %v3187, %v3188
  %v3190 = vadd.f32 %v3172, %v3178
  %v3191 = vrot.slane %v3190, 4
  %v3192 = vadd.f32 %v3190, %v3191
  %v3193 = vrot.slane %v3192, 2
  %v3194 = vadd.f32 %v3192, %v3193
  %v3195 = vrot.slane %v3194, 1
  %v3196 = vadd.f32 %v3194, %v3195
  %v3197 = vadd.f32 %v3173, %v3179
  %v3198 = vrot.slane %v3197, 4
  %v3199 = vadd.f32 %v3197, %v3198
  %v3200 = vrot.slane %v3199, 2
  %v3201 = vadd.f32 %v3199, %v3200
  %v3202 = vrot.slane %v3201, 1
  %v3203 = vadd.f32 %v3201, %v3202
  %v3204 = vadd.f32 %v3174, %v3180
  %v3205 = vrot.slane %v3204, 4
  %v3206 = vadd.f32 %v3204, %v3205
  %v3207 = vrot.slane %v3206, 2
  %v3208 = vadd.f32 %v3206, %v3207
  %v3209 = vrot.slane %v3208, 1
  %v3210 = vadd.f32 %v3208, %v3209
  %v3211 = vadd.f32 %v3175, %v3181
  %v3212 = vrot.slane %v3211, 4
  %v3213 = vadd.f32 %v3211, %v3212
  %v3214 = vrot.slane %v3213, 2
  %v3215 = vadd.f32 %v3213, %v3214
  %v3216 = vrot.slane %v3215, 1
  %v3217 = vadd.f32 %v3215, %v3216
  %v3218 = vadd.f32 %v3176, %v3182
  %v3219 = vrot.slane %v3218, 4
  %v3220 = vadd.f32 %v3218, %v3219
  %v3221 = vrot.slane %v3220, 2
  %v3222 = vadd.f32 %v3220, %v3221
  %v3223 = vrot.slane %v3222, 1
  %v3224 = vadd.f32 %v3222, %v3223
  %v3225 = vadd.f32 %v2707, %v3189
  %v3226 = vadd.f32 %v2708, %v3196
  %v3227 = vadd.f32 %v2709, %v3203
  %v3228 = vadd.f32 %v2710, %v3210
  %v3229 = vadd.f32 %v2711, %v3217
  %v3230 = vadd.f32 %v2712, %v3224
  %v3231 = vmul.f32 %v3171, %v3146
  %v3232 = vmul.f32 %v3172, %v3147
  %v3233 = vmul.f32 %v3173, %v3148
  %v3234 = vmul.f32 %v3174, %v3149
  %v3235 = vmul.f32 %v3175, %v3150
  %v3236 = vmul.f32 %v3176, %v3151
  %v3237 = vmul.f32 %v3177, %v3152
  %v3238 = vmul.f32 %v3178, %v3153
  %v3239 = vmul.f32 %v3179, %v3154
  %v3240 = vmul.f32 %v3180, %v3155
  %v3241 = vmul.f32 %v3181, %v3156
  %v3242 = vmul.f32 %v3182, %v3157
  %v3243 = vadd.f32 %v3231, %v3237
  %v3244 = vrot.slane %v3243, 4
  %v3245 = vadd.f32 %v3243, %v3244
  %v3246 = vrot.slane %v3245, 2
  %v3247 = vadd.f32 %v3245, %v3246
  %v3248 = vrot.slane %v3247, 1
  %v3249 = vadd.f32 %v3247, %v3248
  %v3250 = vadd.f32 %v3232, %v3238
  %v3251 = vrot.slane %v3250, 4
  %v3252 = vadd.f32 %v3250, %v3251
  %v3253 = vrot.slane %v3252, 2
  %v3254 = vadd.f32 %v3252, %v3253
  %v3255 = vrot.slane %v3254, 1
  %v3256 = vadd.f32 %v3254, %v3255
  %v3257 = vadd.f32 %v3233, %v3239
  %v3258 = vrot.slane %v3257, 4
  %v3259 = vadd.f32 %v3257, %v3258
  %v3260 = vrot.slane %v3259, 2
  %v3261 = vadd.f32 %v3259, %v3260
  %v3262 = vrot.slane %v3261, 1
  %v3263 = vadd.f32 %v3261, %v3262
  %v3264 = vadd.f32 %v3234, %v3240
  %v3265 = vrot.slane %v3264, 4
  %v3266 = vadd.f32 %v3264, %v3265
  %v3267 = vrot.slane %v3266, 2
  %v3268 = vadd.f32 %v3266, %v3267
  %v3269 = vrot.slane %v3268, 1
  %v3270 = vadd.f32 %v3268, %v3269
  %v3271 = vadd.f32 %v3235, %v3241
  %v3272 = vrot.slane %v3271, 4
  %v3273 = vadd.f32 %v3271, %v3272
  %v3274 = vrot.slane %v3273, 2
  %v3275 = vadd.f32 %v3273, %v3274
  %v3276 = vrot.slane %v3275, 1
  %v3277 = vadd.f32 %v3275, %v3276
  %v3278 = vadd.f32 %v3236, %v3242
  %v3279 = vrot.slane %v3278, 4
  %v3280 = vadd.f32 %v3278, %v3279
  %v3281 = vrot.slane %v3280, 2
  %v3282 = vadd.f32 %v3280, %v3281
  %v3283 = vrot.slane %v3282, 1
  %v3284 = vadd.f32 %v3282, %v3283
  %v3285 = vadd.f32 %v2767, %v3249
  %v3286 = vadd.f32 %v2768, %v3256
  %v3287 = vadd.f32 %v2769, %v3263
  %v3288 = vadd.f32 %v2770, %v3270
  %v3289 = vadd.f32 %v2771, %v3277
  %v3290 = vadd.f32 %v2772, %v3284
  %v3291 = vld [vmem:[%s2507] sm:$0xff]
  %v3292 = vld [vmem:[%s2507 + $0x8] sm:$0xff]
  %v3293 = vld [vmem:[%s2507 + $0x10] sm:$0xff]
  %v3294 = vld [vmem:[%s2507 + $0x18] sm:$0xff]
  %v3295 = vld [vmem:[%s2507 + $0x20] sm:$0xff]
  %v3296 = vld [vmem:[%s2507 + $0x28] sm:$0xff]
  %v3297 = vld [vmem:[%s2507 + $0x30] sm:$0xff]
  %v3298 = vld [vmem:[%s2507 + $0x38] sm:$0xff]
  %v3299 = vld [vmem:[%s2507 + $0x40] sm:$0xff]
  %v3300 = vld [vmem:[%s2507 + $0x48] sm:$0xff]
  %v3301 = vld [vmem:[%s2507 + $0x50] sm:$0xff]
  %v3302 = vld [vmem:[%s2507 + $0x58] sm:$0xff]
  %v3303 = vrot.slane %v3291, 7
  %v3304 = vrot.slane %v3292, 7
  %v3305 = vrot.slane %v3293, 7
  %v3306 = vrot.slane %v3294, 7
  %v3307 = vrot.slane %v3295, 7
  %v3308 = vrot.slane %v3296, 7
  %v3309 = vrot.slane %v3297, 7
  %v3310 = vrot.slane %v3298, 7
  %v3311 = vrot.slane %v3299, 7
  %v3312 = vrot.slane %v3300, 7
  %v3313 = vrot.slane %v3301, 7
  %v3314 = vrot.slane %v3302, 7
  %v3315 = vsel %vm508, %v3303, %v3309
  %v3316 = vsel %vm508, %v3304, %v3310
  %v3317 = vsel %vm508, %v3305, %v3311
  %v3318 = vsel %vm508, %v3306, %v3312
  %v3319 = vsel %vm508, %v3307, %v3313
  %v3320 = vsel %vm508, %v3308, %v3314
  %v3321 = vsel %vm508, %v3309, %v3303
  %v3322 = vsel %vm508, %v3310, %v3304
  %v3323 = vsel %vm508, %v3311, %v3305
  %v3324 = vsel %vm508, %v3312, %v3306
  %v3325 = vsel %vm508, %v3313, %v3307
  %v3326 = vsel %vm508, %v3314, %v3308
  %v3327 = vmul.f32 %v3321, %v524
  %v3328 = vmul.f32 %v3322, %v528
  %v3329 = vmul.f32 %v3323, %v532
  %v3330 = vmul.f32 %v3324, %v536
  %v3331 = vmul.f32 %v3325, %v540
  %v3332 = vmul.f32 %v3326, %v544
  %v3333 = vmul.f32 %v3315, %v524
  %v3334 = vmul.f32 %v3316, %v528
  %v3335 = vmul.f32 %v3317, %v532
  %v3336 = vmul.f32 %v3318, %v536
  %v3337 = vmul.f32 %v3319, %v540
  %v3338 = vmul.f32 %v3320, %v544
  %v3339 = vmul.f32 %v3291, %v560
  %v3340 = vmul.f32 %v3292, %v564
  %v3341 = vmul.f32 %v3293, %v568
  %v3342 = vmul.f32 %v3294, %v572
  %v3343 = vmul.f32 %v3295, %v576
  %v3344 = vmul.f32 %v3296, %v580
  %v3345 = vmul.f32 %v3297, %v560
  %v3346 = vmul.f32 %v3298, %v564
  %v3347 = vmul.f32 %v3299, %v568
  %v3348 = vmul.f32 %v3300, %v572
  %v3349 = vmul.f32 %v3301, %v576
  %v3350 = vmul.f32 %v3302, %v580
  %v3351 = vadd.f32 %v3327, %v3339
  %v3352 = vadd.f32 %v3328, %v3340
  %v3353 = vadd.f32 %v3329, %v3341
  %v3354 = vadd.f32 %v3330, %v3342
  %v3355 = vadd.f32 %v3331, %v3343
  %v3356 = vadd.f32 %v3332, %v3344
  %v3357 = vadd.f32 %v3333, %v3345
  %v3358 = vadd.f32 %v3334, %v3346
  %v3359 = vadd.f32 %v3335, %v3347
  %v3360 = vadd.f32 %v3336, %v3348
  %v3361 = vadd.f32 %v3337, %v3349
  %v3362 = vadd.f32 %v3338, %v3350
  %v3363 = vrot.slane %v3291, 1
  %v3364 = vrot.slane %v3292, 1
  %v3365 = vrot.slane %v3293, 1
  %v3366 = vrot.slane %v3294, 1
  %v3367 = vrot.slane %v3295, 1
  %v3368 = vrot.slane %v3296, 1
  %v3369 = vrot.slane %v3297, 1
  %v3370 = vrot.slane %v3298, 1
  %v3371 = vrot.slane %v3299, 1
  %v3372 = vrot.slane %v3300, 1
  %v3373 = vrot.slane %v3301, 1
  %v3374 = vrot.slane %v3302, 1
  %v3375 = vsel %vm617, %v3363, %v3369
  %v3376 = vsel %vm617, %v3364, %v3370
  %v3377 = vsel %vm617, %v3365, %v3371
  %v3378 = vsel %vm617, %v3366, %v3372
  %v3379 = vsel %vm617, %v3367, %v3373
  %v3380 = vsel %vm617, %v3368, %v3374
  %v3381 = vsel %vm617, %v3369, %v3363
  %v3382 = vsel %vm617, %v3370, %v3364
  %v3383 = vsel %vm617, %v3371, %v3365
  %v3384 = vsel %vm617, %v3372, %v3366
  %v3385 = vsel %vm617, %v3373, %v3367
  %v3386 = vsel %vm617, %v3374, %v3368
  %v3387 = vmul.f32 %v3375, %v633
  %v3388 = vmul.f32 %v3376, %v637
  %v3389 = vmul.f32 %v3377, %v641
  %v3390 = vmul.f32 %v3378, %v645
  %v3391 = vmul.f32 %v3379, %v649
  %v3392 = vmul.f32 %v3380, %v653
  %v3393 = vmul.f32 %v3381, %v633
  %v3394 = vmul.f32 %v3382, %v637
  %v3395 = vmul.f32 %v3383, %v641
  %v3396 = vmul.f32 %v3384, %v645
  %v3397 = vmul.f32 %v3385, %v649
  %v3398 = vmul.f32 %v3386, %v653
  %v3399 = vadd.f32 %v3351, %v3387
  %v3400 = vadd.f32 %v3352, %v3388
  %v3401 = vadd.f32 %v3353, %v3389
  %v3402 = vadd.f32 %v3354, %v3390
  %v3403 = vadd.f32 %v3355, %v3391
  %v3404 = vadd.f32 %v3356, %v3392
  %v3405 = vadd.f32 %v3357, %v3393
  %v3406 = vadd.f32 %v3358, %v3394
  %v3407 = vadd.f32 %v3359, %v3395
  %v3408 = vadd.f32 %v3360, %v3396
  %v3409 = vadd.f32 %v3361, %v3397
  %v3410 = vadd.f32 %v3362, %v3398
  %v3411 = vld [vmem:[%s3025] sm:$0xff]
  %v3412 = vld [vmem:[%s3025 + $0x8] sm:$0xff]
  %v3413 = vld [vmem:[%s3025 + $0x10] sm:$0xff]
  %v3414 = vld [vmem:[%s3025 + $0x18] sm:$0xff]
  %v3415 = vld [vmem:[%s3025 + $0x20] sm:$0xff]
  %v3416 = vld [vmem:[%s3025 + $0x28] sm:$0xff]
  %v3417 = vld [vmem:[%s3025 + $0x30] sm:$0xff]
  %v3418 = vld [vmem:[%s3025 + $0x38] sm:$0xff]
  %v3419 = vld [vmem:[%s3025 + $0x40] sm:$0xff]
  %v3420 = vld [vmem:[%s3025 + $0x48] sm:$0xff]
  %v3421 = vld [vmem:[%s3025 + $0x50] sm:$0xff]
  %v3422 = vld [vmem:[%s3025 + $0x58] sm:$0xff]
  %v3423 = vrot.slane %v3411, 7
  %v3424 = vrot.slane %v3412, 7
  %v3425 = vrot.slane %v3413, 7
  %v3426 = vrot.slane %v3414, 7
  %v3427 = vrot.slane %v3415, 7
  %v3428 = vrot.slane %v3416, 7
  %v3429 = vrot.slane %v3417, 7
  %v3430 = vrot.slane %v3418, 7
  %v3431 = vrot.slane %v3419, 7
  %v3432 = vrot.slane %v3420, 7
  %v3433 = vrot.slane %v3421, 7
  %v3434 = vrot.slane %v3422, 7
  %v3435 = vsel %vm508, %v3423, %v3429
  %v3436 = vsel %vm508, %v3424, %v3430
  %v3437 = vsel %vm508, %v3425, %v3431
  %v3438 = vsel %vm508, %v3426, %v3432
  %v3439 = vsel %vm508, %v3427, %v3433
  %v3440 = vsel %vm508, %v3428, %v3434
  %v3441 = vsel %vm508, %v3429, %v3423
  %v3442 = vsel %vm508, %v3430, %v3424
  %v3443 = vsel %vm508, %v3431, %v3425
  %v3444 = vsel %vm508, %v3432, %v3426
  %v3445 = vsel %vm508, %v3433, %v3427
  %v3446 = vsel %vm508, %v3434, %v3428
  %v3447 = vmul.f32 %v3441, %v717
  %v3448 = vmul.f32 %v3442, %v721
  %v3449 = vmul.f32 %v3443, %v725
  %v3450 = vmul.f32 %v3444, %v729
  %v3451 = vmul.f32 %v3445, %v733
  %v3452 = vmul.f32 %v3446, %v737
  %v3453 = vmul.f32 %v3435, %v717
  %v3454 = vmul.f32 %v3436, %v721
  %v3455 = vmul.f32 %v3437, %v725
  %v3456 = vmul.f32 %v3438, %v729
  %v3457 = vmul.f32 %v3439, %v733
  %v3458 = vmul.f32 %v3440, %v737
  %v3459 = vmul.f32 %v3411, %v753
  %v3460 = vmul.f32 %v3412, %v757
  %v3461 = vmul.f32 %v3413, %v761
  %v3462 = vmul.f32 %v3414, %v765
  %v3463 = vmul.f32 %v3415, %v769
  %v3464 = vmul.f32 %v3416, %v773
  %v3465 = vmul.f32 %v3417, %v753
  %v3466 = vmul.f32 %v3418, %v757
  %v3467 = vmul.f32 %v3419, %v761
  %v3468 = vmul.f32 %v3420, %v765
  %v3469 = vmul.f32 %v3421, %v769
  %v3470 = vmul.f32 %v3422, %v773
  %v3471 = vadd.f32 %v3447, %v3459
  %v3472 = vadd.f32 %v3448, %v3460
  %v3473 = vadd.f32 %v3449, %v3461
  %v3474 = vadd.f32 %v3450, %v3462
  %v3475 = vadd.f32 %v3451, %v3463
  %v3476 = vadd.f32 %v3452, %v3464
  %v3477 = vadd.f32 %v3453, %v3465
  %v3478 = vadd.f32 %v3454, %v3466
  %v3479 = vadd.f32 %v3455, %v3467
  %v3480 = vadd.f32 %v3456, %v3468
  %v3481 = vadd.f32 %v3457, %v3469
  %v3482 = vadd.f32 %v3458, %v3470
  %v3483 = vrot.slane %v3411, 1
  %v3484 = vrot.slane %v3412, 1
  %v3485 = vrot.slane %v3413, 1
  %v3486 = vrot.slane %v3414, 1
  %v3487 = vrot.slane %v3415, 1
  %v3488 = vrot.slane %v3416, 1
  %v3489 = vrot.slane %v3417, 1
  %v3490 = vrot.slane %v3418, 1
  %v3491 = vrot.slane %v3419, 1
  %v3492 = vrot.slane %v3420, 1
  %v3493 = vrot.slane %v3421, 1
  %v3494 = vrot.slane %v3422, 1
  %v3495 = vsel %vm617, %v3483, %v3489
  %v3496 = vsel %vm617, %v3484, %v3490
  %v3497 = vsel %vm617, %v3485, %v3491
  %v3498 = vsel %vm617, %v3486, %v3492
  %v3499 = vsel %vm617, %v3487, %v3493
  %v3500 = vsel %vm617, %v3488, %v3494
  %v3501 = vsel %vm617, %v3489, %v3483
  %v3502 = vsel %vm617, %v3490, %v3484
  %v3503 = vsel %vm617, %v3491, %v3485
  %v3504 = vsel %vm617, %v3492, %v3486
  %v3505 = vsel %vm617, %v3493, %v3487
  %v3506 = vsel %vm617, %v3494, %v3488
  %v3507 = vmul.f32 %v3495, %v825
  %v3508 = vmul.f32 %v3496, %v829
  %v3509 = vmul.f32 %v3497, %v833
  %v3510 = vmul.f32 %v3498, %v837
  %v3511 = vmul.f32 %v3499, %v841
  %v3512 = vmul.f32 %v3500, %v845
  %v3513 = vmul.f32 %v3501, %v825
  %v3514 = vmul.f32 %v3502, %v829
  %v3515 = vmul.f32 %v3503, %v833
  %v3516 = vmul.f32 %v3504, %v837
  %v3517 = vmul.f32 %v3505, %v841
  %v3518 = vmul.f32 %v3506, %v845
  %v3519 = vadd.f32 %v3471, %v3507
  %v3520 = vadd.f32 %v3472, %v3508
  %v3521 = vadd.f32 %v3473, %v3509
  %v3522 = vadd.f32 %v3474, %v3510
  %v3523 = vadd.f32 %v3475, %v3511
  %v3524 = vadd.f32 %v3476, %v3512
  %v3525 = vadd.f32 %v3477, %v3513
  %v3526 = vadd.f32 %v3478, %v3514
  %v3527 = vadd.f32 %v3479, %v3515
  %v3528 = vadd.f32 %v3480, %v3516
  %v3529 = vadd.f32 %v3481, %v3517
  %v3530 = vadd.f32 %v3482, %v3518
  %v3531 = vadd.f32 %v3399, %v3519
  %v3532 = vadd.f32 %v3400, %v3520
  %v3533 = vadd.f32 %v3401, %v3521
  %v3534 = vadd.f32 %v3402, %v3522
  %v3535 = vadd.f32 %v3403, %v3523
  %v3536 = vadd.f32 %v3404, %v3524
  %v3537 = vadd.f32 %v3405, %v3525
  %v3538 = vadd.f32 %v3406, %v3526
  %v3539 = vadd.f32 %v3407, %v3527
  %v3540 = vadd.f32 %v3408, %v3528
  %v3541 = vadd.f32 %v3409, %v3529
  %v3542 = vadd.f32 %v3410, %v3530
  %s3543 = scalar_lea.vmem [#allocation2], 672
  %v3544 = vld [vmem:[%s3543] sm:$0xff]
  %v3545 = vld [vmem:[%s3543 + $0x8] sm:$0xff]
  %v3546 = vld [vmem:[%s3543 + $0x10] sm:$0xff]
  %v3547 = vld [vmem:[%s3543 + $0x18] sm:$0xff]
  %v3548 = vld [vmem:[%s3543 + $0x20] sm:$0xff]
  %v3549 = vld [vmem:[%s3543 + $0x28] sm:$0xff]
  %v3550 = vld [vmem:[%s3543 + $0x30] sm:$0xff]
  %v3551 = vld [vmem:[%s3543 + $0x38] sm:$0xff]
  %v3552 = vld [vmem:[%s3543 + $0x40] sm:$0xff]
  %v3553 = vld [vmem:[%s3543 + $0x48] sm:$0xff]
  %v3554 = vld [vmem:[%s3543 + $0x50] sm:$0xff]
  %v3555 = vld [vmem:[%s3543 + $0x58] sm:$0xff]
  %v3556 = vrot.slane %v3544, 7
  %v3557 = vrot.slane %v3545, 7
  %v3558 = vrot.slane %v3546, 7
  %v3559 = vrot.slane %v3547, 7
  %v3560 = vrot.slane %v3548, 7
  %v3561 = vrot.slane %v3549, 7
  %v3562 = vrot.slane %v3550, 7
  %v3563 = vrot.slane %v3551, 7
  %v3564 = vrot.slane %v3552, 7
  %v3565 = vrot.slane %v3553, 7
  %v3566 = vrot.slane %v3554, 7
  %v3567 = vrot.slane %v3555, 7
  %v3568 = vsel %vm508, %v3556, %v3562
  %v3569 = vsel %vm508, %v3557, %v3563
  %v3570 = vsel %vm508, %v3558, %v3564
  %v3571 = vsel %vm508, %v3559, %v3565
  %v3572 = vsel %vm508, %v3560, %v3566
  %v3573 = vsel %vm508, %v3561, %v3567
  %v3574 = vsel %vm508, %v3562, %v3556
  %v3575 = vsel %vm508, %v3563, %v3557
  %v3576 = vsel %vm508, %v3564, %v3558
  %v3577 = vsel %vm508, %v3565, %v3559
  %v3578 = vsel %vm508, %v3566, %v3560
  %v3579 = vsel %vm508, %v3567, %v3561
  %v3580 = vmul.f32 %v3574, %v922
  %v3581 = vmul.f32 %v3575, %v926
  %v3582 = vmul.f32 %v3576, %v930
  %v3583 = vmul.f32 %v3577, %v934
  %v3584 = vmul.f32 %v3578, %v938
  %v3585 = vmul.f32 %v3579, %v942
  %v3586 = vmul.f32 %v3568, %v922
  %v3587 = vmul.f32 %v3569, %v926
  %v3588 = vmul.f32 %v3570, %v930
  %v3589 = vmul.f32 %v3571, %v934
  %v3590 = vmul.f32 %v3572, %v938
  %v3591 = vmul.f32 %v3573, %v942
  %v3592 = vmul.f32 %v3544, %v958
  %v3593 = vmul.f32 %v3545, %v962
  %v3594 = vmul.f32 %v3546, %v966
  %v3595 = vmul.f32 %v3547, %v970
  %v3596 = vmul.f32 %v3548, %v974
  %v3597 = vmul.f32 %v3549, %v978
  %v3598 = vmul.f32 %v3550, %v958
  %v3599 = vmul.f32 %v3551, %v962
  %v3600 = vmul.f32 %v3552, %v966
  %v3601 = vmul.f32 %v3553, %v970
  %v3602 = vmul.f32 %v3554, %v974
  %v3603 = vmul.f32 %v3555, %v978
  %v3604 = vadd.f32 %v3580, %v3592
  %v3605 = vadd.f32 %v3581, %v3593
  %v3606 = vadd.f32 %v3582, %v3594
  %v3607 = vadd.f32 %v3583, %v3595
  %v3608 = vadd.f32 %v3584, %v3596
  %v3609 = vadd.f32 %v3585, %v3597
  %v3610 = vadd.f32 %v3586, %v3598
  %v3611 = vadd.f32 %v3587, %v3599
  %v3612 = vadd.f32 %v3588, %v3600
  %v3613 = vadd.f32 %v3589, %v3601
  %v3614 = vadd.f32 %v3590, %v3602
  %v3615 = vadd.f32 %v3591, %v3603
  %v3616 = vrot.slane %v3544, 1
  %v3617 = vrot.slane %v3545, 1
  %v3618 = vrot.slane %v3546, 1
  %v3619 = vrot.slane %v3547, 1
  %v3620 = vrot.slane %v3548, 1
  %v3621 = vrot.slane %v3549, 1
  %v3622 = vrot.slane %v3550, 1
  %v3623 = vrot.slane %v3551, 1
  %v3624 = vrot.slane %v3552, 1
  %v3625 = vrot.slane %v3553, 1
  %v3626 = vrot.slane %v3554, 1
  %v3627 = vrot.slane %v3555, 1
  %v3628 = vsel %vm617, %v3616, %v3622
  %v3629 = vsel %vm617, %v3617, %v3623
  %v3630 = vsel %vm617, %v3618, %v3624
  %v3631 = vsel %vm617, %v3619, %v3625
  %v3632 = vsel %vm617, %v3620, %v3626
  %v3633 = vsel %vm617, %v3621, %v3627
  %v3634 = vsel %vm617, %v3622, %v3616
  %v3635 = vsel %vm617, %v3623, %v3617
  %v3636 = vsel %vm617, %v3624, %v3618
  %v3637 = vsel %vm617, %v3625, %v3619
  %v3638 = vsel %vm617, %v3626, %v3620
  %v3639 = vsel %vm617, %v3627, %v3621
  %v3640 = vmul.f32 %v3628, %v1030
  %v3641 = vmul.f32 %v3629, %v1034
  %v3642 = vmul.f32 %v3630, %v1038
  %v3643 = vmul.f32 %v3631, %v1042
  %v3644 = vmul.f32 %v3632, %v1046
  %v3645 = vmul.f32 %v3633, %v1050
  %v3646 = vmul.f32 %v3634, %v1030
  %v3647 = vmul.f32 %v3635, %v1034
  %v3648 = vmul.f32 %v3636, %v1038
  %v3649 = vmul.f32 %v3637, %v1042
  %v3650 = vmul.f32 %v3638, %v1046
  %v3651 = vmul.f32 %v3639, %v1050
  %v3652 = vadd.f32 %v3604, %v3640
  %v3653 = vadd.f32 %v3605, %v3641
  %v3654 = vadd.f32 %v3606, %v3642
  %v3655 = vadd.f32 %v3607, %v3643
  %v3656 = vadd.f32 %v3608, %v3644
  %v3657 = vadd.f32 %v3609, %v3645
  %v3658 = vadd.f32 %v3610, %v3646
  %v3659 = vadd.f32 %v3611, %v3647
  %v3660 = vadd.f32 %v3612, %v3648
  %v3661 = vadd.f32 %v3613, %v3649
  %v3662 = vadd.f32 %v3614, %v3650
  %v3663 = vadd.f32 %v3615, %v3651
  %v3664 = vadd.f32 %v3531, %v3652
  %v3665 = vadd.f32 %v3532, %v3653
  %v3666 = vadd.f32 %v3533, %v3654
  %v3667 = vadd.f32 %v3534, %v3655
  %v3668 = vadd.f32 %v3535, %v3656
  %v3669 = vadd.f32 %v3536, %v3657
  %v3670 = vadd.f32 %v3537, %v3658
  %v3671 = vadd.f32 %v3538, %v3659
  %v3672 = vadd.f32 %v3539, %v3660
  %v3673 = vadd.f32 %v3540, %v3661
  %v3674 = vadd.f32 %v3541, %v3662
  %v3675 = vadd.f32 %v3542, %v3663
  %s3676 = scalar_lea.vmem [#allocation3], 480
  %3677 = vst [vmem:[%s3676] sm:$0xff] %v3664
  %3678 = vst [vmem:[%s3676 + $0x8] sm:$0xff] %v3665
  %3679 = vst [vmem:[%s3676 + $0x10] sm:$0xff] %v3666
  %3680 = vst [vmem:[%s3676 + $0x18] sm:$0xff] %v3667
  %3681 = vst [vmem:[%s3676 + $0x20] sm:$0xff] %v3668
  %3682 = vst [vmem:[%s3676 + $0x28] sm:$0xff] %v3669
  %3683 = vst [vmem:[%s3676 + $0x30] sm:$0xff] %v3670
  %3684 = vst [vmem:[%s3676 + $0x38] sm:$0xff] %v3671
  %3685 = vst [vmem:[%s3676 + $0x40] sm:$0xff] %v3672
  %3686 = vst [vmem:[%s3676 + $0x48] sm:$0xff] %v3673
  %3687 = vst [vmem:[%s3676 + $0x50] sm:$0xff] %v3674
  %3688 = vst [vmem:[%s3676 + $0x58] sm:$0xff] %v3675
  %v3689 = vmul.f32 %v3664, %v482
  %v3690 = vmul.f32 %v3665, %v482
  %v3691 = vmul.f32 %v3666, %v482
  %v3692 = vmul.f32 %v3667, %v482
  %v3693 = vmul.f32 %v3668, %v482
  %v3694 = vmul.f32 %v3669, %v482
  %v3695 = vmul.f32 %v3670, %v483
  %v3696 = vmul.f32 %v3671, %v483
  %v3697 = vmul.f32 %v3672, %v483
  %v3698 = vmul.f32 %v3673, %v483
  %v3699 = vmul.f32 %v3674, %v483
  %v3700 = vmul.f32 %v3675, %v483
  %v3701 = vadd.f32 %v3689, %v3695
  %v3702 = vrot.slane %v3701, 4
  %v3703 = vadd.f32 %v3701, %v3702
  %v3704 = vrot.slane %v3703, 2
  %v3705 = vadd.f32 %v3703, %v3704
  %v3706 = vrot.slane %v3705, 1
  %v3707 = vadd.f32 %v3705, %v3706
  %v3708 = vadd.f32 %v3690, %v3696
  %v3709 = vrot.slane %v3708, 4
  %v3710 = vadd.f32 %v3708, %v3709
  %v3711 = vrot.slane %v3710, 2
  %v3712 = vadd.f32 %v3710, %v3711
  %v3713 = vrot.slane %v3712, 1
  %v3714 = vadd.f32 %v3712, %v3713
  %v3715 = vadd.f32 %v3691, %v3697
  %v3716 = vrot.slane %v3715, 4
  %v3717 = vadd.f32 %v3715, %v3716
  %v3718 = vrot.slane %v3717, 2
  %v3719 = vadd.f32 %v3717, %v3718
  %v3720 = vrot.slane %v3719, 1
  %v3721 = vadd.f32 %v3719, %v3720
  %v3722 = vadd.f32 %v3692, %v3698
  %v3723 = vrot.slane %v3722, 4
  %v3724 = vadd.f32 %v3722, %v3723
  %v3725 = vrot.slane %v3724, 2
  %v3726 = vadd.f32 %v3724, %v3725
  %v3727 = vrot.slane %v3726, 1
  %v3728 = vadd.f32 %v3726, %v3727
  %v3729 = vadd.f32 %v3693, %v3699
  %v3730 = vrot.slane %v3729, 4
  %v3731 = vadd.f32 %v3729, %v3730
  %v3732 = vrot.slane %v3731, 2
  %v3733 = vadd.f32 %v3731, %v3732
  %v3734 = vrot.slane %v3733, 1
  %v3735 = vadd.f32 %v3733, %v3734
  %v3736 = vadd.f32 %v3694, %v3700
  %v3737 = vrot.slane %v3736, 4
  %v3738 = vadd.f32 %v3736, %v3737
  %v3739 = vrot.slane %v3738, 2
  %v3740 = vadd.f32 %v3738, %v3739
  %v3741 = vrot.slane %v3740, 1
  %v3742 = vadd.f32 %v3740, %v3741
  %v3743 = vadd.f32 %v3225, %v3707
  %v3744 = vadd.f32 %v3226, %v3714
  %v3745 = vadd.f32 %v3227, %v3721
  %v3746 = vadd.f32 %v3228, %v3728
  %v3747 = vadd.f32 %v3229, %v3735
  %v3748 = vadd.f32 %v3230, %v3742
  %v3749 = vmul.f32 %v3689, %v3664
  %v3750 = vmul.f32 %v3690, %v3665
  %v3751 = vmul.f32 %v3691, %v3666
  %v3752 = vmul.f32 %v3692, %v3667
  %v3753 = vmul.f32 %v3693, %v3668
  %v3754 = vmul.f32 %v3694, %v3669
  %v3755 = vmul.f32 %v3695, %v3670
  %v3756 = vmul.f32 %v3696, %v3671
  %v3757 = vmul.f32 %v3697, %v3672
  %v3758 = vmul.f32 %v3698, %v3673
  %v3759 = vmul.f32 %v3699, %v3674
  %v3760 = vmul.f32 %v3700, %v3675
  %v3761 = vadd.f32 %v3749, %v3755
  %v3762 = vrot.slane %v3761, 4
  %v3763 = vadd.f32 %v3761, %v3762
  %v3764 = vrot.slane %v3763, 2
  %v3765 = vadd.f32 %v3763, %v3764
  %v3766 = vrot.slane %v3765, 1
  %v3767 = vadd.f32 %v3765, %v3766
  %v3768 = vadd.f32 %v3750, %v3756
  %v3769 = vrot.slane %v3768, 4
  %v3770 = vadd.f32 %v3768, %v3769
  %v3771 = vrot.slane %v3770, 2
  %v3772 = vadd.f32 %v3770, %v3771
  %v3773 = vrot.slane %v3772, 1
  %v3774 = vadd.f32 %v3772, %v3773
  %v3775 = vadd.f32 %v3751, %v3757
  %v3776 = vrot.slane %v3775, 4
  %v3777 = vadd.f32 %v3775, %v3776
  %v3778 = vrot.slane %v3777, 2
  %v3779 = vadd.f32 %v3777, %v3778
  %v3780 = vrot.slane %v3779, 1
  %v3781 = vadd.f32 %v3779, %v3780
  %v3782 = vadd.f32 %v3752, %v3758
  %v3783 = vrot.slane %v3782, 4
  %v3784 = vadd.f32 %v3782, %v3783
  %v3785 = vrot.slane %v3784, 2
  %v3786 = vadd.f32 %v3784, %v3785
  %v3787 = vrot.slane %v3786, 1
  %v3788 = vadd.f32 %v3786, %v3787
  %v3789 = vadd.f32 %v3753, %v3759
  %v3790 = vrot.slane %v3789, 4
  %v3791 = vadd.f32 %v3789, %v3790
  %v3792 = vrot.slane %v3791, 2
  %v3793 = vadd.f32 %v3791, %v3792
  %v3794 = vrot.slane %v3793, 1
  %v3795 = vadd.f32 %v3793, %v3794
  %v3796 = vadd.f32 %v3754, %v3760
  %v3797 = vrot.slane %v3796, 4
  %v3798 = vadd.f32 %v3796, %v3797
  %v3799 = vrot.slane %v3798, 2
  %v3800 = vadd.f32 %v3798, %v3799
  %v3801 = vrot.slane %v3800, 1
  %v3802 = vadd.f32 %v3800, %v3801
  %v3803 = vadd.f32 %v3285, %v3767
  %v3804 = vadd.f32 %v3286, %v3774
  %v3805 = vadd.f32 %v3287, %v3781
  %v3806 = vadd.f32 %v3288, %v3788
  %v3807 = vadd.f32 %v3289, %v3795
  %v3808 = vadd.f32 %v3290, %v3802
  %v3809 = vld [vmem:[%s3025] sm:$0xff]
  %v3810 = vld [vmem:[%s3025 + $0x8] sm:$0xff]
  %v3811 = vld [vmem:[%s3025 + $0x10] sm:$0xff]
  %v3812 = vld [vmem:[%s3025 + $0x18] sm:$0xff]
  %v3813 = vld [vmem:[%s3025 + $0x20] sm:$0xff]
  %v3814 = vld [vmem:[%s3025 + $0x28] sm:$0xff]
  %v3815 = vld [vmem:[%s3025 + $0x30] sm:$0xff]
  %v3816 = vld [vmem:[%s3025 + $0x38] sm:$0xff]
  %v3817 = vld [vmem:[%s3025 + $0x40] sm:$0xff]
  %v3818 = vld [vmem:[%s3025 + $0x48] sm:$0xff]
  %v3819 = vld [vmem:[%s3025 + $0x50] sm:$0xff]
  %v3820 = vld [vmem:[%s3025 + $0x58] sm:$0xff]
  %v3821 = vrot.slane %v3809, 7
  %v3822 = vrot.slane %v3810, 7
  %v3823 = vrot.slane %v3811, 7
  %v3824 = vrot.slane %v3812, 7
  %v3825 = vrot.slane %v3813, 7
  %v3826 = vrot.slane %v3814, 7
  %v3827 = vrot.slane %v3815, 7
  %v3828 = vrot.slane %v3816, 7
  %v3829 = vrot.slane %v3817, 7
  %v3830 = vrot.slane %v3818, 7
  %v3831 = vrot.slane %v3819, 7
  %v3832 = vrot.slane %v3820, 7
  %v3833 = vsel %vm508, %v3821, %v3827
  %v3834 = vsel %vm508, %v3822, %v3828
  %v3835 = vsel %vm508, %v3823, %v3829
  %v3836 = vsel %vm508, %v3824, %v3830
  %v3837 = vsel %vm508, %v3825, %v3831
  %v3838 = vsel %vm508, %v3826, %v3832
  %v3839 = vsel %vm508, %v3827, %v3821
  %v3840 = vsel %vm508, %v3828, %v3822
  %v3841 = vsel %vm508, %v3829, %v3823
  %v3842 = vsel %vm508, %v3830, %v3824
  %v3843 = vsel %vm508, %v3831, %v3825
  %v3844 = vsel %vm508, %v3832, %v3826
  %v3845 = vmul.f32 %v3839, %v524
  %v3846 = vmul.f32 %v3840, %v528
  %v3847 = vmul.f32 %v3841, %v532
  %v3848 = vmul.f32 %v3842, %v536
  %v3849 = vmul.f32 %v3843, %v540
  %v3850 = vmul.f32 %v3844, %v544
  %v3851 = vmul.f32 %v3833, %v524
  %v3852 = vmul.f32 %v3834, %v528
  %v3853 = vmul.f32 %v3835, %v532
  %v3854 = vmul.f32 %v3836, %v536
  %v3855 = vmul.f32 %v3837, %v540
  %v3856 = vmul.f32 %v3838, %v544
  %v3857 = vmul.f32 %v3809, %v560
  %v3858 = vmul.f32 %v3810, %v564
  %v3859 = vmul.f32 %v3811, %v568
  %v3860 = vmul.f32 %v3812, %v572
  %v3861 = vmul.f32 %v3813, %v576
  %v3862 = vmul.f32 %v3814, %v580
  %v3863 = vmul.f32 %v3815, %v560
  %v3864 = vmul.f32 %v3816, %v564
  %v3865 = vmul.f32 %v3817, %v568
  %v3866 = vmul.f32 %v3818, %v572
  %v3867 = vmul.f32 %v3819, %v576
  %v3868 = vmul.f32 %v3820, %v580
  %v3869 = vadd.f32 %v3845, %v3857
  %v3870 = vadd.f32 %v3846, %v3858
  %v3871 = vadd.f32 %v3847, %v3859
  %v3872 = vadd.f32 %v3848, %v3860
  %v3873 = vadd.f32 %v3849, %v3861
  %v3874 = vadd.f32 %v3850, %v3862
  %v3875 = vadd.f32 %v3851, %v3863
  %v3876 = vadd.f32 %v3852, %v3864
  %v3877 = vadd.f32 %v3853, %v3865
  %v3878 = vadd.f32 %v3854, %v3866
  %v3879 = vadd.f32 %v3855, %v3867
  %v3880 = vadd.f32 %v3856, %v3868
  %v3881 = vrot.slane %v3809, 1
  %v3882 = vrot.slane %v3810, 1
  %v3883 = vrot.slane %v3811, 1
  %v3884 = vrot.slane %v3812, 1
  %v3885 = vrot.slane %v3813, 1
  %v3886 = vrot.slane %v3814, 1
  %v3887 = vrot.slane %v3815, 1
  %v3888 = vrot.slane %v3816, 1
  %v3889 = vrot.slane %v3817, 1
  %v3890 = vrot.slane %v3818, 1
  %v3891 = vrot.slane %v3819, 1
  %v3892 = vrot.slane %v3820, 1
  %v3893 = vsel %vm617, %v3881, %v3887
  %v3894 = vsel %vm617, %v3882, %v3888
  %v3895 = vsel %vm617, %v3883, %v3889
  %v3896 = vsel %vm617, %v3884, %v3890
  %v3897 = vsel %vm617, %v3885, %v3891
  %v3898 = vsel %vm617, %v3886, %v3892
  %v3899 = vsel %vm617, %v3887, %v3881
  %v3900 = vsel %vm617, %v3888, %v3882
  %v3901 = vsel %vm617, %v3889, %v3883
  %v3902 = vsel %vm617, %v3890, %v3884
  %v3903 = vsel %vm617, %v3891, %v3885
  %v3904 = vsel %vm617, %v3892, %v3886
  %v3905 = vmul.f32 %v3893, %v633
  %v3906 = vmul.f32 %v3894, %v637
  %v3907 = vmul.f32 %v3895, %v641
  %v3908 = vmul.f32 %v3896, %v645
  %v3909 = vmul.f32 %v3897, %v649
  %v3910 = vmul.f32 %v3898, %v653
  %v3911 = vmul.f32 %v3899, %v633
  %v3912 = vmul.f32 %v3900, %v637
  %v3913 = vmul.f32 %v3901, %v641
  %v3914 = vmul.f32 %v3902, %v645
  %v3915 = vmul.f32 %v3903, %v649
  %v3916 = vmul.f32 %v3904, %v653
  %v3917 = vadd.f32 %v3869, %v3905
  %v3918 = vadd.f32 %v3870, %v3906
  %v3919 = vadd.f32 %v3871, %v3907
  %v3920 = vadd.f32 %v3872, %v3908
  %v3921 = vadd.f32 %v3873, %v3909
  %v3922 = vadd.f32 %v3874, %v3910
  %v3923 = vadd.f32 %v3875, %v3911
  %v3924 = vadd.f32 %v3876, %v3912
  %v3925 = vadd.f32 %v3877, %v3913
  %v3926 = vadd.f32 %v3878, %v3914
  %v3927 = vadd.f32 %v3879, %v3915
  %v3928 = vadd.f32 %v3880, %v3916
  %v3929 = vld [vmem:[%s3543] sm:$0xff]
  %v3930 = vld [vmem:[%s3543 + $0x8] sm:$0xff]
  %v3931 = vld [vmem:[%s3543 + $0x10] sm:$0xff]
  %v3932 = vld [vmem:[%s3543 + $0x18] sm:$0xff]
  %v3933 = vld [vmem:[%s3543 + $0x20] sm:$0xff]
  %v3934 = vld [vmem:[%s3543 + $0x28] sm:$0xff]
  %v3935 = vld [vmem:[%s3543 + $0x30] sm:$0xff]
  %v3936 = vld [vmem:[%s3543 + $0x38] sm:$0xff]
  %v3937 = vld [vmem:[%s3543 + $0x40] sm:$0xff]
  %v3938 = vld [vmem:[%s3543 + $0x48] sm:$0xff]
  %v3939 = vld [vmem:[%s3543 + $0x50] sm:$0xff]
  %v3940 = vld [vmem:[%s3543 + $0x58] sm:$0xff]
  %v3941 = vrot.slane %v3929, 7
  %v3942 = vrot.slane %v3930, 7
  %v3943 = vrot.slane %v3931, 7
  %v3944 = vrot.slane %v3932, 7
  %v3945 = vrot.slane %v3933, 7
  %v3946 = vrot.slane %v3934, 7
  %v3947 = vrot.slane %v3935, 7
  %v3948 = vrot.slane %v3936, 7
  %v3949 = vrot.slane %v3937, 7
  %v3950 = vrot.slane %v3938, 7
  %v3951 = vrot.slane %v3939, 7
  %v3952 = vrot.slane %v3940, 7
  %v3953 = vsel %vm508, %v3941, %v3947
  %v3954 = vsel %vm508, %v3942, %v3948
  %v3955 = vsel %vm508, %v3943, %v3949
  %v3956 = vsel %vm508, %v3944, %v3950
  %v3957 = vsel %vm508, %v3945, %v3951
  %v3958 = vsel %vm508, %v3946, %v3952
  %v3959 = vsel %vm508, %v3947, %v3941
  %v3960 = vsel %vm508, %v3948, %v3942
  %v3961 = vsel %vm508, %v3949, %v3943
  %v3962 = vsel %vm508, %v3950, %v3944
  %v3963 = vsel %vm508, %v3951, %v3945
  %v3964 = vsel %vm508, %v3952, %v3946
  %v3965 = vmul.f32 %v3959, %v717
  %v3966 = vmul.f32 %v3960, %v721
  %v3967 = vmul.f32 %v3961, %v725
  %v3968 = vmul.f32 %v3962, %v729
  %v3969 = vmul.f32 %v3963, %v733
  %v3970 = vmul.f32 %v3964, %v737
  %v3971 = vmul.f32 %v3953, %v717
  %v3972 = vmul.f32 %v3954, %v721
  %v3973 = vmul.f32 %v3955, %v725
  %v3974 = vmul.f32 %v3956, %v729
  %v3975 = vmul.f32 %v3957, %v733
  %v3976 = vmul.f32 %v3958, %v737
  %v3977 = vmul.f32 %v3929, %v753
  %v3978 = vmul.f32 %v3930, %v757
  %v3979 = vmul.f32 %v3931, %v761
  %v3980 = vmul.f32 %v3932, %v765
  %v3981 = vmul.f32 %v3933, %v769
  %v3982 = vmul.f32 %v3934, %v773
  %v3983 = vmul.f32 %v3935, %v753
  %v3984 = vmul.f32 %v3936, %v757
  %v3985 = vmul.f32 %v3937, %v761
  %v3986 = vmul.f32 %v3938, %v765
  %v3987 = vmul.f32 %v3939, %v769
  %v3988 = vmul.f32 %v3940, %v773
  %v3989 = vadd.f32 %v3965, %v3977
  %v3990 = vadd.f32 %v3966, %v3978
  %v3991 = vadd.f32 %v3967, %v3979
  %v3992 = vadd.f32 %v3968, %v3980
  %v3993 = vadd.f32 %v3969, %v3981
  %v3994 = vadd.f32 %v3970, %v3982
  %v3995 = vadd.f32 %v3971, %v3983
  %v3996 = vadd.f32 %v3972, %v3984
  %v3997 = vadd.f32 %v3973, %v3985
  %v3998 = vadd.f32 %v3974, %v3986
  %v3999 = vadd.f32 %v3975, %v3987
  %v4000 = vadd.f32 %v3976, %v3988
  %v4001 = vrot.slane %v3929, 1
  %v4002 = vrot.slane %v3930, 1
  %v4003 = vrot.slane %v3931, 1
  %v4004 = vrot.slane %v3932, 1
  %v4005 = vrot.slane %v3933, 1
  %v4006 = vrot.slane %v3934, 1
  %v4007 = vrot.slane %v3935, 1
  %v4008 = vrot.slane %v3936, 1
  %v4009 = vrot.slane %v3937, 1
  %v4010 = vrot.slane %v3938, 1
  %v4011 = vrot.slane %v3939, 1
  %v4012 = vrot.slane %v3940, 1
  %v4013 = vsel %vm617, %v4001, %v4007
  %v4014 = vsel %vm617, %v4002, %v4008
  %v4015 = vsel %vm617, %v4003, %v4009
  %v4016 = vsel %vm617, %v4004, %v4010
  %v4017 = vsel %vm617, %v4005, %v4011
  %v4018 = vsel %vm617, %v4006, %v4012
  %v4019 = vsel %vm617, %v4007, %v4001
  %v4020 = vsel %vm617, %v4008, %v4002
  %v4021 = vsel %vm617, %v4009, %v4003
  %v4022 = vsel %vm617, %v4010, %v4004
  %v4023 = vsel %vm617, %v4011, %v4005
  %v4024 = vsel %vm617, %v4012, %v4006
  %v4025 = vmul.f32 %v4013, %v825
  %v4026 = vmul.f32 %v4014, %v829
  %v4027 = vmul.f32 %v4015, %v833
  %v4028 = vmul.f32 %v4016, %v837
  %v4029 = vmul.f32 %v4017, %v841
  %v4030 = vmul.f32 %v4018, %v845
  %v4031 = vmul.f32 %v4019, %v825
  %v4032 = vmul.f32 %v4020, %v829
  %v4033 = vmul.f32 %v4021, %v833
  %v4034 = vmul.f32 %v4022, %v837
  %v4035 = vmul.f32 %v4023, %v841
  %v4036 = vmul.f32 %v4024, %v845
  %v4037 = vadd.f32 %v3989, %v4025
  %v4038 = vadd.f32 %v3990, %v4026
  %v4039 = vadd.f32 %v3991, %v4027
  %v4040 = vadd.f32 %v3992, %v4028
  %v4041 = vadd.f32 %v3993, %v4029
  %v4042 = vadd.f32 %v3994, %v4030
  %v4043 = vadd.f32 %v3995, %v4031
  %v4044 = vadd.f32 %v3996, %v4032
  %v4045 = vadd.f32 %v3997, %v4033
  %v4046 = vadd.f32 %v3998, %v4034
  %v4047 = vadd.f32 %v3999, %v4035
  %v4048 = vadd.f32 %v4000, %v4036
  %v4049 = vadd.f32 %v3917, %v4037
  %v4050 = vadd.f32 %v3918, %v4038
  %v4051 = vadd.f32 %v3919, %v4039
  %v4052 = vadd.f32 %v3920, %v4040
  %v4053 = vadd.f32 %v3921, %v4041
  %v4054 = vadd.f32 %v3922, %v4042
  %v4055 = vadd.f32 %v3923, %v4043
  %v4056 = vadd.f32 %v3924, %v4044
  %v4057 = vadd.f32 %v3925, %v4045
  %v4058 = vadd.f32 %v3926, %v4046
  %v4059 = vadd.f32 %v3927, %v4047
  %v4060 = vadd.f32 %v3928, %v4048
  %s4061 = scalar_lea.vmem [#allocation2], 768
  %v4062 = vld [vmem:[%s4061] sm:$0xff]
  %v4063 = vld [vmem:[%s4061 + $0x8] sm:$0xff]
  %v4064 = vld [vmem:[%s4061 + $0x10] sm:$0xff]
  %v4065 = vld [vmem:[%s4061 + $0x18] sm:$0xff]
  %v4066 = vld [vmem:[%s4061 + $0x20] sm:$0xff]
  %v4067 = vld [vmem:[%s4061 + $0x28] sm:$0xff]
  %v4068 = vld [vmem:[%s4061 + $0x30] sm:$0xff]
  %v4069 = vld [vmem:[%s4061 + $0x38] sm:$0xff]
  %v4070 = vld [vmem:[%s4061 + $0x40] sm:$0xff]
  %v4071 = vld [vmem:[%s4061 + $0x48] sm:$0xff]
  %v4072 = vld [vmem:[%s4061 + $0x50] sm:$0xff]
  %v4073 = vld [vmem:[%s4061 + $0x58] sm:$0xff]
  %v4074 = vrot.slane %v4062, 7
  %v4075 = vrot.slane %v4063, 7
  %v4076 = vrot.slane %v4064, 7
  %v4077 = vrot.slane %v4065, 7
  %v4078 = vrot.slane %v4066, 7
  %v4079 = vrot.slane %v4067, 7
  %v4080 = vrot.slane %v4068, 7
  %v4081 = vrot.slane %v4069, 7
  %v4082 = vrot.slane %v4070, 7
  %v4083 = vrot.slane %v4071, 7
  %v4084 = vrot.slane %v4072, 7
  %v4085 = vrot.slane %v4073, 7
  %v4086 = vsel %vm508, %v4074, %v4080
  %v4087 = vsel %vm508, %v4075, %v4081
  %v4088 = vsel %vm508, %v4076, %v4082
  %v4089 = vsel %vm508, %v4077, %v4083
  %v4090 = vsel %vm508, %v4078, %v4084
  %v4091 = vsel %vm508, %v4079, %v4085
  %v4092 = vsel %vm508, %v4080, %v4074
  %v4093 = vsel %vm508, %v4081, %v4075
  %v4094 = vsel %vm508, %v4082, %v4076
  %v4095 = vsel %vm508, %v4083, %v4077
  %v4096 = vsel %vm508, %v4084, %v4078
  %v4097 = vsel %vm508, %v4085, %v4079
  %v4098 = vmul.f32 %v4092, %v922
  %v4099 = vmul.f32 %v4093, %v926
  %v4100 = vmul.f32 %v4094, %v930
  %v4101 = vmul.f32 %v4095, %v934
  %v4102 = vmul.f32 %v4096, %v938
  %v4103 = vmul.f32 %v4097, %v942
  %v4104 = vmul.f32 %v4086, %v922
  %v4105 = vmul.f32 %v4087, %v926
  %v4106 = vmul.f32 %v4088, %v930
  %v4107 = vmul.f32 %v4089, %v934
  %v4108 = vmul.f32 %v4090, %v938
  %v4109 = vmul.f32 %v4091, %v942
  %v4110 = vmul.f32 %v4062, %v958
  %v4111 = vmul.f32 %v4063, %v962
  %v4112 = vmul.f32 %v4064, %v966
  %v4113 = vmul.f32 %v4065, %v970
  %v4114 = vmul.f32 %v4066, %v974
  %v4115 = vmul.f32 %v4067, %v978
  %v4116 = vmul.f32 %v4068, %v958
  %v4117 = vmul.f32 %v4069, %v962
  %v4118 = vmul.f32 %v4070, %v966
  %v4119 = vmul.f32 %v4071, %v970
  %v4120 = vmul.f32 %v4072, %v974
  %v4121 = vmul.f32 %v4073, %v978
  %v4122 = vadd.f32 %v4098, %v4110
  %v4123 = vadd.f32 %v4099, %v4111
  %v4124 = vadd.f32 %v4100, %v4112
  %v4125 = vadd.f32 %v4101, %v4113
  %v4126 = vadd.f32 %v4102, %v4114
  %v4127 = vadd.f32 %v4103, %v4115
  %v4128 = vadd.f32 %v4104, %v4116
  %v4129 = vadd.f32 %v4105, %v4117
  %v4130 = vadd.f32 %v4106, %v4118
  %v4131 = vadd.f32 %v4107, %v4119
  %v4132 = vadd.f32 %v4108, %v4120
  %v4133 = vadd.f32 %v4109, %v4121
  %v4134 = vrot.slane %v4062, 1
  %v4135 = vrot.slane %v4063, 1
  %v4136 = vrot.slane %v4064, 1
  %v4137 = vrot.slane %v4065, 1
  %v4138 = vrot.slane %v4066, 1
  %v4139 = vrot.slane %v4067, 1
  %v4140 = vrot.slane %v4068, 1
  %v4141 = vrot.slane %v4069, 1
  %v4142 = vrot.slane %v4070, 1
  %v4143 = vrot.slane %v4071, 1
  %v4144 = vrot.slane %v4072, 1
  %v4145 = vrot.slane %v4073, 1
  %v4146 = vsel %vm617, %v4134, %v4140
  %v4147 = vsel %vm617, %v4135, %v4141
  %v4148 = vsel %vm617, %v4136, %v4142
  %v4149 = vsel %vm617, %v4137, %v4143
  %v4150 = vsel %vm617, %v4138, %v4144
  %v4151 = vsel %vm617, %v4139, %v4145
  %v4152 = vsel %vm617, %v4140, %v4134
  %v4153 = vsel %vm617, %v4141, %v4135
  %v4154 = vsel %vm617, %v4142, %v4136
  %v4155 = vsel %vm617, %v4143, %v4137
  %v4156 = vsel %vm617, %v4144, %v4138
  %v4157 = vsel %vm617, %v4145, %v4139
  %v4158 = vmul.f32 %v4146, %v1030
  %v4159 = vmul.f32 %v4147, %v1034
  %v4160 = vmul.f32 %v4148, %v1038
  %v4161 = vmul.f32 %v4149, %v1042
  %v4162 = vmul.f32 %v4150, %v1046
  %v4163 = vmul.f32 %v4151, %v1050
  %v4164 = vmul.f32 %v4152, %v1030
  %v4165 = vmul.f32 %v4153, %v1034
  %v4166 = vmul.f32 %v4154, %v1038
  %v4167 = vmul.f32 %v4155, %v1042
  %v4168 = vmul.f32 %v4156, %v1046
  %v4169 = vmul.f32 %v4157, %v1050
  %v4170 = vadd.f32 %v4122, %v4158
  %v4171 = vadd.f32 %v4123, %v4159
  %v4172 = vadd.f32 %v4124, %v4160
  %v4173 = vadd.f32 %v4125, %v4161
  %v4174 = vadd.f32 %v4126, %v4162
  %v4175 = vadd.f32 %v4127, %v4163
  %v4176 = vadd.f32 %v4128, %v4164
  %v4177 = vadd.f32 %v4129, %v4165
  %v4178 = vadd.f32 %v4130, %v4166
  %v4179 = vadd.f32 %v4131, %v4167
  %v4180 = vadd.f32 %v4132, %v4168
  %v4181 = vadd.f32 %v4133, %v4169
  %v4182 = vadd.f32 %v4049, %v4170
  %v4183 = vadd.f32 %v4050, %v4171
  %v4184 = vadd.f32 %v4051, %v4172
  %v4185 = vadd.f32 %v4052, %v4173
  %v4186 = vadd.f32 %v4053, %v4174
  %v4187 = vadd.f32 %v4054, %v4175
  %v4188 = vadd.f32 %v4055, %v4176
  %v4189 = vadd.f32 %v4056, %v4177
  %v4190 = vadd.f32 %v4057, %v4178
  %v4191 = vadd.f32 %v4058, %v4179
  %v4192 = vadd.f32 %v4059, %v4180
  %v4193 = vadd.f32 %v4060, %v4181
  %s4194 = scalar_lea.vmem [#allocation3], 576
  %4195 = vst [vmem:[%s4194] sm:$0xff] %v4182
  %4196 = vst [vmem:[%s4194 + $0x8] sm:$0xff] %v4183
  %4197 = vst [vmem:[%s4194 + $0x10] sm:$0xff] %v4184
  %4198 = vst [vmem:[%s4194 + $0x18] sm:$0xff] %v4185
  %4199 = vst [vmem:[%s4194 + $0x20] sm:$0xff] %v4186
  %4200 = vst [vmem:[%s4194 + $0x28] sm:$0xff] %v4187
  %4201 = vst [vmem:[%s4194 + $0x30] sm:$0xff] %v4188
  %4202 = vst [vmem:[%s4194 + $0x38] sm:$0xff] %v4189
  %4203 = vst [vmem:[%s4194 + $0x40] sm:$0xff] %v4190
  %4204 = vst [vmem:[%s4194 + $0x48] sm:$0xff] %v4191
  %4205 = vst [vmem:[%s4194 + $0x50] sm:$0xff] %v4192
  %4206 = vst [vmem:[%s4194 + $0x58] sm:$0xff] %v4193
  %v4207 = vmul.f32 %v4182, %v482
  %v4208 = vmul.f32 %v4183, %v482
  %v4209 = vmul.f32 %v4184, %v482
  %v4210 = vmul.f32 %v4185, %v482
  %v4211 = vmul.f32 %v4186, %v482
  %v4212 = vmul.f32 %v4187, %v482
  %v4213 = vmul.f32 %v4188, %v483
  %v4214 = vmul.f32 %v4189, %v483
  %v4215 = vmul.f32 %v4190, %v483
  %v4216 = vmul.f32 %v4191, %v483
  %v4217 = vmul.f32 %v4192, %v483
  %v4218 = vmul.f32 %v4193, %v483
  %v4219 = vadd.f32 %v4207, %v4213
  %v4220 = vrot.slane %v4219, 4
  %v4221 = vadd.f32 %v4219, %v4220
  %v4222 = vrot.slane %v4221, 2
  %v4223 = vadd.f32 %v4221, %v4222
  %v4224 = vrot.slane %v4223, 1
  %v4225 = vadd.f32 %v4223, %v4224
  %v4226 = vadd.f32 %v4208, %v4214
  %v4227 = vrot.slane %v4226, 4
  %v4228 = vadd.f32 %v4226, %v4227
  %v4229 = vrot.slane %v4228, 2
  %v4230 = vadd.f32 %v4228, %v4229
  %v4231 = vrot.slane %v4230, 1
  %v4232 = vadd.f32 %v4230, %v4231
  %v4233 = vadd.f32 %v4209, %v4215
  %v4234 = vrot.slane %v4233, 4
  %v4235 = vadd.f32 %v4233, %v4234
  %v4236 = vrot.slane %v4235, 2
  %v4237 = vadd.f32 %v4235, %v4236
  %v4238 = vrot.slane %v4237, 1
  %v4239 = vadd.f32 %v4237, %v4238
  %v4240 = vadd.f32 %v4210, %v4216
  %v4241 = vrot.slane %v4240, 4
  %v4242 = vadd.f32 %v4240, %v4241
  %v4243 = vrot.slane %v4242, 2
  %v4244 = vadd.f32 %v4242, %v4243
  %v4245 = vrot.slane %v4244, 1
  %v4246 = vadd.f32 %v4244, %v4245
  %v4247 = vadd.f32 %v4211, %v4217
  %v4248 = vrot.slane %v4247, 4
  %v4249 = vadd.f32 %v4247, %v4248
  %v4250 = vrot.slane %v4249, 2
  %v4251 = vadd.f32 %v4249, %v4250
  %v4252 = vrot.slane %v4251, 1
  %v4253 = vadd.f32 %v4251, %v4252
  %v4254 = vadd.f32 %v4212, %v4218
  %v4255 = vrot.slane %v4254, 4
  %v4256 = vadd.f32 %v4254, %v4255
  %v4257 = vrot.slane %v4256, 2
  %v4258 = vadd.f32 %v4256, %v4257
  %v4259 = vrot.slane %v4258, 1
  %v4260 = vadd.f32 %v4258, %v4259
  %v4261 = vadd.f32 %v3743, %v4225
  %v4262 = vadd.f32 %v3744, %v4232
  %v4263 = vadd.f32 %v3745, %v4239
  %v4264 = vadd.f32 %v3746, %v4246
  %v4265 = vadd.f32 %v3747, %v4253
  %v4266 = vadd.f32 %v3748, %v4260
  %v4267 = vmul.f32 %v4207, %v4182
  %v4268 = vmul.f32 %v4208, %v4183
  %v4269 = vmul.f32 %v4209, %v4184
  %v4270 = vmul.f32 %v4210, %v4185
  %v4271 = vmul.f32 %v4211, %v4186
  %v4272 = vmul.f32 %v4212, %v4187
  %v4273 = vmul.f32 %v4213, %v4188
  %v4274 = vmul.f32 %v4214, %v4189
  %v4275 = vmul.f32 %v4215, %v4190
  %v4276 = vmul.f32 %v4216, %v4191
  %v4277 = vmul.f32 %v4217, %v4192
  %v4278 = vmul.f32 %v4218, %v4193
  %v4279 = vadd.f32 %v4267, %v4273
  %v4280 = vrot.slane %v4279, 4
  %v4281 = vadd.f32 %v4279, %v4280
  %v4282 = vrot.slane %v4281, 2
  %v4283 = vadd.f32 %v4281, %v4282
  %v4284 = vrot.slane %v4283, 1
  %v4285 = vadd.f32 %v4283, %v4284
  %v4286 = vadd.f32 %v4268, %v4274
  %v4287 = vrot.slane %v4286, 4
  %v4288 = vadd.f32 %v4286, %v4287
  %v4289 = vrot.slane %v4288, 2
  %v4290 = vadd.f32 %v4288, %v4289
  %v4291 = vrot.slane %v4290, 1
  %v4292 = vadd.f32 %v4290, %v4291
  %v4293 = vadd.f32 %v4269, %v4275
  %v4294 = vrot.slane %v4293, 4
  %v4295 = vadd.f32 %v4293, %v4294
  %v4296 = vrot.slane %v4295, 2
  %v4297 = vadd.f32 %v4295, %v4296
  %v4298 = vrot.slane %v4297, 1
  %v4299 = vadd.f32 %v4297, %v4298
  %v4300 = vadd.f32 %v4270, %v4276
  %v4301 = vrot.slane %v4300, 4
  %v4302 = vadd.f32 %v4300, %v4301
  %v4303 = vrot.slane %v4302, 2
  %v4304 = vadd.f32 %v4302, %v4303
  %v4305 = vrot.slane %v4304, 1
  %v4306 = vadd.f32 %v4304, %v4305
  %v4307 = vadd.f32 %v4271, %v4277
  %v4308 = vrot.slane %v4307, 4
  %v4309 = vadd.f32 %v4307, %v4308
  %v4310 = vrot.slane %v4309, 2
  %v4311 = vadd.f32 %v4309, %v4310
  %v4312 = vrot.slane %v4311, 1
  %v4313 = vadd.f32 %v4311, %v4312
  %v4314 = vadd.f32 %v4272, %v4278
  %v4315 = vrot.slane %v4314, 4
  %v4316 = vadd.f32 %v4314, %v4315
  %v4317 = vrot.slane %v4316, 2
  %v4318 = vadd.f32 %v4316, %v4317
  %v4319 = vrot.slane %v4318, 1
  %v4320 = vadd.f32 %v4318, %v4319
  %v4321 = vadd.f32 %v3803, %v4285
  %v4322 = vadd.f32 %v3804, %v4292
  %v4323 = vadd.f32 %v3805, %v4299
  %v4324 = vadd.f32 %v3806, %v4306
  %v4325 = vadd.f32 %v3807, %v4313
  %v4326 = vadd.f32 %v3808, %v4320
  %v4327 = vld [vmem:[%s3543] sm:$0xff]
  %v4328 = vld [vmem:[%s3543 + $0x8] sm:$0xff]
  %v4329 = vld [vmem:[%s3543 + $0x10] sm:$0xff]
  %v4330 = vld [vmem:[%s3543 + $0x18] sm:$0xff]
  %v4331 = vld [vmem:[%s3543 + $0x20] sm:$0xff]
  %v4332 = vld [vmem:[%s3543 + $0x28] sm:$0xff]
  %v4333 = vld [vmem:[%s3543 + $0x30] sm:$0xff]
  %v4334 = vld [vmem:[%s3543 + $0x38] sm:$0xff]
  %v4335 = vld [vmem:[%s3543 + $0x40] sm:$0xff]
  %v4336 = vld [vmem:[%s3543 + $0x48] sm:$0xff]
  %v4337 = vld [vmem:[%s3543 + $0x50] sm:$0xff]
  %v4338 = vld [vmem:[%s3543 + $0x58] sm:$0xff]
  %v4339 = vrot.slane %v4327, 7
  %v4340 = vrot.slane %v4328, 7
  %v4341 = vrot.slane %v4329, 7
  %v4342 = vrot.slane %v4330, 7
  %v4343 = vrot.slane %v4331, 7
  %v4344 = vrot.slane %v4332, 7
  %v4345 = vrot.slane %v4333, 7
  %v4346 = vrot.slane %v4334, 7
  %v4347 = vrot.slane %v4335, 7
  %v4348 = vrot.slane %v4336, 7
  %v4349 = vrot.slane %v4337, 7
  %v4350 = vrot.slane %v4338, 7
  %v4351 = vsel %vm508, %v4339, %v4345
  %v4352 = vsel %vm508, %v4340, %v4346
  %v4353 = vsel %vm508, %v4341, %v4347
  %v4354 = vsel %vm508, %v4342, %v4348
  %v4355 = vsel %vm508, %v4343, %v4349
  %v4356 = vsel %vm508, %v4344, %v4350
  %v4357 = vsel %vm508, %v4345, %v4339
  %v4358 = vsel %vm508, %v4346, %v4340
  %v4359 = vsel %vm508, %v4347, %v4341
  %v4360 = vsel %vm508, %v4348, %v4342
  %v4361 = vsel %vm508, %v4349, %v4343
  %v4362 = vsel %vm508, %v4350, %v4344
  %v4363 = vmul.f32 %v4357, %v524
  %v4364 = vmul.f32 %v4358, %v528
  %v4365 = vmul.f32 %v4359, %v532
  %v4366 = vmul.f32 %v4360, %v536
  %v4367 = vmul.f32 %v4361, %v540
  %v4368 = vmul.f32 %v4362, %v544
  %v4369 = vmul.f32 %v4351, %v524
  %v4370 = vmul.f32 %v4352, %v528
  %v4371 = vmul.f32 %v4353, %v532
  %v4372 = vmul.f32 %v4354, %v536
  %v4373 = vmul.f32 %v4355, %v540
  %v4374 = vmul.f32 %v4356, %v544
  %v4375 = vmul.f32 %v4327, %v560
  %v4376 = vmul.f32 %v4328, %v564
  %v4377 = vmul.f32 %v4329, %v568
  %v4378 = vmul.f32 %v4330, %v572
  %v4379 = vmul.f32 %v4331, %v576
  %v4380 = vmul.f32 %v4332, %v580
  %v4381 = vmul.f32 %v4333, %v560
  %v4382 = vmul.f32 %v4334, %v564
  %v4383 = vmul.f32 %v4335, %v568
  %v4384 = vmul.f32 %v4336, %v572
  %v4385 = vmul.f32 %v4337, %v576
  %v4386 = vmul.f32 %v4338, %v580
  %v4387 = vadd.f32 %v4363, %v4375
  %v4388 = vadd.f32 %v4364, %v4376
  %v4389 = vadd.f32 %v4365, %v4377
  %v4390 = vadd.f32 %v4366, %v4378
  %v4391 = vadd.f32 %v4367, %v4379
  %v4392 = vadd.f32 %v4368, %v4380
  %v4393 = vadd.f32 %v4369, %v4381
  %v4394 = vadd.f32 %v4370, %v4382
  %v4395 = vadd.f32 %v4371, %v4383
  %v4396 = vadd.f32 %v4372, %v4384
  %v4397 = vadd.f32 %v4373, %v4385
  %v4398 = vadd.f32 %v4374, %v4386
  %v4399 = vrot.slane %v4327, 1
  %v4400 = vrot.slane %v4328, 1
  %v4401 = vrot.slane %v4329, 1
  %v4402 = vrot.slane %v4330, 1
  %v4403 = vrot.slane %v4331, 1
  %v4404 = vrot.slane %v4332, 1
  %v4405 = vrot.slane %v4333, 1
  %v4406 = vrot.slane %v4334, 1
  %v4407 = vrot.slane %v4335, 1
  %v4408 = vrot.slane %v4336, 1
  %v4409 = vrot.slane %v4337, 1
  %v4410 = vrot.slane %v4338, 1
  %v4411 = vsel %vm617, %v4399, %v4405
  %v4412 = vsel %vm617, %v4400, %v4406
  %v4413 = vsel %vm617, %v4401, %v4407
  %v4414 = vsel %vm617, %v4402, %v4408
  %v4415 = vsel %vm617, %v4403, %v4409
  %v4416 = vsel %vm617, %v4404, %v4410
  %v4417 = vsel %vm617, %v4405, %v4399
  %v4418 = vsel %vm617, %v4406, %v4400
  %v4419 = vsel %vm617, %v4407, %v4401
  %v4420 = vsel %vm617, %v4408, %v4402
  %v4421 = vsel %vm617, %v4409, %v4403
  %v4422 = vsel %vm617, %v4410, %v4404
  %v4423 = vmul.f32 %v4411, %v633
  %v4424 = vmul.f32 %v4412, %v637
  %v4425 = vmul.f32 %v4413, %v641
  %v4426 = vmul.f32 %v4414, %v645
  %v4427 = vmul.f32 %v4415, %v649
  %v4428 = vmul.f32 %v4416, %v653
  %v4429 = vmul.f32 %v4417, %v633
  %v4430 = vmul.f32 %v4418, %v637
  %v4431 = vmul.f32 %v4419, %v641
  %v4432 = vmul.f32 %v4420, %v645
  %v4433 = vmul.f32 %v4421, %v649
  %v4434 = vmul.f32 %v4422, %v653
  %v4435 = vadd.f32 %v4387, %v4423
  %v4436 = vadd.f32 %v4388, %v4424
  %v4437 = vadd.f32 %v4389, %v4425
  %v4438 = vadd.f32 %v4390, %v4426
  %v4439 = vadd.f32 %v4391, %v4427
  %v4440 = vadd.f32 %v4392, %v4428
  %v4441 = vadd.f32 %v4393, %v4429
  %v4442 = vadd.f32 %v4394, %v4430
  %v4443 = vadd.f32 %v4395, %v4431
  %v4444 = vadd.f32 %v4396, %v4432
  %v4445 = vadd.f32 %v4397, %v4433
  %v4446 = vadd.f32 %v4398, %v4434
  %v4447 = vld [vmem:[%s4061] sm:$0xff]
  %v4448 = vld [vmem:[%s4061 + $0x8] sm:$0xff]
  %v4449 = vld [vmem:[%s4061 + $0x10] sm:$0xff]
  %v4450 = vld [vmem:[%s4061 + $0x18] sm:$0xff]
  %v4451 = vld [vmem:[%s4061 + $0x20] sm:$0xff]
  %v4452 = vld [vmem:[%s4061 + $0x28] sm:$0xff]
  %v4453 = vld [vmem:[%s4061 + $0x30] sm:$0xff]
  %v4454 = vld [vmem:[%s4061 + $0x38] sm:$0xff]
  %v4455 = vld [vmem:[%s4061 + $0x40] sm:$0xff]
  %v4456 = vld [vmem:[%s4061 + $0x48] sm:$0xff]
  %v4457 = vld [vmem:[%s4061 + $0x50] sm:$0xff]
  %v4458 = vld [vmem:[%s4061 + $0x58] sm:$0xff]
  %v4459 = vrot.slane %v4447, 7
  %v4460 = vrot.slane %v4448, 7
  %v4461 = vrot.slane %v4449, 7
  %v4462 = vrot.slane %v4450, 7
  %v4463 = vrot.slane %v4451, 7
  %v4464 = vrot.slane %v4452, 7
  %v4465 = vrot.slane %v4453, 7
  %v4466 = vrot.slane %v4454, 7
  %v4467 = vrot.slane %v4455, 7
  %v4468 = vrot.slane %v4456, 7
  %v4469 = vrot.slane %v4457, 7
  %v4470 = vrot.slane %v4458, 7
  %v4471 = vsel %vm508, %v4459, %v4465
  %v4472 = vsel %vm508, %v4460, %v4466
  %v4473 = vsel %vm508, %v4461, %v4467
  %v4474 = vsel %vm508, %v4462, %v4468
  %v4475 = vsel %vm508, %v4463, %v4469
  %v4476 = vsel %vm508, %v4464, %v4470
  %v4477 = vsel %vm508, %v4465, %v4459
  %v4478 = vsel %vm508, %v4466, %v4460
  %v4479 = vsel %vm508, %v4467, %v4461
  %v4480 = vsel %vm508, %v4468, %v4462
  %v4481 = vsel %vm508, %v4469, %v4463
  %v4482 = vsel %vm508, %v4470, %v4464
  %v4483 = vmul.f32 %v4477, %v717
  %v4484 = vmul.f32 %v4478, %v721
  %v4485 = vmul.f32 %v4479, %v725
  %v4486 = vmul.f32 %v4480, %v729
  %v4487 = vmul.f32 %v4481, %v733
  %v4488 = vmul.f32 %v4482, %v737
  %v4489 = vmul.f32 %v4471, %v717
  %v4490 = vmul.f32 %v4472, %v721
  %v4491 = vmul.f32 %v4473, %v725
  %v4492 = vmul.f32 %v4474, %v729
  %v4493 = vmul.f32 %v4475, %v733
  %v4494 = vmul.f32 %v4476, %v737
  %v4495 = vmul.f32 %v4447, %v753
  %v4496 = vmul.f32 %v4448, %v757
  %v4497 = vmul.f32 %v4449, %v761
  %v4498 = vmul.f32 %v4450, %v765
  %v4499 = vmul.f32 %v4451, %v769
  %v4500 = vmul.f32 %v4452, %v773
  %v4501 = vmul.f32 %v4453, %v753
  %v4502 = vmul.f32 %v4454, %v757
  %v4503 = vmul.f32 %v4455, %v761
  %v4504 = vmul.f32 %v4456, %v765
  %v4505 = vmul.f32 %v4457, %v769
  %v4506 = vmul.f32 %v4458, %v773
  %v4507 = vadd.f32 %v4483, %v4495
  %v4508 = vadd.f32 %v4484, %v4496
  %v4509 = vadd.f32 %v4485, %v4497
  %v4510 = vadd.f32 %v4486, %v4498
  %v4511 = vadd.f32 %v4487, %v4499
  %v4512 = vadd.f32 %v4488, %v4500
  %v4513 = vadd.f32 %v4489, %v4501
  %v4514 = vadd.f32 %v4490, %v4502
  %v4515 = vadd.f32 %v4491, %v4503
  %v4516 = vadd.f32 %v4492, %v4504
  %v4517 = vadd.f32 %v4493, %v4505
  %v4518 = vadd.f32 %v4494, %v4506
  %v4519 = vrot.slane %v4447, 1
  %v4520 = vrot.slane %v4448, 1
  %v4521 = vrot.slane %v4449, 1
  %v4522 = vrot.slane %v4450, 1
  %v4523 = vrot.slane %v4451, 1
  %v4524 = vrot.slane %v4452, 1
  %v4525 = vrot.slane %v4453, 1
  %v4526 = vrot.slane %v4454, 1
  %v4527 = vrot.slane %v4455, 1
  %v4528 = vrot.slane %v4456, 1
  %v4529 = vrot.slane %v4457, 1
  %v4530 = vrot.slane %v4458, 1
  %v4531 = vsel %vm617, %v4519, %v4525
  %v4532 = vsel %vm617, %v4520, %v4526
  %v4533 = vsel %vm617, %v4521, %v4527
  %v4534 = vsel %vm617, %v4522, %v4528
  %v4535 = vsel %vm617, %v4523, %v4529
  %v4536 = vsel %vm617, %v4524, %v4530
  %v4537 = vsel %vm617, %v4525, %v4519
  %v4538 = vsel %vm617, %v4526, %v4520
  %v4539 = vsel %vm617, %v4527, %v4521
  %v4540 = vsel %vm617, %v4528, %v4522
  %v4541 = vsel %vm617, %v4529, %v4523
  %v4542 = vsel %vm617, %v4530, %v4524
  %v4543 = vmul.f32 %v4531, %v825
  %v4544 = vmul.f32 %v4532, %v829
  %v4545 = vmul.f32 %v4533, %v833
  %v4546 = vmul.f32 %v4534, %v837
  %v4547 = vmul.f32 %v4535, %v841
  %v4548 = vmul.f32 %v4536, %v845
  %v4549 = vmul.f32 %v4537, %v825
  %v4550 = vmul.f32 %v4538, %v829
  %v4551 = vmul.f32 %v4539, %v833
  %v4552 = vmul.f32 %v4540, %v837
  %v4553 = vmul.f32 %v4541, %v841
  %v4554 = vmul.f32 %v4542, %v845
  %v4555 = vadd.f32 %v4507, %v4543
  %v4556 = vadd.f32 %v4508, %v4544
  %v4557 = vadd.f32 %v4509, %v4545
  %v4558 = vadd.f32 %v4510, %v4546
  %v4559 = vadd.f32 %v4511, %v4547
  %v4560 = vadd.f32 %v4512, %v4548
  %v4561 = vadd.f32 %v4513, %v4549
  %v4562 = vadd.f32 %v4514, %v4550
  %v4563 = vadd.f32 %v4515, %v4551
  %v4564 = vadd.f32 %v4516, %v4552
  %v4565 = vadd.f32 %v4517, %v4553
  %v4566 = vadd.f32 %v4518, %v4554
  %v4567 = vadd.f32 %v4435, %v4555
  %v4568 = vadd.f32 %v4436, %v4556
  %v4569 = vadd.f32 %v4437, %v4557
  %v4570 = vadd.f32 %v4438, %v4558
  %v4571 = vadd.f32 %v4439, %v4559
  %v4572 = vadd.f32 %v4440, %v4560
  %v4573 = vadd.f32 %v4441, %v4561
  %v4574 = vadd.f32 %v4442, %v4562
  %v4575 = vadd.f32 %v4443, %v4563
  %v4576 = vadd.f32 %v4444, %v4564
  %v4577 = vadd.f32 %v4445, %v4565
  %v4578 = vadd.f32 %v4446, %v4566
  %s4579 = scalar_lea.vmem [#allocation2], 864
  %v4580 = vld [vmem:[%s4579] sm:$0xff]
  %v4581 = vld [vmem:[%s4579 + $0x8] sm:$0xff]
  %v4582 = vld [vmem:[%s4579 + $0x10] sm:$0xff]
  %v4583 = vld [vmem:[%s4579 + $0x18] sm:$0xff]
  %v4584 = vld [vmem:[%s4579 + $0x20] sm:$0xff]
  %v4585 = vld [vmem:[%s4579 + $0x28] sm:$0xff]
  %v4586 = vld [vmem:[%s4579 + $0x30] sm:$0xff]
  %v4587 = vld [vmem:[%s4579 + $0x38] sm:$0xff]
  %v4588 = vld [vmem:[%s4579 + $0x40] sm:$0xff]
  %v4589 = vld [vmem:[%s4579 + $0x48] sm:$0xff]
  %v4590 = vld [vmem:[%s4579 + $0x50] sm:$0xff]
  %v4591 = vld [vmem:[%s4579 + $0x58] sm:$0xff]
  %v4592 = vrot.slane %v4580, 7
  %v4593 = vrot.slane %v4581, 7
  %v4594 = vrot.slane %v4582, 7
  %v4595 = vrot.slane %v4583, 7
  %v4596 = vrot.slane %v4584, 7
  %v4597 = vrot.slane %v4585, 7
  %v4598 = vrot.slane %v4586, 7
  %v4599 = vrot.slane %v4587, 7
  %v4600 = vrot.slane %v4588, 7
  %v4601 = vrot.slane %v4589, 7
  %v4602 = vrot.slane %v4590, 7
  %v4603 = vrot.slane %v4591, 7
  %v4604 = vsel %vm508, %v4592, %v4598
  %v4605 = vsel %vm508, %v4593, %v4599
  %v4606 = vsel %vm508, %v4594, %v4600
  %v4607 = vsel %vm508, %v4595, %v4601
  %v4608 = vsel %vm508, %v4596, %v4602
  %v4609 = vsel %vm508, %v4597, %v4603
  %v4610 = vsel %vm508, %v4598, %v4592
  %v4611 = vsel %vm508, %v4599, %v4593
  %v4612 = vsel %vm508, %v4600, %v4594
  %v4613 = vsel %vm508, %v4601, %v4595
  %v4614 = vsel %vm508, %v4602, %v4596
  %v4615 = vsel %vm508, %v4603, %v4597
  %v4616 = vmul.f32 %v4610, %v922
  %v4617 = vmul.f32 %v4611, %v926
  %v4618 = vmul.f32 %v4612, %v930
  %v4619 = vmul.f32 %v4613, %v934
  %v4620 = vmul.f32 %v4614, %v938
  %v4621 = vmul.f32 %v4615, %v942
  %v4622 = vmul.f32 %v4604, %v922
  %v4623 = vmul.f32 %v4605, %v926
  %v4624 = vmul.f32 %v4606, %v930
  %v4625 = vmul.f32 %v4607, %v934
  %v4626 = vmul.f32 %v4608, %v938
  %v4627 = vmul.f32 %v4609, %v942
  %v4628 = vmul.f32 %v4580, %v958
  %v4629 = vmul.f32 %v4581, %v962
  %v4630 = vmul.f32 %v4582, %v966
  %v4631 = vmul.f32 %v4583, %v970
  %v4632 = vmul.f32 %v4584, %v974
  %v4633 = vmul.f32 %v4585, %v978
  %v4634 = vmul.f32 %v4586, %v958
  %v4635 = vmul.f32 %v4587, %v962
  %v4636 = vmul.f32 %v4588, %v966
  %v4637 = vmul.f32 %v4589, %v970
  %v4638 = vmul.f32 %v4590, %v974
  %v4639 = vmul.f32 %v4591, %v978
  %v4640 = vadd.f32 %v4616, %v4628
  %v4641 = vadd.f32 %v4617, %v4629
  %v4642 = vadd.f32 %v4618, %v4630
  %v4643 = vadd.f32 %v4619, %v4631
  %v4644 = vadd.f32 %v4620, %v4632
  %v4645 = vadd.f32 %v4621, %v4633
  %v4646 = vadd.f32 %v4622, %v4634
  %v4647 = vadd.f32 %v4623, %v4635
  %v4648 = vadd.f32 %v4624, %v4636
  %v4649 = vadd.f32 %v4625, %v4637
  %v4650 = vadd.f32 %v4626, %v4638
  %v4651 = vadd.f32 %v4627, %v4639
  %v4652 = vrot.slane %v4580, 1
  %v4653 = vrot.slane %v4581, 1
  %v4654 = vrot.slane %v4582, 1
  %v4655 = vrot.slane %v4583, 1
  %v4656 = vrot.slane %v4584, 1
  %v4657 = vrot.slane %v4585, 1
  %v4658 = vrot.slane %v4586, 1
  %v4659 = vrot.slane %v4587, 1
  %v4660 = vrot.slane %v4588, 1
  %v4661 = vrot.slane %v4589, 1
  %v4662 = vrot.slane %v4590, 1
  %v4663 = vrot.slane %v4591, 1
  %v4664 = vsel %vm617, %v4652, %v4658
  %v4665 = vsel %vm617, %v4653, %v4659
  %v4666 = vsel %vm617, %v4654, %v4660
  %v4667 = vsel %vm617, %v4655, %v4661
  %v4668 = vsel %vm617, %v4656, %v4662
  %v4669 = vsel %vm617, %v4657, %v4663
  %v4670 = vsel %vm617, %v4658, %v4652
  %v4671 = vsel %vm617, %v4659, %v4653
  %v4672 = vsel %vm617, %v4660, %v4654
  %v4673 = vsel %vm617, %v4661, %v4655
  %v4674 = vsel %vm617, %v4662, %v4656
  %v4675 = vsel %vm617, %v4663, %v4657
  %v4676 = vmul.f32 %v4664, %v1030
  %v4677 = vmul.f32 %v4665, %v1034
  %v4678 = vmul.f32 %v4666, %v1038
  %v4679 = vmul.f32 %v4667, %v1042
  %v4680 = vmul.f32 %v4668, %v1046
  %v4681 = vmul.f32 %v4669, %v1050
  %v4682 = vmul.f32 %v4670, %v1030
  %v4683 = vmul.f32 %v4671, %v1034
  %v4684 = vmul.f32 %v4672, %v1038
  %v4685 = vmul.f32 %v4673, %v1042
  %v4686 = vmul.f32 %v4674, %v1046
  %v4687 = vmul.f32 %v4675, %v1050
  %v4688 = vadd.f32 %v4640, %v4676
  %v4689 = vadd.f32 %v4641, %v4677
  %v4690 = vadd.f32 %v4642, %v4678
  %v4691 = vadd.f32 %v4643, %v4679
  %v4692 = vadd.f32 %v4644, %v4680
  %v4693 = vadd.f32 %v4645, %v4681
  %v4694 = vadd.f32 %v4646, %v4682
  %v4695 = vadd.f32 %v4647, %v4683
  %v4696 = vadd.f32 %v4648, %v4684
  %v4697 = vadd.f32 %v4649, %v4685
  %v4698 = vadd.f32 %v4650, %v4686
  %v4699 = vadd.f32 %v4651, %v4687
  %v4700 = vadd.f32 %v4567, %v4688
  %v4701 = vadd.f32 %v4568, %v4689
  %v4702 = vadd.f32 %v4569, %v4690
  %v4703 = vadd.f32 %v4570, %v4691
  %v4704 = vadd.f32 %v4571, %v4692
  %v4705 = vadd.f32 %v4572, %v4693
  %v4706 = vadd.f32 %v4573, %v4694
  %v4707 = vadd.f32 %v4574, %v4695
  %v4708 = vadd.f32 %v4575, %v4696
  %v4709 = vadd.f32 %v4576, %v4697
  %v4710 = vadd.f32 %v4577, %v4698
  %v4711 = vadd.f32 %v4578, %v4699
  %s4712 = scalar_lea.vmem [#allocation3], 672
  %4713 = vst [vmem:[%s4712] sm:$0xff] %v4700
  %4714 = vst [vmem:[%s4712 + $0x8] sm:$0xff] %v4701
  %4715 = vst [vmem:[%s4712 + $0x10] sm:$0xff] %v4702
  %4716 = vst [vmem:[%s4712 + $0x18] sm:$0xff] %v4703
  %4717 = vst [vmem:[%s4712 + $0x20] sm:$0xff] %v4704
  %4718 = vst [vmem:[%s4712 + $0x28] sm:$0xff] %v4705
  %4719 = vst [vmem:[%s4712 + $0x30] sm:$0xff] %v4706
  %4720 = vst [vmem:[%s4712 + $0x38] sm:$0xff] %v4707
  %4721 = vst [vmem:[%s4712 + $0x40] sm:$0xff] %v4708
  %4722 = vst [vmem:[%s4712 + $0x48] sm:$0xff] %v4709
  %4723 = vst [vmem:[%s4712 + $0x50] sm:$0xff] %v4710
  %4724 = vst [vmem:[%s4712 + $0x58] sm:$0xff] %v4711
  %v4725 = vmul.f32 %v4700, %v482
  %v4726 = vmul.f32 %v4701, %v482
  %v4727 = vmul.f32 %v4702, %v482
  %v4728 = vmul.f32 %v4703, %v482
  %v4729 = vmul.f32 %v4704, %v482
  %v4730 = vmul.f32 %v4705, %v482
  %v4731 = vmul.f32 %v4706, %v483
  %v4732 = vmul.f32 %v4707, %v483
  %v4733 = vmul.f32 %v4708, %v483
  %v4734 = vmul.f32 %v4709, %v483
  %v4735 = vmul.f32 %v4710, %v483
  %v4736 = vmul.f32 %v4711, %v483
  %v4737 = vadd.f32 %v4725, %v4731
  %v4738 = vrot.slane %v4737, 4
  %v4739 = vadd.f32 %v4737, %v4738
  %v4740 = vrot.slane %v4739, 2
  %v4741 = vadd.f32 %v4739, %v4740
  %v4742 = vrot.slane %v4741, 1
  %v4743 = vadd.f32 %v4741, %v4742
  %v4744 = vadd.f32 %v4726, %v4732
  %v4745 = vrot.slane %v4744, 4
  %v4746 = vadd.f32 %v4744, %v4745
  %v4747 = vrot.slane %v4746, 2
  %v4748 = vadd.f32 %v4746, %v4747
  %v4749 = vrot.slane %v4748, 1
  %v4750 = vadd.f32 %v4748, %v4749
  %v4751 = vadd.f32 %v4727, %v4733
  %v4752 = vrot.slane %v4751, 4
  %v4753 = vadd.f32 %v4751, %v4752
  %v4754 = vrot.slane %v4753, 2
  %v4755 = vadd.f32 %v4753, %v4754
  %v4756 = vrot.slane %v4755, 1
  %v4757 = vadd.f32 %v4755, %v4756
  %v4758 = vadd.f32 %v4728, %v4734
  %v4759 = vrot.slane %v4758, 4
  %v4760 = vadd.f32 %v4758, %v4759
  %v4761 = vrot.slane %v4760, 2
  %v4762 = vadd.f32 %v4760, %v4761
  %v4763 = vrot.slane %v4762, 1
  %v4764 = vadd.f32 %v4762, %v4763
  %v4765 = vadd.f32 %v4729, %v4735
  %v4766 = vrot.slane %v4765, 4
  %v4767 = vadd.f32 %v4765, %v4766
  %v4768 = vrot.slane %v4767, 2
  %v4769 = vadd.f32 %v4767, %v4768
  %v4770 = vrot.slane %v4769, 1
  %v4771 = vadd.f32 %v4769, %v4770
  %v4772 = vadd.f32 %v4730, %v4736
  %v4773 = vrot.slane %v4772, 4
  %v4774 = vadd.f32 %v4772, %v4773
  %v4775 = vrot.slane %v4774, 2
  %v4776 = vadd.f32 %v4774, %v4775
  %v4777 = vrot.slane %v4776, 1
  %v4778 = vadd.f32 %v4776, %v4777
  %v4779 = vadd.f32 %v4261, %v4743
  %v4780 = vadd.f32 %v4262, %v4750
  %v4781 = vadd.f32 %v4263, %v4757
  %v4782 = vadd.f32 %v4264, %v4764
  %v4783 = vadd.f32 %v4265, %v4771
  %v4784 = vadd.f32 %v4266, %v4778
  %v4785 = vmul.f32 %v4725, %v4700
  %v4786 = vmul.f32 %v4726, %v4701
  %v4787 = vmul.f32 %v4727, %v4702
  %v4788 = vmul.f32 %v4728, %v4703
  %v4789 = vmul.f32 %v4729, %v4704
  %v4790 = vmul.f32 %v4730, %v4705
  %v4791 = vmul.f32 %v4731, %v4706
  %v4792 = vmul.f32 %v4732, %v4707
  %v4793 = vmul.f32 %v4733, %v4708
  %v4794 = vmul.f32 %v4734, %v4709
  %v4795 = vmul.f32 %v4735, %v4710
  %v4796 = vmul.f32 %v4736, %v4711
  %v4797 = vadd.f32 %v4785, %v4791
  %v4798 = vrot.slane %v4797, 4
  %v4799 = vadd.f32 %v4797, %v4798
  %v4800 = vrot.slane %v4799, 2
  %v4801 = vadd.f32 %v4799, %v4800
  %v4802 = vrot.slane %v4801, 1
  %v4803 = vadd.f32 %v4801, %v4802
  %v4804 = vadd.f32 %v4786, %v4792
  %v4805 = vrot.slane %v4804, 4
  %v4806 = vadd.f32 %v4804, %v4805
  %v4807 = vrot.slane %v4806, 2
  %v4808 = vadd.f32 %v4806, %v4807
  %v4809 = vrot.slane %v4808, 1
  %v4810 = vadd.f32 %v4808, %v4809
  %v4811 = vadd.f32 %v4787, %v4793
  %v4812 = vrot.slane %v4811, 4
  %v4813 = vadd.f32 %v4811, %v4812
  %v4814 = vrot.slane %v4813, 2
  %v4815 = vadd.f32 %v4813, %v4814
  %v4816 = vrot.slane %v4815, 1
  %v4817 = vadd.f32 %v4815, %v4816
  %v4818 = vadd.f32 %v4788, %v4794
  %v4819 = vrot.slane %v4818, 4
  %v4820 = vadd.f32 %v4818, %v4819
  %v4821 = vrot.slane %v4820, 2
  %v4822 = vadd.f32 %v4820, %v4821
  %v4823 = vrot.slane %v4822, 1
  %v4824 = vadd.f32 %v4822, %v4823
  %v4825 = vadd.f32 %v4789, %v4795
  %v4826 = vrot.slane %v4825, 4
  %v4827 = vadd.f32 %v4825, %v4826
  %v4828 = vrot.slane %v4827, 2
  %v4829 = vadd.f32 %v4827, %v4828
  %v4830 = vrot.slane %v4829, 1
  %v4831 = vadd.f32 %v4829, %v4830
  %v4832 = vadd.f32 %v4790, %v4796
  %v4833 = vrot.slane %v4832, 4
  %v4834 = vadd.f32 %v4832, %v4833
  %v4835 = vrot.slane %v4834, 2
  %v4836 = vadd.f32 %v4834, %v4835
  %v4837 = vrot.slane %v4836, 1
  %v4838 = vadd.f32 %v4836, %v4837
  %v4839 = vadd.f32 %v4321, %v4803
  %v4840 = vadd.f32 %v4322, %v4810
  %v4841 = vadd.f32 %v4323, %v4817
  %v4842 = vadd.f32 %v4324, %v4824
  %v4843 = vadd.f32 %v4325, %v4831
  %v4844 = vadd.f32 %v4326, %v4838
  %v4845 = vld [vmem:[%s4061] sm:$0xff]
  %v4846 = vld [vmem:[%s4061 + $0x8] sm:$0xff]
  %v4847 = vld [vmem:[%s4061 + $0x10] sm:$0xff]
  %v4848 = vld [vmem:[%s4061 + $0x18] sm:$0xff]
  %v4849 = vld [vmem:[%s4061 + $0x20] sm:$0xff]
  %v4850 = vld [vmem:[%s4061 + $0x28] sm:$0xff]
  %v4851 = vld [vmem:[%s4061 + $0x30] sm:$0xff]
  %v4852 = vld [vmem:[%s4061 + $0x38] sm:$0xff]
  %v4853 = vld [vmem:[%s4061 + $0x40] sm:$0xff]
  %v4854 = vld [vmem:[%s4061 + $0x48] sm:$0xff]
  %v4855 = vld [vmem:[%s4061 + $0x50] sm:$0xff]
  %v4856 = vld [vmem:[%s4061 + $0x58] sm:$0xff]
  %v4857 = vrot.slane %v4845, 7
  %v4858 = vrot.slane %v4846, 7
  %v4859 = vrot.slane %v4847, 7
  %v4860 = vrot.slane %v4848, 7
  %v4861 = vrot.slane %v4849, 7
  %v4862 = vrot.slane %v4850, 7
  %v4863 = vrot.slane %v4851, 7
  %v4864 = vrot.slane %v4852, 7
  %v4865 = vrot.slane %v4853, 7
  %v4866 = vrot.slane %v4854, 7
  %v4867 = vrot.slane %v4855, 7
  %v4868 = vrot.slane %v4856, 7
  %v4869 = vsel %vm508, %v4857, %v4863
  %v4870 = vsel %vm508, %v4858, %v4864
  %v4871 = vsel %vm508, %v4859, %v4865
  %v4872 = vsel %vm508, %v4860, %v4866
  %v4873 = vsel %vm508, %v4861, %v4867
  %v4874 = vsel %vm508, %v4862, %v4868
  %v4875 = vsel %vm508, %v4863, %v4857
  %v4876 = vsel %vm508, %v4864, %v4858
  %v4877 = vsel %vm508, %v4865, %v4859
  %v4878 = vsel %vm508, %v4866, %v4860
  %v4879 = vsel %vm508, %v4867, %v4861
  %v4880 = vsel %vm508, %v4868, %v4862
  %v4881 = vmul.f32 %v4875, %v524
  %v4882 = vmul.f32 %v4876, %v528
  %v4883 = vmul.f32 %v4877, %v532
  %v4884 = vmul.f32 %v4878, %v536
  %v4885 = vmul.f32 %v4879, %v540
  %v4886 = vmul.f32 %v4880, %v544
  %v4887 = vmul.f32 %v4869, %v524
  %v4888 = vmul.f32 %v4870, %v528
  %v4889 = vmul.f32 %v4871, %v532
  %v4890 = vmul.f32 %v4872, %v536
  %v4891 = vmul.f32 %v4873, %v540
  %v4892 = vmul.f32 %v4874, %v544
  %v4893 = vmul.f32 %v4845, %v560
  %v4894 = vmul.f32 %v4846, %v564
  %v4895 = vmul.f32 %v4847, %v568
  %v4896 = vmul.f32 %v4848, %v572
  %v4897 = vmul.f32 %v4849, %v576
  %v4898 = vmul.f32 %v4850, %v580
  %v4899 = vmul.f32 %v4851, %v560
  %v4900 = vmul.f32 %v4852, %v564
  %v4901 = vmul.f32 %v4853, %v568
  %v4902 = vmul.f32 %v4854, %v572
  %v4903 = vmul.f32 %v4855, %v576
  %v4904 = vmul.f32 %v4856, %v580
  %v4905 = vadd.f32 %v4881, %v4893
  %v4906 = vadd.f32 %v4882, %v4894
  %v4907 = vadd.f32 %v4883, %v4895
  %v4908 = vadd.f32 %v4884, %v4896
  %v4909 = vadd.f32 %v4885, %v4897
  %v4910 = vadd.f32 %v4886, %v4898
  %v4911 = vadd.f32 %v4887, %v4899
  %v4912 = vadd.f32 %v4888, %v4900
  %v4913 = vadd.f32 %v4889, %v4901
  %v4914 = vadd.f32 %v4890, %v4902
  %v4915 = vadd.f32 %v4891, %v4903
  %v4916 = vadd.f32 %v4892, %v4904
  %v4917 = vrot.slane %v4845, 1
  %v4918 = vrot.slane %v4846, 1
  %v4919 = vrot.slane %v4847, 1
  %v4920 = vrot.slane %v4848, 1
  %v4921 = vrot.slane %v4849, 1
  %v4922 = vrot.slane %v4850, 1
  %v4923 = vrot.slane %v4851, 1
  %v4924 = vrot.slane %v4852, 1
  %v4925 = vrot.slane %v4853, 1
  %v4926 = vrot.slane %v4854, 1
  %v4927 = vrot.slane %v4855, 1
  %v4928 = vrot.slane %v4856, 1
  %v4929 = vsel %vm617, %v4917, %v4923
  %v4930 = vsel %vm617, %v4918, %v4924
  %v4931 = vsel %vm617, %v4919, %v4925
  %v4932 = vsel %vm617, %v4920, %v4926
  %v4933 = vsel %vm617, %v4921, %v4927
  %v4934 = vsel %vm617, %v4922, %v4928
  %v4935 = vsel %vm617, %v4923, %v4917
  %v4936 = vsel %vm617, %v4924, %v4918
  %v4937 = vsel %vm617, %v4925, %v4919
  %v4938 = vsel %vm617, %v4926, %v4920
  %v4939 = vsel %vm617, %v4927, %v4921
  %v4940 = vsel %vm617, %v4928, %v4922
  %v4941 = vmul.f32 %v4929, %v633
  %v4942 = vmul.f32 %v4930, %v637
  %v4943 = vmul.f32 %v4931, %v641
  %v4944 = vmul.f32 %v4932, %v645
  %v4945 = vmul.f32 %v4933, %v649
  %v4946 = vmul.f32 %v4934, %v653
  %v4947 = vmul.f32 %v4935, %v633
  %v4948 = vmul.f32 %v4936, %v637
  %v4949 = vmul.f32 %v4937, %v641
  %v4950 = vmul.f32 %v4938, %v645
  %v4951 = vmul.f32 %v4939, %v649
  %v4952 = vmul.f32 %v4940, %v653
  %v4953 = vadd.f32 %v4905, %v4941
  %v4954 = vadd.f32 %v4906, %v4942
  %v4955 = vadd.f32 %v4907, %v4943
  %v4956 = vadd.f32 %v4908, %v4944
  %v4957 = vadd.f32 %v4909, %v4945
  %v4958 = vadd.f32 %v4910, %v4946
  %v4959 = vadd.f32 %v4911, %v4947
  %v4960 = vadd.f32 %v4912, %v4948
  %v4961 = vadd.f32 %v4913, %v4949
  %v4962 = vadd.f32 %v4914, %v4950
  %v4963 = vadd.f32 %v4915, %v4951
  %v4964 = vadd.f32 %v4916, %v4952
  %v4965 = vld [vmem:[%s4579] sm:$0xff]
  %v4966 = vld [vmem:[%s4579 + $0x8] sm:$0xff]
  %v4967 = vld [vmem:[%s4579 + $0x10] sm:$0xff]
  %v4968 = vld [vmem:[%s4579 + $0x18] sm:$0xff]
  %v4969 = vld [vmem:[%s4579 + $0x20] sm:$0xff]
  %v4970 = vld [vmem:[%s4579 + $0x28] sm:$0xff]
  %v4971 = vld [vmem:[%s4579 + $0x30] sm:$0xff]
  %v4972 = vld [vmem:[%s4579 + $0x38] sm:$0xff]
  %v4973 = vld [vmem:[%s4579 + $0x40] sm:$0xff]
  %v4974 = vld [vmem:[%s4579 + $0x48] sm:$0xff]
  %v4975 = vld [vmem:[%s4579 + $0x50] sm:$0xff]
  %v4976 = vld [vmem:[%s4579 + $0x58] sm:$0xff]
  %v4977 = vrot.slane %v4965, 7
  %v4978 = vrot.slane %v4966, 7
  %v4979 = vrot.slane %v4967, 7
  %v4980 = vrot.slane %v4968, 7
  %v4981 = vrot.slane %v4969, 7
  %v4982 = vrot.slane %v4970, 7
  %v4983 = vrot.slane %v4971, 7
  %v4984 = vrot.slane %v4972, 7
  %v4985 = vrot.slane %v4973, 7
  %v4986 = vrot.slane %v4974, 7
  %v4987 = vrot.slane %v4975, 7
  %v4988 = vrot.slane %v4976, 7
  %v4989 = vsel %vm508, %v4977, %v4983
  %v4990 = vsel %vm508, %v4978, %v4984
  %v4991 = vsel %vm508, %v4979, %v4985
  %v4992 = vsel %vm508, %v4980, %v4986
  %v4993 = vsel %vm508, %v4981, %v4987
  %v4994 = vsel %vm508, %v4982, %v4988
  %v4995 = vsel %vm508, %v4983, %v4977
  %v4996 = vsel %vm508, %v4984, %v4978
  %v4997 = vsel %vm508, %v4985, %v4979
  %v4998 = vsel %vm508, %v4986, %v4980
  %v4999 = vsel %vm508, %v4987, %v4981
  %v5000 = vsel %vm508, %v4988, %v4982
  %v5001 = vmul.f32 %v4995, %v717
  %v5002 = vmul.f32 %v4996, %v721
  %v5003 = vmul.f32 %v4997, %v725
  %v5004 = vmul.f32 %v4998, %v729
  %v5005 = vmul.f32 %v4999, %v733
  %v5006 = vmul.f32 %v5000, %v737
  %v5007 = vmul.f32 %v4989, %v717
  %v5008 = vmul.f32 %v4990, %v721
  %v5009 = vmul.f32 %v4991, %v725
  %v5010 = vmul.f32 %v4992, %v729
  %v5011 = vmul.f32 %v4993, %v733
  %v5012 = vmul.f32 %v4994, %v737
  %v5013 = vmul.f32 %v4965, %v753
  %v5014 = vmul.f32 %v4966, %v757
  %v5015 = vmul.f32 %v4967, %v761
  %v5016 = vmul.f32 %v4968, %v765
  %v5017 = vmul.f32 %v4969, %v769
  %v5018 = vmul.f32 %v4970, %v773
  %v5019 = vmul.f32 %v4971, %v753
  %v5020 = vmul.f32 %v4972, %v757
  %v5021 = vmul.f32 %v4973, %v761
  %v5022 = vmul.f32 %v4974, %v765
  %v5023 = vmul.f32 %v4975, %v769
  %v5024 = vmul.f32 %v4976, %v773
  %v5025 = vadd.f32 %v5001, %v5013
  %v5026 = vadd.f32 %v5002, %v5014
  %v5027 = vadd.f32 %v5003, %v5015
  %v5028 = vadd.f32 %v5004, %v5016
  %v5029 = vadd.f32 %v5005, %v5017
  %v5030 = vadd.f32 %v5006, %v5018
  %v5031 = vadd.f32 %v5007, %v5019
  %v5032 = vadd.f32 %v5008, %v5020
  %v5033 = vadd.f32 %v5009, %v5021
  %v5034 = vadd.f32 %v5010, %v5022
  %v5035 = vadd.f32 %v5011, %v5023
  %v5036 = vadd.f32 %v5012, %v5024
  %v5037 = vrot.slane %v4965, 1
  %v5038 = vrot.slane %v4966, 1
  %v5039 = vrot.slane %v4967, 1
  %v5040 = vrot.slane %v4968, 1
  %v5041 = vrot.slane %v4969, 1
  %v5042 = vrot.slane %v4970, 1
  %v5043 = vrot.slane %v4971, 1
  %v5044 = vrot.slane %v4972, 1
  %v5045 = vrot.slane %v4973, 1
  %v5046 = vrot.slane %v4974, 1
  %v5047 = vrot.slane %v4975, 1
  %v5048 = vrot.slane %v4976, 1
  %v5049 = vsel %vm617, %v5037, %v5043
  %v5050 = vsel %vm617, %v5038, %v5044
  %v5051 = vsel %vm617, %v5039, %v5045
  %v5052 = vsel %vm617, %v5040, %v5046
  %v5053 = vsel %vm617, %v5041, %v5047
  %v5054 = vsel %vm617, %v5042, %v5048
  %v5055 = vsel %vm617, %v5043, %v5037
  %v5056 = vsel %vm617, %v5044, %v5038
  %v5057 = vsel %vm617, %v5045, %v5039
  %v5058 = vsel %vm617, %v5046, %v5040
  %v5059 = vsel %vm617, %v5047, %v5041
  %v5060 = vsel %vm617, %v5048, %v5042
  %v5061 = vmul.f32 %v5049, %v825
  %v5062 = vmul.f32 %v5050, %v829
  %v5063 = vmul.f32 %v5051, %v833
  %v5064 = vmul.f32 %v5052, %v837
  %v5065 = vmul.f32 %v5053, %v841
  %v5066 = vmul.f32 %v5054, %v845
  %v5067 = vmul.f32 %v5055, %v825
  %v5068 = vmul.f32 %v5056, %v829
  %v5069 = vmul.f32 %v5057, %v833
  %v5070 = vmul.f32 %v5058, %v837
  %v5071 = vmul.f32 %v5059, %v841
  %v5072 = vmul.f32 %v5060, %v845
  %v5073 = vadd.f32 %v5025, %v5061
  %v5074 = vadd.f32 %v5026, %v5062
  %v5075 = vadd.f32 %v5027, %v5063
  %v5076 = vadd.f32 %v5028, %v5064
  %v5077 = vadd.f32 %v5029, %v5065
  %v5078 = vadd.f32 %v5030, %v5066
  %v5079 = vadd.f32 %v5031, %v5067
  %v5080 = vadd.f32 %v5032, %v5068
  %v5081 = vadd.f32 %v5033, %v5069
  %v5082 = vadd.f32 %v5034, %v5070
  %v5083 = vadd.f32 %v5035, %v5071
  %v5084 = vadd.f32 %v5036, %v5072
  %v5085 = vadd.f32 %v4953, %v5073
  %v5086 = vadd.f32 %v4954, %v5074
  %v5087 = vadd.f32 %v4955, %v5075
  %v5088 = vadd.f32 %v4956, %v5076
  %v5089 = vadd.f32 %v4957, %v5077
  %v5090 = vadd.f32 %v4958, %v5078
  %v5091 = vadd.f32 %v4959, %v5079
  %v5092 = vadd.f32 %v4960, %v5080
  %v5093 = vadd.f32 %v4961, %v5081
  %v5094 = vadd.f32 %v4962, %v5082
  %v5095 = vadd.f32 %v4963, %v5083
  %v5096 = vadd.f32 %v4964, %v5084
  %s5097 = scalar_lea.vmem [#allocation2], 960
  %v5098 = vld [vmem:[%s5097] sm:$0xff]
  %v5099 = vld [vmem:[%s5097 + $0x8] sm:$0xff]
  %v5100 = vld [vmem:[%s5097 + $0x10] sm:$0xff]
  %v5101 = vld [vmem:[%s5097 + $0x18] sm:$0xff]
  %v5102 = vld [vmem:[%s5097 + $0x20] sm:$0xff]
  %v5103 = vld [vmem:[%s5097 + $0x28] sm:$0xff]
  %v5104 = vld [vmem:[%s5097 + $0x30] sm:$0xff]
  %v5105 = vld [vmem:[%s5097 + $0x38] sm:$0xff]
  %v5106 = vld [vmem:[%s5097 + $0x40] sm:$0xff]
  %v5107 = vld [vmem:[%s5097 + $0x48] sm:$0xff]
  %v5108 = vld [vmem:[%s5097 + $0x50] sm:$0xff]
  %v5109 = vld [vmem:[%s5097 + $0x58] sm:$0xff]
  %v5110 = vrot.slane %v5098, 7
  %v5111 = vrot.slane %v5099, 7
  %v5112 = vrot.slane %v5100, 7
  %v5113 = vrot.slane %v5101, 7
  %v5114 = vrot.slane %v5102, 7
  %v5115 = vrot.slane %v5103, 7
  %v5116 = vrot.slane %v5104, 7
  %v5117 = vrot.slane %v5105, 7
  %v5118 = vrot.slane %v5106, 7
  %v5119 = vrot.slane %v5107, 7
  %v5120 = vrot.slane %v5108, 7
  %v5121 = vrot.slane %v5109, 7
  %v5122 = vsel %vm508, %v5110, %v5116
  %v5123 = vsel %vm508, %v5111, %v5117
  %v5124 = vsel %vm508, %v5112, %v5118
  %v5125 = vsel %vm508, %v5113, %v5119
  %v5126 = vsel %vm508, %v5114, %v5120
  %v5127 = vsel %vm508, %v5115, %v5121
  %v5128 = vsel %vm508, %v5116, %v5110
  %v5129 = vsel %vm508, %v5117, %v5111
  %v5130 = vsel %vm508, %v5118, %v5112
  %v5131 = vsel %vm508, %v5119, %v5113
  %v5132 = vsel %vm508, %v5120, %v5114
  %v5133 = vsel %vm508, %v5121, %v5115
  %v5134 = vmul.f32 %v5128, %v922
  %v5135 = vmul.f32 %v5129, %v926
  %v5136 = vmul.f32 %v5130, %v930
  %v5137 = vmul.f32 %v5131, %v934
  %v5138 = vmul.f32 %v5132, %v938
  %v5139 = vmul.f32 %v5133, %v942
  %v5140 = vmul.f32 %v5122, %v922
  %v5141 = vmul.f32 %v5123, %v926
  %v5142 = vmul.f32 %v5124, %v930
  %v5143 = vmul.f32 %v5125, %v934
  %v5144 = vmul.f32 %v5126, %v938
  %v5145 = vmul.f32 %v5127, %v942
  %v5146 = vmul.f32 %v5098, %v958
  %v5147 = vmul.f32 %v5099, %v962
  %v5148 = vmul.f32 %v5100, %v966
  %v5149 = vmul.f32 %v5101, %v970
  %v5150 = vmul.f32 %v5102, %v974
  %v5151 = vmul.f32 %v5103, %v978
  %v5152 = vmul.f32 %v5104, %v958
  %v5153 = vmul.f32 %v5105, %v962
  %v5154 = vmul.f32 %v5106, %v966
  %v5155 = vmul.f32 %v5107, %v970
  %v5156 = vmul.f32 %v5108, %v974
  %v5157 = vmul.f32 %v5109, %v978
  %v5158 = vadd.f32 %v5134, %v5146
  %v5159 = vadd.f32 %v5135, %v5147
  %v5160 = vadd.f32 %v5136, %v5148
  %v5161 = vadd.f32 %v5137, %v5149
  %v5162 = vadd.f32 %v5138, %v5150
  %v5163 = vadd.f32 %v5139, %v5151
  %v5164 = vadd.f32 %v5140, %v5152
  %v5165 = vadd.f32 %v5141, %v5153
  %v5166 = vadd.f32 %v5142, %v5154
  %v5167 = vadd.f32 %v5143, %v5155
  %v5168 = vadd.f32 %v5144, %v5156
  %v5169 = vadd.f32 %v5145, %v5157
  %v5170 = vrot.slane %v5098, 1
  %v5171 = vrot.slane %v5099, 1
  %v5172 = vrot.slane %v5100, 1
  %v5173 = vrot.slane %v5101, 1
  %v5174 = vrot.slane %v5102, 1
  %v5175 = vrot.slane %v5103, 1
  %v5176 = vrot.slane %v5104, 1
  %v5177 = vrot.slane %v5105, 1
  %v5178 = vrot.slane %v5106, 1
  %v5179 = vrot.slane %v5107, 1
  %v5180 = vrot.slane %v5108, 1
  %v5181 = vrot.slane %v5109, 1
  %v5182 = vsel %vm617, %v5170, %v5176
  %v5183 = vsel %vm617, %v5171, %v5177
  %v5184 = vsel %vm617, %v5172, %v5178
  %v5185 = vsel %vm617, %v5173, %v5179
  %v5186 = vsel %vm617, %v5174, %v5180
  %v5187 = vsel %vm617, %v5175, %v5181
  %v5188 = vsel %vm617, %v5176, %v5170
  %v5189 = vsel %vm617, %v5177, %v5171
  %v5190 = vsel %vm617, %v5178, %v5172
  %v5191 = vsel %vm617, %v5179, %v5173
  %v5192 = vsel %vm617, %v5180, %v5174
  %v5193 = vsel %vm617, %v5181, %v5175
  %v5194 = vmul.f32 %v5182, %v1030
  %v5195 = vmul.f32 %v5183, %v1034
  %v5196 = vmul.f32 %v5184, %v1038
  %v5197 = vmul.f32 %v5185, %v1042
  %v5198 = vmul.f32 %v5186, %v1046
  %v5199 = vmul.f32 %v5187, %v1050
  %v5200 = vmul.f32 %v5188, %v1030
  %v5201 = vmul.f32 %v5189, %v1034
  %v5202 = vmul.f32 %v5190, %v1038
  %v5203 = vmul.f32 %v5191, %v1042
  %v5204 = vmul.f32 %v5192, %v1046
  %v5205 = vmul.f32 %v5193, %v1050
  %v5206 = vadd.f32 %v5158, %v5194
  %v5207 = vadd.f32 %v5159, %v5195
  %v5208 = vadd.f32 %v5160, %v5196
  %v5209 = vadd.f32 %v5161, %v5197
  %v5210 = vadd.f32 %v5162, %v5198
  %v5211 = vadd.f32 %v5163, %v5199
  %v5212 = vadd.f32 %v5164, %v5200
  %v5213 = vadd.f32 %v5165, %v5201
  %v5214 = vadd.f32 %v5166, %v5202
  %v5215 = vadd.f32 %v5167, %v5203
  %v5216 = vadd.f32 %v5168, %v5204
  %v5217 = vadd.f32 %v5169, %v5205
  %v5218 = vadd.f32 %v5085, %v5206
  %v5219 = vadd.f32 %v5086, %v5207
  %v5220 = vadd.f32 %v5087, %v5208
  %v5221 = vadd.f32 %v5088, %v5209
  %v5222 = vadd.f32 %v5089, %v5210
  %v5223 = vadd.f32 %v5090, %v5211
  %v5224 = vadd.f32 %v5091, %v5212
  %v5225 = vadd.f32 %v5092, %v5213
  %v5226 = vadd.f32 %v5093, %v5214
  %v5227 = vadd.f32 %v5094, %v5215
  %v5228 = vadd.f32 %v5095, %v5216
  %v5229 = vadd.f32 %v5096, %v5217
  %s5230 = scalar_lea.vmem [#allocation3], 768
  %5231 = vst [vmem:[%s5230] sm:$0xff] %v5218
  %5232 = vst [vmem:[%s5230 + $0x8] sm:$0xff] %v5219
  %5233 = vst [vmem:[%s5230 + $0x10] sm:$0xff] %v5220
  %5234 = vst [vmem:[%s5230 + $0x18] sm:$0xff] %v5221
  %5235 = vst [vmem:[%s5230 + $0x20] sm:$0xff] %v5222
  %5236 = vst [vmem:[%s5230 + $0x28] sm:$0xff] %v5223
  %5237 = vst [vmem:[%s5230 + $0x30] sm:$0xff] %v5224
  %5238 = vst [vmem:[%s5230 + $0x38] sm:$0xff] %v5225
  %5239 = vst [vmem:[%s5230 + $0x40] sm:$0xff] %v5226
  %5240 = vst [vmem:[%s5230 + $0x48] sm:$0xff] %v5227
  %5241 = vst [vmem:[%s5230 + $0x50] sm:$0xff] %v5228
  %5242 = vst [vmem:[%s5230 + $0x58] sm:$0xff] %v5229
  %v5243 = vmul.f32 %v5218, %v482
  %v5244 = vmul.f32 %v5219, %v482
  %v5245 = vmul.f32 %v5220, %v482
  %v5246 = vmul.f32 %v5221, %v482
  %v5247 = vmul.f32 %v5222, %v482
  %v5248 = vmul.f32 %v5223, %v482
  %v5249 = vmul.f32 %v5224, %v483
  %v5250 = vmul.f32 %v5225, %v483
  %v5251 = vmul.f32 %v5226, %v483
  %v5252 = vmul.f32 %v5227, %v483
  %v5253 = vmul.f32 %v5228, %v483
  %v5254 = vmul.f32 %v5229, %v483
  %v5255 = vadd.f32 %v5243, %v5249
  %v5256 = vrot.slane %v5255, 4
  %v5257 = vadd.f32 %v5255, %v5256
  %v5258 = vrot.slane %v5257, 2
  %v5259 = vadd.f32 %v5257, %v5258
  %v5260 = vrot.slane %v5259, 1
  %v5261 = vadd.f32 %v5259, %v5260
  %v5262 = vadd.f32 %v5244, %v5250
  %v5263 = vrot.slane %v5262, 4
  %v5264 = vadd.f32 %v5262, %v5263
  %v5265 = vrot.slane %v5264, 2
  %v5266 = vadd.f32 %v5264, %v5265
  %v5267 = vrot.slane %v5266, 1
  %v5268 = vadd.f32 %v5266, %v5267
  %v5269 = vadd.f32 %v5245, %v5251
  %v5270 = vrot.slane %v5269, 4
  %v5271 = vadd.f32 %v5269, %v5270
  %v5272 = vrot.slane %v5271, 2
  %v5273 = vadd.f32 %v5271, %v5272
  %v5274 = vrot.slane %v5273, 1
  %v5275 = vadd.f32 %v5273, %v5274
  %v5276 = vadd.f32 %v5246, %v5252
  %v5277 = vrot.slane %v5276, 4
  %v5278 = vadd.f32 %v5276, %v5277
  %v5279 = vrot.slane %v5278, 2
  %v5280 = vadd.f32 %v5278, %v5279
  %v5281 = vrot.slane %v5280, 1
  %v5282 = vadd.f32 %v5280, %v5281
  %v5283 = vadd.f32 %v5247, %v5253
  %v5284 = vrot.slane %v5283, 4
  %v5285 = vadd.f32 %v5283, %v5284
  %v5286 = vrot.slane %v5285, 2
  %v5287 = vadd.f32 %v5285, %v5286
  %v5288 = vrot.slane %v5287, 1
  %v5289 = vadd.f32 %v5287, %v5288
  %v5290 = vadd.f32 %v5248, %v5254
  %v5291 = vrot.slane %v5290, 4
  %v5292 = vadd.f32 %v5290, %v5291
  %v5293 = vrot.slane %v5292, 2
  %v5294 = vadd.f32 %v5292, %v5293
  %v5295 = vrot.slane %v5294, 1
  %v5296 = vadd.f32 %v5294, %v5295
  %v5297 = vadd.f32 %v4779, %v5261
  %v5298 = vadd.f32 %v4780, %v5268
  %v5299 = vadd.f32 %v4781, %v5275
  %v5300 = vadd.f32 %v4782, %v5282
  %v5301 = vadd.f32 %v4783, %v5289
  %v5302 = vadd.f32 %v4784, %v5296
  %v5303 = vmul.f32 %v5243, %v5218
  %v5304 = vmul.f32 %v5244, %v5219
  %v5305 = vmul.f32 %v5245, %v5220
  %v5306 = vmul.f32 %v5246, %v5221
  %v5307 = vmul.f32 %v5247, %v5222
  %v5308 = vmul.f32 %v5248, %v5223
  %v5309 = vmul.f32 %v5249, %v5224
  %v5310 = vmul.f32 %v5250, %v5225
  %v5311 = vmul.f32 %v5251, %v5226
  %v5312 = vmul.f32 %v5252, %v5227
  %v5313 = vmul.f32 %v5253, %v5228
  %v5314 = vmul.f32 %v5254, %v5229
  %v5315 = vadd.f32 %v5303, %v5309
  %v5316 = vrot.slane %v5315, 4
  %v5317 = vadd.f32 %v5315, %v5316
  %v5318 = vrot.slane %v5317, 2
  %v5319 = vadd.f32 %v5317, %v5318
  %v5320 = vrot.slane %v5319, 1
  %v5321 = vadd.f32 %v5319, %v5320
  %v5322 = vadd.f32 %v5304, %v5310
  %v5323 = vrot.slane %v5322, 4
  %v5324 = vadd.f32 %v5322, %v5323
  %v5325 = vrot.slane %v5324, 2
  %v5326 = vadd.f32 %v5324, %v5325
  %v5327 = vrot.slane %v5326, 1
  %v5328 = vadd.f32 %v5326, %v5327
  %v5329 = vadd.f32 %v5305, %v5311
  %v5330 = vrot.slane %v5329, 4
  %v5331 = vadd.f32 %v5329, %v5330
  %v5332 = vrot.slane %v5331, 2
  %v5333 = vadd.f32 %v5331, %v5332
  %v5334 = vrot.slane %v5333, 1
  %v5335 = vadd.f32 %v5333, %v5334
  %v5336 = vadd.f32 %v5306, %v5312
  %v5337 = vrot.slane %v5336, 4
  %v5338 = vadd.f32 %v5336, %v5337
  %v5339 = vrot.slane %v5338, 2
  %v5340 = vadd.f32 %v5338, %v5339
  %v5341 = vrot.slane %v5340, 1
  %v5342 = vadd.f32 %v5340, %v5341
  %v5343 = vadd.f32 %v5307, %v5313
  %v5344 = vrot.slane %v5343, 4
  %v5345 = vadd.f32 %v5343, %v5344
  %v5346 = vrot.slane %v5345, 2
  %v5347 = vadd.f32 %v5345, %v5346
  %v5348 = vrot.slane %v5347, 1
  %v5349 = vadd.f32 %v5347, %v5348
  %v5350 = vadd.f32 %v5308, %v5314
  %v5351 = vrot.slane %v5350, 4
  %v5352 = vadd.f32 %v5350, %v5351
  %v5353 = vrot.slane %v5352, 2
  %v5354 = vadd.f32 %v5352, %v5353
  %v5355 = vrot.slane %v5354, 1
  %v5356 = vadd.f32 %v5354, %v5355
  %v5357 = vadd.f32 %v4839, %v5321
  %v5358 = vadd.f32 %v4840, %v5328
  %v5359 = vadd.f32 %v4841, %v5335
  %v5360 = vadd.f32 %v4842, %v5342
  %v5361 = vadd.f32 %v4843, %v5349
  %v5362 = vadd.f32 %v4844, %v5356
  %v5363 = vld [vmem:[%s4579] sm:$0xff]
  %v5364 = vld [vmem:[%s4579 + $0x8] sm:$0xff]
  %v5365 = vld [vmem:[%s4579 + $0x10] sm:$0xff]
  %v5366 = vld [vmem:[%s4579 + $0x18] sm:$0xff]
  %v5367 = vld [vmem:[%s4579 + $0x20] sm:$0xff]
  %v5368 = vld [vmem:[%s4579 + $0x28] sm:$0xff]
  %v5369 = vld [vmem:[%s4579 + $0x30] sm:$0xff]
  %v5370 = vld [vmem:[%s4579 + $0x38] sm:$0xff]
  %v5371 = vld [vmem:[%s4579 + $0x40] sm:$0xff]
  %v5372 = vld [vmem:[%s4579 + $0x48] sm:$0xff]
  %v5373 = vld [vmem:[%s4579 + $0x50] sm:$0xff]
  %v5374 = vld [vmem:[%s4579 + $0x58] sm:$0xff]
  %v5375 = vrot.slane %v5363, 7
  %v5376 = vrot.slane %v5364, 7
  %v5377 = vrot.slane %v5365, 7
  %v5378 = vrot.slane %v5366, 7
  %v5379 = vrot.slane %v5367, 7
  %v5380 = vrot.slane %v5368, 7
  %v5381 = vrot.slane %v5369, 7
  %v5382 = vrot.slane %v5370, 7
  %v5383 = vrot.slane %v5371, 7
  %v5384 = vrot.slane %v5372, 7
  %v5385 = vrot.slane %v5373, 7
  %v5386 = vrot.slane %v5374, 7
  %v5387 = vsel %vm508, %v5375, %v5381
  %v5388 = vsel %vm508, %v5376, %v5382
  %v5389 = vsel %vm508, %v5377, %v5383
  %v5390 = vsel %vm508, %v5378, %v5384
  %v5391 = vsel %vm508, %v5379, %v5385
  %v5392 = vsel %vm508, %v5380, %v5386
  %v5393 = vsel %vm508, %v5381, %v5375
  %v5394 = vsel %vm508, %v5382, %v5376
  %v5395 = vsel %vm508, %v5383, %v5377
  %v5396 = vsel %vm508, %v5384, %v5378
  %v5397 = vsel %vm508, %v5385, %v5379
  %v5398 = vsel %vm508, %v5386, %v5380
  %v5399 = vmul.f32 %v5393, %v524
  %v5400 = vmul.f32 %v5394, %v528
  %v5401 = vmul.f32 %v5395, %v532
  %v5402 = vmul.f32 %v5396, %v536
  %v5403 = vmul.f32 %v5397, %v540
  %v5404 = vmul.f32 %v5398, %v544
  %v5405 = vmul.f32 %v5387, %v524
  %v5406 = vmul.f32 %v5388, %v528
  %v5407 = vmul.f32 %v5389, %v532
  %v5408 = vmul.f32 %v5390, %v536
  %v5409 = vmul.f32 %v5391, %v540
  %v5410 = vmul.f32 %v5392, %v544
  %v5411 = vmul.f32 %v5363, %v560
  %v5412 = vmul.f32 %v5364, %v564
  %v5413 = vmul.f32 %v5365, %v568
  %v5414 = vmul.f32 %v5366, %v572
  %v5415 = vmul.f32 %v5367, %v576
  %v5416 = vmul.f32 %v5368, %v580
  %v5417 = vmul.f32 %v5369, %v560
  %v5418 = vmul.f32 %v5370, %v564
  %v5419 = vmul.f32 %v5371, %v568
  %v5420 = vmul.f32 %v5372, %v572
  %v5421 = vmul.f32 %v5373, %v576
  %v5422 = vmul.f32 %v5374, %v580
  %v5423 = vadd.f32 %v5399, %v5411
  %v5424 = vadd.f32 %v5400, %v5412
  %v5425 = vadd.f32 %v5401, %v5413
  %v5426 = vadd.f32 %v5402, %v5414
  %v5427 = vadd.f32 %v5403, %v5415
  %v5428 = vadd.f32 %v5404, %v5416
  %v5429 = vadd.f32 %v5405, %v5417
  %v5430 = vadd.f32 %v5406, %v5418
  %v5431 = vadd.f32 %v5407, %v5419
  %v5432 = vadd.f32 %v5408, %v5420
  %v5433 = vadd.f32 %v5409, %v5421
  %v5434 = vadd.f32 %v5410, %v5422
  %v5435 = vrot.slane %v5363, 1
  %v5436 = vrot.slane %v5364, 1
  %v5437 = vrot.slane %v5365, 1
  %v5438 = vrot.slane %v5366, 1
  %v5439 = vrot.slane %v5367, 1
  %v5440 = vrot.slane %v5368, 1
  %v5441 = vrot.slane %v5369, 1
  %v5442 = vrot.slane %v5370, 1
  %v5443 = vrot.slane %v5371, 1
  %v5444 = vrot.slane %v5372, 1
  %v5445 = vrot.slane %v5373, 1
  %v5446 = vrot.slane %v5374, 1
  %v5447 = vsel %vm617, %v5435, %v5441
  %v5448 = vsel %vm617, %v5436, %v5442
  %v5449 = vsel %vm617, %v5437, %v5443
  %v5450 = vsel %vm617, %v5438, %v5444
  %v5451 = vsel %vm617, %v5439, %v5445
  %v5452 = vsel %vm617, %v5440, %v5446
  %v5453 = vsel %vm617, %v5441, %v5435
  %v5454 = vsel %vm617, %v5442, %v5436
  %v5455 = vsel %vm617, %v5443, %v5437
  %v5456 = vsel %vm617, %v5444, %v5438
  %v5457 = vsel %vm617, %v5445, %v5439
  %v5458 = vsel %vm617, %v5446, %v5440
  %v5459 = vmul.f32 %v5447, %v633
  %v5460 = vmul.f32 %v5448, %v637
  %v5461 = vmul.f32 %v5449, %v641
  %v5462 = vmul.f32 %v5450, %v645
  %v5463 = vmul.f32 %v5451, %v649
  %v5464 = vmul.f32 %v5452, %v653
  %v5465 = vmul.f32 %v5453, %v633
  %v5466 = vmul.f32 %v5454, %v637
  %v5467 = vmul.f32 %v5455, %v641
  %v5468 = vmul.f32 %v5456, %v645
  %v5469 = vmul.f32 %v5457, %v649
  %v5470 = vmul.f32 %v5458, %v653
  %v5471 = vadd.f32 %v5423, %v5459
  %v5472 = vadd.f32 %v5424, %v5460
  %v5473 = vadd.f32 %v5425, %v5461
  %v5474 = vadd.f32 %v5426, %v5462
  %v5475 = vadd.f32 %v5427, %v5463
  %v5476 = vadd.f32 %v5428, %v5464
  %v5477 = vadd.f32 %v5429, %v5465
  %v5478 = vadd.f32 %v5430, %v5466
  %v5479 = vadd.f32 %v5431, %v5467
  %v5480 = vadd.f32 %v5432, %v5468
  %v5481 = vadd.f32 %v5433, %v5469
  %v5482 = vadd.f32 %v5434, %v5470
  %v5483 = vld [vmem:[%s5097] sm:$0xff]
  %v5484 = vld [vmem:[%s5097 + $0x8] sm:$0xff]
  %v5485 = vld [vmem:[%s5097 + $0x10] sm:$0xff]
  %v5486 = vld [vmem:[%s5097 + $0x18] sm:$0xff]
  %v5487 = vld [vmem:[%s5097 + $0x20] sm:$0xff]
  %v5488 = vld [vmem:[%s5097 + $0x28] sm:$0xff]
  %v5489 = vld [vmem:[%s5097 + $0x30] sm:$0xff]
  %v5490 = vld [vmem:[%s5097 + $0x38] sm:$0xff]
  %v5491 = vld [vmem:[%s5097 + $0x40] sm:$0xff]
  %v5492 = vld [vmem:[%s5097 + $0x48] sm:$0xff]
  %v5493 = vld [vmem:[%s5097 + $0x50] sm:$0xff]
  %v5494 = vld [vmem:[%s5097 + $0x58] sm:$0xff]
  %v5495 = vrot.slane %v5483, 7
  %v5496 = vrot.slane %v5484, 7
  %v5497 = vrot.slane %v5485, 7
  %v5498 = vrot.slane %v5486, 7
  %v5499 = vrot.slane %v5487, 7
  %v5500 = vrot.slane %v5488, 7
  %v5501 = vrot.slane %v5489, 7
  %v5502 = vrot.slane %v5490, 7
  %v5503 = vrot.slane %v5491, 7
  %v5504 = vrot.slane %v5492, 7
  %v5505 = vrot.slane %v5493, 7
  %v5506 = vrot.slane %v5494, 7
  %v5507 = vsel %vm508, %v5495, %v5501
  %v5508 = vsel %vm508, %v5496, %v5502
  %v5509 = vsel %vm508, %v5497, %v5503
  %v5510 = vsel %vm508, %v5498, %v5504
  %v5511 = vsel %vm508, %v5499, %v5505
  %v5512 = vsel %vm508, %v5500, %v5506
  %v5513 = vsel %vm508, %v5501, %v5495
  %v5514 = vsel %vm508, %v5502, %v5496
  %v5515 = vsel %vm508, %v5503, %v5497
  %v5516 = vsel %vm508, %v5504, %v5498
  %v5517 = vsel %vm508, %v5505, %v5499
  %v5518 = vsel %vm508, %v5506, %v5500
  %v5519 = vmul.f32 %v5513, %v717
  %v5520 = vmul.f32 %v5514, %v721
  %v5521 = vmul.f32 %v5515, %v725
  %v5522 = vmul.f32 %v5516, %v729
  %v5523 = vmul.f32 %v5517, %v733
  %v5524 = vmul.f32 %v5518, %v737
  %v5525 = vmul.f32 %v5507, %v717
  %v5526 = vmul.f32 %v5508, %v721
  %v5527 = vmul.f32 %v5509, %v725
  %v5528 = vmul.f32 %v5510, %v729
  %v5529 = vmul.f32 %v5511, %v733
  %v5530 = vmul.f32 %v5512, %v737
  %v5531 = vmul.f32 %v5483, %v753
  %v5532 = vmul.f32 %v5484, %v757
  %v5533 = vmul.f32 %v5485, %v761
  %v5534 = vmul.f32 %v5486, %v765
  %v5535 = vmul.f32 %v5487, %v769
  %v5536 = vmul.f32 %v5488, %v773
  %v5537 = vmul.f32 %v5489, %v753
  %v5538 = vmul.f32 %v5490, %v757
  %v5539 = vmul.f32 %v5491, %v761
  %v5540 = vmul.f32 %v5492, %v765
  %v5541 = vmul.f32 %v5493, %v769
  %v5542 = vmul.f32 %v5494, %v773
  %v5543 = vadd.f32 %v5519, %v5531
  %v5544 = vadd.f32 %v5520, %v5532
  %v5545 = vadd.f32 %v5521, %v5533
  %v5546 = vadd.f32 %v5522, %v5534
  %v5547 = vadd.f32 %v5523, %v5535
  %v5548 = vadd.f32 %v5524, %v5536
  %v5549 = vadd.f32 %v5525, %v5537
  %v5550 = vadd.f32 %v5526, %v5538
  %v5551 = vadd.f32 %v5527, %v5539
  %v5552 = vadd.f32 %v5528, %v5540
  %v5553 = vadd.f32 %v5529, %v5541
  %v5554 = vadd.f32 %v5530, %v5542
  %v5555 = vrot.slane %v5483, 1
  %v5556 = vrot.slane %v5484, 1
  %v5557 = vrot.slane %v5485, 1
  %v5558 = vrot.slane %v5486, 1
  %v5559 = vrot.slane %v5487, 1
  %v5560 = vrot.slane %v5488, 1
  %v5561 = vrot.slane %v5489, 1
  %v5562 = vrot.slane %v5490, 1
  %v5563 = vrot.slane %v5491, 1
  %v5564 = vrot.slane %v5492, 1
  %v5565 = vrot.slane %v5493, 1
  %v5566 = vrot.slane %v5494, 1
  %v5567 = vsel %vm617, %v5555, %v5561
  %v5568 = vsel %vm617, %v5556, %v5562
  %v5569 = vsel %vm617, %v5557, %v5563
  %v5570 = vsel %vm617, %v5558, %v5564
  %v5571 = vsel %vm617, %v5559, %v5565
  %v5572 = vsel %vm617, %v5560, %v5566
  %v5573 = vsel %vm617, %v5561, %v5555
  %v5574 = vsel %vm617, %v5562, %v5556
  %v5575 = vsel %vm617, %v5563, %v5557
  %v5576 = vsel %vm617, %v5564, %v5558
  %v5577 = vsel %vm617, %v5565, %v5559
  %v5578 = vsel %vm617, %v5566, %v5560
  %v5579 = vmul.f32 %v5567, %v825
  %v5580 = vmul.f32 %v5568, %v829
  %v5581 = vmul.f32 %v5569, %v833
  %v5582 = vmul.f32 %v5570, %v837
  %v5583 = vmul.f32 %v5571, %v841
  %v5584 = vmul.f32 %v5572, %v845
  %v5585 = vmul.f32 %v5573, %v825
  %v5586 = vmul.f32 %v5574, %v829
  %v5587 = vmul.f32 %v5575, %v833
  %v5588 = vmul.f32 %v5576, %v837
  %v5589 = vmul.f32 %v5577, %v841
  %v5590 = vmul.f32 %v5578, %v845
  %v5591 = vadd.f32 %v5543, %v5579
  %v5592 = vadd.f32 %v5544, %v5580
  %v5593 = vadd.f32 %v5545, %v5581
  %v5594 = vadd.f32 %v5546, %v5582
  %v5595 = vadd.f32 %v5547, %v5583
  %v5596 = vadd.f32 %v5548, %v5584
  %v5597 = vadd.f32 %v5549, %v5585
  %v5598 = vadd.f32 %v5550, %v5586
  %v5599 = vadd.f32 %v5551, %v5587
  %v5600 = vadd.f32 %v5552, %v5588
  %v5601 = vadd.f32 %v5553, %v5589
  %v5602 = vadd.f32 %v5554, %v5590
  %v5603 = vadd.f32 %v5471, %v5591
  %v5604 = vadd.f32 %v5472, %v5592
  %v5605 = vadd.f32 %v5473, %v5593
  %v5606 = vadd.f32 %v5474, %v5594
  %v5607 = vadd.f32 %v5475, %v5595
  %v5608 = vadd.f32 %v5476, %v5596
  %v5609 = vadd.f32 %v5477, %v5597
  %v5610 = vadd.f32 %v5478, %v5598
  %v5611 = vadd.f32 %v5479, %v5599
  %v5612 = vadd.f32 %v5480, %v5600
  %v5613 = vadd.f32 %v5481, %v5601
  %v5614 = vadd.f32 %v5482, %v5602
  %s5615 = scalar_lea.vmem [#allocation2], 1056
  %v5616 = vld [vmem:[%s5615] sm:$0xff]
  %v5617 = vld [vmem:[%s5615 + $0x8] sm:$0xff]
  %v5618 = vld [vmem:[%s5615 + $0x10] sm:$0xff]
  %v5619 = vld [vmem:[%s5615 + $0x18] sm:$0xff]
  %v5620 = vld [vmem:[%s5615 + $0x20] sm:$0xff]
  %v5621 = vld [vmem:[%s5615 + $0x28] sm:$0xff]
  %v5622 = vld [vmem:[%s5615 + $0x30] sm:$0xff]
  %v5623 = vld [vmem:[%s5615 + $0x38] sm:$0xff]
  %v5624 = vld [vmem:[%s5615 + $0x40] sm:$0xff]
  %v5625 = vld [vmem:[%s5615 + $0x48] sm:$0xff]
  %v5626 = vld [vmem:[%s5615 + $0x50] sm:$0xff]
  %v5627 = vld [vmem:[%s5615 + $0x58] sm:$0xff]
  %v5628 = vrot.slane %v5616, 7
  %v5629 = vrot.slane %v5617, 7
  %v5630 = vrot.slane %v5618, 7
  %v5631 = vrot.slane %v5619, 7
  %v5632 = vrot.slane %v5620, 7
  %v5633 = vrot.slane %v5621, 7
  %v5634 = vrot.slane %v5622, 7
  %v5635 = vrot.slane %v5623, 7
  %v5636 = vrot.slane %v5624, 7
  %v5637 = vrot.slane %v5625, 7
  %v5638 = vrot.slane %v5626, 7
  %v5639 = vrot.slane %v5627, 7
  %v5640 = vsel %vm508, %v5628, %v5634
  %v5641 = vsel %vm508, %v5629, %v5635
  %v5642 = vsel %vm508, %v5630, %v5636
  %v5643 = vsel %vm508, %v5631, %v5637
  %v5644 = vsel %vm508, %v5632, %v5638
  %v5645 = vsel %vm508, %v5633, %v5639
  %v5646 = vsel %vm508, %v5634, %v5628
  %v5647 = vsel %vm508, %v5635, %v5629
  %v5648 = vsel %vm508, %v5636, %v5630
  %v5649 = vsel %vm508, %v5637, %v5631
  %v5650 = vsel %vm508, %v5638, %v5632
  %v5651 = vsel %vm508, %v5639, %v5633
  %v5652 = vmul.f32 %v5646, %v922
  %v5653 = vmul.f32 %v5647, %v926
  %v5654 = vmul.f32 %v5648, %v930
  %v5655 = vmul.f32 %v5649, %v934
  %v5656 = vmul.f32 %v5650, %v938
  %v5657 = vmul.f32 %v5651, %v942
  %v5658 = vmul.f32 %v5640, %v922
  %v5659 = vmul.f32 %v5641, %v926
  %v5660 = vmul.f32 %v5642, %v930
  %v5661 = vmul.f32 %v5643, %v934
  %v5662 = vmul.f32 %v5644, %v938
  %v5663 = vmul.f32 %v5645, %v942
  %v5664 = vmul.f32 %v5616, %v958
  %v5665 = vmul.f32 %v5617, %v962
  %v5666 = vmul.f32 %v5618, %v966
  %v5667 = vmul.f32 %v5619, %v970
  %v5668 = vmul.f32 %v5620, %v974
  %v5669 = vmul.f32 %v5621, %v978
  %v5670 = vmul.f32 %v5622, %v958
  %v5671 = vmul.f32 %v5623, %v962
  %v5672 = vmul.f32 %v5624, %v966
  %v5673 = vmul.f32 %v5625, %v970
  %v5674 = vmul.f32 %v5626, %v974
  %v5675 = vmul.f32 %v5627, %v978
  %v5676 = vadd.f32 %v5652, %v5664
  %v5677 = vadd.f32 %v5653, %v5665
  %v5678 = vadd.f32 %v5654, %v5666
  %v5679 = vadd.f32 %v5655, %v5667
  %v5680 = vadd.f32 %v5656, %v5668
  %v5681 = vadd.f32 %v5657, %v5669
  %v5682 = vadd.f32 %v5658, %v5670
  %v5683 = vadd.f32 %v5659, %v5671
  %v5684 = vadd.f32 %v5660, %v5672
  %v5685 = vadd.f32 %v5661, %v5673
  %v5686 = vadd.f32 %v5662, %v5674
  %v5687 = vadd.f32 %v5663, %v5675
  %v5688 = vrot.slane %v5616, 1
  %v5689 = vrot.slane %v5617, 1
  %v5690 = vrot.slane %v5618, 1
  %v5691 = vrot.slane %v5619, 1
  %v5692 = vrot.slane %v5620, 1
  %v5693 = vrot.slane %v5621, 1
  %v5694 = vrot.slane %v5622, 1
  %v5695 = vrot.slane %v5623, 1
  %v5696 = vrot.slane %v5624, 1
  %v5697 = vrot.slane %v5625, 1
  %v5698 = vrot.slane %v5626, 1
  %v5699 = vrot.slane %v5627, 1
  %v5700 = vsel %vm617, %v5688, %v5694
  %v5701 = vsel %vm617, %v5689, %v5695
  %v5702 = vsel %vm617, %v5690, %v5696
  %v5703 = vsel %vm617, %v5691, %v5697
  %v5704 = vsel %vm617, %v5692, %v5698
  %v5705 = vsel %vm617, %v5693, %v5699
  %v5706 = vsel %vm617, %v5694, %v5688
  %v5707 = vsel %vm617, %v5695, %v5689
  %v5708 = vsel %vm617, %v5696, %v5690
  %v5709 = vsel %vm617, %v5697, %v5691
  %v5710 = vsel %vm617, %v5698, %v5692
  %v5711 = vsel %vm617, %v5699, %v5693
  %v5712 = vmul.f32 %v5700, %v1030
  %v5713 = vmul.f32 %v5701, %v1034
  %v5714 = vmul.f32 %v5702, %v1038
  %v5715 = vmul.f32 %v5703, %v1042
  %v5716 = vmul.f32 %v5704, %v1046
  %v5717 = vmul.f32 %v5705, %v1050
  %v5718 = vmul.f32 %v5706, %v1030
  %v5719 = vmul.f32 %v5707, %v1034
  %v5720 = vmul.f32 %v5708, %v1038
  %v5721 = vmul.f32 %v5709, %v1042
  %v5722 = vmul.f32 %v5710, %v1046
  %v5723 = vmul.f32 %v5711, %v1050
  %v5724 = vadd.f32 %v5676, %v5712
  %v5725 = vadd.f32 %v5677, %v5713
  %v5726 = vadd.f32 %v5678, %v5714
  %v5727 = vadd.f32 %v5679, %v5715
  %v5728 = vadd.f32 %v5680, %v5716
  %v5729 = vadd.f32 %v5681, %v5717
  %v5730 = vadd.f32 %v5682, %v5718
  %v5731 = vadd.f32 %v5683, %v5719
  %v5732 = vadd.f32 %v5684, %v5720
  %v5733 = vadd.f32 %v5685, %v5721
  %v5734 = vadd.f32 %v5686, %v5722
  %v5735 = vadd.f32 %v5687, %v5723
  %v5736 = vadd.f32 %v5603, %v5724
  %v5737 = vadd.f32 %v5604, %v5725
  %v5738 = vadd.f32 %v5605, %v5726
  %v5739 = vadd.f32 %v5606, %v5727
  %v5740 = vadd.f32 %v5607, %v5728
  %v5741 = vadd.f32 %v5608, %v5729
  %v5742 = vadd.f32 %v5609, %v5730
  %v5743 = vadd.f32 %v5610, %v5731
  %v5744 = vadd.f32 %v5611, %v5732
  %v5745 = vadd.f32 %v5612, %v5733
  %v5746 = vadd.f32 %v5613, %v5734
  %v5747 = vadd.f32 %v5614, %v5735
  %s5748 = scalar_lea.vmem [#allocation3], 864
  %5749 = vst [vmem:[%s5748] sm:$0xff] %v5736
  %5750 = vst [vmem:[%s5748 + $0x8] sm:$0xff] %v5737
  %5751 = vst [vmem:[%s5748 + $0x10] sm:$0xff] %v5738
  %5752 = vst [vmem:[%s5748 + $0x18] sm:$0xff] %v5739
  %5753 = vst [vmem:[%s5748 + $0x20] sm:$0xff] %v5740
  %5754 = vst [vmem:[%s5748 + $0x28] sm:$0xff] %v5741
  %5755 = vst [vmem:[%s5748 + $0x30] sm:$0xff] %v5742
  %5756 = vst [vmem:[%s5748 + $0x38] sm:$0xff] %v5743
  %5757 = vst [vmem:[%s5748 + $0x40] sm:$0xff] %v5744
  %5758 = vst [vmem:[%s5748 + $0x48] sm:$0xff] %v5745
  %5759 = vst [vmem:[%s5748 + $0x50] sm:$0xff] %v5746
  %5760 = vst [vmem:[%s5748 + $0x58] sm:$0xff] %v5747
  %v5761 = vmul.f32 %v5736, %v482
  %v5762 = vmul.f32 %v5737, %v482
  %v5763 = vmul.f32 %v5738, %v482
  %v5764 = vmul.f32 %v5739, %v482
  %v5765 = vmul.f32 %v5740, %v482
  %v5766 = vmul.f32 %v5741, %v482
  %v5767 = vmul.f32 %v5742, %v483
  %v5768 = vmul.f32 %v5743, %v483
  %v5769 = vmul.f32 %v5744, %v483
  %v5770 = vmul.f32 %v5745, %v483
  %v5771 = vmul.f32 %v5746, %v483
  %v5772 = vmul.f32 %v5747, %v483
  %v5773 = vadd.f32 %v5761, %v5767
  %v5774 = vrot.slane %v5773, 4
  %v5775 = vadd.f32 %v5773, %v5774
  %v5776 = vrot.slane %v5775, 2
  %v5777 = vadd.f32 %v5775, %v5776
  %v5778 = vrot.slane %v5777, 1
  %v5779 = vadd.f32 %v5777, %v5778
  %v5780 = vadd.f32 %v5762, %v5768
  %v5781 = vrot.slane %v5780, 4
  %v5782 = vadd.f32 %v5780, %v5781
  %v5783 = vrot.slane %v5782, 2
  %v5784 = vadd.f32 %v5782, %v5783
  %v5785 = vrot.slane %v5784, 1
  %v5786 = vadd.f32 %v5784, %v5785
  %v5787 = vadd.f32 %v5763, %v5769
  %v5788 = vrot.slane %v5787, 4
  %v5789 = vadd.f32 %v5787, %v5788
  %v5790 = vrot.slane %v5789, 2
  %v5791 = vadd.f32 %v5789, %v5790
  %v5792 = vrot.slane %v5791, 1
  %v5793 = vadd.f32 %v5791, %v5792
  %v5794 = vadd.f32 %v5764, %v5770
  %v5795 = vrot.slane %v5794, 4
  %v5796 = vadd.f32 %v5794, %v5795
  %v5797 = vrot.slane %v5796, 2
  %v5798 = vadd.f32 %v5796, %v5797
  %v5799 = vrot.slane %v5798, 1
  %v5800 = vadd.f32 %v5798, %v5799
  %v5801 = vadd.f32 %v5765, %v5771
  %v5802 = vrot.slane %v5801, 4
  %v5803 = vadd.f32 %v5801, %v5802
  %v5804 = vrot.slane %v5803, 2
  %v5805 = vadd.f32 %v5803, %v5804
  %v5806 = vrot.slane %v5805, 1
  %v5807 = vadd.f32 %v5805, %v5806
  %v5808 = vadd.f32 %v5766, %v5772
  %v5809 = vrot.slane %v5808, 4
  %v5810 = vadd.f32 %v5808, %v5809
  %v5811 = vrot.slane %v5810, 2
  %v5812 = vadd.f32 %v5810, %v5811
  %v5813 = vrot.slane %v5812, 1
  %v5814 = vadd.f32 %v5812, %v5813
  %v5815 = vadd.f32 %v5297, %v5779
  %v5816 = vadd.f32 %v5298, %v5786
  %v5817 = vadd.f32 %v5299, %v5793
  %v5818 = vadd.f32 %v5300, %v5800
  %v5819 = vadd.f32 %v5301, %v5807
  %v5820 = vadd.f32 %v5302, %v5814
  %v5821 = vmul.f32 %v5761, %v5736
  %v5822 = vmul.f32 %v5762, %v5737
  %v5823 = vmul.f32 %v5763, %v5738
  %v5824 = vmul.f32 %v5764, %v5739
  %v5825 = vmul.f32 %v5765, %v5740
  %v5826 = vmul.f32 %v5766, %v5741
  %v5827 = vmul.f32 %v5767, %v5742
  %v5828 = vmul.f32 %v5768, %v5743
  %v5829 = vmul.f32 %v5769, %v5744
  %v5830 = vmul.f32 %v5770, %v5745
  %v5831 = vmul.f32 %v5771, %v5746
  %v5832 = vmul.f32 %v5772, %v5747
  %v5833 = vadd.f32 %v5821, %v5827
  %v5834 = vrot.slane %v5833, 4
  %v5835 = vadd.f32 %v5833, %v5834
  %v5836 = vrot.slane %v5835, 2
  %v5837 = vadd.f32 %v5835, %v5836
  %v5838 = vrot.slane %v5837, 1
  %v5839 = vadd.f32 %v5837, %v5838
  %v5840 = vadd.f32 %v5822, %v5828
  %v5841 = vrot.slane %v5840, 4
  %v5842 = vadd.f32 %v5840, %v5841
  %v5843 = vrot.slane %v5842, 2
  %v5844 = vadd.f32 %v5842, %v5843
  %v5845 = vrot.slane %v5844, 1
  %v5846 = vadd.f32 %v5844, %v5845
  %v5847 = vadd.f32 %v5823, %v5829
  %v5848 = vrot.slane %v5847, 4
  %v5849 = vadd.f32 %v5847, %v5848
  %v5850 = vrot.slane %v5849, 2
  %v5851 = vadd.f32 %v5849, %v5850
  %v5852 = vrot.slane %v5851, 1
  %v5853 = vadd.f32 %v5851, %v5852
  %v5854 = vadd.f32 %v5824, %v5830
  %v5855 = vrot.slane %v5854, 4
  %v5856 = vadd.f32 %v5854, %v5855
  %v5857 = vrot.slane %v5856, 2
  %v5858 = vadd.f32 %v5856, %v5857
  %v5859 = vrot.slane %v5858, 1
  %v5860 = vadd.f32 %v5858, %v5859
  %v5861 = vadd.f32 %v5825, %v5831
  %v5862 = vrot.slane %v5861, 4
  %v5863 = vadd.f32 %v5861, %v5862
  %v5864 = vrot.slane %v5863, 2
  %v5865 = vadd.f32 %v5863, %v5864
  %v5866 = vrot.slane %v5865, 1
  %v5867 = vadd.f32 %v5865, %v5866
  %v5868 = vadd.f32 %v5826, %v5832
  %v5869 = vrot.slane %v5868, 4
  %v5870 = vadd.f32 %v5868, %v5869
  %v5871 = vrot.slane %v5870, 2
  %v5872 = vadd.f32 %v5870, %v5871
  %v5873 = vrot.slane %v5872, 1
  %v5874 = vadd.f32 %v5872, %v5873
  %v5875 = vadd.f32 %v5357, %v5839
  %v5876 = vadd.f32 %v5358, %v5846
  %v5877 = vadd.f32 %v5359, %v5853
  %v5878 = vadd.f32 %v5360, %v5860
  %v5879 = vadd.f32 %v5361, %v5867
  %v5880 = vadd.f32 %v5362, %v5874
  %v5881 = vld [vmem:[%s5097] sm:$0xff]
  %v5882 = vld [vmem:[%s5097 + $0x8] sm:$0xff]
  %v5883 = vld [vmem:[%s5097 + $0x10] sm:$0xff]
  %v5884 = vld [vmem:[%s5097 + $0x18] sm:$0xff]
  %v5885 = vld [vmem:[%s5097 + $0x20] sm:$0xff]
  %v5886 = vld [vmem:[%s5097 + $0x28] sm:$0xff]
  %v5887 = vld [vmem:[%s5097 + $0x30] sm:$0xff]
  %v5888 = vld [vmem:[%s5097 + $0x38] sm:$0xff]
  %v5889 = vld [vmem:[%s5097 + $0x40] sm:$0xff]
  %v5890 = vld [vmem:[%s5097 + $0x48] sm:$0xff]
  %v5891 = vld [vmem:[%s5097 + $0x50] sm:$0xff]
  %v5892 = vld [vmem:[%s5097 + $0x58] sm:$0xff]
  %v5893 = vrot.slane %v5881, 7
  %v5894 = vrot.slane %v5882, 7
  %v5895 = vrot.slane %v5883, 7
  %v5896 = vrot.slane %v5884, 7
  %v5897 = vrot.slane %v5885, 7
  %v5898 = vrot.slane %v5886, 7
  %v5899 = vrot.slane %v5887, 7
  %v5900 = vrot.slane %v5888, 7
  %v5901 = vrot.slane %v5889, 7
  %v5902 = vrot.slane %v5890, 7
  %v5903 = vrot.slane %v5891, 7
  %v5904 = vrot.slane %v5892, 7
  %v5905 = vsel %vm508, %v5893, %v5899
  %v5906 = vsel %vm508, %v5894, %v5900
  %v5907 = vsel %vm508, %v5895, %v5901
  %v5908 = vsel %vm508, %v5896, %v5902
  %v5909 = vsel %vm508, %v5897, %v5903
  %v5910 = vsel %vm508, %v5898, %v5904
  %v5911 = vsel %vm508, %v5899, %v5893
  %v5912 = vsel %vm508, %v5900, %v5894
  %v5913 = vsel %vm508, %v5901, %v5895
  %v5914 = vsel %vm508, %v5902, %v5896
  %v5915 = vsel %vm508, %v5903, %v5897
  %v5916 = vsel %vm508, %v5904, %v5898
  %v5917 = vmul.f32 %v5911, %v524
  %v5918 = vmul.f32 %v5912, %v528
  %v5919 = vmul.f32 %v5913, %v532
  %v5920 = vmul.f32 %v5914, %v536
  %v5921 = vmul.f32 %v5915, %v540
  %v5922 = vmul.f32 %v5916, %v544
  %v5923 = vmul.f32 %v5905, %v524
  %v5924 = vmul.f32 %v5906, %v528
  %v5925 = vmul.f32 %v5907, %v532
  %v5926 = vmul.f32 %v5908, %v536
  %v5927 = vmul.f32 %v5909, %v540
  %v5928 = vmul.f32 %v5910, %v544
  %v5929 = vmul.f32 %v5881, %v560
  %v5930 = vmul.f32 %v5882, %v564
  %v5931 = vmul.f32 %v5883, %v568
  %v5932 = vmul.f32 %v5884, %v572
  %v5933 = vmul.f32 %v5885, %v576
  %v5934 = vmul.f32 %v5886, %v580
  %v5935 = vmul.f32 %v5887, %v560
  %v5936 = vmul.f32 %v5888, %v564
  %v5937 = vmul.f32 %v5889, %v568
  %v5938 = vmul.f32 %v5890, %v572
  %v5939 = vmul.f32 %v5891, %v576
  %v5940 = vmul.f32 %v5892, %v580
  %v5941 = vadd.f32 %v5917, %v5929
  %v5942 = vadd.f32 %v5918, %v5930
  %v5943 = vadd.f32 %v5919, %v5931
  %v5944 = vadd.f32 %v5920, %v5932
  %v5945 = vadd.f32 %v5921, %v5933
  %v5946 = vadd.f32 %v5922, %v5934
  %v5947 = vadd.f32 %v5923, %v5935
  %v5948 = vadd.f32 %v5924, %v5936
  %v5949 = vadd.f32 %v5925, %v5937
  %v5950 = vadd.f32 %v5926, %v5938
  %v5951 = vadd.f32 %v5927, %v5939
  %v5952 = vadd.f32 %v5928, %v5940
  %v5953 = vrot.slane %v5881, 1
  %v5954 = vrot.slane %v5882, 1
  %v5955 = vrot.slane %v5883, 1
  %v5956 = vrot.slane %v5884, 1
  %v5957 = vrot.slane %v5885, 1
  %v5958 = vrot.slane %v5886, 1
  %v5959 = vrot.slane %v5887, 1
  %v5960 = vrot.slane %v5888, 1
  %v5961 = vrot.slane %v5889, 1
  %v5962 = vrot.slane %v5890, 1
  %v5963 = vrot.slane %v5891, 1
  %v5964 = vrot.slane %v5892, 1
  %v5965 = vsel %vm617, %v5953, %v5959
  %v5966 = vsel %vm617, %v5954, %v5960
  %v5967 = vsel %vm617, %v5955, %v5961
  %v5968 = vsel %vm617, %v5956, %v5962
  %v5969 = vsel %vm617, %v5957, %v5963
  %v5970 = vsel %vm617, %v5958, %v5964
  %v5971 = vsel %vm617, %v5959, %v5953
  %v5972 = vsel %vm617, %v5960, %v5954
  %v5973 = vsel %vm617, %v5961, %v5955
  %v5974 = vsel %vm617, %v5962, %v5956
  %v5975 = vsel %vm617, %v5963, %v5957
  %v5976 = vsel %vm617, %v5964, %v5958
  %v5977 = vmul.f32 %v5965, %v633
  %v5978 = vmul.f32 %v5966, %v637
  %v5979 = vmul.f32 %v5967, %v641
  %v5980 = vmul.f32 %v5968, %v645
  %v5981 = vmul.f32 %v5969, %v649
  %v5982 = vmul.f32 %v5970, %v653
  %v5983 = vmul.f32 %v5971, %v633
  %v5984 = vmul.f32 %v5972, %v637
  %v5985 = vmul.f32 %v5973, %v641
  %v5986 = vmul.f32 %v5974, %v645
  %v5987 = vmul.f32 %v5975, %v649
  %v5988 = vmul.f32 %v5976, %v653
  %v5989 = vadd.f32 %v5941, %v5977
  %v5990 = vadd.f32 %v5942, %v5978
  %v5991 = vadd.f32 %v5943, %v5979
  %v5992 = vadd.f32 %v5944, %v5980
  %v5993 = vadd.f32 %v5945, %v5981
  %v5994 = vadd.f32 %v5946, %v5982
  %v5995 = vadd.f32 %v5947, %v5983
  %v5996 = vadd.f32 %v5948, %v5984
  %v5997 = vadd.f32 %v5949, %v5985
  %v5998 = vadd.f32 %v5950, %v5986
  %v5999 = vadd.f32 %v5951, %v5987
  %v6000 = vadd.f32 %v5952, %v5988
  %v6001 = vld [vmem:[%s5615] sm:$0xff]
  %v6002 = vld [vmem:[%s5615 + $0x8] sm:$0xff]
  %v6003 = vld [vmem:[%s5615 + $0x10] sm:$0xff]
  %v6004 = vld [vmem:[%s5615 + $0x18] sm:$0xff]
  %v6005 = vld [vmem:[%s5615 + $0x20] sm:$0xff]
  %v6006 = vld [vmem:[%s5615 + $0x28] sm:$0xff]
  %v6007 = vld [vmem:[%s5615 + $0x30] sm:$0xff]
  %v6008 = vld [vmem:[%s5615 + $0x38] sm:$0xff]
  %v6009 = vld [vmem:[%s5615 + $0x40] sm:$0xff]
  %v6010 = vld [vmem:[%s5615 + $0x48] sm:$0xff]
  %v6011 = vld [vmem:[%s5615 + $0x50] sm:$0xff]
  %v6012 = vld [vmem:[%s5615 + $0x58] sm:$0xff]
  %v6013 = vrot.slane %v6001, 7
  %v6014 = vrot.slane %v6002, 7
  %v6015 = vrot.slane %v6003, 7
  %v6016 = vrot.slane %v6004, 7
  %v6017 = vrot.slane %v6005, 7
  %v6018 = vrot.slane %v6006, 7
  %v6019 = vrot.slane %v6007, 7
  %v6020 = vrot.slane %v6008, 7
  %v6021 = vrot.slane %v6009, 7
  %v6022 = vrot.slane %v6010, 7
  %v6023 = vrot.slane %v6011, 7
  %v6024 = vrot.slane %v6012, 7
  %v6025 = vsel %vm508, %v6013, %v6019
  %v6026 = vsel %vm508, %v6014, %v6020
  %v6027 = vsel %vm508, %v6015, %v6021
  %v6028 = vsel %vm508, %v6016, %v6022
  %v6029 = vsel %vm508, %v6017, %v6023
  %v6030 = vsel %vm508, %v6018, %v6024
  %v6031 = vsel %vm508, %v6019, %v6013
  %v6032 = vsel %vm508, %v6020, %v6014
  %v6033 = vsel %vm508, %v6021, %v6015
  %v6034 = vsel %vm508, %v6022, %v6016
  %v6035 = vsel %vm508, %v6023, %v6017
  %v6036 = vsel %vm508, %v6024, %v6018
  %v6037 = vmul.f32 %v6031, %v717
  %v6038 = vmul.f32 %v6032, %v721
  %v6039 = vmul.f32 %v6033, %v725
  %v6040 = vmul.f32 %v6034, %v729
  %v6041 = vmul.f32 %v6035, %v733
  %v6042 = vmul.f32 %v6036, %v737
  %v6043 = vmul.f32 %v6025, %v717
  %v6044 = vmul.f32 %v6026, %v721
  %v6045 = vmul.f32 %v6027, %v725
  %v6046 = vmul.f32 %v6028, %v729
  %v6047 = vmul.f32 %v6029, %v733
  %v6048 = vmul.f32 %v6030, %v737
  %v6049 = vmul.f32 %v6001, %v753
  %v6050 = vmul.f32 %v6002, %v757
  %v6051 = vmul.f32 %v6003, %v761
  %v6052 = vmul.f32 %v6004, %v765
  %v6053 = vmul.f32 %v6005, %v769
  %v6054 = vmul.f32 %v6006, %v773
  %v6055 = vmul.f32 %v6007, %v753
  %v6056 = vmul.f32 %v6008, %v757
  %v6057 = vmul.f32 %v6009, %v761
  %v6058 = vmul.f32 %v6010, %v765
  %v6059 = vmul.f32 %v6011, %v769
  %v6060 = vmul.f32 %v6012, %v773
  %v6061 = vadd.f32 %v6037, %v6049
  %v6062 = vadd.f32 %v6038, %v6050
  %v6063 = vadd.f32 %v6039, %v6051
  %v6064 = vadd.f32 %v6040, %v6052
  %v6065 = vadd.f32 %v6041, %v6053
  %v6066 = vadd.f32 %v6042, %v6054
  %v6067 = vadd.f32 %v6043, %v6055
  %v6068 = vadd.f32 %v6044, %v6056
  %v6069 = vadd.f32 %v6045, %v6057
  %v6070 = vadd.f32 %v6046, %v6058
  %v6071 = vadd.f32 %v6047, %v6059
  %v6072 = vadd.f32 %v6048, %v6060
  %v6073 = vrot.slane %v6001, 1
  %v6074 = vrot.slane %v6002, 1
  %v6075 = vrot.slane %v6003, 1
  %v6076 = vrot.slane %v6004, 1
  %v6077 = vrot.slane %v6005, 1
  %v6078 = vrot.slane %v6006, 1
  %v6079 = vrot.slane %v6007, 1
  %v6080 = vrot.slane %v6008, 1
  %v6081 = vrot.slane %v6009, 1
  %v6082 = vrot.slane %v6010, 1
  %v6083 = vrot.slane %v6011, 1
  %v6084 = vrot.slane %v6012, 1
  %v6085 = vsel %vm617, %v6073, %v6079
  %v6086 = vsel %vm617, %v6074, %v6080
  %v6087 = vsel %vm617, %v6075, %v6081
  %v6088 = vsel %vm617, %v6076, %v6082
  %v6089 = vsel %vm617, %v6077, %v6083
  %v6090 = vsel %vm617, %v6078, %v6084
  %v6091 = vsel %vm617, %v6079, %v6073
  %v6092 = vsel %vm617, %v6080, %v6074
  %v6093 = vsel %vm617, %v6081, %v6075
  %v6094 = vsel %vm617, %v6082, %v6076
  %v6095 = vsel %vm617, %v6083, %v6077
  %v6096 = vsel %vm617, %v6084, %v6078
  %v6097 = vmul.f32 %v6085, %v825
  %v6098 = vmul.f32 %v6086, %v829
  %v6099 = vmul.f32 %v6087, %v833
  %v6100 = vmul.f32 %v6088, %v837
  %v6101 = vmul.f32 %v6089, %v841
  %v6102 = vmul.f32 %v6090, %v845
  %v6103 = vmul.f32 %v6091, %v825
  %v6104 = vmul.f32 %v6092, %v829
  %v6105 = vmul.f32 %v6093, %v833
  %v6106 = vmul.f32 %v6094, %v837
  %v6107 = vmul.f32 %v6095, %v841
  %v6108 = vmul.f32 %v6096, %v845
  %v6109 = vadd.f32 %v6061, %v6097
  %v6110 = vadd.f32 %v6062, %v6098
  %v6111 = vadd.f32 %v6063, %v6099
  %v6112 = vadd.f32 %v6064, %v6100
  %v6113 = vadd.f32 %v6065, %v6101
  %v6114 = vadd.f32 %v6066, %v6102
  %v6115 = vadd.f32 %v6067, %v6103
  %v6116 = vadd.f32 %v6068, %v6104
  %v6117 = vadd.f32 %v6069, %v6105
  %v6118 = vadd.f32 %v6070, %v6106
  %v6119 = vadd.f32 %v6071, %v6107
  %v6120 = vadd.f32 %v6072, %v6108
  %v6121 = vadd.f32 %v5989, %v6109
  %v6122 = vadd.f32 %v5990, %v6110
  %v6123 = vadd.f32 %v5991, %v6111
  %v6124 = vadd.f32 %v5992, %v6112
  %v6125 = vadd.f32 %v5993, %v6113
  %v6126 = vadd.f32 %v5994, %v6114
  %v6127 = vadd.f32 %v5995, %v6115
  %v6128 = vadd.f32 %v5996, %v6116
  %v6129 = vadd.f32 %v5997, %v6117
  %v6130 = vadd.f32 %v5998, %v6118
  %v6131 = vadd.f32 %v5999, %v6119
  %v6132 = vadd.f32 %v6000, %v6120
  %s6133 = scalar_lea.vmem [#allocation2], 1152
  %v6134 = vld [vmem:[%s6133] sm:$0xff]
  %v6135 = vld [vmem:[%s6133 + $0x8] sm:$0xff]
  %v6136 = vld [vmem:[%s6133 + $0x10] sm:$0xff]
  %v6137 = vld [vmem:[%s6133 + $0x18] sm:$0xff]
  %v6138 = vld [vmem:[%s6133 + $0x20] sm:$0xff]
  %v6139 = vld [vmem:[%s6133 + $0x28] sm:$0xff]
  %v6140 = vld [vmem:[%s6133 + $0x30] sm:$0xff]
  %v6141 = vld [vmem:[%s6133 + $0x38] sm:$0xff]
  %v6142 = vld [vmem:[%s6133 + $0x40] sm:$0xff]
  %v6143 = vld [vmem:[%s6133 + $0x48] sm:$0xff]
  %v6144 = vld [vmem:[%s6133 + $0x50] sm:$0xff]
  %v6145 = vld [vmem:[%s6133 + $0x58] sm:$0xff]
  %v6146 = vrot.slane %v6134, 7
  %v6147 = vrot.slane %v6135, 7
  %v6148 = vrot.slane %v6136, 7
  %v6149 = vrot.slane %v6137, 7
  %v6150 = vrot.slane %v6138, 7
  %v6151 = vrot.slane %v6139, 7
  %v6152 = vrot.slane %v6140, 7
  %v6153 = vrot.slane %v6141, 7
  %v6154 = vrot.slane %v6142, 7
  %v6155 = vrot.slane %v6143, 7
  %v6156 = vrot.slane %v6144, 7
  %v6157 = vrot.slane %v6145, 7
  %v6158 = vsel %vm508, %v6146, %v6152
  %v6159 = vsel %vm508, %v6147, %v6153
  %v6160 = vsel %vm508, %v6148, %v6154
  %v6161 = vsel %vm508, %v6149, %v6155
  %v6162 = vsel %vm508, %v6150, %v6156
  %v6163 = vsel %vm508, %v6151, %v6157
  %v6164 = vsel %vm508, %v6152, %v6146
  %v6165 = vsel %vm508, %v6153, %v6147
  %v6166 = vsel %vm508, %v6154, %v6148
  %v6167 = vsel %vm508, %v6155, %v6149
  %v6168 = vsel %vm508, %v6156, %v6150
  %v6169 = vsel %vm508, %v6157, %v6151
  %v6170 = vmul.f32 %v6164, %v922
  %v6171 = vmul.f32 %v6165, %v926
  %v6172 = vmul.f32 %v6166, %v930
  %v6173 = vmul.f32 %v6167, %v934
  %v6174 = vmul.f32 %v6168, %v938
  %v6175 = vmul.f32 %v6169, %v942
  %v6176 = vmul.f32 %v6158, %v922
  %v6177 = vmul.f32 %v6159, %v926
  %v6178 = vmul.f32 %v6160, %v930
  %v6179 = vmul.f32 %v6161, %v934
  %v6180 = vmul.f32 %v6162, %v938
  %v6181 = vmul.f32 %v6163, %v942
  %v6182 = vmul.f32 %v6134, %v958
  %v6183 = vmul.f32 %v6135, %v962
  %v6184 = vmul.f32 %v6136, %v966
  %v6185 = vmul.f32 %v6137, %v970
  %v6186 = vmul.f32 %v6138, %v974
  %v6187 = vmul.f32 %v6139, %v978
  %v6188 = vmul.f32 %v6140, %v958
  %v6189 = vmul.f32 %v6141, %v962
  %v6190 = vmul.f32 %v6142, %v966
  %v6191 = vmul.f32 %v6143, %v970
  %v6192 = vmul.f32 %v6144, %v974
  %v6193 = vmul.f32 %v6145, %v978
  %v6194 = vadd.f32 %v6170, %v6182
  %v6195 = vadd.f32 %v6171, %v6183
  %v6196 = vadd.f32 %v6172, %v6184
  %v6197 = vadd.f32 %v6173, %v6185
  %v6198 = vadd.f32 %v6174, %v6186
  %v6199 = vadd.f32 %v6175, %v6187
  %v6200 = vadd.f32 %v6176, %v6188
  %v6201 = vadd.f32 %v6177, %v6189
  %v6202 = vadd.f32 %v6178, %v6190
  %v6203 = vadd.f32 %v6179, %v6191
  %v6204 = vadd.f32 %v6180, %v6192
  %v6205 = vadd.f32 %v6181, %v6193
  %v6206 = vrot.slane %v6134, 1
  %v6207 = vrot.slane %v6135, 1
  %v6208 = vrot.slane %v6136, 1
  %v6209 = vrot.slane %v6137, 1
  %v6210 = vrot.slane %v6138, 1
  %v6211 = vrot.slane %v6139, 1
  %v6212 = vrot.slane %v6140, 1
  %v6213 = vrot.slane %v6141, 1
  %v6214 = vrot.slane %v6142, 1
  %v6215 = vrot.slane %v6143, 1
  %v6216 = vrot.slane %v6144, 1
  %v6217 = vrot.slane %v6145, 1
  %v6218 = vsel %vm617, %v6206, %v6212
  %v6219 = vsel %vm617, %v6207, %v6213
  %v6220 = vsel %vm617, %v6208, %v6214
  %v6221 = vsel %vm617, %v6209, %v6215
  %v6222 = vsel %vm617, %v6210, %v6216
  %v6223 = vsel %vm617, %v6211, %v6217
  %v6224 = vsel %vm617, %v6212, %v6206
  %v6225 = vsel %vm617, %v6213, %v6207
  %v6226 = vsel %vm617, %v6214, %v6208
  %v6227 = vsel %vm617, %v6215, %v6209
  %v6228 = vsel %vm617, %v6216, %v6210
  %v6229 = vsel %vm617, %v6217, %v6211
  %v6230 = vmul.f32 %v6218, %v1030
  %v6231 = vmul.f32 %v6219, %v1034
  %v6232 = vmul.f32 %v6220, %v1038
  %v6233 = vmul.f32 %v6221, %v1042
  %v6234 = vmul.f32 %v6222, %v1046
  %v6235 = vmul.f32 %v6223, %v1050
  %v6236 = vmul.f32 %v6224, %v1030
  %v6237 = vmul.f32 %v6225, %v1034
  %v6238 = vmul.f32 %v6226, %v1038
  %v6239 = vmul.f32 %v6227, %v1042
  %v6240 = vmul.f32 %v6228, %v1046
  %v6241 = vmul.f32 %v6229, %v1050
  %v6242 = vadd.f32 %v6194, %v6230
  %v6243 = vadd.f32 %v6195, %v6231
  %v6244 = vadd.f32 %v6196, %v6232
  %v6245 = vadd.f32 %v6197, %v6233
  %v6246 = vadd.f32 %v6198, %v6234
  %v6247 = vadd.f32 %v6199, %v6235
  %v6248 = vadd.f32 %v6200, %v6236
  %v6249 = vadd.f32 %v6201, %v6237
  %v6250 = vadd.f32 %v6202, %v6238
  %v6251 = vadd.f32 %v6203, %v6239
  %v6252 = vadd.f32 %v6204, %v6240
  %v6253 = vadd.f32 %v6205, %v6241
  %v6254 = vadd.f32 %v6121, %v6242
  %v6255 = vadd.f32 %v6122, %v6243
  %v6256 = vadd.f32 %v6123, %v6244
  %v6257 = vadd.f32 %v6124, %v6245
  %v6258 = vadd.f32 %v6125, %v6246
  %v6259 = vadd.f32 %v6126, %v6247
  %v6260 = vadd.f32 %v6127, %v6248
  %v6261 = vadd.f32 %v6128, %v6249
  %v6262 = vadd.f32 %v6129, %v6250
  %v6263 = vadd.f32 %v6130, %v6251
  %v6264 = vadd.f32 %v6131, %v6252
  %v6265 = vadd.f32 %v6132, %v6253
  %s6266 = scalar_lea.vmem [#allocation3], 960
  %6267 = vst [vmem:[%s6266] sm:$0xff] %v6254
  %6268 = vst [vmem:[%s6266 + $0x8] sm:$0xff] %v6255
  %6269 = vst [vmem:[%s6266 + $0x10] sm:$0xff] %v6256
  %6270 = vst [vmem:[%s6266 + $0x18] sm:$0xff] %v6257
  %6271 = vst [vmem:[%s6266 + $0x20] sm:$0xff] %v6258
  %6272 = vst [vmem:[%s6266 + $0x28] sm:$0xff] %v6259
  %6273 = vst [vmem:[%s6266 + $0x30] sm:$0xff] %v6260
  %6274 = vst [vmem:[%s6266 + $0x38] sm:$0xff] %v6261
  %6275 = vst [vmem:[%s6266 + $0x40] sm:$0xff] %v6262
  %6276 = vst [vmem:[%s6266 + $0x48] sm:$0xff] %v6263
  %6277 = vst [vmem:[%s6266 + $0x50] sm:$0xff] %v6264
  %6278 = vst [vmem:[%s6266 + $0x58] sm:$0xff] %v6265
  %v6279 = vmul.f32 %v6254, %v482
  %v6280 = vmul.f32 %v6255, %v482
  %v6281 = vmul.f32 %v6256, %v482
  %v6282 = vmul.f32 %v6257, %v482
  %v6283 = vmul.f32 %v6258, %v482
  %v6284 = vmul.f32 %v6259, %v482
  %v6285 = vmul.f32 %v6260, %v483
  %v6286 = vmul.f32 %v6261, %v483
  %v6287 = vmul.f32 %v6262, %v483
  %v6288 = vmul.f32 %v6263, %v483
  %v6289 = vmul.f32 %v6264, %v483
  %v6290 = vmul.f32 %v6265, %v483
  %v6291 = vadd.f32 %v6279, %v6285
  %v6292 = vrot.slane %v6291, 4
  %v6293 = vadd.f32 %v6291, %v6292
  %v6294 = vrot.slane %v6293, 2
  %v6295 = vadd.f32 %v6293, %v6294
  %v6296 = vrot.slane %v6295, 1
  %v6297 = vadd.f32 %v6295, %v6296
  %v6298 = vadd.f32 %v6280, %v6286
  %v6299 = vrot.slane %v6298, 4
  %v6300 = vadd.f32 %v6298, %v6299
  %v6301 = vrot.slane %v6300, 2
  %v6302 = vadd.f32 %v6300, %v6301
  %v6303 = vrot.slane %v6302, 1
  %v6304 = vadd.f32 %v6302, %v6303
  %v6305 = vadd.f32 %v6281, %v6287
  %v6306 = vrot.slane %v6305, 4
  %v6307 = vadd.f32 %v6305, %v6306
  %v6308 = vrot.slane %v6307, 2
  %v6309 = vadd.f32 %v6307, %v6308
  %v6310 = vrot.slane %v6309, 1
  %v6311 = vadd.f32 %v6309, %v6310
  %v6312 = vadd.f32 %v6282, %v6288
  %v6313 = vrot.slane %v6312, 4
  %v6314 = vadd.f32 %v6312, %v6313
  %v6315 = vrot.slane %v6314, 2
  %v6316 = vadd.f32 %v6314, %v6315
  %v6317 = vrot.slane %v6316, 1
  %v6318 = vadd.f32 %v6316, %v6317
  %v6319 = vadd.f32 %v6283, %v6289
  %v6320 = vrot.slane %v6319, 4
  %v6321 = vadd.f32 %v6319, %v6320
  %v6322 = vrot.slane %v6321, 2
  %v6323 = vadd.f32 %v6321, %v6322
  %v6324 = vrot.slane %v6323, 1
  %v6325 = vadd.f32 %v6323, %v6324
  %v6326 = vadd.f32 %v6284, %v6290
  %v6327 = vrot.slane %v6326, 4
  %v6328 = vadd.f32 %v6326, %v6327
  %v6329 = vrot.slane %v6328, 2
  %v6330 = vadd.f32 %v6328, %v6329
  %v6331 = vrot.slane %v6330, 1
  %v6332 = vadd.f32 %v6330, %v6331
  %v6333 = vadd.f32 %v5815, %v6297
  %v6334 = vadd.f32 %v5816, %v6304
  %v6335 = vadd.f32 %v5817, %v6311
  %v6336 = vadd.f32 %v5818, %v6318
  %v6337 = vadd.f32 %v5819, %v6325
  %v6338 = vadd.f32 %v5820, %v6332
  %v6339 = vmul.f32 %v6279, %v6254
  %v6340 = vmul.f32 %v6280, %v6255
  %v6341 = vmul.f32 %v6281, %v6256
  %v6342 = vmul.f32 %v6282, %v6257
  %v6343 = vmul.f32 %v6283, %v6258
  %v6344 = vmul.f32 %v6284, %v6259
  %v6345 = vmul.f32 %v6285, %v6260
  %v6346 = vmul.f32 %v6286, %v6261
  %v6347 = vmul.f32 %v6287, %v6262
  %v6348 = vmul.f32 %v6288, %v6263
  %v6349 = vmul.f32 %v6289, %v6264
  %v6350 = vmul.f32 %v6290, %v6265
  %v6351 = vadd.f32 %v6339, %v6345
  %v6352 = vrot.slane %v6351, 4
  %v6353 = vadd.f32 %v6351, %v6352
  %v6354 = vrot.slane %v6353, 2
  %v6355 = vadd.f32 %v6353, %v6354
  %v6356 = vrot.slane %v6355, 1
  %v6357 = vadd.f32 %v6355, %v6356
  %v6358 = vadd.f32 %v6340, %v6346
  %v6359 = vrot.slane %v6358, 4
  %v6360 = vadd.f32 %v6358, %v6359
  %v6361 = vrot.slane %v6360, 2
  %v6362 = vadd.f32 %v6360, %v6361
  %v6363 = vrot.slane %v6362, 1
  %v6364 = vadd.f32 %v6362, %v6363
  %v6365 = vadd.f32 %v6341, %v6347
  %v6366 = vrot.slane %v6365, 4
  %v6367 = vadd.f32 %v6365, %v6366
  %v6368 = vrot.slane %v6367, 2
  %v6369 = vadd.f32 %v6367, %v6368
  %v6370 = vrot.slane %v6369, 1
  %v6371 = vadd.f32 %v6369, %v6370
  %v6372 = vadd.f32 %v6342, %v6348
  %v6373 = vrot.slane %v6372, 4
  %v6374 = vadd.f32 %v6372, %v6373
  %v6375 = vrot.slane %v6374, 2
  %v6376 = vadd.f32 %v6374, %v6375
  %v6377 = vrot.slane %v6376, 1
  %v6378 = vadd.f32 %v6376, %v6377
  %v6379 = vadd.f32 %v6343, %v6349
  %v6380 = vrot.slane %v6379, 4
  %v6381 = vadd.f32 %v6379, %v6380
  %v6382 = vrot.slane %v6381, 2
  %v6383 = vadd.f32 %v6381, %v6382
  %v6384 = vrot.slane %v6383, 1
  %v6385 = vadd.f32 %v6383, %v6384
  %v6386 = vadd.f32 %v6344, %v6350
  %v6387 = vrot.slane %v6386, 4
  %v6388 = vadd.f32 %v6386, %v6387
  %v6389 = vrot.slane %v6388, 2
  %v6390 = vadd.f32 %v6388, %v6389
  %v6391 = vrot.slane %v6390, 1
  %v6392 = vadd.f32 %v6390, %v6391
  %v6393 = vadd.f32 %v5875, %v6357
  %v6394 = vadd.f32 %v5876, %v6364
  %v6395 = vadd.f32 %v5877, %v6371
  %v6396 = vadd.f32 %v5878, %v6378
  %v6397 = vadd.f32 %v5879, %v6385
  %v6398 = vadd.f32 %v5880, %v6392
  %v6399 = vld [vmem:[%s5615] sm:$0xff]
  %v6400 = vld [vmem:[%s5615 + $0x8] sm:$0xff]
  %v6401 = vld [vmem:[%s5615 + $0x10] sm:$0xff]
  %v6402 = vld [vmem:[%s5615 + $0x18] sm:$0xff]
  %v6403 = vld [vmem:[%s5615 + $0x20] sm:$0xff]
  %v6404 = vld [vmem:[%s5615 + $0x28] sm:$0xff]
  %v6405 = vld [vmem:[%s5615 + $0x30] sm:$0xff]
  %v6406 = vld [vmem:[%s5615 + $0x38] sm:$0xff]
  %v6407 = vld [vmem:[%s5615 + $0x40] sm:$0xff]
  %v6408 = vld [vmem:[%s5615 + $0x48] sm:$0xff]
  %v6409 = vld [vmem:[%s5615 + $0x50] sm:$0xff]
  %v6410 = vld [vmem:[%s5615 + $0x58] sm:$0xff]
  %v6411 = vrot.slane %v6399, 7
  %v6412 = vrot.slane %v6400, 7
  %v6413 = vrot.slane %v6401, 7
  %v6414 = vrot.slane %v6402, 7
  %v6415 = vrot.slane %v6403, 7
  %v6416 = vrot.slane %v6404, 7
  %v6417 = vrot.slane %v6405, 7
  %v6418 = vrot.slane %v6406, 7
  %v6419 = vrot.slane %v6407, 7
  %v6420 = vrot.slane %v6408, 7
  %v6421 = vrot.slane %v6409, 7
  %v6422 = vrot.slane %v6410, 7
  %v6423 = vsel %vm508, %v6411, %v6417
  %v6424 = vsel %vm508, %v6412, %v6418
  %v6425 = vsel %vm508, %v6413, %v6419
  %v6426 = vsel %vm508, %v6414, %v6420
  %v6427 = vsel %vm508, %v6415, %v6421
  %v6428 = vsel %vm508, %v6416, %v6422
  %v6429 = vsel %vm508, %v6417, %v6411
  %v6430 = vsel %vm508, %v6418, %v6412
  %v6431 = vsel %vm508, %v6419, %v6413
  %v6432 = vsel %vm508, %v6420, %v6414
  %v6433 = vsel %vm508, %v6421, %v6415
  %v6434 = vsel %vm508, %v6422, %v6416
  %v6435 = vmul.f32 %v6429, %v524
  %v6436 = vmul.f32 %v6430, %v528
  %v6437 = vmul.f32 %v6431, %v532
  %v6438 = vmul.f32 %v6432, %v536
  %v6439 = vmul.f32 %v6433, %v540
  %v6440 = vmul.f32 %v6434, %v544
  %v6441 = vmul.f32 %v6423, %v524
  %v6442 = vmul.f32 %v6424, %v528
  %v6443 = vmul.f32 %v6425, %v532
  %v6444 = vmul.f32 %v6426, %v536
  %v6445 = vmul.f32 %v6427, %v540
  %v6446 = vmul.f32 %v6428, %v544
  %v6447 = vmul.f32 %v6399, %v560
  %v6448 = vmul.f32 %v6400, %v564
  %v6449 = vmul.f32 %v6401, %v568
  %v6450 = vmul.f32 %v6402, %v572
  %v6451 = vmul.f32 %v6403, %v576
  %v6452 = vmul.f32 %v6404, %v580
  %v6453 = vmul.f32 %v6405, %v560
  %v6454 = vmul.f32 %v6406, %v564
  %v6455 = vmul.f32 %v6407, %v568
  %v6456 = vmul.f32 %v6408, %v572
  %v6457 = vmul.f32 %v6409, %v576
  %v6458 = vmul.f32 %v6410, %v580
  %v6459 = vadd.f32 %v6435, %v6447
  %v6460 = vadd.f32 %v6436, %v6448
  %v6461 = vadd.f32 %v6437, %v6449
  %v6462 = vadd.f32 %v6438, %v6450
  %v6463 = vadd.f32 %v6439, %v6451
  %v6464 = vadd.f32 %v6440, %v6452
  %v6465 = vadd.f32 %v6441, %v6453
  %v6466 = vadd.f32 %v6442, %v6454
  %v6467 = vadd.f32 %v6443, %v6455
  %v6468 = vadd.f32 %v6444, %v6456
  %v6469 = vadd.f32 %v6445, %v6457
  %v6470 = vadd.f32 %v6446, %v6458
  %v6471 = vrot.slane %v6399, 1
  %v6472 = vrot.slane %v6400, 1
  %v6473 = vrot.slane %v6401, 1
  %v6474 = vrot.slane %v6402, 1
  %v6475 = vrot.slane %v6403, 1
  %v6476 = vrot.slane %v6404, 1
  %v6477 = vrot.slane %v6405, 1
  %v6478 = vrot.slane %v6406, 1
  %v6479 = vrot.slane %v6407, 1
  %v6480 = vrot.slane %v6408, 1
  %v6481 = vrot.slane %v6409, 1
  %v6482 = vrot.slane %v6410, 1
  %v6483 = vsel %vm617, %v6471, %v6477
  %v6484 = vsel %vm617, %v6472, %v6478
  %v6485 = vsel %vm617, %v6473, %v6479
  %v6486 = vsel %vm617, %v6474, %v6480
  %v6487 = vsel %vm617, %v6475, %v6481
  %v6488 = vsel %vm617, %v6476, %v6482
  %v6489 = vsel %vm617, %v6477, %v6471
  %v6490 = vsel %vm617, %v6478, %v6472
  %v6491 = vsel %vm617, %v6479, %v6473
  %v6492 = vsel %vm617, %v6480, %v6474
  %v6493 = vsel %vm617, %v6481, %v6475
  %v6494 = vsel %vm617, %v6482, %v6476
  %v6495 = vmul.f32 %v6483, %v633
  %v6496 = vmul.f32 %v6484, %v637
  %v6497 = vmul.f32 %v6485, %v641
  %v6498 = vmul.f32 %v6486, %v645
  %v6499 = vmul.f32 %v6487, %v649
  %v6500 = vmul.f32 %v6488, %v653
  %v6501 = vmul.f32 %v6489, %v633
  %v6502 = vmul.f32 %v6490, %v637
  %v6503 = vmul.f32 %v6491, %v641
  %v6504 = vmul.f32 %v6492, %v645
  %v6505 = vmul.f32 %v6493, %v649
  %v6506 = vmul.f32 %v6494, %v653
  %v6507 = vadd.f32 %v6459, %v6495
  %v6508 = vadd.f32 %v6460, %v6496
  %v6509 = vadd.f32 %v6461, %v6497
  %v6510 = vadd.f32 %v6462, %v6498
  %v6511 = vadd.f32 %v6463, %v6499
  %v6512 = vadd.f32 %v6464, %v6500
  %v6513 = vadd.f32 %v6465, %v6501
  %v6514 = vadd.f32 %v6466, %v6502
  %v6515 = vadd.f32 %v6467, %v6503
  %v6516 = vadd.f32 %v6468, %v6504
  %v6517 = vadd.f32 %v6469, %v6505
  %v6518 = vadd.f32 %v6470, %v6506
  %v6519 = vld [vmem:[%s6133] sm:$0xff]
  %v6520 = vld [vmem:[%s6133 + $0x8] sm:$0xff]
  %v6521 = vld [vmem:[%s6133 + $0x10] sm:$0xff]
  %v6522 = vld [vmem:[%s6133 + $0x18] sm:$0xff]
  %v6523 = vld [vmem:[%s6133 + $0x20] sm:$0xff]
  %v6524 = vld [vmem:[%s6133 + $0x28] sm:$0xff]
  %v6525 = vld [vmem:[%s6133 + $0x30] sm:$0xff]
  %v6526 = vld [vmem:[%s6133 + $0x38] sm:$0xff]
  %v6527 = vld [vmem:[%s6133 + $0x40] sm:$0xff]
  %v6528 = vld [vmem:[%s6133 + $0x48] sm:$0xff]
  %v6529 = vld [vmem:[%s6133 + $0x50] sm:$0xff]
  %v6530 = vld [vmem:[%s6133 + $0x58] sm:$0xff]
  %v6531 = vrot.slane %v6519, 7
  %v6532 = vrot.slane %v6520, 7
  %v6533 = vrot.slane %v6521, 7
  %v6534 = vrot.slane %v6522, 7
  %v6535 = vrot.slane %v6523, 7
  %v6536 = vrot.slane %v6524, 7
  %v6537 = vrot.slane %v6525, 7
  %v6538 = vrot.slane %v6526, 7
  %v6539 = vrot.slane %v6527, 7
  %v6540 = vrot.slane %v6528, 7
  %v6541 = vrot.slane %v6529, 7
  %v6542 = vrot.slane %v6530, 7
  %v6543 = vsel %vm508, %v6531, %v6537
  %v6544 = vsel %vm508, %v6532, %v6538
  %v6545 = vsel %vm508, %v6533, %v6539
  %v6546 = vsel %vm508, %v6534, %v6540
  %v6547 = vsel %vm508, %v6535, %v6541
  %v6548 = vsel %vm508, %v6536, %v6542
  %v6549 = vsel %vm508, %v6537, %v6531
  %v6550 = vsel %vm508, %v6538, %v6532
  %v6551 = vsel %vm508, %v6539, %v6533
  %v6552 = vsel %vm508, %v6540, %v6534
  %v6553 = vsel %vm508, %v6541, %v6535
  %v6554 = vsel %vm508, %v6542, %v6536
  %v6555 = vmul.f32 %v6549, %v717
  %v6556 = vmul.f32 %v6550, %v721
  %v6557 = vmul.f32 %v6551, %v725
  %v6558 = vmul.f32 %v6552, %v729
  %v6559 = vmul.f32 %v6553, %v733
  %v6560 = vmul.f32 %v6554, %v737
  %v6561 = vmul.f32 %v6543, %v717
  %v6562 = vmul.f32 %v6544, %v721
  %v6563 = vmul.f32 %v6545, %v725
  %v6564 = vmul.f32 %v6546, %v729
  %v6565 = vmul.f32 %v6547, %v733
  %v6566 = vmul.f32 %v6548, %v737
  %v6567 = vmul.f32 %v6519, %v753
  %v6568 = vmul.f32 %v6520, %v757
  %v6569 = vmul.f32 %v6521, %v761
  %v6570 = vmul.f32 %v6522, %v765
  %v6571 = vmul.f32 %v6523, %v769
  %v6572 = vmul.f32 %v6524, %v773
  %v6573 = vmul.f32 %v6525, %v753
  %v6574 = vmul.f32 %v6526, %v757
  %v6575 = vmul.f32 %v6527, %v761
  %v6576 = vmul.f32 %v6528, %v765
  %v6577 = vmul.f32 %v6529, %v769
  %v6578 = vmul.f32 %v6530, %v773
  %v6579 = vadd.f32 %v6555, %v6567
  %v6580 = vadd.f32 %v6556, %v6568
  %v6581 = vadd.f32 %v6557, %v6569
  %v6582 = vadd.f32 %v6558, %v6570
  %v6583 = vadd.f32 %v6559, %v6571
  %v6584 = vadd.f32 %v6560, %v6572
  %v6585 = vadd.f32 %v6561, %v6573
  %v6586 = vadd.f32 %v6562, %v6574
  %v6587 = vadd.f32 %v6563, %v6575
  %v6588 = vadd.f32 %v6564, %v6576
  %v6589 = vadd.f32 %v6565, %v6577
  %v6590 = vadd.f32 %v6566, %v6578
  %v6591 = vrot.slane %v6519, 1
  %v6592 = vrot.slane %v6520, 1
  %v6593 = vrot.slane %v6521, 1
  %v6594 = vrot.slane %v6522, 1
  %v6595 = vrot.slane %v6523, 1
  %v6596 = vrot.slane %v6524, 1
  %v6597 = vrot.slane %v6525, 1
  %v6598 = vrot.slane %v6526, 1
  %v6599 = vrot.slane %v6527, 1
  %v6600 = vrot.slane %v6528, 1
  %v6601 = vrot.slane %v6529, 1
  %v6602 = vrot.slane %v6530, 1
  %v6603 = vsel %vm617, %v6591, %v6597
  %v6604 = vsel %vm617, %v6592, %v6598
  %v6605 = vsel %vm617, %v6593, %v6599
  %v6606 = vsel %vm617, %v6594, %v6600
  %v6607 = vsel %vm617, %v6595, %v6601
  %v6608 = vsel %vm617, %v6596, %v6602
  %v6609 = vsel %vm617, %v6597, %v6591
  %v6610 = vsel %vm617, %v6598, %v6592
  %v6611 = vsel %vm617, %v6599, %v6593
  %v6612 = vsel %vm617, %v6600, %v6594
  %v6613 = vsel %vm617, %v6601, %v6595
  %v6614 = vsel %vm617, %v6602, %v6596
  %v6615 = vmul.f32 %v6603, %v825
  %v6616 = vmul.f32 %v6604, %v829
  %v6617 = vmul.f32 %v6605, %v833
  %v6618 = vmul.f32 %v6606, %v837
  %v6619 = vmul.f32 %v6607, %v841
  %v6620 = vmul.f32 %v6608, %v845
  %v6621 = vmul.f32 %v6609, %v825
  %v6622 = vmul.f32 %v6610, %v829
  %v6623 = vmul.f32 %v6611, %v833
  %v6624 = vmul.f32 %v6612, %v837
  %v6625 = vmul.f32 %v6613, %v841
  %v6626 = vmul.f32 %v6614, %v845
  %v6627 = vadd.f32 %v6579, %v6615
  %v6628 = vadd.f32 %v6580, %v6616
  %v6629 = vadd.f32 %v6581, %v6617
  %v6630 = vadd.f32 %v6582, %v6618
  %v6631 = vadd.f32 %v6583, %v6619
  %v6632 = vadd.f32 %v6584, %v6620
  %v6633 = vadd.f32 %v6585, %v6621
  %v6634 = vadd.f32 %v6586, %v6622
  %v6635 = vadd.f32 %v6587, %v6623
  %v6636 = vadd.f32 %v6588, %v6624
  %v6637 = vadd.f32 %v6589, %v6625
  %v6638 = vadd.f32 %v6590, %v6626
  %v6639 = vadd.f32 %v6507, %v6627
  %v6640 = vadd.f32 %v6508, %v6628
  %v6641 = vadd.f32 %v6509, %v6629
  %v6642 = vadd.f32 %v6510, %v6630
  %v6643 = vadd.f32 %v6511, %v6631
  %v6644 = vadd.f32 %v6512, %v6632
  %v6645 = vadd.f32 %v6513, %v6633
  %v6646 = vadd.f32 %v6514, %v6634
  %v6647 = vadd.f32 %v6515, %v6635
  %v6648 = vadd.f32 %v6516, %v6636
  %v6649 = vadd.f32 %v6517, %v6637
  %v6650 = vadd.f32 %v6518, %v6638
  %s6651 = scalar_lea.vmem [#allocation2], 1248
  %v6652 = vld [vmem:[%s6651] sm:$0xff]
  %v6653 = vld [vmem:[%s6651 + $0x8] sm:$0xff]
  %v6654 = vld [vmem:[%s6651 + $0x10] sm:$0xff]
  %v6655 = vld [vmem:[%s6651 + $0x18] sm:$0xff]
  %v6656 = vld [vmem:[%s6651 + $0x20] sm:$0xff]
  %v6657 = vld [vmem:[%s6651 + $0x28] sm:$0xff]
  %v6658 = vld [vmem:[%s6651 + $0x30] sm:$0xff]
  %v6659 = vld [vmem:[%s6651 + $0x38] sm:$0xff]
  %v6660 = vld [vmem:[%s6651 + $0x40] sm:$0xff]
  %v6661 = vld [vmem:[%s6651 + $0x48] sm:$0xff]
  %v6662 = vld [vmem:[%s6651 + $0x50] sm:$0xff]
  %v6663 = vld [vmem:[%s6651 + $0x58] sm:$0xff]
  %v6664 = vrot.slane %v6652, 7
  %v6665 = vrot.slane %v6653, 7
  %v6666 = vrot.slane %v6654, 7
  %v6667 = vrot.slane %v6655, 7
  %v6668 = vrot.slane %v6656, 7
  %v6669 = vrot.slane %v6657, 7
  %v6670 = vrot.slane %v6658, 7
  %v6671 = vrot.slane %v6659, 7
  %v6672 = vrot.slane %v6660, 7
  %v6673 = vrot.slane %v6661, 7
  %v6674 = vrot.slane %v6662, 7
  %v6675 = vrot.slane %v6663, 7
  %v6676 = vsel %vm508, %v6664, %v6670
  %v6677 = vsel %vm508, %v6665, %v6671
  %v6678 = vsel %vm508, %v6666, %v6672
  %v6679 = vsel %vm508, %v6667, %v6673
  %v6680 = vsel %vm508, %v6668, %v6674
  %v6681 = vsel %vm508, %v6669, %v6675
  %v6682 = vsel %vm508, %v6670, %v6664
  %v6683 = vsel %vm508, %v6671, %v6665
  %v6684 = vsel %vm508, %v6672, %v6666
  %v6685 = vsel %vm508, %v6673, %v6667
  %v6686 = vsel %vm508, %v6674, %v6668
  %v6687 = vsel %vm508, %v6675, %v6669
  %v6688 = vmul.f32 %v6682, %v922
  %v6689 = vmul.f32 %v6683, %v926
  %v6690 = vmul.f32 %v6684, %v930
  %v6691 = vmul.f32 %v6685, %v934
  %v6692 = vmul.f32 %v6686, %v938
  %v6693 = vmul.f32 %v6687, %v942
  %v6694 = vmul.f32 %v6676, %v922
  %v6695 = vmul.f32 %v6677, %v926
  %v6696 = vmul.f32 %v6678, %v930
  %v6697 = vmul.f32 %v6679, %v934
  %v6698 = vmul.f32 %v6680, %v938
  %v6699 = vmul.f32 %v6681, %v942
  %v6700 = vmul.f32 %v6652, %v958
  %v6701 = vmul.f32 %v6653, %v962
  %v6702 = vmul.f32 %v6654, %v966
  %v6703 = vmul.f32 %v6655, %v970
  %v6704 = vmul.f32 %v6656, %v974
  %v6705 = vmul.f32 %v6657, %v978
  %v6706 = vmul.f32 %v6658, %v958
  %v6707 = vmul.f32 %v6659, %v962
  %v6708 = vmul.f32 %v6660, %v966
  %v6709 = vmul.f32 %v6661, %v970
  %v6710 = vmul.f32 %v6662, %v974
  %v6711 = vmul.f32 %v6663, %v978
  %v6712 = vadd.f32 %v6688, %v6700
  %v6713 = vadd.f32 %v6689, %v6701
  %v6714 = vadd.f32 %v6690, %v6702
  %v6715 = vadd.f32 %v6691, %v6703
  %v6716 = vadd.f32 %v6692, %v6704
  %v6717 = vadd.f32 %v6693, %v6705
  %v6718 = vadd.f32 %v6694, %v6706
  %v6719 = vadd.f32 %v6695, %v6707
  %v6720 = vadd.f32 %v6696, %v6708
  %v6721 = vadd.f32 %v6697, %v6709
  %v6722 = vadd.f32 %v6698, %v6710
  %v6723 = vadd.f32 %v6699, %v6711
  %v6724 = vrot.slane %v6652, 1
  %v6725 = vrot.slane %v6653, 1
  %v6726 = vrot.slane %v6654, 1
  %v6727 = vrot.slane %v6655, 1
  %v6728 = vrot.slane %v6656, 1
  %v6729 = vrot.slane %v6657, 1
  %v6730 = vrot.slane %v6658, 1
  %v6731 = vrot.slane %v6659, 1
  %v6732 = vrot.slane %v6660, 1
  %v6733 = vrot.slane %v6661, 1
  %v6734 = vrot.slane %v6662, 1
  %v6735 = vrot.slane %v6663, 1
  %v6736 = vsel %vm617, %v6724, %v6730
  %v6737 = vsel %vm617, %v6725, %v6731
  %v6738 = vsel %vm617, %v6726, %v6732
  %v6739 = vsel %vm617, %v6727, %v6733
  %v6740 = vsel %vm617, %v6728, %v6734
  %v6741 = vsel %vm617, %v6729, %v6735
  %v6742 = vsel %vm617, %v6730, %v6724
  %v6743 = vsel %vm617, %v6731, %v6725
  %v6744 = vsel %vm617, %v6732, %v6726
  %v6745 = vsel %vm617, %v6733, %v6727
  %v6746 = vsel %vm617, %v6734, %v6728
  %v6747 = vsel %vm617, %v6735, %v6729
  %v6748 = vmul.f32 %v6736, %v1030
  %v6749 = vmul.f32 %v6737, %v1034
  %v6750 = vmul.f32 %v6738, %v1038
  %v6751 = vmul.f32 %v6739, %v1042
  %v6752 = vmul.f32 %v6740, %v1046
  %v6753 = vmul.f32 %v6741, %v1050
  %v6754 = vmul.f32 %v6742, %v1030
  %v6755 = vmul.f32 %v6743, %v1034
  %v6756 = vmul.f32 %v6744, %v1038
  %v6757 = vmul.f32 %v6745, %v1042
  %v6758 = vmul.f32 %v6746, %v1046
  %v6759 = vmul.f32 %v6747, %v1050
  %v6760 = vadd.f32 %v6712, %v6748
  %v6761 = vadd.f32 %v6713, %v6749
  %v6762 = vadd.f32 %v6714, %v6750
  %v6763 = vadd.f32 %v6715, %v6751
  %v6764 = vadd.f32 %v6716, %v6752
  %v6765 = vadd.f32 %v6717, %v6753
  %v6766 = vadd.f32 %v6718, %v6754
  %v6767 = vadd.f32 %v6719, %v6755
  %v6768 = vadd.f32 %v6720, %v6756
  %v6769 = vadd.f32 %v6721, %v6757
  %v6770 = vadd.f32 %v6722, %v6758
  %v6771 = vadd.f32 %v6723, %v6759
  %v6772 = vadd.f32 %v6639, %v6760
  %v6773 = vadd.f32 %v6640, %v6761
  %v6774 = vadd.f32 %v6641, %v6762
  %v6775 = vadd.f32 %v6642, %v6763
  %v6776 = vadd.f32 %v6643, %v6764
  %v6777 = vadd.f32 %v6644, %v6765
  %v6778 = vadd.f32 %v6645, %v6766
  %v6779 = vadd.f32 %v6646, %v6767
  %v6780 = vadd.f32 %v6647, %v6768
  %v6781 = vadd.f32 %v6648, %v6769
  %v6782 = vadd.f32 %v6649, %v6770
  %v6783 = vadd.f32 %v6650, %v6771
  %s6784 = scalar_lea.vmem [#allocation3], 1056
  %6785 = vst [vmem:[%s6784] sm:$0xff] %v6772
  %6786 = vst [vmem:[%s6784 + $0x8] sm:$0xff] %v6773
  %6787 = vst [vmem:[%s6784 + $0x10] sm:$0xff] %v6774
  %6788 = vst [vmem:[%s6784 + $0x18] sm:$0xff] %v6775
  %6789 = vst [vmem:[%s6784 + $0x20] sm:$0xff] %v6776
  %6790 = vst [vmem:[%s6784 + $0x28] sm:$0xff] %v6777
  %6791 = vst [vmem:[%s6784 + $0x30] sm:$0xff] %v6778
  %6792 = vst [vmem:[%s6784 + $0x38] sm:$0xff] %v6779
  %6793 = vst [vmem:[%s6784 + $0x40] sm:$0xff] %v6780
  %6794 = vst [vmem:[%s6784 + $0x48] sm:$0xff] %v6781
  %6795 = vst [vmem:[%s6784 + $0x50] sm:$0xff] %v6782
  %6796 = vst [vmem:[%s6784 + $0x58] sm:$0xff] %v6783
  %v6797 = vmul.f32 %v6772, %v482
  %v6798 = vmul.f32 %v6773, %v482
  %v6799 = vmul.f32 %v6774, %v482
  %v6800 = vmul.f32 %v6775, %v482
  %v6801 = vmul.f32 %v6776, %v482
  %v6802 = vmul.f32 %v6777, %v482
  %v6803 = vmul.f32 %v6778, %v483
  %v6804 = vmul.f32 %v6779, %v483
  %v6805 = vmul.f32 %v6780, %v483
  %v6806 = vmul.f32 %v6781, %v483
  %v6807 = vmul.f32 %v6782, %v483
  %v6808 = vmul.f32 %v6783, %v483
  %v6809 = vadd.f32 %v6797, %v6803
  %v6810 = vrot.slane %v6809, 4
  %v6811 = vadd.f32 %v6809, %v6810
  %v6812 = vrot.slane %v6811, 2
  %v6813 = vadd.f32 %v6811, %v6812
  %v6814 = vrot.slane %v6813, 1
  %v6815 = vadd.f32 %v6813, %v6814
  %v6816 = vadd.f32 %v6798, %v6804
  %v6817 = vrot.slane %v6816, 4
  %v6818 = vadd.f32 %v6816, %v6817
  %v6819 = vrot.slane %v6818, 2
  %v6820 = vadd.f32 %v6818, %v6819
  %v6821 = vrot.slane %v6820, 1
  %v6822 = vadd.f32 %v6820, %v6821
  %v6823 = vadd.f32 %v6799, %v6805
  %v6824 = vrot.slane %v6823, 4
  %v6825 = vadd.f32 %v6823, %v6824
  %v6826 = vrot.slane %v6825, 2
  %v6827 = vadd.f32 %v6825, %v6826
  %v6828 = vrot.slane %v6827, 1
  %v6829 = vadd.f32 %v6827, %v6828
  %v6830 = vadd.f32 %v6800, %v6806
  %v6831 = vrot.slane %v6830, 4
  %v6832 = vadd.f32 %v6830, %v6831
  %v6833 = vrot.slane %v6832, 2
  %v6834 = vadd.f32 %v6832, %v6833
  %v6835 = vrot.slane %v6834, 1
  %v6836 = vadd.f32 %v6834, %v6835
  %v6837 = vadd.f32 %v6801, %v6807
  %v6838 = vrot.slane %v6837, 4
  %v6839 = vadd.f32 %v6837, %v6838
  %v6840 = vrot.slane %v6839, 2
  %v6841 = vadd.f32 %v6839, %v6840
  %v6842 = vrot.slane %v6841, 1
  %v6843 = vadd.f32 %v6841, %v6842
  %v6844 = vadd.f32 %v6802, %v6808
  %v6845 = vrot.slane %v6844, 4
  %v6846 = vadd.f32 %v6844, %v6845
  %v6847 = vrot.slane %v6846, 2
  %v6848 = vadd.f32 %v6846, %v6847
  %v6849 = vrot.slane %v6848, 1
  %v6850 = vadd.f32 %v6848, %v6849
  %v6851 = vadd.f32 %v6333, %v6815
  %v6852 = vadd.f32 %v6334, %v6822
  %v6853 = vadd.f32 %v6335, %v6829
  %v6854 = vadd.f32 %v6336, %v6836
  %v6855 = vadd.f32 %v6337, %v6843
  %v6856 = vadd.f32 %v6338, %v6850
  %v6857 = vmul.f32 %v6797, %v6772
  %v6858 = vmul.f32 %v6798, %v6773
  %v6859 = vmul.f32 %v6799, %v6774
  %v6860 = vmul.f32 %v6800, %v6775
  %v6861 = vmul.f32 %v6801, %v6776
  %v6862 = vmul.f32 %v6802, %v6777
  %v6863 = vmul.f32 %v6803, %v6778
  %v6864 = vmul.f32 %v6804, %v6779
  %v6865 = vmul.f32 %v6805, %v6780
  %v6866 = vmul.f32 %v6806, %v6781
  %v6867 = vmul.f32 %v6807, %v6782
  %v6868 = vmul.f32 %v6808, %v6783
  %v6869 = vadd.f32 %v6857, %v6863
  %v6870 = vrot.slane %v6869, 4
  %v6871 = vadd.f32 %v6869, %v6870
  %v6872 = vrot.slane %v6871, 2
  %v6873 = vadd.f32 %v6871, %v6872
  %v6874 = vrot.slane %v6873, 1
  %v6875 = vadd.f32 %v6873, %v6874
  %v6876 = vadd.f32 %v6858, %v6864
  %v6877 = vrot.slane %v6876, 4
  %v6878 = vadd.f32 %v6876, %v6877
  %v6879 = vrot.slane %v6878, 2
  %v6880 = vadd.f32 %v6878, %v6879
  %v6881 = vrot.slane %v6880, 1
  %v6882 = vadd.f32 %v6880, %v6881
  %v6883 = vadd.f32 %v6859, %v6865
  %v6884 = vrot.slane %v6883, 4
  %v6885 = vadd.f32 %v6883, %v6884
  %v6886 = vrot.slane %v6885, 2
  %v6887 = vadd.f32 %v6885, %v6886
  %v6888 = vrot.slane %v6887, 1
  %v6889 = vadd.f32 %v6887, %v6888
  %v6890 = vadd.f32 %v6860, %v6866
  %v6891 = vrot.slane %v6890, 4
  %v6892 = vadd.f32 %v6890, %v6891
  %v6893 = vrot.slane %v6892, 2
  %v6894 = vadd.f32 %v6892, %v6893
  %v6895 = vrot.slane %v6894, 1
  %v6896 = vadd.f32 %v6894, %v6895
  %v6897 = vadd.f32 %v6861, %v6867
  %v6898 = vrot.slane %v6897, 4
  %v6899 = vadd.f32 %v6897, %v6898
  %v6900 = vrot.slane %v6899, 2
  %v6901 = vadd.f32 %v6899, %v6900
  %v6902 = vrot.slane %v6901, 1
  %v6903 = vadd.f32 %v6901, %v6902
  %v6904 = vadd.f32 %v6862, %v6868
  %v6905 = vrot.slane %v6904, 4
  %v6906 = vadd.f32 %v6904, %v6905
  %v6907 = vrot.slane %v6906, 2
  %v6908 = vadd.f32 %v6906, %v6907
  %v6909 = vrot.slane %v6908, 1
  %v6910 = vadd.f32 %v6908, %v6909
  %v6911 = vadd.f32 %v6393, %v6875
  %v6912 = vadd.f32 %v6394, %v6882
  %v6913 = vadd.f32 %v6395, %v6889
  %v6914 = vadd.f32 %v6396, %v6896
  %v6915 = vadd.f32 %v6397, %v6903
  %v6916 = vadd.f32 %v6398, %v6910
  %v6917 = vld [vmem:[%s6133] sm:$0xff]
  %v6918 = vld [vmem:[%s6133 + $0x8] sm:$0xff]
  %v6919 = vld [vmem:[%s6133 + $0x10] sm:$0xff]
  %v6920 = vld [vmem:[%s6133 + $0x18] sm:$0xff]
  %v6921 = vld [vmem:[%s6133 + $0x20] sm:$0xff]
  %v6922 = vld [vmem:[%s6133 + $0x28] sm:$0xff]
  %v6923 = vld [vmem:[%s6133 + $0x30] sm:$0xff]
  %v6924 = vld [vmem:[%s6133 + $0x38] sm:$0xff]
  %v6925 = vld [vmem:[%s6133 + $0x40] sm:$0xff]
  %v6926 = vld [vmem:[%s6133 + $0x48] sm:$0xff]
  %v6927 = vld [vmem:[%s6133 + $0x50] sm:$0xff]
  %v6928 = vld [vmem:[%s6133 + $0x58] sm:$0xff]
  %v6929 = vrot.slane %v6917, 7
  %v6930 = vrot.slane %v6918, 7
  %v6931 = vrot.slane %v6919, 7
  %v6932 = vrot.slane %v6920, 7
  %v6933 = vrot.slane %v6921, 7
  %v6934 = vrot.slane %v6922, 7
  %v6935 = vrot.slane %v6923, 7
  %v6936 = vrot.slane %v6924, 7
  %v6937 = vrot.slane %v6925, 7
  %v6938 = vrot.slane %v6926, 7
  %v6939 = vrot.slane %v6927, 7
  %v6940 = vrot.slane %v6928, 7
  %v6941 = vsel %vm508, %v6929, %v6935
  %v6942 = vsel %vm508, %v6930, %v6936
  %v6943 = vsel %vm508, %v6931, %v6937
  %v6944 = vsel %vm508, %v6932, %v6938
  %v6945 = vsel %vm508, %v6933, %v6939
  %v6946 = vsel %vm508, %v6934, %v6940
  %v6947 = vsel %vm508, %v6935, %v6929
  %v6948 = vsel %vm508, %v6936, %v6930
  %v6949 = vsel %vm508, %v6937, %v6931
  %v6950 = vsel %vm508, %v6938, %v6932
  %v6951 = vsel %vm508, %v6939, %v6933
  %v6952 = vsel %vm508, %v6940, %v6934
  %v6953 = vmul.f32 %v6947, %v524
  %v6954 = vmul.f32 %v6948, %v528
  %v6955 = vmul.f32 %v6949, %v532
  %v6956 = vmul.f32 %v6950, %v536
  %v6957 = vmul.f32 %v6951, %v540
  %v6958 = vmul.f32 %v6952, %v544
  %v6959 = vmul.f32 %v6941, %v524
  %v6960 = vmul.f32 %v6942, %v528
  %v6961 = vmul.f32 %v6943, %v532
  %v6962 = vmul.f32 %v6944, %v536
  %v6963 = vmul.f32 %v6945, %v540
  %v6964 = vmul.f32 %v6946, %v544
  %v6965 = vmul.f32 %v6917, %v560
  %v6966 = vmul.f32 %v6918, %v564
  %v6967 = vmul.f32 %v6919, %v568
  %v6968 = vmul.f32 %v6920, %v572
  %v6969 = vmul.f32 %v6921, %v576
  %v6970 = vmul.f32 %v6922, %v580
  %v6971 = vmul.f32 %v6923, %v560
  %v6972 = vmul.f32 %v6924, %v564
  %v6973 = vmul.f32 %v6925, %v568
  %v6974 = vmul.f32 %v6926, %v572
  %v6975 = vmul.f32 %v6927, %v576
  %v6976 = vmul.f32 %v6928, %v580
  %v6977 = vadd.f32 %v6953, %v6965
  %v6978 = vadd.f32 %v6954, %v6966
  %v6979 = vadd.f32 %v6955, %v6967
  %v6980 = vadd.f32 %v6956, %v6968
  %v6981 = vadd.f32 %v6957, %v6969
  %v6982 = vadd.f32 %v6958, %v6970
  %v6983 = vadd.f32 %v6959, %v6971
  %v6984 = vadd.f32 %v6960, %v6972
  %v6985 = vadd.f32 %v6961, %v6973
  %v6986 = vadd.f32 %v6962, %v6974
  %v6987 = vadd.f32 %v6963, %v6975
  %v6988 = vadd.f32 %v6964, %v6976
  %v6989 = vrot.slane %v6917, 1
  %v6990 = vrot.slane %v6918, 1
  %v6991 = vrot.slane %v6919, 1
  %v6992 = vrot.slane %v6920, 1
  %v6993 = vrot.slane %v6921, 1
  %v6994 = vrot.slane %v6922, 1
  %v6995 = vrot.slane %v6923, 1
  %v6996 = vrot.slane %v6924, 1
  %v6997 = vrot.slane %v6925, 1
  %v6998 = vrot.slane %v6926, 1
  %v6999 = vrot.slane %v6927, 1
  %v7000 = vrot.slane %v6928, 1
  %v7001 = vsel %vm617, %v6989, %v6995
  %v7002 = vsel %vm617, %v6990, %v6996
  %v7003 = vsel %vm617, %v6991, %v6997
  %v7004 = vsel %vm617, %v6992, %v6998
  %v7005 = vsel %vm617, %v6993, %v6999
  %v7006 = vsel %vm617, %v6994, %v7000
  %v7007 = vsel %vm617, %v6995, %v6989
  %v7008 = vsel %vm617, %v6996, %v6990
  %v7009 = vsel %vm617, %v6997, %v6991
  %v7010 = vsel %vm617, %v6998, %v6992
  %v7011 = vsel %vm617, %v6999, %v6993
  %v7012 = vsel %vm617, %v7000, %v6994
  %v7013 = vmul.f32 %v7001, %v633
  %v7014 = vmul.f32 %v7002, %v637
  %v7015 = vmul.f32 %v7003, %v641
  %v7016 = vmul.f32 %v7004, %v645
  %v7017 = vmul.f32 %v7005, %v649
  %v7018 = vmul.f32 %v7006, %v653
  %v7019 = vmul.f32 %v7007, %v633
  %v7020 = vmul.f32 %v7008, %v637
  %v7021 = vmul.f32 %v7009, %v641
  %v7022 = vmul.f32 %v7010, %v645
  %v7023 = vmul.f32 %v7011, %v649
  %v7024 = vmul.f32 %v7012, %v653
  %v7025 = vadd.f32 %v6977, %v7013
  %v7026 = vadd.f32 %v6978, %v7014
  %v7027 = vadd.f32 %v6979, %v7015
  %v7028 = vadd.f32 %v6980, %v7016
  %v7029 = vadd.f32 %v6981, %v7017
  %v7030 = vadd.f32 %v6982, %v7018
  %v7031 = vadd.f32 %v6983, %v7019
  %v7032 = vadd.f32 %v6984, %v7020
  %v7033 = vadd.f32 %v6985, %v7021
  %v7034 = vadd.f32 %v6986, %v7022
  %v7035 = vadd.f32 %v6987, %v7023
  %v7036 = vadd.f32 %v6988, %v7024
  %v7037 = vld [vmem:[%s6651] sm:$0xff]
  %v7038 = vld [vmem:[%s6651 + $0x8] sm:$0xff]
  %v7039 = vld [vmem:[%s6651 + $0x10] sm:$0xff]
  %v7040 = vld [vmem:[%s6651 + $0x18] sm:$0xff]
  %v7041 = vld [vmem:[%s6651 + $0x20] sm:$0xff]
  %v7042 = vld [vmem:[%s6651 + $0x28] sm:$0xff]
  %v7043 = vld [vmem:[%s6651 + $0x30] sm:$0xff]
  %v7044 = vld [vmem:[%s6651 + $0x38] sm:$0xff]
  %v7045 = vld [vmem:[%s6651 + $0x40] sm:$0xff]
  %v7046 = vld [vmem:[%s6651 + $0x48] sm:$0xff]
  %v7047 = vld [vmem:[%s6651 + $0x50] sm:$0xff]
  %v7048 = vld [vmem:[%s6651 + $0x58] sm:$0xff]
  %v7049 = vrot.slane %v7037, 7
  %v7050 = vrot.slane %v7038, 7
  %v7051 = vrot.slane %v7039, 7
  %v7052 = vrot.slane %v7040, 7
  %v7053 = vrot.slane %v7041, 7
  %v7054 = vrot.slane %v7042, 7
  %v7055 = vrot.slane %v7043, 7
  %v7056 = vrot.slane %v7044, 7
  %v7057 = vrot.slane %v7045, 7
  %v7058 = vrot.slane %v7046, 7
  %v7059 = vrot.slane %v7047, 7
  %v7060 = vrot.slane %v7048, 7
  %v7061 = vsel %vm508, %v7049, %v7055
  %v7062 = vsel %vm508, %v7050, %v7056
  %v7063 = vsel %vm508, %v7051, %v7057
  %v7064 = vsel %vm508, %v7052, %v7058
  %v7065 = vsel %vm508, %v7053, %v7059
  %v7066 = vsel %vm508, %v7054, %v7060
  %v7067 = vsel %vm508, %v7055, %v7049
  %v7068 = vsel %vm508, %v7056, %v7050
  %v7069 = vsel %vm508, %v7057, %v7051
  %v7070 = vsel %vm508, %v7058, %v7052
  %v7071 = vsel %vm508, %v7059, %v7053
  %v7072 = vsel %vm508, %v7060, %v7054
  %v7073 = vmul.f32 %v7067, %v717
  %v7074 = vmul.f32 %v7068, %v721
  %v7075 = vmul.f32 %v7069, %v725
  %v7076 = vmul.f32 %v7070, %v729
  %v7077 = vmul.f32 %v7071, %v733
  %v7078 = vmul.f32 %v7072, %v737
  %v7079 = vmul.f32 %v7061, %v717
  %v7080 = vmul.f32 %v7062, %v721
  %v7081 = vmul.f32 %v7063, %v725
  %v7082 = vmul.f32 %v7064, %v729
  %v7083 = vmul.f32 %v7065, %v733
  %v7084 = vmul.f32 %v7066, %v737
  %v7085 = vmul.f32 %v7037, %v753
  %v7086 = vmul.f32 %v7038, %v757
  %v7087 = vmul.f32 %v7039, %v761
  %v7088 = vmul.f32 %v7040, %v765
  %v7089 = vmul.f32 %v7041, %v769
  %v7090 = vmul.f32 %v7042, %v773
  %v7091 = vmul.f32 %v7043, %v753
  %v7092 = vmul.f32 %v7044, %v757
  %v7093 = vmul.f32 %v7045, %v761
  %v7094 = vmul.f32 %v7046, %v765
  %v7095 = vmul.f32 %v7047, %v769
  %v7096 = vmul.f32 %v7048, %v773
  %v7097 = vadd.f32 %v7073, %v7085
  %v7098 = vadd.f32 %v7074, %v7086
  %v7099 = vadd.f32 %v7075, %v7087
  %v7100 = vadd.f32 %v7076, %v7088
  %v7101 = vadd.f32 %v7077, %v7089
  %v7102 = vadd.f32 %v7078, %v7090
  %v7103 = vadd.f32 %v7079, %v7091
  %v7104 = vadd.f32 %v7080, %v7092
  %v7105 = vadd.f32 %v7081, %v7093
  %v7106 = vadd.f32 %v7082, %v7094
  %v7107 = vadd.f32 %v7083, %v7095
  %v7108 = vadd.f32 %v7084, %v7096
  %v7109 = vrot.slane %v7037, 1
  %v7110 = vrot.slane %v7038, 1
  %v7111 = vrot.slane %v7039, 1
  %v7112 = vrot.slane %v7040, 1
  %v7113 = vrot.slane %v7041, 1
  %v7114 = vrot.slane %v7042, 1
  %v7115 = vrot.slane %v7043, 1
  %v7116 = vrot.slane %v7044, 1
  %v7117 = vrot.slane %v7045, 1
  %v7118 = vrot.slane %v7046, 1
  %v7119 = vrot.slane %v7047, 1
  %v7120 = vrot.slane %v7048, 1
  %v7121 = vsel %vm617, %v7109, %v7115
  %v7122 = vsel %vm617, %v7110, %v7116
  %v7123 = vsel %vm617, %v7111, %v7117
  %v7124 = vsel %vm617, %v7112, %v7118
  %v7125 = vsel %vm617, %v7113, %v7119
  %v7126 = vsel %vm617, %v7114, %v7120
  %v7127 = vsel %vm617, %v7115, %v7109
  %v7128 = vsel %vm617, %v7116, %v7110
  %v7129 = vsel %vm617, %v7117, %v7111
  %v7130 = vsel %vm617, %v7118, %v7112
  %v7131 = vsel %vm617, %v7119, %v7113
  %v7132 = vsel %vm617, %v7120, %v7114
  %v7133 = vmul.f32 %v7121, %v825
  %v7134 = vmul.f32 %v7122, %v829
  %v7135 = vmul.f32 %v7123, %v833
  %v7136 = vmul.f32 %v7124, %v837
  %v7137 = vmul.f32 %v7125, %v841
  %v7138 = vmul.f32 %v7126, %v845
  %v7139 = vmul.f32 %v7127, %v825
  %v7140 = vmul.f32 %v7128, %v829
  %v7141 = vmul.f32 %v7129, %v833
  %v7142 = vmul.f32 %v7130, %v837
  %v7143 = vmul.f32 %v7131, %v841
  %v7144 = vmul.f32 %v7132, %v845
  %v7145 = vadd.f32 %v7097, %v7133
  %v7146 = vadd.f32 %v7098, %v7134
  %v7147 = vadd.f32 %v7099, %v7135
  %v7148 = vadd.f32 %v7100, %v7136
  %v7149 = vadd.f32 %v7101, %v7137
  %v7150 = vadd.f32 %v7102, %v7138
  %v7151 = vadd.f32 %v7103, %v7139
  %v7152 = vadd.f32 %v7104, %v7140
  %v7153 = vadd.f32 %v7105, %v7141
  %v7154 = vadd.f32 %v7106, %v7142
  %v7155 = vadd.f32 %v7107, %v7143
  %v7156 = vadd.f32 %v7108, %v7144
  %v7157 = vadd.f32 %v7025, %v7145
  %v7158 = vadd.f32 %v7026, %v7146
  %v7159 = vadd.f32 %v7027, %v7147
  %v7160 = vadd.f32 %v7028, %v7148
  %v7161 = vadd.f32 %v7029, %v7149
  %v7162 = vadd.f32 %v7030, %v7150
  %v7163 = vadd.f32 %v7031, %v7151
  %v7164 = vadd.f32 %v7032, %v7152
  %v7165 = vadd.f32 %v7033, %v7153
  %v7166 = vadd.f32 %v7034, %v7154
  %v7167 = vadd.f32 %v7035, %v7155
  %v7168 = vadd.f32 %v7036, %v7156
  %s7169 = scalar_lea.vmem [#allocation2], 1344
  %v7170 = vld [vmem:[%s7169] sm:$0xff]
  %v7171 = vld [vmem:[%s7169 + $0x8] sm:$0xff]
  %v7172 = vld [vmem:[%s7169 + $0x10] sm:$0xff]
  %v7173 = vld [vmem:[%s7169 + $0x18] sm:$0xff]
  %v7174 = vld [vmem:[%s7169 + $0x20] sm:$0xff]
  %v7175 = vld [vmem:[%s7169 + $0x28] sm:$0xff]
  %v7176 = vld [vmem:[%s7169 + $0x30] sm:$0xff]
  %v7177 = vld [vmem:[%s7169 + $0x38] sm:$0xff]
  %v7178 = vld [vmem:[%s7169 + $0x40] sm:$0xff]
  %v7179 = vld [vmem:[%s7169 + $0x48] sm:$0xff]
  %v7180 = vld [vmem:[%s7169 + $0x50] sm:$0xff]
  %v7181 = vld [vmem:[%s7169 + $0x58] sm:$0xff]
  %v7182 = vrot.slane %v7170, 7
  %v7183 = vrot.slane %v7171, 7
  %v7184 = vrot.slane %v7172, 7
  %v7185 = vrot.slane %v7173, 7
  %v7186 = vrot.slane %v7174, 7
  %v7187 = vrot.slane %v7175, 7
  %v7188 = vrot.slane %v7176, 7
  %v7189 = vrot.slane %v7177, 7
  %v7190 = vrot.slane %v7178, 7
  %v7191 = vrot.slane %v7179, 7
  %v7192 = vrot.slane %v7180, 7
  %v7193 = vrot.slane %v7181, 7
  %v7194 = vsel %vm508, %v7182, %v7188
  %v7195 = vsel %vm508, %v7183, %v7189
  %v7196 = vsel %vm508, %v7184, %v7190
  %v7197 = vsel %vm508, %v7185, %v7191
  %v7198 = vsel %vm508, %v7186, %v7192
  %v7199 = vsel %vm508, %v7187, %v7193
  %v7200 = vsel %vm508, %v7188, %v7182
  %v7201 = vsel %vm508, %v7189, %v7183
  %v7202 = vsel %vm508, %v7190, %v7184
  %v7203 = vsel %vm508, %v7191, %v7185
  %v7204 = vsel %vm508, %v7192, %v7186
  %v7205 = vsel %vm508, %v7193, %v7187
  %v7206 = vmul.f32 %v7200, %v922
  %v7207 = vmul.f32 %v7201, %v926
  %v7208 = vmul.f32 %v7202, %v930
  %v7209 = vmul.f32 %v7203, %v934
  %v7210 = vmul.f32 %v7204, %v938
  %v7211 = vmul.f32 %v7205, %v942
  %v7212 = vmul.f32 %v7194, %v922
  %v7213 = vmul.f32 %v7195, %v926
  %v7214 = vmul.f32 %v7196, %v930
  %v7215 = vmul.f32 %v7197, %v934
  %v7216 = vmul.f32 %v7198, %v938
  %v7217 = vmul.f32 %v7199, %v942
  %v7218 = vmul.f32 %v7170, %v958
  %v7219 = vmul.f32 %v7171, %v962
  %v7220 = vmul.f32 %v7172, %v966
  %v7221 = vmul.f32 %v7173, %v970
  %v7222 = vmul.f32 %v7174, %v974
  %v7223 = vmul.f32 %v7175, %v978
  %v7224 = vmul.f32 %v7176, %v958
  %v7225 = vmul.f32 %v7177, %v962
  %v7226 = vmul.f32 %v7178, %v966
  %v7227 = vmul.f32 %v7179, %v970
  %v7228 = vmul.f32 %v7180, %v974
  %v7229 = vmul.f32 %v7181, %v978
  %v7230 = vadd.f32 %v7206, %v7218
  %v7231 = vadd.f32 %v7207, %v7219
  %v7232 = vadd.f32 %v7208, %v7220
  %v7233 = vadd.f32 %v7209, %v7221
  %v7234 = vadd.f32 %v7210, %v7222
  %v7235 = vadd.f32 %v7211, %v7223
  %v7236 = vadd.f32 %v7212, %v7224
  %v7237 = vadd.f32 %v7213, %v7225
  %v7238 = vadd.f32 %v7214, %v7226
  %v7239 = vadd.f32 %v7215, %v7227
  %v7240 = vadd.f32 %v7216, %v7228
  %v7241 = vadd.f32 %v7217, %v7229
  %v7242 = vrot.slane %v7170, 1
  %v7243 = vrot.slane %v7171, 1
  %v7244 = vrot.slane %v7172, 1
  %v7245 = vrot.slane %v7173, 1
  %v7246 = vrot.slane %v7174, 1
  %v7247 = vrot.slane %v7175, 1
  %v7248 = vrot.slane %v7176, 1
  %v7249 = vrot.slane %v7177, 1
  %v7250 = vrot.slane %v7178, 1
  %v7251 = vrot.slane %v7179, 1
  %v7252 = vrot.slane %v7180, 1
  %v7253 = vrot.slane %v7181, 1
  %v7254 = vsel %vm617, %v7242, %v7248
  %v7255 = vsel %vm617, %v7243, %v7249
  %v7256 = vsel %vm617, %v7244, %v7250
  %v7257 = vsel %vm617, %v7245, %v7251
  %v7258 = vsel %vm617, %v7246, %v7252
  %v7259 = vsel %vm617, %v7247, %v7253
  %v7260 = vsel %vm617, %v7248, %v7242
  %v7261 = vsel %vm617, %v7249, %v7243
  %v7262 = vsel %vm617, %v7250, %v7244
  %v7263 = vsel %vm617, %v7251, %v7245
  %v7264 = vsel %vm617, %v7252, %v7246
  %v7265 = vsel %vm617, %v7253, %v7247
  %v7266 = vmul.f32 %v7254, %v1030
  %v7267 = vmul.f32 %v7255, %v1034
  %v7268 = vmul.f32 %v7256, %v1038
  %v7269 = vmul.f32 %v7257, %v1042
  %v7270 = vmul.f32 %v7258, %v1046
  %v7271 = vmul.f32 %v7259, %v1050
  %v7272 = vmul.f32 %v7260, %v1030
  %v7273 = vmul.f32 %v7261, %v1034
  %v7274 = vmul.f32 %v7262, %v1038
  %v7275 = vmul.f32 %v7263, %v1042
  %v7276 = vmul.f32 %v7264, %v1046
  %v7277 = vmul.f32 %v7265, %v1050
  %v7278 = vadd.f32 %v7230, %v7266
  %v7279 = vadd.f32 %v7231, %v7267
  %v7280 = vadd.f32 %v7232, %v7268
  %v7281 = vadd.f32 %v7233, %v7269
  %v7282 = vadd.f32 %v7234, %v7270
  %v7283 = vadd.f32 %v7235, %v7271
  %v7284 = vadd.f32 %v7236, %v7272
  %v7285 = vadd.f32 %v7237, %v7273
  %v7286 = vadd.f32 %v7238, %v7274
  %v7287 = vadd.f32 %v7239, %v7275
  %v7288 = vadd.f32 %v7240, %v7276
  %v7289 = vadd.f32 %v7241, %v7277
  %v7290 = vadd.f32 %v7157, %v7278
  %v7291 = vadd.f32 %v7158, %v7279
  %v7292 = vadd.f32 %v7159, %v7280
  %v7293 = vadd.f32 %v7160, %v7281
  %v7294 = vadd.f32 %v7161, %v7282
  %v7295 = vadd.f32 %v7162, %v7283
  %v7296 = vadd.f32 %v7163, %v7284
  %v7297 = vadd.f32 %v7164, %v7285
  %v7298 = vadd.f32 %v7165, %v7286
  %v7299 = vadd.f32 %v7166, %v7287
  %v7300 = vadd.f32 %v7167, %v7288
  %v7301 = vadd.f32 %v7168, %v7289
  %s7302 = scalar_lea.vmem [#allocation3], 1152
  %7303 = vst [vmem:[%s7302] sm:$0xff] %v7290
  %7304 = vst [vmem:[%s7302 + $0x8] sm:$0xff] %v7291
  %7305 = vst [vmem:[%s7302 + $0x10] sm:$0xff] %v7292
  %7306 = vst [vmem:[%s7302 + $0x18] sm:$0xff] %v7293
  %7307 = vst [vmem:[%s7302 + $0x20] sm:$0xff] %v7294
  %7308 = vst [vmem:[%s7302 + $0x28] sm:$0xff] %v7295
  %7309 = vst [vmem:[%s7302 + $0x30] sm:$0xff] %v7296
  %7310 = vst [vmem:[%s7302 + $0x38] sm:$0xff] %v7297
  %7311 = vst [vmem:[%s7302 + $0x40] sm:$0xff] %v7298
  %7312 = vst [vmem:[%s7302 + $0x48] sm:$0xff] %v7299
  %7313 = vst [vmem:[%s7302 + $0x50] sm:$0xff] %v7300
  %7314 = vst [vmem:[%s7302 + $0x58] sm:$0xff] %v7301
  %v7315 = vmul.f32 %v7290, %v482
  %v7316 = vmul.f32 %v7291, %v482
  %v7317 = vmul.f32 %v7292, %v482
  %v7318 = vmul.f32 %v7293, %v482
  %v7319 = vmul.f32 %v7294, %v482
  %v7320 = vmul.f32 %v7295, %v482
  %v7321 = vmul.f32 %v7296, %v483
  %v7322 = vmul.f32 %v7297, %v483
  %v7323 = vmul.f32 %v7298, %v483
  %v7324 = vmul.f32 %v7299, %v483
  %v7325 = vmul.f32 %v7300, %v483
  %v7326 = vmul.f32 %v7301, %v483
  %v7327 = vadd.f32 %v7315, %v7321
  %v7328 = vrot.slane %v7327, 4
  %v7329 = vadd.f32 %v7327, %v7328
  %v7330 = vrot.slane %v7329, 2
  %v7331 = vadd.f32 %v7329, %v7330
  %v7332 = vrot.slane %v7331, 1
  %v7333 = vadd.f32 %v7331, %v7332
  %v7334 = vadd.f32 %v7316, %v7322
  %v7335 = vrot.slane %v7334, 4
  %v7336 = vadd.f32 %v7334, %v7335
  %v7337 = vrot.slane %v7336, 2
  %v7338 = vadd.f32 %v7336, %v7337
  %v7339 = vrot.slane %v7338, 1
  %v7340 = vadd.f32 %v7338, %v7339
  %v7341 = vadd.f32 %v7317, %v7323
  %v7342 = vrot.slane %v7341, 4
  %v7343 = vadd.f32 %v7341, %v7342
  %v7344 = vrot.slane %v7343, 2
  %v7345 = vadd.f32 %v7343, %v7344
  %v7346 = vrot.slane %v7345, 1
  %v7347 = vadd.f32 %v7345, %v7346
  %v7348 = vadd.f32 %v7318, %v7324
  %v7349 = vrot.slane %v7348, 4
  %v7350 = vadd.f32 %v7348, %v7349
  %v7351 = vrot.slane %v7350, 2
  %v7352 = vadd.f32 %v7350, %v7351
  %v7353 = vrot.slane %v7352, 1
  %v7354 = vadd.f32 %v7352, %v7353
  %v7355 = vadd.f32 %v7319, %v7325
  %v7356 = vrot.slane %v7355, 4
  %v7357 = vadd.f32 %v7355, %v7356
  %v7358 = vrot.slane %v7357, 2
  %v7359 = vadd.f32 %v7357, %v7358
  %v7360 = vrot.slane %v7359, 1
  %v7361 = vadd.f32 %v7359, %v7360
  %v7362 = vadd.f32 %v7320, %v7326
  %v7363 = vrot.slane %v7362, 4
  %v7364 = vadd.f32 %v7362, %v7363
  %v7365 = vrot.slane %v7364, 2
  %v7366 = vadd.f32 %v7364, %v7365
  %v7367 = vrot.slane %v7366, 1
  %v7368 = vadd.f32 %v7366, %v7367
  %v7369 = vadd.f32 %v6851, %v7333
  %v7370 = vadd.f32 %v6852, %v7340
  %v7371 = vadd.f32 %v6853, %v7347
  %v7372 = vadd.f32 %v6854, %v7354
  %v7373 = vadd.f32 %v6855, %v7361
  %v7374 = vadd.f32 %v6856, %v7368
  %v7375 = vmul.f32 %v7315, %v7290
  %v7376 = vmul.f32 %v7316, %v7291
  %v7377 = vmul.f32 %v7317, %v7292
  %v7378 = vmul.f32 %v7318, %v7293
  %v7379 = vmul.f32 %v7319, %v7294
  %v7380 = vmul.f32 %v7320, %v7295
  %v7381 = vmul.f32 %v7321, %v7296
  %v7382 = vmul.f32 %v7322, %v7297
  %v7383 = vmul.f32 %v7323, %v7298
  %v7384 = vmul.f32 %v7324, %v7299
  %v7385 = vmul.f32 %v7325, %v7300
  %v7386 = vmul.f32 %v7326, %v7301
  %v7387 = vadd.f32 %v7375, %v7381
  %v7388 = vrot.slane %v7387, 4
  %v7389 = vadd.f32 %v7387, %v7388
  %v7390 = vrot.slane %v7389, 2
  %v7391 = vadd.f32 %v7389, %v7390
  %v7392 = vrot.slane %v7391, 1
  %v7393 = vadd.f32 %v7391, %v7392
  %v7394 = vadd.f32 %v7376, %v7382
  %v7395 = vrot.slane %v7394, 4
  %v7396 = vadd.f32 %v7394, %v7395
  %v7397 = vrot.slane %v7396, 2
  %v7398 = vadd.f32 %v7396, %v7397
  %v7399 = vrot.slane %v7398, 1
  %v7400 = vadd.f32 %v7398, %v7399
  %v7401 = vadd.f32 %v7377, %v7383
  %v7402 = vrot.slane %v7401, 4
  %v7403 = vadd.f32 %v7401, %v7402
  %v7404 = vrot.slane %v7403, 2
  %v7405 = vadd.f32 %v7403, %v7404
  %v7406 = vrot.slane %v7405, 1
  %v7407 = vadd.f32 %v7405, %v7406
  %v7408 = vadd.f32 %v7378, %v7384
  %v7409 = vrot.slane %v7408, 4
  %v7410 = vadd.f32 %v7408, %v7409
  %v7411 = vrot.slane %v7410, 2
  %v7412 = vadd.f32 %v7410, %v7411
  %v7413 = vrot.slane %v7412, 1
  %v7414 = vadd.f32 %v7412, %v7413
  %v7415 = vadd.f32 %v7379, %v7385
  %v7416 = vrot.slane %v7415, 4
  %v7417 = vadd.f32 %v7415, %v7416
  %v7418 = vrot.slane %v7417, 2
  %v7419 = vadd.f32 %v7417, %v7418
  %v7420 = vrot.slane %v7419, 1
  %v7421 = vadd.f32 %v7419, %v7420
  %v7422 = vadd.f32 %v7380, %v7386
  %v7423 = vrot.slane %v7422, 4
  %v7424 = vadd.f32 %v7422, %v7423
  %v7425 = vrot.slane %v7424, 2
  %v7426 = vadd.f32 %v7424, %v7425
  %v7427 = vrot.slane %v7426, 1
  %v7428 = vadd.f32 %v7426, %v7427
  %v7429 = vadd.f32 %v6911, %v7393
  %v7430 = vadd.f32 %v6912, %v7400
  %v7431 = vadd.f32 %v6913, %v7407
  %v7432 = vadd.f32 %v6914, %v7414
  %v7433 = vadd.f32 %v6915, %v7421
  %v7434 = vadd.f32 %v6916, %v7428
  %v7435 = vld [vmem:[%s6651] sm:$0xff]
  %v7436 = vld [vmem:[%s6651 + $0x8] sm:$0xff]
  %v7437 = vld [vmem:[%s6651 + $0x10] sm:$0xff]
  %v7438 = vld [vmem:[%s6651 + $0x18] sm:$0xff]
  %v7439 = vld [vmem:[%s6651 + $0x20] sm:$0xff]
  %v7440 = vld [vmem:[%s6651 + $0x28] sm:$0xff]
  %v7441 = vld [vmem:[%s6651 + $0x30] sm:$0xff]
  %v7442 = vld [vmem:[%s6651 + $0x38] sm:$0xff]
  %v7443 = vld [vmem:[%s6651 + $0x40] sm:$0xff]
  %v7444 = vld [vmem:[%s6651 + $0x48] sm:$0xff]
  %v7445 = vld [vmem:[%s6651 + $0x50] sm:$0xff]
  %v7446 = vld [vmem:[%s6651 + $0x58] sm:$0xff]
  %v7447 = vrot.slane %v7435, 7
  %v7448 = vrot.slane %v7436, 7
  %v7449 = vrot.slane %v7437, 7
  %v7450 = vrot.slane %v7438, 7
  %v7451 = vrot.slane %v7439, 7
  %v7452 = vrot.slane %v7440, 7
  %v7453 = vrot.slane %v7441, 7
  %v7454 = vrot.slane %v7442, 7
  %v7455 = vrot.slane %v7443, 7
  %v7456 = vrot.slane %v7444, 7
  %v7457 = vrot.slane %v7445, 7
  %v7458 = vrot.slane %v7446, 7
  %v7459 = vsel %vm508, %v7447, %v7453
  %v7460 = vsel %vm508, %v7448, %v7454
  %v7461 = vsel %vm508, %v7449, %v7455
  %v7462 = vsel %vm508, %v7450, %v7456
  %v7463 = vsel %vm508, %v7451, %v7457
  %v7464 = vsel %vm508, %v7452, %v7458
  %v7465 = vsel %vm508, %v7453, %v7447
  %v7466 = vsel %vm508, %v7454, %v7448
  %v7467 = vsel %vm508, %v7455, %v7449
  %v7468 = vsel %vm508, %v7456, %v7450
  %v7469 = vsel %vm508, %v7457, %v7451
  %v7470 = vsel %vm508, %v7458, %v7452
  %v7471 = vmul.f32 %v7465, %v524
  %v7472 = vmul.f32 %v7466, %v528
  %v7473 = vmul.f32 %v7467, %v532
  %v7474 = vmul.f32 %v7468, %v536
  %v7475 = vmul.f32 %v7469, %v540
  %v7476 = vmul.f32 %v7470, %v544
  %v7477 = vmul.f32 %v7459, %v524
  %v7478 = vmul.f32 %v7460, %v528
  %v7479 = vmul.f32 %v7461, %v532
  %v7480 = vmul.f32 %v7462, %v536
  %v7481 = vmul.f32 %v7463, %v540
  %v7482 = vmul.f32 %v7464, %v544
  %v7483 = vmul.f32 %v7435, %v560
  %v7484 = vmul.f32 %v7436, %v564
  %v7485 = vmul.f32 %v7437, %v568
  %v7486 = vmul.f32 %v7438, %v572
  %v7487 = vmul.f32 %v7439, %v576
  %v7488 = vmul.f32 %v7440, %v580
  %v7489 = vmul.f32 %v7441, %v560
  %v7490 = vmul.f32 %v7442, %v564
  %v7491 = vmul.f32 %v7443, %v568
  %v7492 = vmul.f32 %v7444, %v572
  %v7493 = vmul.f32 %v7445, %v576
  %v7494 = vmul.f32 %v7446, %v580
  %v7495 = vadd.f32 %v7471, %v7483
  %v7496 = vadd.f32 %v7472, %v7484
  %v7497 = vadd.f32 %v7473, %v7485
  %v7498 = vadd.f32 %v7474, %v7486
  %v7499 = vadd.f32 %v7475, %v7487
  %v7500 = vadd.f32 %v7476, %v7488
  %v7501 = vadd.f32 %v7477, %v7489
  %v7502 = vadd.f32 %v7478, %v7490
  %v7503 = vadd.f32 %v7479, %v7491
  %v7504 = vadd.f32 %v7480, %v7492
  %v7505 = vadd.f32 %v7481, %v7493
  %v7506 = vadd.f32 %v7482, %v7494
  %v7507 = vrot.slane %v7435, 1
  %v7508 = vrot.slane %v7436, 1
  %v7509 = vrot.slane %v7437, 1
  %v7510 = vrot.slane %v7438, 1
  %v7511 = vrot.slane %v7439, 1
  %v7512 = vrot.slane %v7440, 1
  %v7513 = vrot.slane %v7441, 1
  %v7514 = vrot.slane %v7442, 1
  %v7515 = vrot.slane %v7443, 1
  %v7516 = vrot.slane %v7444, 1
  %v7517 = vrot.slane %v7445, 1
  %v7518 = vrot.slane %v7446, 1
  %v7519 = vsel %vm617, %v7507, %v7513
  %v7520 = vsel %vm617, %v7508, %v7514
  %v7521 = vsel %vm617, %v7509, %v7515
  %v7522 = vsel %vm617, %v7510, %v7516
  %v7523 = vsel %vm617, %v7511, %v7517
  %v7524 = vsel %vm617, %v7512, %v7518
  %v7525 = vsel %vm617, %v7513, %v7507
  %v7526 = vsel %vm617, %v7514, %v7508
  %v7527 = vsel %vm617, %v7515, %v7509
  %v7528 = vsel %vm617, %v7516, %v7510
  %v7529 = vsel %vm617, %v7517, %v7511
  %v7530 = vsel %vm617, %v7518, %v7512
  %v7531 = vmul.f32 %v7519, %v633
  %v7532 = vmul.f32 %v7520, %v637
  %v7533 = vmul.f32 %v7521, %v641
  %v7534 = vmul.f32 %v7522, %v645
  %v7535 = vmul.f32 %v7523, %v649
  %v7536 = vmul.f32 %v7524, %v653
  %v7537 = vmul.f32 %v7525, %v633
  %v7538 = vmul.f32 %v7526, %v637
  %v7539 = vmul.f32 %v7527, %v641
  %v7540 = vmul.f32 %v7528, %v645
  %v7541 = vmul.f32 %v7529, %v649
  %v7542 = vmul.f32 %v7530, %v653
  %v7543 = vadd.f32 %v7495, %v7531
  %v7544 = vadd.f32 %v7496, %v7532
  %v7545 = vadd.f32 %v7497, %v7533
  %v7546 = vadd.f32 %v7498, %v7534
  %v7547 = vadd.f32 %v7499, %v7535
  %v7548 = vadd.f32 %v7500, %v7536
  %v7549 = vadd.f32 %v7501, %v7537
  %v7550 = vadd.f32 %v7502, %v7538
  %v7551 = vadd.f32 %v7503, %v7539
  %v7552 = vadd.f32 %v7504, %v7540
  %v7553 = vadd.f32 %v7505, %v7541
  %v7554 = vadd.f32 %v7506, %v7542
  %v7555 = vld [vmem:[%s7169] sm:$0xff]
  %v7556 = vld [vmem:[%s7169 + $0x8] sm:$0xff]
  %v7557 = vld [vmem:[%s7169 + $0x10] sm:$0xff]
  %v7558 = vld [vmem:[%s7169 + $0x18] sm:$0xff]
  %v7559 = vld [vmem:[%s7169 + $0x20] sm:$0xff]
  %v7560 = vld [vmem:[%s7169 + $0x28] sm:$0xff]
  %v7561 = vld [vmem:[%s7169 + $0x30] sm:$0xff]
  %v7562 = vld [vmem:[%s7169 + $0x38] sm:$0xff]
  %v7563 = vld [vmem:[%s7169 + $0x40] sm:$0xff]
  %v7564 = vld [vmem:[%s7169 + $0x48] sm:$0xff]
  %v7565 = vld [vmem:[%s7169 + $0x50] sm:$0xff]
  %v7566 = vld [vmem:[%s7169 + $0x58] sm:$0xff]
  %v7567 = vrot.slane %v7555, 7
  %v7568 = vrot.slane %v7556, 7
  %v7569 = vrot.slane %v7557, 7
  %v7570 = vrot.slane %v7558, 7
  %v7571 = vrot.slane %v7559, 7
  %v7572 = vrot.slane %v7560, 7
  %v7573 = vrot.slane %v7561, 7
  %v7574 = vrot.slane %v7562, 7
  %v7575 = vrot.slane %v7563, 7
  %v7576 = vrot.slane %v7564, 7
  %v7577 = vrot.slane %v7565, 7
  %v7578 = vrot.slane %v7566, 7
  %v7579 = vsel %vm508, %v7567, %v7573
  %v7580 = vsel %vm508, %v7568, %v7574
  %v7581 = vsel %vm508, %v7569, %v7575
  %v7582 = vsel %vm508, %v7570, %v7576
  %v7583 = vsel %vm508, %v7571, %v7577
  %v7584 = vsel %vm508, %v7572, %v7578
  %v7585 = vsel %vm508, %v7573, %v7567
  %v7586 = vsel %vm508, %v7574, %v7568
  %v7587 = vsel %vm508, %v7575, %v7569
  %v7588 = vsel %vm508, %v7576, %v7570
  %v7589 = vsel %vm508, %v7577, %v7571
  %v7590 = vsel %vm508, %v7578, %v7572
  %v7591 = vmul.f32 %v7585, %v717
  %v7592 = vmul.f32 %v7586, %v721
  %v7593 = vmul.f32 %v7587, %v725
  %v7594 = vmul.f32 %v7588, %v729
  %v7595 = vmul.f32 %v7589, %v733
  %v7596 = vmul.f32 %v7590, %v737
  %v7597 = vmul.f32 %v7579, %v717
  %v7598 = vmul.f32 %v7580, %v721
  %v7599 = vmul.f32 %v7581, %v725
  %v7600 = vmul.f32 %v7582, %v729
  %v7601 = vmul.f32 %v7583, %v733
  %v7602 = vmul.f32 %v7584, %v737
  %v7603 = vmul.f32 %v7555, %v753
  %v7604 = vmul.f32 %v7556, %v757
  %v7605 = vmul.f32 %v7557, %v761
  %v7606 = vmul.f32 %v7558, %v765
  %v7607 = vmul.f32 %v7559, %v769
  %v7608 = vmul.f32 %v7560, %v773
  %v7609 = vmul.f32 %v7561, %v753
  %v7610 = vmul.f32 %v7562, %v757
  %v7611 = vmul.f32 %v7563, %v761
  %v7612 = vmul.f32 %v7564, %v765
  %v7613 = vmul.f32 %v7565, %v769
  %v7614 = vmul.f32 %v7566, %v773
  %v7615 = vadd.f32 %v7591, %v7603
  %v7616 = vadd.f32 %v7592, %v7604
  %v7617 = vadd.f32 %v7593, %v7605
  %v7618 = vadd.f32 %v7594, %v7606
  %v7619 = vadd.f32 %v7595, %v7607
  %v7620 = vadd.f32 %v7596, %v7608
  %v7621 = vadd.f32 %v7597, %v7609
  %v7622 = vadd.f32 %v7598, %v7610
  %v7623 = vadd.f32 %v7599, %v7611
  %v7624 = vadd.f32 %v7600, %v7612
  %v7625 = vadd.f32 %v7601, %v7613
  %v7626 = vadd.f32 %v7602, %v7614
  %v7627 = vrot.slane %v7555, 1
  %v7628 = vrot.slane %v7556, 1
  %v7629 = vrot.slane %v7557, 1
  %v7630 = vrot.slane %v7558, 1
  %v7631 = vrot.slane %v7559, 1
  %v7632 = vrot.slane %v7560, 1
  %v7633 = vrot.slane %v7561, 1
  %v7634 = vrot.slane %v7562, 1
  %v7635 = vrot.slane %v7563, 1
  %v7636 = vrot.slane %v7564, 1
  %v7637 = vrot.slane %v7565, 1
  %v7638 = vrot.slane %v7566, 1
  %v7639 = vsel %vm617, %v7627, %v7633
  %v7640 = vsel %vm617, %v7628, %v7634
  %v7641 = vsel %vm617, %v7629, %v7635
  %v7642 = vsel %vm617, %v7630, %v7636
  %v7643 = vsel %vm617, %v7631, %v7637
  %v7644 = vsel %vm617, %v7632, %v7638
  %v7645 = vsel %vm617, %v7633, %v7627
  %v7646 = vsel %vm617, %v7634, %v7628
  %v7647 = vsel %vm617, %v7635, %v7629
  %v7648 = vsel %vm617, %v7636, %v7630
  %v7649 = vsel %vm617, %v7637, %v7631
  %v7650 = vsel %vm617, %v7638, %v7632
  %v7651 = vmul.f32 %v7639, %v825
  %v7652 = vmul.f32 %v7640, %v829
  %v7653 = vmul.f32 %v7641, %v833
  %v7654 = vmul.f32 %v7642, %v837
  %v7655 = vmul.f32 %v7643, %v841
  %v7656 = vmul.f32 %v7644, %v845
  %v7657 = vmul.f32 %v7645, %v825
  %v7658 = vmul.f32 %v7646, %v829
  %v7659 = vmul.f32 %v7647, %v833
  %v7660 = vmul.f32 %v7648, %v837
  %v7661 = vmul.f32 %v7649, %v841
  %v7662 = vmul.f32 %v7650, %v845
  %v7663 = vadd.f32 %v7615, %v7651
  %v7664 = vadd.f32 %v7616, %v7652
  %v7665 = vadd.f32 %v7617, %v7653
  %v7666 = vadd.f32 %v7618, %v7654
  %v7667 = vadd.f32 %v7619, %v7655
  %v7668 = vadd.f32 %v7620, %v7656
  %v7669 = vadd.f32 %v7621, %v7657
  %v7670 = vadd.f32 %v7622, %v7658
  %v7671 = vadd.f32 %v7623, %v7659
  %v7672 = vadd.f32 %v7624, %v7660
  %v7673 = vadd.f32 %v7625, %v7661
  %v7674 = vadd.f32 %v7626, %v7662
  %v7675 = vadd.f32 %v7543, %v7663
  %v7676 = vadd.f32 %v7544, %v7664
  %v7677 = vadd.f32 %v7545, %v7665
  %v7678 = vadd.f32 %v7546, %v7666
  %v7679 = vadd.f32 %v7547, %v7667
  %v7680 = vadd.f32 %v7548, %v7668
  %v7681 = vadd.f32 %v7549, %v7669
  %v7682 = vadd.f32 %v7550, %v7670
  %v7683 = vadd.f32 %v7551, %v7671
  %v7684 = vadd.f32 %v7552, %v7672
  %v7685 = vadd.f32 %v7553, %v7673
  %v7686 = vadd.f32 %v7554, %v7674
  %v7687 = vld [vmem:[%s29] sm:$0xff]
  %v7688 = vld [vmem:[%s29 + $0x8] sm:$0xff]
  %v7689 = vld [vmem:[%s29 + $0x10] sm:$0xff]
  %v7690 = vld [vmem:[%s29 + $0x18] sm:$0xff]
  %v7691 = vld [vmem:[%s29 + $0x20] sm:$0xff]
  %v7692 = vld [vmem:[%s29 + $0x28] sm:$0xff]
  %v7693 = vld [vmem:[%s29 + $0x30] sm:$0xff]
  %v7694 = vld [vmem:[%s29 + $0x38] sm:$0xff]
  %v7695 = vld [vmem:[%s29 + $0x40] sm:$0xff]
  %v7696 = vld [vmem:[%s29 + $0x48] sm:$0xff]
  %v7697 = vld [vmem:[%s29 + $0x50] sm:$0xff]
  %v7698 = vld [vmem:[%s29 + $0x58] sm:$0xff]
  %v7699 = vrot.slane %v7687, 7
  %v7700 = vrot.slane %v7688, 7
  %v7701 = vrot.slane %v7689, 7
  %v7702 = vrot.slane %v7690, 7
  %v7703 = vrot.slane %v7691, 7
  %v7704 = vrot.slane %v7692, 7
  %v7705 = vrot.slane %v7693, 7
  %v7706 = vrot.slane %v7694, 7
  %v7707 = vrot.slane %v7695, 7
  %v7708 = vrot.slane %v7696, 7
  %v7709 = vrot.slane %v7697, 7
  %v7710 = vrot.slane %v7698, 7
  %v7711 = vsel %vm508, %v7699, %v7705
  %v7712 = vsel %vm508, %v7700, %v7706
  %v7713 = vsel %vm508, %v7701, %v7707
  %v7714 = vsel %vm508, %v7702, %v7708
  %v7715 = vsel %vm508, %v7703, %v7709
  %v7716 = vsel %vm508, %v7704, %v7710
  %v7717 = vsel %vm508, %v7705, %v7699
  %v7718 = vsel %vm508, %v7706, %v7700
  %v7719 = vsel %vm508, %v7707, %v7701
  %v7720 = vsel %vm508, %v7708, %v7702
  %v7721 = vsel %vm508, %v7709, %v7703
  %v7722 = vsel %vm508, %v7710, %v7704
  %v7723 = vmul.f32 %v7717, %v922
  %v7724 = vmul.f32 %v7718, %v926
  %v7725 = vmul.f32 %v7719, %v930
  %v7726 = vmul.f32 %v7720, %v934
  %v7727 = vmul.f32 %v7721, %v938
  %v7728 = vmul.f32 %v7722, %v942
  %v7729 = vmul.f32 %v7711, %v922
  %v7730 = vmul.f32 %v7712, %v926
  %v7731 = vmul.f32 %v7713, %v930
  %v7732 = vmul.f32 %v7714, %v934
  %v7733 = vmul.f32 %v7715, %v938
  %v7734 = vmul.f32 %v7716, %v942
  %v7735 = vmul.f32 %v7687, %v958
  %v7736 = vmul.f32 %v7688, %v962
  %v7737 = vmul.f32 %v7689, %v966
  %v7738 = vmul.f32 %v7690, %v970
  %v7739 = vmul.f32 %v7691, %v974
  %v7740 = vmul.f32 %v7692, %v978
  %v7741 = vmul.f32 %v7693, %v958
  %v7742 = vmul.f32 %v7694, %v962
  %v7743 = vmul.f32 %v7695, %v966
  %v7744 = vmul.f32 %v7696, %v970
  %v7745 = vmul.f32 %v7697, %v974
  %v7746 = vmul.f32 %v7698, %v978
  %v7747 = vadd.f32 %v7723, %v7735
  %v7748 = vadd.f32 %v7724, %v7736
  %v7749 = vadd.f32 %v7725, %v7737
  %v7750 = vadd.f32 %v7726, %v7738
  %v7751 = vadd.f32 %v7727, %v7739
  %v7752 = vadd.f32 %v7728, %v7740
  %v7753 = vadd.f32 %v7729, %v7741
  %v7754 = vadd.f32 %v7730, %v7742
  %v7755 = vadd.f32 %v7731, %v7743
  %v7756 = vadd.f32 %v7732, %v7744
  %v7757 = vadd.f32 %v7733, %v7745
  %v7758 = vadd.f32 %v7734, %v7746
  %v7759 = vrot.slane %v7687, 1
  %v7760 = vrot.slane %v7688, 1
  %v7761 = vrot.slane %v7689, 1
  %v7762 = vrot.slane %v7690, 1
  %v7763 = vrot.slane %v7691, 1
  %v7764 = vrot.slane %v7692, 1
  %v7765 = vrot.slane %v7693, 1
  %v7766 = vrot.slane %v7694, 1
  %v7767 = vrot.slane %v7695, 1
  %v7768 = vrot.slane %v7696, 1
  %v7769 = vrot.slane %v7697, 1
  %v7770 = vrot.slane %v7698, 1
  %v7771 = vsel %vm617, %v7759, %v7765
  %v7772 = vsel %vm617, %v7760, %v7766
  %v7773 = vsel %vm617, %v7761, %v7767
  %v7774 = vsel %vm617, %v7762, %v7768
  %v7775 = vsel %vm617, %v7763, %v7769
  %v7776 = vsel %vm617, %v7764, %v7770
  %v7777 = vsel %vm617, %v7765, %v7759
  %v7778 = vsel %vm617, %v7766, %v7760
  %v7779 = vsel %vm617, %v7767, %v7761
  %v7780 = vsel %vm617, %v7768, %v7762
  %v7781 = vsel %vm617, %v7769, %v7763
  %v7782 = vsel %vm617, %v7770, %v7764
  %v7783 = vmul.f32 %v7771, %v1030
  %v7784 = vmul.f32 %v7772, %v1034
  %v7785 = vmul.f32 %v7773, %v1038
  %v7786 = vmul.f32 %v7774, %v1042
  %v7787 = vmul.f32 %v7775, %v1046
  %v7788 = vmul.f32 %v7776, %v1050
  %v7789 = vmul.f32 %v7777, %v1030
  %v7790 = vmul.f32 %v7778, %v1034
  %v7791 = vmul.f32 %v7779, %v1038
  %v7792 = vmul.f32 %v7780, %v1042
  %v7793 = vmul.f32 %v7781, %v1046
  %v7794 = vmul.f32 %v7782, %v1050
  %v7795 = vadd.f32 %v7747, %v7783
  %v7796 = vadd.f32 %v7748, %v7784
  %v7797 = vadd.f32 %v7749, %v7785
  %v7798 = vadd.f32 %v7750, %v7786
  %v7799 = vadd.f32 %v7751, %v7787
  %v7800 = vadd.f32 %v7752, %v7788
  %v7801 = vadd.f32 %v7753, %v7789
  %v7802 = vadd.f32 %v7754, %v7790
  %v7803 = vadd.f32 %v7755, %v7791
  %v7804 = vadd.f32 %v7756, %v7792
  %v7805 = vadd.f32 %v7757, %v7793
  %v7806 = vadd.f32 %v7758, %v7794
  %v7807 = vadd.f32 %v7675, %v7795
  %v7808 = vadd.f32 %v7676, %v7796
  %v7809 = vadd.f32 %v7677, %v7797
  %v7810 = vadd.f32 %v7678, %v7798
  %v7811 = vadd.f32 %v7679, %v7799
  %v7812 = vadd.f32 %v7680, %v7800
  %v7813 = vadd.f32 %v7681, %v7801
  %v7814 = vadd.f32 %v7682, %v7802
  %v7815 = vadd.f32 %v7683, %v7803
  %v7816 = vadd.f32 %v7684, %v7804
  %v7817 = vadd.f32 %v7685, %v7805
  %v7818 = vadd.f32 %v7686, %v7806
  %s7819 = scalar_lea.vmem [#allocation3], 1248
  %7820 = vst [vmem:[%s7819] sm:$0xff] %v7807
  %7821 = vst [vmem:[%s7819 + $0x8] sm:$0xff] %v7808
  %7822 = vst [vmem:[%s7819 + $0x10] sm:$0xff] %v7809
  %7823 = vst [vmem:[%s7819 + $0x18] sm:$0xff] %v7810
  %7824 = vst [vmem:[%s7819 + $0x20] sm:$0xff] %v7811
  %7825 = vst [vmem:[%s7819 + $0x28] sm:$0xff] %v7812
  %7826 = vst [vmem:[%s7819 + $0x30] sm:$0xff] %v7813
  %7827 = vst [vmem:[%s7819 + $0x38] sm:$0xff] %v7814
  %7828 = vst [vmem:[%s7819 + $0x40] sm:$0xff] %v7815
  %7829 = vst [vmem:[%s7819 + $0x48] sm:$0xff] %v7816
  %7830 = vst [vmem:[%s7819 + $0x50] sm:$0xff] %v7817
  %7831 = vst [vmem:[%s7819 + $0x58] sm:$0xff] %v7818
  %v7832 = vmul.f32 %v7807, %v482
  %v7833 = vmul.f32 %v7808, %v482
  %v7834 = vmul.f32 %v7809, %v482
  %v7835 = vmul.f32 %v7810, %v482
  %v7836 = vmul.f32 %v7811, %v482
  %v7837 = vmul.f32 %v7812, %v482
  %v7838 = vmul.f32 %v7813, %v483
  %v7839 = vmul.f32 %v7814, %v483
  %v7840 = vmul.f32 %v7815, %v483
  %v7841 = vmul.f32 %v7816, %v483
  %v7842 = vmul.f32 %v7817, %v483
  %v7843 = vmul.f32 %v7818, %v483
  %v7844 = vadd.f32 %v7832, %v7838
  %v7845 = vrot.slane %v7844, 4
  %v7846 = vadd.f32 %v7844, %v7845
  %v7847 = vrot.slane %v7846, 2
  %v7848 = vadd.f32 %v7846, %v7847
  %v7849 = vrot.slane %v7848, 1
  %v7850 = vadd.f32 %v7848, %v7849
  %v7851 = vadd.f32 %v7833, %v7839
  %v7852 = vrot.slane %v7851, 4
  %v7853 = vadd.f32 %v7851, %v7852
  %v7854 = vrot.slane %v7853, 2
  %v7855 = vadd.f32 %v7853, %v7854
  %v7856 = vrot.slane %v7855, 1
  %v7857 = vadd.f32 %v7855, %v7856
  %v7858 = vadd.f32 %v7834, %v7840
  %v7859 = vrot.slane %v7858, 4
  %v7860 = vadd.f32 %v7858, %v7859
  %v7861 = vrot.slane %v7860, 2
  %v7862 = vadd.f32 %v7860, %v7861
  %v7863 = vrot.slane %v7862, 1
  %v7864 = vadd.f32 %v7862, %v7863
  %v7865 = vadd.f32 %v7835, %v7841
  %v7866 = vrot.slane %v7865, 4
  %v7867 = vadd.f32 %v7865, %v7866
  %v7868 = vrot.slane %v7867, 2
  %v7869 = vadd.f32 %v7867, %v7868
  %v7870 = vrot.slane %v7869, 1
  %v7871 = vadd.f32 %v7869, %v7870
  %v7872 = vadd.f32 %v7836, %v7842
  %v7873 = vrot.slane %v7872, 4
  %v7874 = vadd.f32 %v7872, %v7873
  %v7875 = vrot.slane %v7874, 2
  %v7876 = vadd.f32 %v7874, %v7875
  %v7877 = vrot.slane %v7876, 1
  %v7878 = vadd.f32 %v7876, %v7877
  %v7879 = vadd.f32 %v7837, %v7843
  %v7880 = vrot.slane %v7879, 4
  %v7881 = vadd.f32 %v7879, %v7880
  %v7882 = vrot.slane %v7881, 2
  %v7883 = vadd.f32 %v7881, %v7882
  %v7884 = vrot.slane %v7883, 1
  %v7885 = vadd.f32 %v7883, %v7884
  %v7886 = vadd.f32 %v7369, %v7850
  %v7887 = vadd.f32 %v7370, %v7857
  %v7888 = vadd.f32 %v7371, %v7864
  %v7889 = vadd.f32 %v7372, %v7871
  %v7890 = vadd.f32 %v7373, %v7878
  %v7891 = vadd.f32 %v7374, %v7885
  %v7892 = vmul.f32 %v7832, %v7807
  %v7893 = vmul.f32 %v7833, %v7808
  %v7894 = vmul.f32 %v7834, %v7809
  %v7895 = vmul.f32 %v7835, %v7810
  %v7896 = vmul.f32 %v7836, %v7811
  %v7897 = vmul.f32 %v7837, %v7812
  %v7898 = vmul.f32 %v7838, %v7813
  %v7899 = vmul.f32 %v7839, %v7814
  %v7900 = vmul.f32 %v7840, %v7815
  %v7901 = vmul.f32 %v7841, %v7816
  %v7902 = vmul.f32 %v7842, %v7817
  %v7903 = vmul.f32 %v7843, %v7818
  %v7904 = vadd.f32 %v7892, %v7898
  %v7905 = vrot.slane %v7904, 4
  %v7906 = vadd.f32 %v7904, %v7905
  %v7907 = vrot.slane %v7906, 2
  %v7908 = vadd.f32 %v7906, %v7907
  %v7909 = vrot.slane %v7908, 1
  %v7910 = vadd.f32 %v7908, %v7909
  %v7911 = vadd.f32 %v7893, %v7899
  %v7912 = vrot.slane %v7911, 4
  %v7913 = vadd.f32 %v7911, %v7912
  %v7914 = vrot.slane %v7913, 2
  %v7915 = vadd.f32 %v7913, %v7914
  %v7916 = vrot.slane %v7915, 1
  %v7917 = vadd.f32 %v7915, %v7916
  %v7918 = vadd.f32 %v7894, %v7900
  %v7919 = vrot.slane %v7918, 4
  %v7920 = vadd.f32 %v7918, %v7919
  %v7921 = vrot.slane %v7920, 2
  %v7922 = vadd.f32 %v7920, %v7921
  %v7923 = vrot.slane %v7922, 1
  %v7924 = vadd.f32 %v7922, %v7923
  %v7925 = vadd.f32 %v7895, %v7901
  %v7926 = vrot.slane %v7925, 4
  %v7927 = vadd.f32 %v7925, %v7926
  %v7928 = vrot.slane %v7927, 2
  %v7929 = vadd.f32 %v7927, %v7928
  %v7930 = vrot.slane %v7929, 1
  %v7931 = vadd.f32 %v7929, %v7930
  %v7932 = vadd.f32 %v7896, %v7902
  %v7933 = vrot.slane %v7932, 4
  %v7934 = vadd.f32 %v7932, %v7933
  %v7935 = vrot.slane %v7934, 2
  %v7936 = vadd.f32 %v7934, %v7935
  %v7937 = vrot.slane %v7936, 1
  %v7938 = vadd.f32 %v7936, %v7937
  %v7939 = vadd.f32 %v7897, %v7903
  %v7940 = vrot.slane %v7939, 4
  %v7941 = vadd.f32 %v7939, %v7940
  %v7942 = vrot.slane %v7941, 2
  %v7943 = vadd.f32 %v7941, %v7942
  %v7944 = vrot.slane %v7943, 1
  %v7945 = vadd.f32 %v7943, %v7944
  %v7946 = vadd.f32 %v7429, %v7910
  %v7947 = vadd.f32 %v7430, %v7917
  %v7948 = vadd.f32 %v7431, %v7924
  %v7949 = vadd.f32 %v7432, %v7931
  %v7950 = vadd.f32 %v7433, %v7938
  %v7951 = vadd.f32 %v7434, %v7945
  %v7952 = vadd.f32 %v7886, 0.0
  %v7953 = vadd.f32 %v7887, 0.0
  %v7954 = vadd.f32 %v7888, 0.0
  %v7955 = vadd.f32 %v7889, 0.0
  %v7956 = vadd.f32 %v7890, 0.0
  %v7957 = vadd.f32 %v7891, 0.0
  %v7958 = vrcp.pop 196.0
  %v7959 = vmul.f32 %v7952, %v7958
  %v7960 = vmul.f32 %v7953, %v7958
  %v7961 = vmul.f32 %v7954, %v7958
  %v7962 = vmul.f32 %v7955, %v7958
  %v7963 = vmul.f32 %v7956, %v7958
  %v7964 = vmul.f32 %v7957, %v7958
  %v7965 = vadd.f32 %v7946, 0.0
  %v7966 = vadd.f32 %v7947, 0.0
  %v7967 = vadd.f32 %v7948, 0.0
  %v7968 = vadd.f32 %v7949, 0.0
  %v7969 = vadd.f32 %v7950, 0.0
  %v7970 = vadd.f32 %v7951, 0.0
  %v7971 = vmul.f32 %v7965, %v7958
  %v7972 = vmul.f32 %v7966, %v7958
  %v7973 = vmul.f32 %v7967, %v7958
  %v7974 = vmul.f32 %v7968, %v7958
  %v7975 = vmul.f32 %v7969, %v7958
  %v7976 = vmul.f32 %v7970, %v7958
  %v7977 = vmul.f32 %v7959, %v7959
  %v7978 = vmul.f32 %v7960, %v7960
  %v7979 = vmul.f32 %v7961, %v7961
  %v7980 = vmul.f32 %v7962, %v7962
  %v7981 = vmul.f32 %v7963, %v7963
  %v7982 = vmul.f32 %v7964, %v7964
  %v7983 = vsub.f32 %v7971, %v7977
  %v7984 = vsub.f32 %v7972, %v7978
  %v7985 = vsub.f32 %v7973, %v7979
  %v7986 = vsub.f32 %v7974, %v7980
  %v7987 = vsub.f32 %v7975, %v7981
  %v7988 = vsub.f32 %v7976, %v7982
  %v7989 = vadd.f32 %v7983, 0.001
  %v7990 = vadd.f32 %v7984, 0.001
  %v7991 = vadd.f32 %v7985, 0.001
  %v7992 = vadd.f32 %v7986, 0.001
  %v7993 = vadd.f32 %v7987, 0.001
  %v7994 = vadd.f32 %v7988, 0.001
  %v7995 = vrsqrt.pop %v7989
  %v7996 = vrsqrt.pop %v7990
  %v7997 = vrsqrt.pop %v7991
  %v7998 = vrsqrt.pop %v7992
  %v7999 = vrsqrt.pop %v7993
  %v8000 = vrsqrt.pop %v7994
  %v8001 = vld [vmem:[%s2] sm:$0x3f]
  %v8002 = vld [vmem:[%s3] sm:$0x3f]
  %v8009 = vcombine.low %v7995, %v7996
  %v8010 = vcombine.low %v7997, %v7998
  %v8011 = vcombine.low %v7999, %v8000
  %v8013 = vunpack.c.l.s4 1966171168
  %v8014 = vunpack.c.0.s8 %v8013
  %v8015 = vlaneseq
  %v8016 = vshrl.u32 %v8015, 7
  %v8017 = vsub.s32 %v8014, %v8016
  %v8018 = vrot.slane %v8009, %v8017
  %v8020 = vunpack.c.l.s4 1966171168
  %v8021 = vunpack.c.0.s8 %v8020
  %v8022 = vlaneseq
  %v8023 = vshrl.u32 %v8022, 7
  %v8024 = vsub.s32 %v8021, %v8023
  %v8025 = vrot.slane %v8010, %v8024
  %v8027 = vunpack.c.l.s4 1966171168
  %v8028 = vunpack.c.0.s8 %v8027
  %v8029 = vlaneseq
  %v8030 = vshrl.u32 %v8029, 7
  %v8031 = vsub.s32 %v8028, %v8030
  %v8032 = vrot.slane %v8011, %v8031
  %v8033 = vcombine.low %v8018, %v8025
  %v8035 = vunpack.c.l.s4 1966171168
  %v8036 = vunpack.c.0.s8 %v8035
  %v8037 = vlaneseq
  %v8038 = vshrl.u32 %v8037, 7
  %v8039 = vsub.s32 %v8036, %v8038
  %v8040 = vrot.slane %v8033, %v8039
  %v8042 = vunpack.c.l.s4 1966171168
  %v8043 = vunpack.c.0.s8 %v8042
  %v8044 = vlaneseq
  %v8045 = vshrl.u32 %v8044, 7
  %v8046 = vsub.s32 %v8043, %v8045
  %v8047 = vrot.slane %v8032, %v8046
  %v8048 = vcombine.low %v8040, %v8047
  %v8050 = vmul.f32 %v8001, %v8048
  %v8052 = vlaneseq
  %v8053 = vshrl.u32 %v8052, 7
  %v8054 = vsub.s32 0, %v8053
  %v8055 = vrot.slane %v8001, %v8054
  %v8056 = vlaneseq
  %v8057 = vshrl.u32 %v8056, 7
  %v8058 = vsub.s32 1, %v8057
  %v8059 = vrot.slane %v8001, %v8058
  %v8060 = vlaneseq
  %v8061 = vshrl.u32 %v8060, 7
  %v8062 = vsub.s32 2, %v8061
  %v8063 = vrot.slane %v8001, %v8062
  %v8064 = vlaneseq
  %v8065 = vshrl.u32 %v8064, 7
  %v8066 = vsub.s32 3, %v8065
  %v8067 = vrot.slane %v8001, %v8066
  %v8068 = vlaneseq
  %v8069 = vshrl.u32 %v8068, 7
  %v8070 = vsub.s32 4, %v8069
  %v8071 = vrot.slane %v8001, %v8070
  %v8072 = vlaneseq
  %v8073 = vshrl.u32 %v8072, 7
  %v8074 = vsub.s32 5, %v8073
  %v8075 = vrot.slane %v8001, %v8074
  %v8082 = vmul.f32 %v7959, %v8055
  %v8083 = vmul.f32 %v7960, %v8059
  %v8084 = vmul.f32 %v7961, %v8063
  %v8085 = vmul.f32 %v7962, %v8067
  %v8086 = vmul.f32 %v7963, %v8071
  %v8087 = vmul.f32 %v7964, %v8075
  %v8088 = vmul.f32 %v8082, %v7995
  %v8089 = vmul.f32 %v8083, %v7996
  %v8090 = vmul.f32 %v8084, %v7997
  %v8091 = vmul.f32 %v8085, %v7998
  %v8092 = vmul.f32 %v8086, %v7999
  %v8093 = vmul.f32 %v8087, %v8000
  %v8100 = vcombine.low %v8088, %v8089
  %v8101 = vcombine.low %v8090, %v8091
  %v8102 = vcombine.low %v8092, %v8093
  %v8104 = vunpack.c.l.s4 1966171168
  %v8105 = vunpack.c.0.s8 %v8104
  %v8106 = vlaneseq
  %v8107 = vshrl.u32 %v8106, 7
  %v8108 = vsub.s32 %v8105, %v8107
  %v8109 = vrot.slane %v8100, %v8108
  %v8111 = vunpack.c.l.s4 1966171168
  %v8112 = vunpack.c.0.s8 %v8111
  %v8113 = vlaneseq
  %v8114 = vshrl.u32 %v8113, 7
  %v8115 = vsub.s32 %v8112, %v8114
  %v8116 = vrot.slane %v8101, %v8115
  %v8118 = vunpack.c.l.s4 1966171168
  %v8119 = vunpack.c.0.s8 %v8118
  %v8120 = vlaneseq
  %v8121 = vshrl.u32 %v8120, 7
  %v8122 = vsub.s32 %v8119, %v8121
  %v8123 = vrot.slane %v8102, %v8122
  %v8124 = vcombine.low %v8109, %v8116
  %v8126 = vunpack.c.l.s4 1966171168
  %v8127 = vunpack.c.0.s8 %v8126
  %v8128 = vlaneseq
  %v8129 = vshrl.u32 %v8128, 7
  %v8130 = vsub.s32 %v8127, %v8129
  %v8131 = vrot.slane %v8124, %v8130
  %v8133 = vunpack.c.l.s4 1966171168
  %v8134 = vunpack.c.0.s8 %v8133
  %v8135 = vlaneseq
  %v8136 = vshrl.u32 %v8135, 7
  %v8137 = vsub.s32 %v8134, %v8136
  %v8138 = vrot.slane %v8123, %v8137
  %v8139 = vcombine.low %v8131, %v8138
  %v8141 = vsub.f32 %v8002, %v8139
  %v8142 = vld [vmem:[#allocation3] sm:$0xff]
  %v8143 = vld [vmem:[#allocation3 + $0x8] sm:$0xff]
  %v8144 = vld [vmem:[#allocation3 + $0x10] sm:$0xff]
  %v8145 = vld [vmem:[#allocation3 + $0x18] sm:$0xff]
  %v8146 = vld [vmem:[#allocation3 + $0x20] sm:$0xff]
  %v8147 = vld [vmem:[#allocation3 + $0x28] sm:$0xff]
  %v8148 = vld [vmem:[#allocation3 + $0x30] sm:$0x3f]
  %v8149 = vld [vmem:[#allocation3 + $0x38] sm:$0x3f]
  %v8150 = vld [vmem:[#allocation3 + $0x40] sm:$0x3f]
  %v8151 = vld [vmem:[#allocation3 + $0x48] sm:$0x3f]
  %v8152 = vld [vmem:[#allocation3 + $0x50] sm:$0x3f]
  %v8153 = vld [vmem:[#allocation3 + $0x58] sm:$0x3f]
  %v8154 = vld [vmem:[#allocation3 + $0x60] sm:$0xff]
  %v8155 = vld [vmem:[#allocation3 + $0x68] sm:$0xff]
  %v8156 = vld [vmem:[#allocation3 + $0x70] sm:$0xff]
  %v8157 = vld [vmem:[#allocation3 + $0x78] sm:$0xff]
  %v8158 = vld [vmem:[#allocation3 + $0x80] sm:$0xff]
  %v8159 = vld [vmem:[#allocation3 + $0x88] sm:$0xff]
  %v8160 = vld [vmem:[#allocation3 + $0x90] sm:$0x3f]
  %v8161 = vld [vmem:[#allocation3 + $0x98] sm:$0x3f]
  %v8162 = vld [vmem:[#allocation3 + $0xa0] sm:$0x3f]
  %v8163 = vld [vmem:[#allocation3 + $0xa8] sm:$0x3f]
  %v8164 = vld [vmem:[#allocation3 + $0xb0] sm:$0x3f]
  %v8165 = vld [vmem:[#allocation3 + $0xb8] sm:$0x3f]
  %v8166 = vld [vmem:[#allocation3 + $0xc0] sm:$0xff]
  %v8167 = vld [vmem:[#allocation3 + $0xc8] sm:$0xff]
  %v8168 = vld [vmem:[#allocation3 + $0xd0] sm:$0xff]
  %v8169 = vld [vmem:[#allocation3 + $0xd8] sm:$0xff]
  %v8170 = vld [vmem:[#allocation3 + $0xe0] sm:$0xff]
  %v8171 = vld [vmem:[#allocation3 + $0xe8] sm:$0xff]
  %v8172 = vld [vmem:[#allocation3 + $0xf0] sm:$0x3f]
  %v8173 = vld [vmem:[#allocation3 + $0xf8] sm:$0x3f]
  %v8174 = vld [vmem:[#allocation3 + $0x100] sm:$0x3f]
  %v8175 = vld [vmem:[#allocation3 + $0x108] sm:$0x3f]
  %v8176 = vld [vmem:[#allocation3 + $0x110] sm:$0x3f]
  %v8177 = vld [vmem:[#allocation3 + $0x118] sm:$0x3f]
  %v8178 = vld [vmem:[#allocation3 + $0x120] sm:$0xff]
  %v8179 = vld [vmem:[#allocation3 + $0x128] sm:$0xff]
  %v8180 = vld [vmem:[#allocation3 + $0x130] sm:$0xff]
  %v8181 = vld [vmem:[#allocation3 + $0x138] sm:$0xff]
  %v8182 = vld [vmem:[#allocation3 + $0x140] sm:$0xff]
  %v8183 = vld [vmem:[#allocation3 + $0x148] sm:$0xff]
  %v8184 = vld [vmem:[#allocation3 + $0x150] sm:$0x3f]
  %v8185 = vld [vmem:[#allocation3 + $0x158] sm:$0x3f]
  %v8186 = vld [vmem:[#allocation3 + $0x160] sm:$0x3f]
  %v8187 = vld [vmem:[#allocation3 + $0x168] sm:$0x3f]
  %v8188 = vld [vmem:[#allocation3 + $0x170] sm:$0x3f]
  %v8189 = vld [vmem:[#allocation3 + $0x178] sm:$0x3f]
  %v8190 = vld [vmem:[#allocation3 + $0x180] sm:$0xff]
  %v8191 = vld [vmem:[#allocation3 + $0x188] sm:$0xff]
  %v8192 = vld [vmem:[#allocation3 + $0x190] sm:$0xff]
  %v8193 = vld [vmem:[#allocation3 + $0x198] sm:$0xff]
  %v8194 = vld [vmem:[#allocation3 + $0x1a0] sm:$0xff]
  %v8195 = vld [vmem:[#allocation3 + $0x1a8] sm:$0xff]
  %v8196 = vld [vmem:[#allocation3 + $0x1b0] sm:$0x3f]
  %v8197 = vld [vmem:[#allocation3 + $0x1b8] sm:$0x3f]
  %v8198 = vld [vmem:[#allocation3 + $0x1c0] sm:$0x3f]
  %v8199 = vld [vmem:[#allocation3 + $0x1c8] sm:$0x3f]
  %v8200 = vld [vmem:[#allocation3 + $0x1d0] sm:$0x3f]
  %v8201 = vld [vmem:[#allocation3 + $0x1d8] sm:$0x3f]
  %v8202 = vld [vmem:[#allocation3 + $0x1e0] sm:$0xff]
  %v8203 = vld [vmem:[#allocation3 + $0x1e8] sm:$0xff]
  %v8204 = vld [vmem:[#allocation3 + $0x1f0] sm:$0xff]
  %v8205 = vld [vmem:[#allocation3 + $0x1f8] sm:$0xff]
  %v8206 = vld [vmem:[#allocation3 + $0x200] sm:$0xff]
  %v8207 = vld [vmem:[#allocation3 + $0x208] sm:$0xff]
  %v8208 = vld [vmem:[#allocation3 + $0x210] sm:$0x3f]
  %v8209 = vld [vmem:[#allocation3 + $0x218] sm:$0x3f]
  %v8210 = vld [vmem:[#allocation3 + $0x220] sm:$0x3f]
  %v8211 = vld [vmem:[#allocation3 + $0x228] sm:$0x3f]
  %v8212 = vld [vmem:[#allocation3 + $0x230] sm:$0x3f]
  %v8213 = vld [vmem:[#allocation3 + $0x238] sm:$0x3f]
  %v8214 = vld [vmem:[#allocation3 + $0x240] sm:$0xff]
  %v8215 = vld [vmem:[#allocation3 + $0x248] sm:$0xff]
  %v8216 = vld [vmem:[#allocation3 + $0x250] sm:$0xff]
  %v8217 = vld [vmem:[#allocation3 + $0x258] sm:$0xff]
  %v8218 = vld [vmem:[#allocation3 + $0x260] sm:$0xff]
  %v8219 = vld [vmem:[#allocation3 + $0x268] sm:$0xff]
  %v8220 = vld [vmem:[#allocation3 + $0x270] sm:$0x3f]
  %v8221 = vld [vmem:[#allocation3 + $0x278] sm:$0x3f]
  %v8222 = vld [vmem:[#allocation3 + $0x280] sm:$0x3f]
  %v8223 = vld [vmem:[#allocation3 + $0x288] sm:$0x3f]
  %v8224 = vld [vmem:[#allocation3 + $0x290] sm:$0x3f]
  %v8225 = vld [vmem:[#allocation3 + $0x298] sm:$0x3f]
  %v8226 = vld [vmem:[#allocation3 + $0x2a0] sm:$0xff]
  %v8227 = vld [vmem:[#allocation3 + $0x2a8] sm:$0xff]
  %v8228 = vld [vmem:[#allocation3 + $0x2b0] sm:$0xff]
  %v8229 = vld [vmem:[#allocation3 + $0x2b8] sm:$0xff]
  %v8230 = vld [vmem:[#allocation3 + $0x2c0] sm:$0xff]
  %v8231 = vld [vmem:[#allocation3 + $0x2c8] sm:$0xff]
  %v8232 = vld [vmem:[#allocation3 + $0x2d0] sm:$0x3f]
  %v8233 = vld [vmem:[#allocation3 + $0x2d8] sm:$0x3f]
  %v8234 = vld [vmem:[#allocation3 + $0x2e0] sm:$0x3f]
  %v8235 = vld [vmem:[#allocation3 + $0x2e8] sm:$0x3f]
  %v8236 = vld [vmem:[#allocation3 + $0x2f0] sm:$0x3f]
  %v8237 = vld [vmem:[#allocation3 + $0x2f8] sm:$0x3f]
  %v8238 = vld [vmem:[#allocation3 + $0x300] sm:$0xff]
  %v8239 = vld [vmem:[#allocation3 + $0x308] sm:$0xff]
  %v8240 = vld [vmem:[#allocation3 + $0x310] sm:$0xff]
  %v8241 = vld [vmem:[#allocation3 + $0x318] sm:$0xff]
  %v8242 = vld [vmem:[#allocation3 + $0x320] sm:$0xff]
  %v8243 = vld [vmem:[#allocation3 + $0x328] sm:$0xff]
  %v8244 = vld [vmem:[#allocation3 + $0x330] sm:$0x3f]
  %v8245 = vld [vmem:[#allocation3 + $0x338] sm:$0x3f]
  %v8246 = vld [vmem:[#allocation3 + $0x340] sm:$0x3f]
  %v8247 = vld [vmem:[#allocation3 + $0x348] sm:$0x3f]
  %v8248 = vld [vmem:[#allocation3 + $0x350] sm:$0x3f]
  %v8249 = vld [vmem:[#allocation3 + $0x358] sm:$0x3f]
  %v8250 = vld [vmem:[#allocation3 + $0x360] sm:$0xff]
  %v8251 = vld [vmem:[#allocation3 + $0x368] sm:$0xff]
  %v8252 = vld [vmem:[#allocation3 + $0x370] sm:$0xff]
  %v8253 = vld [vmem:[#allocation3 + $0x378] sm:$0xff]
  %v8254 = vld [vmem:[#allocation3 + $0x380] sm:$0xff]
  %v8255 = vld [vmem:[#allocation3 + $0x388] sm:$0xff]
  %v8256 = vld [vmem:[#allocation3 + $0x390] sm:$0x3f]
  %v8257 = vld [vmem:[#allocation3 + $0x398] sm:$0x3f]
  %v8258 = vld [vmem:[#allocation3 + $0x3a0] sm:$0x3f]
  %v8259 = vld [vmem:[#allocation3 + $0x3a8] sm:$0x3f]
  %v8260 = vld [vmem:[#allocation3 + $0x3b0] sm:$0x3f]
  %v8261 = vld [vmem:[#allocation3 + $0x3b8] sm:$0x3f]
  %v8262 = vld [vmem:[#allocation3 + $0x3c0] sm:$0xff]
  %v8263 = vld [vmem:[#allocation3 + $0x3c8] sm:$0xff]
  %v8264 = vld [vmem:[#allocation3 + $0x3d0] sm:$0xff]
  %v8265 = vld [vmem:[#allocation3 + $0x3d8] sm:$0xff]
  %v8266 = vld [vmem:[#allocation3 + $0x3e0] sm:$0xff]
  %v8267 = vld [vmem:[#allocation3 + $0x3e8] sm:$0xff]
  %v8268 = vld [vmem:[#allocation3 + $0x3f0] sm:$0x3f]
  %v8269 = vld [vmem:[#allocation3 + $0x3f8] sm:$0x3f]
  %v8270 = vld [vmem:[#allocation3 + $0x400] sm:$0x3f]
  %v8271 = vld [vmem:[#allocation3 + $0x408] sm:$0x3f]
  %v8272 = vld [vmem:[#allocation3 + $0x410] sm:$0x3f]
  %v8273 = vld [vmem:[#allocation3 + $0x418] sm:$0x3f]
  %v8274 = vld [vmem:[#allocation3 + $0x420] sm:$0xff]
  %v8275 = vld [vmem:[#allocation3 + $0x428] sm:$0xff]
  %v8276 = vld [vmem:[#allocation3 + $0x430] sm:$0xff]
  %v8277 = vld [vmem:[#allocation3 + $0x438] sm:$0xff]
  %v8278 = vld [vmem:[#allocation3 + $0x440] sm:$0xff]
  %v8279 = vld [vmem:[#allocation3 + $0x448] sm:$0xff]
  %v8280 = vld [vmem:[#allocation3 + $0x450] sm:$0x3f]
  %v8281 = vld [vmem:[#allocation3 + $0x458] sm:$0x3f]
  %v8282 = vld [vmem:[#allocation3 + $0x460] sm:$0x3f]
  %v8283 = vld [vmem:[#allocation3 + $0x468] sm:$0x3f]
  %v8284 = vld [vmem:[#allocation3 + $0x470] sm:$0x3f]
  %v8285 = vld [vmem:[#allocation3 + $0x478] sm:$0x3f]
  %v8286 = vld [vmem:[#allocation3 + $0x480] sm:$0xff]
  %v8287 = vld [vmem:[#allocation3 + $0x488] sm:$0xff]
  %v8288 = vld [vmem:[#allocation3 + $0x490] sm:$0xff]
  %v8289 = vld [vmem:[#allocation3 + $0x498] sm:$0xff]
  %v8290 = vld [vmem:[#allocation3 + $0x4a0] sm:$0xff]
  %v8291 = vld [vmem:[#allocation3 + $0x4a8] sm:$0xff]
  %v8292 = vld [vmem:[#allocation3 + $0x4b0] sm:$0x3f]
  %v8293 = vld [vmem:[#allocation3 + $0x4b8] sm:$0x3f]
  %v8294 = vld [vmem:[#allocation3 + $0x4c0] sm:$0x3f]
  %v8295 = vld [vmem:[#allocation3 + $0x4c8] sm:$0x3f]
  %v8296 = vld [vmem:[#allocation3 + $0x4d0] sm:$0x3f]
  %v8297 = vld [vmem:[#allocation3 + $0x4d8] sm:$0x3f]
  %v8298 = vld [vmem:[#allocation3 + $0x4e0] sm:$0xff]
  %v8299 = vld [vmem:[#allocation3 + $0x4e8] sm:$0xff]
  %v8300 = vld [vmem:[#allocation3 + $0x4f0] sm:$0xff]
  %v8301 = vld [vmem:[#allocation3 + $0x4f8] sm:$0xff]
  %v8302 = vld [vmem:[#allocation3 + $0x500] sm:$0xff]
  %v8303 = vld [vmem:[#allocation3 + $0x508] sm:$0xff]
  %v8304 = vld [vmem:[#allocation3 + $0x510] sm:$0x3f]
  %v8305 = vld [vmem:[#allocation3 + $0x518] sm:$0x3f]
  %v8306 = vld [vmem:[#allocation3 + $0x520] sm:$0x3f]
  %v8307 = vld [vmem:[#allocation3 + $0x528] sm:$0x3f]
  %v8308 = vld [vmem:[#allocation3 + $0x530] sm:$0x3f]
  %v8309 = vld [vmem:[#allocation3 + $0x538] sm:$0x3f]
  %v8311 = vlaneseq
  %v8312 = vshrl.u32 %v8311, 7
  %v8313 = vsub.s32 0, %v8312
  %v8314 = vrot.slane %v8050, %v8313
  %v8315 = vlaneseq
  %v8316 = vshrl.u32 %v8315, 7
  %v8317 = vsub.s32 1, %v8316
  %v8318 = vrot.slane %v8050, %v8317
  %v8319 = vlaneseq
  %v8320 = vshrl.u32 %v8319, 7
  %v8321 = vsub.s32 2, %v8320
  %v8322 = vrot.slane %v8050, %v8321
  %v8323 = vlaneseq
  %v8324 = vshrl.u32 %v8323, 7
  %v8325 = vsub.s32 3, %v8324
  %v8326 = vrot.slane %v8050, %v8325
  %v8327 = vlaneseq
  %v8328 = vshrl.u32 %v8327, 7
  %v8329 = vsub.s32 4, %v8328
  %v8330 = vrot.slane %v8050, %v8329
  %v8331 = vlaneseq
  %v8332 = vshrl.u32 %v8331, 7
  %v8333 = vsub.s32 5, %v8332
  %v8334 = vrot.slane %v8050, %v8333
  %v8341 = vmul.f32 %v8142, %v8314
  %v8342 = vmul.f32 %v8143, %v8318
  %v8343 = vmul.f32 %v8144, %v8322
  %v8344 = vmul.f32 %v8145, %v8326
  %v8345 = vmul.f32 %v8146, %v8330
  %v8346 = vmul.f32 %v8147, %v8334
  %v8347 = vmul.f32 %v8148, %v8314
  %v8348 = vmul.f32 %v8149, %v8318
  %v8349 = vmul.f32 %v8150, %v8322
  %v8350 = vmul.f32 %v8151, %v8326
  %v8351 = vmul.f32 %v8152, %v8330
  %v8352 = vmul.f32 %v8153, %v8334
  %v8353 = vmul.f32 %v8154, %v8314
  %v8354 = vmul.f32 %v8155, %v8318
  %v8355 = vmul.f32 %v8156, %v8322
  %v8356 = vmul.f32 %v8157, %v8326
  %v8357 = vmul.f32 %v8158, %v8330
  %v8358 = vmul.f32 %v8159, %v8334
  %v8359 = vmul.f32 %v8160, %v8314
  %v8360 = vmul.f32 %v8161, %v8318
  %v8361 = vmul.f32 %v8162, %v8322
  %v8362 = vmul.f32 %v8163, %v8326
  %v8363 = vmul.f32 %v8164, %v8330
  %v8364 = vmul.f32 %v8165, %v8334
  %v8365 = vmul.f32 %v8166, %v8314
  %v8366 = vmul.f32 %v8167, %v8318
  %v8367 = vmul.f32 %v8168, %v8322
  %v8368 = vmul.f32 %v8169, %v8326
  %v8369 = vmul.f32 %v8170, %v8330
  %v8370 = vmul.f32 %v8171, %v8334
  %v8371 = vmul.f32 %v8172, %v8314
  %v8372 = vmul.f32 %v8173, %v8318
  %v8373 = vmul.f32 %v8174, %v8322
  %v8374 = vmul.f32 %v8175, %v8326
  %v8375 = vmul.f32 %v8176, %v8330
  %v8376 = vmul.f32 %v8177, %v8334
  %v8377 = vmul.f32 %v8178, %v8314
  %v8378 = vmul.f32 %v8179, %v8318
  %v8379 = vmul.f32 %v8180, %v8322
  %v8380 = vmul.f32 %v8181, %v8326
  %v8381 = vmul.f32 %v8182, %v8330
  %v8382 = vmul.f32 %v8183, %v8334
  %v8383 = vmul.f32 %v8184, %v8314
  %v8384 = vmul.f32 %v8185, %v8318
  %v8385 = vmul.f32 %v8186, %v8322
  %v8386 = vmul.f32 %v8187, %v8326
  %v8387 = vmul.f32 %v8188, %v8330
  %v8388 = vmul.f32 %v8189, %v8334
  %v8389 = vmul.f32 %v8190, %v8314
  %v8390 = vmul.f32 %v8191, %v8318
  %v8391 = vmul.f32 %v8192, %v8322
  %v8392 = vmul.f32 %v8193, %v8326
  %v8393 = vmul.f32 %v8194, %v8330
  %v8394 = vmul.f32 %v8195, %v8334
  %v8395 = vmul.f32 %v8196, %v8314
  %v8396 = vmul.f32 %v8197, %v8318
  %v8397 = vmul.f32 %v8198, %v8322
  %v8398 = vmul.f32 %v8199, %v8326
  %v8399 = vmul.f32 %v8200, %v8330
  %v8400 = vmul.f32 %v8201, %v8334
  %v8401 = vmul.f32 %v8202, %v8314
  %v8402 = vmul.f32 %v8203, %v8318
  %v8403 = vmul.f32 %v8204, %v8322
  %v8404 = vmul.f32 %v8205, %v8326
  %v8405 = vmul.f32 %v8206, %v8330
  %v8406 = vmul.f32 %v8207, %v8334
  %v8407 = vmul.f32 %v8208, %v8314
  %v8408 = vmul.f32 %v8209, %v8318
  %v8409 = vmul.f32 %v8210, %v8322
  %v8410 = vmul.f32 %v8211, %v8326
  %v8411 = vmul.f32 %v8212, %v8330
  %v8412 = vmul.f32 %v8213, %v8334
  %v8413 = vmul.f32 %v8214, %v8314
  %v8414 = vmul.f32 %v8215, %v8318
  %v8415 = vmul.f32 %v8216, %v8322
  %v8416 = vmul.f32 %v8217, %v8326
  %v8417 = vmul.f32 %v8218, %v8330
  %v8418 = vmul.f32 %v8219, %v8334
  %v8419 = vmul.f32 %v8220, %v8314
  %v8420 = vmul.f32 %v8221, %v8318
  %v8421 = vmul.f32 %v8222, %v8322
  %v8422 = vmul.f32 %v8223, %v8326
  %v8423 = vmul.f32 %v8224, %v8330
  %v8424 = vmul.f32 %v8225, %v8334
  %v8425 = vmul.f32 %v8226, %v8314
  %v8426 = vmul.f32 %v8227, %v8318
  %v8427 = vmul.f32 %v8228, %v8322
  %v8428 = vmul.f32 %v8229, %v8326
  %v8429 = vmul.f32 %v8230, %v8330
  %v8430 = vmul.f32 %v8231, %v8334
  %v8431 = vmul.f32 %v8232, %v8314
  %v8432 = vmul.f32 %v8233, %v8318
  %v8433 = vmul.f32 %v8234, %v8322
  %v8434 = vmul.f32 %v8235, %v8326
  %v8435 = vmul.f32 %v8236, %v8330
  %v8436 = vmul.f32 %v8237, %v8334
  %v8437 = vmul.f32 %v8238, %v8314
  %v8438 = vmul.f32 %v8239, %v8318
  %v8439 = vmul.f32 %v8240, %v8322
  %v8440 = vmul.f32 %v8241, %v8326
  %v8441 = vmul.f32 %v8242, %v8330
  %v8442 = vmul.f32 %v8243, %v8334
  %v8443 = vmul.f32 %v8244, %v8314
  %v8444 = vmul.f32 %v8245, %v8318
  %v8445 = vmul.f32 %v8246, %v8322
  %v8446 = vmul.f32 %v8247, %v8326
  %v8447 = vmul.f32 %v8248, %v8330
  %v8448 = vmul.f32 %v8249, %v8334
  %v8449 = vmul.f32 %v8250, %v8314
  %v8450 = vmul.f32 %v8251, %v8318
  %v8451 = vmul.f32 %v8252, %v8322
  %v8452 = vmul.f32 %v8253, %v8326
  %v8453 = vmul.f32 %v8254, %v8330
  %v8454 = vmul.f32 %v8255, %v8334
  %v8455 = vmul.f32 %v8256, %v8314
  %v8456 = vmul.f32 %v8257, %v8318
  %v8457 = vmul.f32 %v8258, %v8322
  %v8458 = vmul.f32 %v8259, %v8326
  %v8459 = vmul.f32 %v8260, %v8330
  %v8460 = vmul.f32 %v8261, %v8334
  %v8461 = vmul.f32 %v8262, %v8314
  %v8462 = vmul.f32 %v8263, %v8318
  %v8463 = vmul.f32 %v8264, %v8322
  %v8464 = vmul.f32 %v8265, %v8326
  %v8465 = vmul.f32 %v8266, %v8330
  %v8466 = vmul.f32 %v8267, %v8334
  %v8467 = vmul.f32 %v8268, %v8314
  %v8468 = vmul.f32 %v8269, %v8318
  %v8469 = vmul.f32 %v8270, %v8322
  %v8470 = vmul.f32 %v8271, %v8326
  %v8471 = vmul.f32 %v8272, %v8330
  %v8472 = vmul.f32 %v8273, %v8334
  %v8473 = vmul.f32 %v8274, %v8314
  %v8474 = vmul.f32 %v8275, %v8318
  %v8475 = vmul.f32 %v8276, %v8322
  %v8476 = vmul.f32 %v8277, %v8326
  %v8477 = vmul.f32 %v8278, %v8330
  %v8478 = vmul.f32 %v8279, %v8334
  %v8479 = vmul.f32 %v8280, %v8314
  %v8480 = vmul.f32 %v8281, %v8318
  %v8481 = vmul.f32 %v8282, %v8322
  %v8482 = vmul.f32 %v8283, %v8326
  %v8483 = vmul.f32 %v8284, %v8330
  %v8484 = vmul.f32 %v8285, %v8334
  %v8485 = vmul.f32 %v8286, %v8314
  %v8486 = vmul.f32 %v8287, %v8318
  %v8487 = vmul.f32 %v8288, %v8322
  %v8488 = vmul.f32 %v8289, %v8326
  %v8489 = vmul.f32 %v8290, %v8330
  %v8490 = vmul.f32 %v8291, %v8334
  %v8491 = vmul.f32 %v8292, %v8314
  %v8492 = vmul.f32 %v8293, %v8318
  %v8493 = vmul.f32 %v8294, %v8322
  %v8494 = vmul.f32 %v8295, %v8326
  %v8495 = vmul.f32 %v8296, %v8330
  %v8496 = vmul.f32 %v8297, %v8334
  %v8497 = vmul.f32 %v8298, %v8314
  %v8498 = vmul.f32 %v8299, %v8318
  %v8499 = vmul.f32 %v8300, %v8322
  %v8500 = vmul.f32 %v8301, %v8326
  %v8501 = vmul.f32 %v8302, %v8330
  %v8502 = vmul.f32 %v8303, %v8334
  %v8503 = vmul.f32 %v8304, %v8314
  %v8504 = vmul.f32 %v8305, %v8318
  %v8505 = vmul.f32 %v8306, %v8322
  %v8506 = vmul.f32 %v8307, %v8326
  %v8507 = vmul.f32 %v8308, %v8330
  %v8508 = vmul.f32 %v8309, %v8334
  %v8510 = vlaneseq
  %v8511 = vshrl.u32 %v8510, 7
  %v8512 = vsub.s32 0, %v8511
  %v8513 = vrot.slane %v8141, %v8512
  %v8514 = vlaneseq
  %v8515 = vshrl.u32 %v8514, 7
  %v8516 = vsub.s32 1, %v8515
  %v8517 = vrot.slane %v8141, %v8516
  %v8518 = vlaneseq
  %v8519 = vshrl.u32 %v8518, 7
  %v8520 = vsub.s32 2, %v8519
  %v8521 = vrot.slane %v8141, %v8520
  %v8522 = vlaneseq
  %v8523 = vshrl.u32 %v8522, 7
  %v8524 = vsub.s32 3, %v8523
  %v8525 = vrot.slane %v8141, %v8524
  %v8526 = vlaneseq
  %v8527 = vshrl.u32 %v8526, 7
  %v8528 = vsub.s32 4, %v8527
  %v8529 = vrot.slane %v8141, %v8528
  %v8530 = vlaneseq
  %v8531 = vshrl.u32 %v8530, 7
  %v8532 = vsub.s32 5, %v8531
  %v8533 = vrot.slane %v8141, %v8532
  %v8540 = vadd.f32 %v8341, %v8513
  %v8541 = vadd.f32 %v8342, %v8517
  %v8542 = vadd.f32 %v8343, %v8521
  %v8543 = vadd.f32 %v8344, %v8525
  %v8544 = vadd.f32 %v8345, %v8529
  %v8545 = vadd.f32 %v8346, %v8533
  %v8546 = vadd.f32 %v8347, %v8513
  %v8547 = vadd.f32 %v8348, %v8517
  %v8548 = vadd.f32 %v8349, %v8521
  %v8549 = vadd.f32 %v8350, %v8525
  %v8550 = vadd.f32 %v8351, %v8529
  %v8551 = vadd.f32 %v8352, %v8533
  %v8552 = vadd.f32 %v8353, %v8513
  %v8553 = vadd.f32 %v8354, %v8517
  %v8554 = vadd.f32 %v8355, %v8521
  %v8555 = vadd.f32 %v8356, %v8525
  %v8556 = vadd.f32 %v8357, %v8529
  %v8557 = vadd.f32 %v8358, %v8533
  %v8558 = vadd.f32 %v8359, %v8513
  %v8559 = vadd.f32 %v8360, %v8517
  %v8560 = vadd.f32 %v8361, %v8521
  %v8561 = vadd.f32 %v8362, %v8525
  %v8562 = vadd.f32 %v8363, %v8529
  %v8563 = vadd.f32 %v8364, %v8533
  %v8564 = vadd.f32 %v8365, %v8513
  %v8565 = vadd.f32 %v8366, %v8517
  %v8566 = vadd.f32 %v8367, %v8521
  %v8567 = vadd.f32 %v8368, %v8525
  %v8568 = vadd.f32 %v8369, %v8529
  %v8569 = vadd.f32 %v8370, %v8533
  %v8570 = vadd.f32 %v8371, %v8513
  %v8571 = vadd.f32 %v8372, %v8517
  %v8572 = vadd.f32 %v8373, %v8521
  %v8573 = vadd.f32 %v8374, %v8525
  %v8574 = vadd.f32 %v8375, %v8529
  %v8575 = vadd.f32 %v8376, %v8533
  %v8576 = vadd.f32 %v8377, %v8513
  %v8577 = vadd.f32 %v8378, %v8517
  %v8578 = vadd.f32 %v8379, %v8521
  %v8579 = vadd.f32 %v8380, %v8525
  %v8580 = vadd.f32 %v8381, %v8529
  %v8581 = vadd.f32 %v8382, %v8533
  %v8582 = vadd.f32 %v8383, %v8513
  %v8583 = vadd.f32 %v8384, %v8517
  %v8584 = vadd.f32 %v8385, %v8521
  %v8585 = vadd.f32 %v8386, %v8525
  %v8586 = vadd.f32 %v8387, %v8529
  %v8587 = vadd.f32 %v8388, %v8533
  %v8588 = vadd.f32 %v8389, %v8513
  %v8589 = vadd.f32 %v8390, %v8517
  %v8590 = vadd.f32 %v8391, %v8521
  %v8591 = vadd.f32 %v8392, %v8525
  %v8592 = vadd.f32 %v8393, %v8529
  %v8593 = vadd.f32 %v8394, %v8533
  %v8594 = vadd.f32 %v8395, %v8513
  %v8595 = vadd.f32 %v8396, %v8517
  %v8596 = vadd.f32 %v8397, %v8521
  %v8597 = vadd.f32 %v8398, %v8525
  %v8598 = vadd.f32 %v8399, %v8529
  %v8599 = vadd.f32 %v8400, %v8533
  %v8600 = vadd.f32 %v8401, %v8513
  %v8601 = vadd.f32 %v8402, %v8517
  %v8602 = vadd.f32 %v8403, %v8521
  %v8603 = vadd.f32 %v8404, %v8525
  %v8604 = vadd.f32 %v8405, %v8529
  %v8605 = vadd.f32 %v8406, %v8533
  %v8606 = vadd.f32 %v8407, %v8513
  %v8607 = vadd.f32 %v8408, %v8517
  %v8608 = vadd.f32 %v8409, %v8521
  %v8609 = vadd.f32 %v8410, %v8525
  %v8610 = vadd.f32 %v8411, %v8529
  %v8611 = vadd.f32 %v8412, %v8533
  %v8612 = vadd.f32 %v8413, %v8513
  %v8613 = vadd.f32 %v8414, %v8517
  %v8614 = vadd.f32 %v8415, %v8521
  %v8615 = vadd.f32 %v8416, %v8525
  %v8616 = vadd.f32 %v8417, %v8529
  %v8617 = vadd.f32 %v8418, %v8533
  %v8618 = vadd.f32 %v8419, %v8513
  %v8619 = vadd.f32 %v8420, %v8517
  %v8620 = vadd.f32 %v8421, %v8521
  %v8621 = vadd.f32 %v8422, %v8525
  %v8622 = vadd.f32 %v8423, %v8529
  %v8623 = vadd.f32 %v8424, %v8533
  %v8624 = vadd.f32 %v8425, %v8513
  %v8625 = vadd.f32 %v8426, %v8517
  %v8626 = vadd.f32 %v8427, %v8521
  %v8627 = vadd.f32 %v8428, %v8525
  %v8628 = vadd.f32 %v8429, %v8529
  %v8629 = vadd.f32 %v8430, %v8533
  %v8630 = vadd.f32 %v8431, %v8513
  %v8631 = vadd.f32 %v8432, %v8517
  %v8632 = vadd.f32 %v8433, %v8521
  %v8633 = vadd.f32 %v8434, %v8525
  %v8634 = vadd.f32 %v8435, %v8529
  %v8635 = vadd.f32 %v8436, %v8533
  %v8636 = vadd.f32 %v8437, %v8513
  %v8637 = vadd.f32 %v8438, %v8517
  %v8638 = vadd.f32 %v8439, %v8521
  %v8639 = vadd.f32 %v8440, %v8525
  %v8640 = vadd.f32 %v8441, %v8529
  %v8641 = vadd.f32 %v8442, %v8533
  %v8642 = vadd.f32 %v8443, %v8513
  %v8643 = vadd.f32 %v8444, %v8517
  %v8644 = vadd.f32 %v8445, %v8521
  %v8645 = vadd.f32 %v8446, %v8525
  %v8646 = vadd.f32 %v8447, %v8529
  %v8647 = vadd.f32 %v8448, %v8533
  %v8648 = vadd.f32 %v8449, %v8513
  %v8649 = vadd.f32 %v8450, %v8517
  %v8650 = vadd.f32 %v8451, %v8521
  %v8651 = vadd.f32 %v8452, %v8525
  %v8652 = vadd.f32 %v8453, %v8529
  %v8653 = vadd.f32 %v8454, %v8533
  %v8654 = vadd.f32 %v8455, %v8513
  %v8655 = vadd.f32 %v8456, %v8517
  %v8656 = vadd.f32 %v8457, %v8521
  %v8657 = vadd.f32 %v8458, %v8525
  %v8658 = vadd.f32 %v8459, %v8529
  %v8659 = vadd.f32 %v8460, %v8533
  %v8660 = vadd.f32 %v8461, %v8513
  %v8661 = vadd.f32 %v8462, %v8517
  %v8662 = vadd.f32 %v8463, %v8521
  %v8663 = vadd.f32 %v8464, %v8525
  %v8664 = vadd.f32 %v8465, %v8529
  %v8665 = vadd.f32 %v8466, %v8533
  %v8666 = vadd.f32 %v8467, %v8513
  %v8667 = vadd.f32 %v8468, %v8517
  %v8668 = vadd.f32 %v8469, %v8521
  %v8669 = vadd.f32 %v8470, %v8525
  %v8670 = vadd.f32 %v8471, %v8529
  %v8671 = vadd.f32 %v8472, %v8533
  %v8672 = vadd.f32 %v8473, %v8513
  %v8673 = vadd.f32 %v8474, %v8517
  %v8674 = vadd.f32 %v8475, %v8521
  %v8675 = vadd.f32 %v8476, %v8525
  %v8676 = vadd.f32 %v8477, %v8529
  %v8677 = vadd.f32 %v8478, %v8533
  %v8678 = vadd.f32 %v8479, %v8513
  %v8679 = vadd.f32 %v8480, %v8517
  %v8680 = vadd.f32 %v8481, %v8521
  %v8681 = vadd.f32 %v8482, %v8525
  %v8682 = vadd.f32 %v8483, %v8529
  %v8683 = vadd.f32 %v8484, %v8533
  %v8684 = vadd.f32 %v8485, %v8513
  %v8685 = vadd.f32 %v8486, %v8517
  %v8686 = vadd.f32 %v8487, %v8521
  %v8687 = vadd.f32 %v8488, %v8525
  %v8688 = vadd.f32 %v8489, %v8529
  %v8689 = vadd.f32 %v8490, %v8533
  %v8690 = vadd.f32 %v8491, %v8513
  %v8691 = vadd.f32 %v8492, %v8517
  %v8692 = vadd.f32 %v8493, %v8521
  %v8693 = vadd.f32 %v8494, %v8525
  %v8694 = vadd.f32 %v8495, %v8529
  %v8695 = vadd.f32 %v8496, %v8533
  %v8696 = vadd.f32 %v8497, %v8513
  %v8697 = vadd.f32 %v8498, %v8517
  %v8698 = vadd.f32 %v8499, %v8521
  %v8699 = vadd.f32 %v8500, %v8525
  %v8700 = vadd.f32 %v8501, %v8529
  %v8701 = vadd.f32 %v8502, %v8533
  %v8702 = vadd.f32 %v8503, %v8513
  %v8703 = vadd.f32 %v8504, %v8517
  %v8704 = vadd.f32 %v8505, %v8521
  %v8705 = vadd.f32 %v8506, %v8525
  %v8706 = vadd.f32 %v8507, %v8529
  %v8707 = vadd.f32 %v8508, %v8533
  %8708 = vst [vmem:[%s4] sm:$0xff] %v8540
  %8709 = vst [vmem:[%s4 + $0x8] sm:$0xff] %v8541
  %8710 = vst [vmem:[%s4 + $0x10] sm:$0xff] %v8542
  %8711 = vst [vmem:[%s4 + $0x18] sm:$0xff] %v8543
  %8712 = vst [vmem:[%s4 + $0x20] sm:$0xff] %v8544
  %8713 = vst [vmem:[%s4 + $0x28] sm:$0xff] %v8545
  %8714 = vst [vmem:[%s4 + $0x30] sm:$0x3f] %v8546
  %8715 = vst [vmem:[%s4 + $0x38] sm:$0x3f] %v8547
  %8716 = vst [vmem:[%s4 + $0x40] sm:$0x3f] %v8548
  %8717 = vst [vmem:[%s4 + $0x48] sm:$0x3f] %v8549
  %8718 = vst [vmem:[%s4 + $0x50] sm:$0x3f] %v8550
  %8719 = vst [vmem:[%s4 + $0x58] sm:$0x3f] %v8551
  %8720 = vst [vmem:[%s4 + $0x60] sm:$0xff] %v8552
  %8721 = vst [vmem:[%s4 + $0x68] sm:$0xff] %v8553
  %8722 = vst [vmem:[%s4 + $0x70] sm:$0xff] %v8554
  %8723 = vst [vmem:[%s4 + $0x78] sm:$0xff] %v8555
  %8724 = vst [vmem:[%s4 + $0x80] sm:$0xff] %v8556
  %8725 = vst [vmem:[%s4 + $0x88] sm:$0xff] %v8557
  %8726 = vst [vmem:[%s4 + $0x90] sm:$0x3f] %v8558
  %8727 = vst [vmem:[%s4 + $0x98] sm:$0x3f] %v8559
  %8728 = vst [vmem:[%s4 + $0xa0] sm:$0x3f] %v8560
  %8729 = vst [vmem:[%s4 + $0xa8] sm:$0x3f] %v8561
  %8730 = vst [vmem:[%s4 + $0xb0] sm:$0x3f] %v8562
  %8731 = vst [vmem:[%s4 + $0xb8] sm:$0x3f] %v8563
  %8732 = vst [vmem:[%s4 + $0xc0] sm:$0xff] %v8564
  %8733 = vst [vmem:[%s4 + $0xc8] sm:$0xff] %v8565
  %8734 = vst [vmem:[%s4 + $0xd0] sm:$0xff] %v8566
  %8735 = vst [vmem:[%s4 + $0xd8] sm:$0xff] %v8567
  %8736 = vst [vmem:[%s4 + $0xe0] sm:$0xff] %v8568
  %8737 = vst [vmem:[%s4 + $0xe8] sm:$0xff] %v8569
  %8738 = vst [vmem:[%s4 + $0xf0] sm:$0x3f] %v8570
  %8739 = vst [vmem:[%s4 + $0xf8] sm:$0x3f] %v8571
  %8740 = vst [vmem:[%s4 + $0x100] sm:$0x3f] %v8572
  %8741 = vst [vmem:[%s4 + $0x108] sm:$0x3f] %v8573
  %8742 = vst [vmem:[%s4 + $0x110] sm:$0x3f] %v8574
  %8743 = vst [vmem:[%s4 + $0x118] sm:$0x3f] %v8575
  %8744 = vst [vmem:[%s4 + $0x120] sm:$0xff] %v8576
  %8745 = vst [vmem:[%s4 + $0x128] sm:$0xff] %v8577
  %8746 = vst [vmem:[%s4 + $0x130] sm:$0xff] %v8578
  %8747 = vst [vmem:[%s4 + $0x138] sm:$0xff] %v8579
  %8748 = vst [vmem:[%s4 + $0x140] sm:$0xff] %v8580
  %8749 = vst [vmem:[%s4 + $0x148] sm:$0xff] %v8581
  %8750 = vst [vmem:[%s4 + $0x150] sm:$0x3f] %v8582
  %8751 = vst [vmem:[%s4 + $0x158] sm:$0x3f] %v8583
  %8752 = vst [vmem:[%s4 + $0x160] sm:$0x3f] %v8584
  %8753 = vst [vmem:[%s4 + $0x168] sm:$0x3f] %v8585
  %8754 = vst [vmem:[%s4 + $0x170] sm:$0x3f] %v8586
  %8755 = vst [vmem:[%s4 + $0x178] sm:$0x3f] %v8587
  %8756 = vst [vmem:[%s4 + $0x180] sm:$0xff] %v8588
  %8757 = vst [vmem:[%s4 + $0x188] sm:$0xff] %v8589
  %8758 = vst [vmem:[%s4 + $0x190] sm:$0xff] %v8590
  %8759 = vst [vmem:[%s4 + $0x198] sm:$0xff] %v8591
  %8760 = vst [vmem:[%s4 + $0x1a0] sm:$0xff] %v8592
  %8761 = vst [vmem:[%s4 + $0x1a8] sm:$0xff] %v8593
  %8762 = vst [vmem:[%s4 + $0x1b0] sm:$0x3f] %v8594
  %8763 = vst [vmem:[%s4 + $0x1b8] sm:$0x3f] %v8595
  %8764 = vst [vmem:[%s4 + $0x1c0] sm:$0x3f] %v8596
  %8765 = vst [vmem:[%s4 + $0x1c8] sm:$0x3f] %v8597
  %8766 = vst [vmem:[%s4 + $0x1d0] sm:$0x3f] %v8598
  %8767 = vst [vmem:[%s4 + $0x1d8] sm:$0x3f] %v8599
  %8768 = vst [vmem:[%s4 + $0x1e0] sm:$0xff] %v8600
  %8769 = vst [vmem:[%s4 + $0x1e8] sm:$0xff] %v8601
  %8770 = vst [vmem:[%s4 + $0x1f0] sm:$0xff] %v8602
  %8771 = vst [vmem:[%s4 + $0x1f8] sm:$0xff] %v8603
  %8772 = vst [vmem:[%s4 + $0x200] sm:$0xff] %v8604
  %8773 = vst [vmem:[%s4 + $0x208] sm:$0xff] %v8605
  %8774 = vst [vmem:[%s4 + $0x210] sm:$0x3f] %v8606
  %8775 = vst [vmem:[%s4 + $0x218] sm:$0x3f] %v8607
  %8776 = vst [vmem:[%s4 + $0x220] sm:$0x3f] %v8608
  %8777 = vst [vmem:[%s4 + $0x228] sm:$0x3f] %v8609
  %8778 = vst [vmem:[%s4 + $0x230] sm:$0x3f] %v8610
  %8779 = vst [vmem:[%s4 + $0x238] sm:$0x3f] %v8611
  %8780 = vst [vmem:[%s4 + $0x240] sm:$0xff] %v8612
  %8781 = vst [vmem:[%s4 + $0x248] sm:$0xff] %v8613
  %8782 = vst [vmem:[%s4 + $0x250] sm:$0xff] %v8614
  %8783 = vst [vmem:[%s4 + $0x258] sm:$0xff] %v8615
  %8784 = vst [vmem:[%s4 + $0x260] sm:$0xff] %v8616
  %8785 = vst [vmem:[%s4 + $0x268] sm:$0xff] %v8617
  %8786 = vst [vmem:[%s4 + $0x270] sm:$0x3f] %v8618
  %8787 = vst [vmem:[%s4 + $0x278] sm:$0x3f] %v8619
  %8788 = vst [vmem:[%s4 + $0x280] sm:$0x3f] %v8620
  %8789 = vst [vmem:[%s4 + $0x288] sm:$0x3f] %v8621
  %8790 = vst [vmem:[%s4 + $0x290] sm:$0x3f] %v8622
  %8791 = vst [vmem:[%s4 + $0x298] sm:$0x3f] %v8623
  %8792 = vst [vmem:[%s4 + $0x2a0] sm:$0xff] %v8624
  %8793 = vst [vmem:[%s4 + $0x2a8] sm:$0xff] %v8625
  %8794 = vst [vmem:[%s4 + $0x2b0] sm:$0xff] %v8626
  %8795 = vst [vmem:[%s4 + $0x2b8] sm:$0xff] %v8627
  %8796 = vst [vmem:[%s4 + $0x2c0] sm:$0xff] %v8628
  %8797 = vst [vmem:[%s4 + $0x2c8] sm:$0xff] %v8629
  %8798 = vst [vmem:[%s4 + $0x2d0] sm:$0x3f] %v8630
  %8799 = vst [vmem:[%s4 + $0x2d8] sm:$0x3f] %v8631
  %8800 = vst [vmem:[%s4 + $0x2e0] sm:$0x3f] %v8632
  %8801 = vst [vmem:[%s4 + $0x2e8] sm:$0x3f] %v8633
  %8802 = vst [vmem:[%s4 + $0x2f0] sm:$0x3f] %v8634
  %8803 = vst [vmem:[%s4 + $0x2f8] sm:$0x3f] %v8635
  %8804 = vst [vmem:[%s4 + $0x300] sm:$0xff] %v8636
  %8805 = vst [vmem:[%s4 + $0x308] sm:$0xff] %v8637
  %8806 = vst [vmem:[%s4 + $0x310] sm:$0xff] %v8638
  %8807 = vst [vmem:[%s4 + $0x318] sm:$0xff] %v8639
  %8808 = vst [vmem:[%s4 + $0x320] sm:$0xff] %v8640
  %8809 = vst [vmem:[%s4 + $0x328] sm:$0xff] %v8641
  %8810 = vst [vmem:[%s4 + $0x330] sm:$0x3f] %v8642
  %8811 = vst [vmem:[%s4 + $0x338] sm:$0x3f] %v8643
  %8812 = vst [vmem:[%s4 + $0x340] sm:$0x3f] %v8644
  %8813 = vst [vmem:[%s4 + $0x348] sm:$0x3f] %v8645
  %8814 = vst [vmem:[%s4 + $0x350] sm:$0x3f] %v8646
  %8815 = vst [vmem:[%s4 + $0x358] sm:$0x3f] %v8647
  %8816 = vst [vmem:[%s4 + $0x360] sm:$0xff] %v8648
  %8817 = vst [vmem:[%s4 + $0x368] sm:$0xff] %v8649
  %8818 = vst [vmem:[%s4 + $0x370] sm:$0xff] %v8650
  %8819 = vst [vmem:[%s4 + $0x378] sm:$0xff] %v8651
  %8820 = vst [vmem:[%s4 + $0x380] sm:$0xff] %v8652
  %8821 = vst [vmem:[%s4 + $0x388] sm:$0xff] %v8653
  %8822 = vst [vmem:[%s4 + $0x390] sm:$0x3f] %v8654
  %8823 = vst [vmem:[%s4 + $0x398] sm:$0x3f] %v8655
  %8824 = vst [vmem:[%s4 + $0x3a0] sm:$0x3f] %v8656
  %8825 = vst [vmem:[%s4 + $0x3a8] sm:$0x3f] %v8657
  %8826 = vst [vmem:[%s4 + $0x3b0] sm:$0x3f] %v8658
  %8827 = vst [vmem:[%s4 + $0x3b8] sm:$0x3f] %v8659
  %8828 = vst [vmem:[%s4 + $0x3c0] sm:$0xff] %v8660
  %8829 = vst [vmem:[%s4 + $0x3c8] sm:$0xff] %v8661
  %8830 = vst [vmem:[%s4 + $0x3d0] sm:$0xff] %v8662
  %8831 = vst [vmem:[%s4 + $0x3d8] sm:$0xff] %v8663
  %8832 = vst [vmem:[%s4 + $0x3e0] sm:$0xff] %v8664
  %8833 = vst [vmem:[%s4 + $0x3e8] sm:$0xff] %v8665
  %8834 = vst [vmem:[%s4 + $0x3f0] sm:$0x3f] %v8666
  %8835 = vst [vmem:[%s4 + $0x3f8] sm:$0x3f] %v8667
  %8836 = vst [vmem:[%s4 + $0x400] sm:$0x3f] %v8668
  %8837 = vst [vmem:[%s4 + $0x408] sm:$0x3f] %v8669
  %8838 = vst [vmem:[%s4 + $0x410] sm:$0x3f] %v8670
  %8839 = vst [vmem:[%s4 + $0x418] sm:$0x3f] %v8671
  %8840 = vst [vmem:[%s4 + $0x420] sm:$0xff] %v8672
  %8841 = vst [vmem:[%s4 + $0x428] sm:$0xff] %v8673
  %8842 = vst [vmem:[%s4 + $0x430] sm:$0xff] %v8674
  %8843 = vst [vmem:[%s4 + $0x438] sm:$0xff] %v8675
  %8844 = vst [vmem:[%s4 + $0x440] sm:$0xff] %v8676
  %8845 = vst [vmem:[%s4 + $0x448] sm:$0xff] %v8677
  %8846 = vst [vmem:[%s4 + $0x450] sm:$0x3f] %v8678
  %8847 = vst [vmem:[%s4 + $0x458] sm:$0x3f] %v8679
  %8848 = vst [vmem:[%s4 + $0x460] sm:$0x3f] %v8680
  %8849 = vst [vmem:[%s4 + $0x468] sm:$0x3f] %v8681
  %8850 = vst [vmem:[%s4 + $0x470] sm:$0x3f] %v8682
  %8851 = vst [vmem:[%s4 + $0x478] sm:$0x3f] %v8683
  %8852 = vst [vmem:[%s4 + $0x480] sm:$0xff] %v8684
  %8853 = vst [vmem:[%s4 + $0x488] sm:$0xff] %v8685
  %8854 = vst [vmem:[%s4 + $0x490] sm:$0xff] %v8686
  %8855 = vst [vmem:[%s4 + $0x498] sm:$0xff] %v8687
  %8856 = vst [vmem:[%s4 + $0x4a0] sm:$0xff] %v8688
  %8857 = vst [vmem:[%s4 + $0x4a8] sm:$0xff] %v8689
  %8858 = vst [vmem:[%s4 + $0x4b0] sm:$0x3f] %v8690
  %8859 = vst [vmem:[%s4 + $0x4b8] sm:$0x3f] %v8691
  %8860 = vst [vmem:[%s4 + $0x4c0] sm:$0x3f] %v8692
  %8861 = vst [vmem:[%s4 + $0x4c8] sm:$0x3f] %v8693
  %8862 = vst [vmem:[%s4 + $0x4d0] sm:$0x3f] %v8694
  %8863 = vst [vmem:[%s4 + $0x4d8] sm:$0x3f] %v8695
  %8864 = vst [vmem:[%s4 + $0x4e0] sm:$0xff] %v8696
  %8865 = vst [vmem:[%s4 + $0x4e8] sm:$0xff] %v8697
  %8866 = vst [vmem:[%s4 + $0x4f0] sm:$0xff] %v8698
  %8867 = vst [vmem:[%s4 + $0x4f8] sm:$0xff] %v8699
  %8868 = vst [vmem:[%s4 + $0x500] sm:$0xff] %v8700
  %8869 = vst [vmem:[%s4 + $0x508] sm:$0xff] %v8701
  %8870 = vst [vmem:[%s4 + $0x510] sm:$0x3f] %v8702
  %8871 = vst [vmem:[%s4 + $0x518] sm:$0x3f] %v8703
  %8872 = vst [vmem:[%s4 + $0x520] sm:$0x3f] %v8704
  %8873 = vst [vmem:[%s4 + $0x528] sm:$0x3f] %v8705
  %8874 = vst [vmem:[%s4 + $0x530] sm:$0x3f] %v8706
  %8875 = vst [vmem:[%s4 + $0x538] sm:$0x3f] %v8707
  // Predicated region
  $region18: #{tpu_custom_call.1} parent=0 // pred_check
    _
  $region19: #{tpu_custom_call.1} parent=0 // pred_check_branch
    %8877 = sbr.rel (0) target = $region21
  $region20: #{tpu_custom_call.1} parent=0 // pred_region
    _
  $region21: #{tpu_custom_call.1} parent=0 // pred_fallthru
    _
  // Predicated region
  $region22: #{tpu_custom_call.1} parent=0 // pred_check
    _
  $region23: #{tpu_custom_call.1} parent=0 // pred_check_branch
    %8879 = sbr.rel (0) target = $region25
  $region24: #{tpu_custom_call.1} parent=0 // pred_region
    _
  $region25: #{tpu_custom_call.1} parent=0 // pred_fallthru
    _

</llo_original>
